<compile_context>
chip_gen: v6e
topology: v6e:2x2x1
jax: 0.10.0
libtpu: 0.0.40
codegen_flags: <defaults>
</compile_context>

<pallas_src>
import functools

import jax
import jax.numpy as jnp
from jax.experimental import pallas as pl
from jax.experimental.pallas import tpu as pltpu

# ----------------------- model hyper-parameters (small) ----------------------
D_MODEL = 32
NUM_HEADS = 4
NUM_LAYERS = 2
DIM_FF = 2048            # nn.TransformerDecoderLayer default dim_feedforward
MAX_LENGTH = 10
NUM_COND = 1
NFI = 2                  # num_features_in
NFO = 16                 # num_features_out
LN_EPS = 1e-5
FF_CHUNK = 512           # FFN hidden-dim chunk (bounds live vregs per chunk)


# ------------------------------ fused kernel ---------------------------------
def _fused_kernel(xin_ref, pos_ref,
                  emb_w1_ref, emb_b1_ref, emb_w2_ref, emb_b2_ref,
                  sa_qkv_w_ref, sa_qkv_b_ref, sa_o_w_ref, sa_o_b_ref,
                  ca_const_ref,
                  ln1_g_ref, ln1_b_ref, ln2_g_ref, ln2_b_ref,
                  ln3_g_ref, ln3_b_ref,
                  ff1_w_hbm, ff1_b_ref, ff2_wt_hbm, ff2_b_ref,
                  out_w_ref, out_b_ref,
                  o_ref,
                  ff1_buf, ff2_buf, ff_sem,
                  *, bsz, seqlen):
    D = D_MODEL
    H = NUM_HEADS
    Dh = D // H
    T = seqlen
    M = bsz * T
    scale = 1.0 / (Dh ** 0.5)

    # -------- FF-weight DMA helpers (HBM -> VMEM double buffer) --------------
    def ff_copies(layer, slot):
        return (pltpu.make_async_copy(ff1_w_hbm.at[layer], ff1_buf.at[slot],
                                      ff_sem.at[0, slot]),
                pltpu.make_async_copy(ff2_wt_hbm.at[layer], ff2_buf.at[slot],
                                      ff_sem.at[1, slot]))

    # Kick off layer-0 FF-weight DMA immediately; it overlaps with the
    # embedding + self-attention compute below.
    for cp in ff_copies(0, 0):
        cp.start()

    def ln(v, g, b):
        mu = jnp.mean(v, axis=-1, keepdims=True)
        var = jnp.mean((v - mu) ** 2, axis=-1, keepdims=True)
        return (v - mu) * jax.lax.rsqrt(var + LN_EPS) * g + b

    # -------- embedding MLP: K=3 projection as VPU broadcast-FMAs ------------
    x = emb_b1_ref[...] + xin_ref[:, 0:1] * emb_w1_ref[0:1, :]
    for k in range(1, NUM_COND + NFI):
        x = x + xin_ref[:, k:k + 1] * emb_w1_ref[k:k + 1, :]
    x = jnp.where(x >= 0.0, x, 0.01 * x)                    # LeakyReLU(0.01)
    x = jnp.dot(x, emb_w2_ref[...],
                preferred_element_type=jnp.float32) + emb_b2_ref[...]
    x = x + pos_ref[...]

    # -------- block-diagonal (same-batch) causal additive bias, built once ---
    ridx = jax.lax.broadcasted_iota(jnp.int32, (M, M), 0)
    cidx = jax.lax.broadcasted_iota(jnp.int32, (M, M), 1)
    same_batch = None
    for b in range(bsz):
        lo, hi = b * T, (b + 1) * T
        blk = (ridx >= lo) & (ridx < hi) & (cidx >= lo) & (cidx < hi)
        same_batch = blk if same_batch is None else (same_batch | blk)
    allowed = same_batch & (cidx <= ridx)
    attn_bias = jnp.where(allowed, 0.0, -1e9).astype(jnp.float32)

    for l in range(NUM_LAYERS):
        slot = l % 2

        # ---------------- self-attention (fused QKV, all batches at once) ----
        qkv = jnp.dot(x, sa_qkv_w_ref[l],
                      preferred_element_type=jnp.float32) + sa_qkv_b_ref[l]
        sa = sa_o_b_ref[l]                                  # (1, D), broadcasts
        for h in range(H):
            c0 = h * Dh
            qh = qkv[:, c0:c0 + Dh]
            kh = qkv[:, D + c0:D + c0 + Dh]
            vh = qkv[:, 2 * D + c0:2 * D + c0 + Dh]
            s = jax.lax.dot_general(qh, kh, (((1,), (1,)), ((), ())),
                                    preferred_element_type=jnp.float32) * scale
            s = s + attn_bias
            s = s - jnp.max(s, axis=-1, keepdims=True)
            p = jnp.exp(s)
            p = p * pl.reciprocal(jnp.sum(p, axis=-1, keepdims=True),
                                  approx=True)
            out_h = jnp.dot(p, vh, preferred_element_type=jnp.float32)
            # Fold this head directly into the output projection: aligned
            # 8-row slice of W_o, no concatenates, no VMEM scratch stores.
            sa = sa + jnp.dot(out_h, sa_o_w_ref[l, c0:c0 + Dh, :],
                              preferred_element_type=jnp.float32)
        x = ln(x + sa, ln1_g_ref[l], ln1_b_ref[l])

        # ------------- cross-attention vs zero memory (precomputed const) ----
        # memory == 0 and Tk == 1  =>  attention output == out_proj(v_bias)+b,
        # precomputed once in pack_params.
        x = ln(x + ca_const_ref[l], ln2_g_ref[l], ln2_b_ref[l])

        # ------------- wait this layer's FF weights; prefetch next layer -----
        for cp in ff_copies(l, slot):
            cp.wait()
        if l + 1 < NUM_LAYERS:
            for cp in ff_copies(l + 1, 1 - slot):
                cp.start()

        # ------------- chunked FFN: bf16 weights, single f32 accumulator -----
        x_bf = x.astype(jnp.bfloat16)
        acc = jnp.zeros((M, D), jnp.float32)
        for c in range(DIM_FF // FF_CHUNK):
            c0 = c * FF_CHUNK
            h1 = jnp.dot(x_bf, ff1_buf[slot, :, c0:c0 + FF_CHUNK],
                         preferred_element_type=jnp.float32)
            h1 = jnp.maximum(h1 + ff1_b_ref[l, :, c0:c0 + FF_CHUNK], 0.0)
            # ff2 stored lane-dense as (D, DIM_FF): contract on the chunk axis
            acc = acc + jax.lax.dot_general(
                h1.astype(jnp.bfloat16), ff2_buf[slot, :, c0:c0 + FF_CHUNK],
                (((1,), (1,)), ((), ())), preferred_element_type=jnp.float32)
        x = ln(x + acc + ff2_b_ref[l], ln3_g_ref[l], ln3_b_ref[l])

    # -------- output projection + grouped softmax, one full-tile store -------
    logits = jnp.dot(x, out_w_ref[...],
                     preferred_element_type=jnp.float32) + out_b_ref[...]
    lane = jax.lax.broadcasted_iota(jnp.int32, (M, NFI * NFO), 1)
    masks = [(lane >= g * NFO) & (lane < (g + 1) * NFO) for g in range(NFI)]
    m_sel = jnp.zeros_like(logits)
    for mg in masks:
        m_g = jnp.max(jnp.where(mg, logits, -1e30), axis=-1, keepdims=True)
        m_sel = jnp.where(mg, m_g, m_sel)
    e = jnp.exp(logits - m_sel)
    s_sel = jnp.ones_like(logits)
    for mg in masks:
        s_g = jnp.sum(jnp.where(mg, e, 0.0), axis=-1, keepdims=True)
        s_sel = jnp.where(mg, s_g, s_sel)
    o_ref[...] = e / s_sel


# ----------------------------- forward wrapper --------------------------------
def transformer3_forward(packed, context, x):
    B, S, nfi = x.shape
    T = S + 1

    # context expand + start token + concat (matches the torch.cat order:
    # [context, x] along the feature dim, start token first along seq)
    ctx = jnp.broadcast_to(context.reshape(B, 1, -1), (B, T, context.shape[-1]))
    xx = jnp.concatenate([jnp.ones((B, 1, nfi), jnp.float32), x], axis=1)
    xx = jnp.concatenate([ctx, xx], axis=-1).reshape(B * T, NUM_COND + nfi)
    pos = jnp.tile(packed["pos_emb"][:T], (B, 1))           # (B*T, D)

    vmem = pl.BlockSpec(memory_space=pltpu.MemorySpace.VMEM)
    hbm = pl.BlockSpec(memory_space=pl.ANY)                 # manual DMA inside

    kern = functools.partial(_fused_kernel, bsz=B, seqlen=T)
    out2d = pl.pallas_call(
        kern,
        out_shape=jax.ShapeDtypeStruct((B * T, NFI * NFO), jnp.float32),
        in_specs=[vmem, vmem,                               # xin, pos
                  vmem, vmem, vmem, vmem,                   # embedding MLP
                  vmem, vmem, vmem, vmem,                   # self-attn qkv / o
                  vmem,                                     # ca_const
                  vmem, vmem, vmem, vmem, vmem, vmem,       # ln1..ln3 g/b
                  hbm, vmem, hbm, vmem,                     # ff1_w(HBM), ff1_b, ff2_wt(HBM), ff2_b
                  vmem, vmem],                              # out_w, out_b
        out_specs=vmem,
        scratch_shapes=[
            pltpu.VMEM((2, D_MODEL, DIM_FF), jnp.bfloat16),  # ff1 double buffer
            pltpu.VMEM((2, D_MODEL, DIM_FF), jnp.bfloat16),  # ff2 double buffer
            pltpu.SemaphoreType.DMA((2, 2)),
        ],
    )(xx, pos,
      packed["emb_w1"], packed["emb_b1"], packed["emb_w2"], packed["emb_b2"],
      packed["sa_qkv_w"], packed["sa_qkv_b"], packed["sa_o_w"], packed["sa_o_b"],
      packed["ca_const"],
      packed["ln1_g"], packed["ln1_b"], packed["ln2_g"], packed["ln2_b"],
      packed["ln3_g"], packed["ln3_b"],
      packed["ff1_w"], packed["ff1_b"], packed["ff2_wt"], packed["ff2_b"],
      packed["out_w"], packed["out_b"])
    return out2d.reshape(B, T, NFI, NFO)


# ------------------------------- parameter init -------------------------------
def init_params(key):
    keys = list(jax.random.split(key, 16 * NUM_LAYERS * 10 + 16))
    kit = iter(keys)

    def w(shape, scale=0.02):
        return (scale * jax.random.normal(next(kit), shape)).astype(jnp.float32)

    p = {}
    p["pos_emb"] = w((MAX_LENGTH, D_MODEL), 0.02)
    p["emb_w1"] = w((NUM_COND + NFI, D_MODEL))
    p["emb_b1"] = w((1, D_MODEL))
    p["emb_w2"] = w((D_MODEL, D_MODEL))
    p["emb_b2"] = w((1, D_MODEL))
    layers = []
    for _ in range(NUM_LAYERS):
        lp = {}
        for pre in ("sa", "ca"):
            for name in ("q", "k", "v", "o"):
                lp[f"{pre}_{name}_w"] = w((D_MODEL, D_MODEL))
                lp[f"{pre}_{name}_b"] = w((1, D_MODEL))
        lp["ff1_w"] = w((D_MODEL, DIM_FF))
        lp["ff1_b"] = w((1, DIM_FF))
        lp["ff2_w"] = w((DIM_FF, D_MODEL))
        lp["ff2_b"] = w((1, D_MODEL))
        for lnn in ("ln1", "ln2", "ln3"):
            lp[f"{lnn}_g"] = jnp.ones((1, D_MODEL), jnp.float32)
            lp[f"{lnn}_b"] = jnp.zeros((1, D_MODEL), jnp.float32)
        layers.append(lp)
    p["layers"] = layers
    p["out_w"] = w((D_MODEL, NFI * NFO))
    p["out_b"] = w((1, NFI * NFO))
    return p


def pack_params(p):
    """One-time packing: stack per-layer weights, fuse QKV, precompute the
    zero-memory cross-attention constant, and store ff weights bf16 with ff2
    pre-transposed to a lane-dense (D, DIM_FF) layout."""
    ls = p["layers"]

    def stack(fn):
        return jnp.stack([fn(lp) for lp in ls], axis=0)

    packed = {
        "pos_emb": p["pos_emb"],
        "emb_w1": p["emb_w1"], "emb_b1": p["emb_b1"],
        "emb_w2": p["emb_w2"], "emb_b2": p["emb_b2"],
        # fused self-attention QKV projection: (L, D, 3D) / (L, 1, 3D)
        "sa_qkv_w": stack(lambda lp: jnp.concatenate(
            [lp["sa_q_w"], lp["sa_k_w"], lp["sa_v_w"]], axis=1)),
        "sa_qkv_b": stack(lambda lp: jnp.concatenate(
            [lp["sa_q_b"], lp["sa_k_b"], lp["sa_v_b"]], axis=1)),
        "sa_o_w": stack(lambda lp: lp["sa_o_w"]),
        "sa_o_b": stack(lambda lp: lp["sa_o_b"]),
        # zero-memory cross-attention (Tk==1) collapses to a constant vector:
        "ca_const": stack(lambda lp: lp["ca_v_b"] @ lp["ca_o_w"] + lp["ca_o_b"]),
        "ln1_g": stack(lambda lp: lp["ln1_g"]),
        "ln1_b": stack(lambda lp: lp["ln1_b"]),
        "ln2_g": stack(lambda lp: lp["ln2_g"]),
        "ln2_b": stack(lambda lp: lp["ln2_b"]),
        "ln3_g": stack(lambda lp: lp["ln3_g"]),
        "ln3_b": stack(lambda lp: lp["ln3_b"]),
        # FF weights bf16; ff2 pre-transposed lane-dense (L, D, DIM_FF)
        "ff1_w": stack(lambda lp: lp["ff1_w"]).astype(jnp.bfloat16),
        "ff1_b": stack(lambda lp: lp["ff1_b"]),
        "ff2_wt": stack(lambda lp: lp["ff2_w"].T).astype(jnp.bfloat16),
        "ff2_b": stack(lambda lp: lp["ff2_b"]),
        "out_w": p["out_w"], "out_b": p["out_b"],
    }
    return packed


# ----------------------------------- main -------------------------------------
if __name__ == "__main__":
    key = jax.random.PRNGKey(0)
    k_param, k_ctx, k_x = jax.random.split(key, 3)

    B, S = 2, 8                                   # seq_length=8 -> T = 9 <= max_length
    params = init_params(k_param)
    packed = pack_params(params)                  # one-time packing, outside jit
    context = jax.random.uniform(k_ctx, (B, NUM_COND), dtype=jnp.float32)
    x = jax.random.uniform(k_x, (B, S, NFI), dtype=jnp.float32)

    fwd = jax.jit(transformer3_forward)
    out = fwd(packed, context, x)
    out = jax.block_until_ready(out)

    assert out.shape == (B, S + 1, NFI, NFO)
    assert bool(jnp.all(jnp.isfinite(out)))
    # softmax rows must sum to ~1
    assert bool(jnp.all(jnp.abs(jnp.sum(out, axis=-1) - 1.0) < 1e-2))
    print("KERNEL_OK")
</pallas_src>

<mosaic_0001>
module attributes {stable_mosaic.version = 11 : i64} {
  func.func @_fused_kernel(%arg0: memref<18x3xf32, #tpu.memory_space<vmem>>, %arg1: memref<18x32xf32, #tpu.memory_space<vmem>>, %arg2: memref<3x32xf32, #tpu.memory_space<vmem>>, %arg3: memref<1x32xf32, #tpu.memory_space<vmem>>, %arg4: memref<32x32xf32, #tpu.memory_space<vmem>>, %arg5: memref<1x32xf32, #tpu.memory_space<vmem>>, %arg6: memref<2x32x96xf32, #tpu.memory_space<vmem>>, %arg7: memref<2x1x96xf32, #tpu.memory_space<vmem>>, %arg8: memref<2x32x32xf32, #tpu.memory_space<vmem>>, %arg9: memref<2x1x32xf32, #tpu.memory_space<vmem>>, %arg10: memref<2x1x32xf32, #tpu.memory_space<vmem>>, %arg11: memref<2x1x32xf32, #tpu.memory_space<vmem>>, %arg12: memref<2x1x32xf32, #tpu.memory_space<vmem>>, %arg13: memref<2x1x32xf32, #tpu.memory_space<vmem>>, %arg14: memref<2x1x32xf32, #tpu.memory_space<vmem>>, %arg15: memref<2x1x32xf32, #tpu.memory_space<vmem>>, %arg16: memref<2x1x32xf32, #tpu.memory_space<vmem>>, %arg17: memref<2x32x2048xbf16, #tpu.memory_space<any>>, %arg18: memref<2x1x2048xf32, #tpu.memory_space<vmem>>, %arg19: memref<2x32x2048xbf16, #tpu.memory_space<any>>, %arg20: memref<2x1x32xf32, #tpu.memory_space<vmem>>, %arg21: memref<32x32xf32, #tpu.memory_space<vmem>>, %arg22: memref<1x32xf32, #tpu.memory_space<vmem>>, %arg23: memref<18x32xf32, #tpu.memory_space<vmem>>, %arg24: memref<2x32x2048xbf16, #tpu.memory_space<vmem>>, %arg25: memref<2x32x2048xbf16, #tpu.memory_space<vmem>>, %arg26: memref<2x2x!tpu.dma_semaphore, #tpu.memory_space<semaphore_mem>>) attributes {dimension_semantics = [], scalar_prefetch = 0 : i64, scratch_operands = 3 : i64, tpu.core_type = #tpu.core_type<tc>} {
    %c0_i32 = arith.constant 0 : i32
    %c0_i32_0 = arith.constant 0 : i32
    %c0_i32_1 = arith.constant 0 : i32
    %c0_i32_2 = arith.constant 0 : i32
    %c0_i32_3 = arith.constant 0 : i32
    %c0_i32_4 = arith.constant 0 : i32
    %0 = tpu.memref_slice %arg17[%c0_i32, %c0_i32_3, %c0_i32_4] : memref<2x32x2048xbf16, #tpu.memory_space<any>> -> memref<1x32x2048xbf16, #tpu.memory_space<any>>
    %1 = tpu.memref_squeeze %0 : memref<1x32x2048xbf16, #tpu.memory_space<any>> -> memref<32x2048xbf16, #tpu.memory_space<any>>
    %c0_i32_5 = arith.constant 0 : i32
    %c0_i32_6 = arith.constant 0 : i32
    %2 = tpu.memref_slice %arg24[%c0_i32_0, %c0_i32_5, %c0_i32_6] : memref<2x32x2048xbf16, #tpu.memory_space<vmem>> -> memref<1x32x2048xbf16, #tpu.memory_space<vmem>>
    %3 = tpu.memref_squeeze %2 : memref<1x32x2048xbf16, #tpu.memory_space<vmem>> -> memref<32x2048xbf16, #tpu.memory_space<vmem>>
    %4 = tpu.memref_slice %arg26[%c0_i32_1, %c0_i32_2] : memref<2x2x!tpu.dma_semaphore, #tpu.memory_space<semaphore_mem>> -> memref<1x1x!tpu.dma_semaphore, #tpu.memory_space<semaphore_mem>>
    %5 = tpu.memref_squeeze %4 : memref<1x1x!tpu.dma_semaphore, #tpu.memory_space<semaphore_mem>> -> memref<!tpu.dma_semaphore, #tpu.memory_space<semaphore_mem>>
    tpu.enqueue_dma source(%1 : memref<32x2048xbf16, #tpu.memory_space<any>>) target(%3 : memref<32x2048xbf16, #tpu.memory_space<vmem>>) target_semaphore(%5 : memref<!tpu.dma_semaphore, #tpu.memory_space<semaphore_mem>>)
    %c0_i32_7 = arith.constant 0 : i32
    %c0_i32_8 = arith.constant 0 : i32
    %c1_i32 = arith.constant 1 : i32
    %c0_i32_9 = arith.constant 0 : i32
    %c0_i32_10 = arith.constant 0 : i32
    %c0_i32_11 = arith.constant 0 : i32
    %6 = tpu.memref_slice %arg19[%c0_i32_7, %c0_i32_10, %c0_i32_11] : memref<2x32x2048xbf16, #tpu.memory_space<any>> -> memref<1x32x2048xbf16, #tpu.memory_space<any>>
    %7 = tpu.memref_squeeze %6 : memref<1x32x2048xbf16, #tpu.memory_space<any>> -> memref<32x2048xbf16, #tpu.memory_space<any>>
    %c0_i32_12 = arith.constant 0 : i32
    %c0_i32_13 = arith.constant 0 : i32
    %8 = tpu.memref_slice %arg25[%c0_i32_8, %c0_i32_12, %c0_i32_13] : memref<2x32x2048xbf16, #tpu.memory_space<vmem>> -> memref<1x32x2048xbf16, #tpu.memory_space<vmem>>
    %9 = tpu.memref_squeeze %8 : memref<1x32x2048xbf16, #tpu.memory_space<vmem>> -> memref<32x2048xbf16, #tpu.memory_space<vmem>>
    %10 = tpu.memref_slice %arg26[%c1_i32, %c0_i32_9] : memref<2x2x!tpu.dma_semaphore, #tpu.memory_space<semaphore_mem>> -> memref<1x1x!tpu.dma_semaphore, #tpu.memory_space<semaphore_mem>>
    %11 = tpu.memref_squeeze %10 : memref<1x1x!tpu.dma_semaphore, #tpu.memory_space<semaphore_mem>> -> memref<!tpu.dma_semaphore, #tpu.memory_space<semaphore_mem>>
    tpu.enqueue_dma source(%7 : memref<32x2048xbf16, #tpu.memory_space<any>>) target(%9 : memref<32x2048xbf16, #tpu.memory_space<vmem>>) target_semaphore(%11 : memref<!tpu.dma_semaphore, #tpu.memory_space<semaphore_mem>>)
    %c0 = arith.constant 0 : index
    %c0_14 = arith.constant 0 : index
    %12 = vector.load %arg3[%c0, %c0_14] : memref<1x32xf32, #tpu.memory_space<vmem>>, vector<1x32xf32>
    %c0_15 = arith.constant 0 : index
    %c0_16 = arith.constant 0 : index
    %13 = vector.load %arg0[%c0_15, %c0_16] : memref<18x3xf32, #tpu.memory_space<vmem>>, vector<18x1xf32>
    %c0_17 = arith.constant 0 : index
    %c0_18 = arith.constant 0 : index
    %14 = vector.load %arg2[%c0_17, %c0_18] : memref<3x32xf32, #tpu.memory_space<vmem>>, vector<1x32xf32>
    %15 = vector.broadcast %13 : vector<18x1xf32> to vector<18x32xf32>
    %16 = vector.broadcast %14 : vector<1x32xf32> to vector<18x32xf32>
    %17 = arith.mulf %15, %16 : vector<18x32xf32>
    %18 = vector.broadcast %12 : vector<1x32xf32> to vector<18x32xf32>
    %19 = arith.addf %18, %17 : vector<18x32xf32>
    %c0_19 = arith.constant 0 : index
    %c1 = arith.constant 1 : index
    %20 = vector.load %arg0[%c0_19, %c1] : memref<18x3xf32, #tpu.memory_space<vmem>>, vector<18x1xf32>
    %c1_20 = arith.constant 1 : index
    %c0_21 = arith.constant 0 : index
    %21 = vector.load %arg2[%c1_20, %c0_21] : memref<3x32xf32, #tpu.memory_space<vmem>>, vector<1x32xf32>
    %22 = vector.broadcast %20 : vector<18x1xf32> to vector<18x32xf32>
    %23 = vector.broadcast %21 : vector<1x32xf32> to vector<18x32xf32>
    %24 = arith.mulf %22, %23 : vector<18x32xf32>
    %25 = arith.addf %19, %24 : vector<18x32xf32>
    %c0_22 = arith.constant 0 : index
    %c2 = arith.constant 2 : index
    %26 = vector.load %arg0[%c0_22, %c2] : memref<18x3xf32, #tpu.memory_space<vmem>>, vector<18x1xf32>
    %c2_23 = arith.constant 2 : index
    %c0_24 = arith.constant 0 : index
    %27 = vector.load %arg2[%c2_23, %c0_24] : memref<3x32xf32, #tpu.memory_space<vmem>>, vector<1x32xf32>
    %28 = vector.broadcast %26 : vector<18x1xf32> to vector<18x32xf32>
    %29 = vector.broadcast %27 : vector<1x32xf32> to vector<18x32xf32>
    %30 = arith.mulf %28, %29 : vector<18x32xf32>
    %31 = arith.addf %25, %30 : vector<18x32xf32>
    %cst = arith.constant 0.000000e+00 : f32
    %32 = vector.broadcast %cst : f32 to vector<18x32xf32>
    %33 = arith.cmpf oge, %31, %32 : vector<18x32xf32>
    %cst_25 = arith.constant 0.00999999977 : f32
    %34 = vector.broadcast %cst_25 : f32 to vector<18x32xf32>
    %35 = arith.mulf %34, %31 : vector<18x32xf32>
    %36 = arith.select %33, %31, %35 : vector<18x32xi1>, vector<18x32xf32>
    %c0_26 = arith.constant 0 : index
    %c0_27 = arith.constant 0 : index
    %37 = vector.load %arg4[%c0_26, %c0_27] : memref<32x32xf32, #tpu.memory_space<vmem>>, vector<32x32xf32>
    %cst_28 = arith.constant dense<0.000000e+00> : vector<18x32xf32>
    %38 = tpu.matmul %36, %37, %cst_28 {dimension_numbers = #tpu.dot_dimension_numbers<[1], [0], [0], [1], [0, 0, 1, 1], [], []>} : vector<18x32xf32>, vector<32x32xf32>, vector<18x32xf32> -> vector<18x32xf32>
    %c0_29 = arith.constant 0 : index
    %c0_30 = arith.constant 0 : index
    %39 = vector.load %arg5[%c0_29, %c0_30] : memref<1x32xf32, #tpu.memory_space<vmem>>, vector<1x32xf32>
    %40 = vector.broadcast %39 : vector<1x32xf32> to vector<18x32xf32>
    %41 = arith.addf %38, %40 : vector<18x32xf32>
    %c0_31 = arith.constant 0 : index
    %c0_32 = arith.constant 0 : index
    %42 = vector.load %arg1[%c0_31, %c0_32] : memref<18x32xf32, #tpu.memory_space<vmem>>, vector<18x32xf32>
    %43 = arith.addf %41, %42 : vector<18x32xf32>
    %44 = tpu.iota {dimensions = array<i32: 0>} : vector<18x18xi32>
    %45 = tpu.iota {dimensions = array<i32: 1>} : vector<18x18xi32>
    %c0_i32_33 = arith.constant 0 : i32
    %46 = vector.broadcast %c0_i32_33 : i32 to vector<18x18xi32>
    %47 = arith.cmpi sge, %44, %46 : vector<18x18xi32>
    %c9_i32 = arith.constant 9 : i32
    %48 = vector.broadcast %c9_i32 : i32 to vector<18x18xi32>
    %49 = arith.cmpi slt, %44, %48 : vector<18x18xi32>
    %50 = arith.andi %47, %49 : vector<18x18xi1>
    %c0_i32_34 = arith.constant 0 : i32
    %51 = vector.broadcast %c0_i32_34 : i32 to vector<18x18xi32>
    %52 = arith.cmpi sge, %45, %51 : vector<18x18xi32>
    %53 = arith.andi %50, %52 : vector<18x18xi1>
    %c9_i32_35 = arith.constant 9 : i32
    %54 = vector.broadcast %c9_i32_35 : i32 to vector<18x18xi32>
    %55 = arith.cmpi slt, %45, %54 : vector<18x18xi32>
    %56 = arith.andi %53, %55 : vector<18x18xi1>
    %c9_i32_36 = arith.constant 9 : i32
    %57 = vector.broadcast %c9_i32_36 : i32 to vector<18x18xi32>
    %58 = arith.cmpi sge, %44, %57 : vector<18x18xi32>
    %c18_i32 = arith.constant 18 : i32
    %59 = vector.broadcast %c18_i32 : i32 to vector<18x18xi32>
    %60 = arith.cmpi slt, %44, %59 : vector<18x18xi32>
    %61 = arith.andi %58, %60 : vector<18x18xi1>
    %c9_i32_37 = arith.constant 9 : i32
    %62 = vector.broadcast %c9_i32_37 : i32 to vector<18x18xi32>
    %63 = arith.cmpi sge, %45, %62 : vector<18x18xi32>
    %64 = arith.andi %61, %63 : vector<18x18xi1>
    %c18_i32_38 = arith.constant 18 : i32
    %65 = vector.broadcast %c18_i32_38 : i32 to vector<18x18xi32>
    %66 = arith.cmpi slt, %45, %65 : vector<18x18xi32>
    %67 = arith.andi %64, %66 : vector<18x18xi1>
    %68 = arith.ori %56, %67 : vector<18x18xi1>
    %69 = arith.cmpi sle, %45, %44 : vector<18x18xi32>
    %70 = arith.andi %68, %69 : vector<18x18xi1>
    %cst_39 = arith.constant 0.000000e+00 : f32
    %cst_40 = arith.constant -1.000000e+09 : f32
    %71 = vector.broadcast %cst_39 : f32 to vector<18x18xf32>
    %72 = vector.broadcast %cst_40 : f32 to vector<18x18xf32>
    %73 = arith.select %70, %71, %72 : vector<18x18xi1>, vector<18x18xf32>
    %c0_41 = arith.constant 0 : index
    %c0_42 = arith.constant 0 : index
    %c0_43 = arith.constant 0 : index
    %74 = vector.load %arg6[%c0_41, %c0_42, %c0_43] : memref<2x32x96xf32, #tpu.memory_space<vmem>>, vector<1x32x96xf32>
    %75 = vector.shape_cast %74 : vector<1x32x96xf32> to vector<32x96xf32>
    %cst_44 = arith.constant dense<0.000000e+00> : vector<18x96xf32>
    %76 = tpu.matmul %43, %75, %cst_44 {dimension_numbers = #tpu.dot_dimension_numbers<[1], [0], [0], [1], [0, 0, 1, 1], [], []>} : vector<18x32xf32>, vector<32x96xf32>, vector<18x96xf32> -> vector<18x96xf32>
    %c0_45 = arith.constant 0 : index
    %c0_46 = arith.constant 0 : index
    %c0_47 = arith.constant 0 : index
    %77 = vector.load %arg7[%c0_45, %c0_46, %c0_47] : memref<2x1x96xf32, #tpu.memory_space<vmem>>, vector<1x1x96xf32>
    %78 = vector.shape_cast %77 : vector<1x1x96xf32> to vector<1x96xf32>
    %79 = vector.broadcast %78 : vector<1x96xf32> to vector<18x96xf32>
    %80 = arith.addf %76, %79 : vector<18x96xf32>
    %c0_48 = arith.constant 0 : index
    %c0_49 = arith.constant 0 : index
    %c0_50 = arith.constant 0 : index
    %81 = vector.load %arg9[%c0_48, %c0_49, %c0_50] : memref<2x1x32xf32, #tpu.memory_space<vmem>>, vector<1x1x32xf32>
    %82 = vector.shape_cast %81 : vector<1x1x32xf32> to vector<1x32xf32>
    %83 = vector.extract_strided_slice %80 {offsets = [0, 0], sizes = [18, 8], strides = [1, 1]} : vector<18x96xf32> to vector<18x8xf32>
    %84 = vector.extract_strided_slice %80 {offsets = [0, 32], sizes = [18, 8], strides = [1, 1]} : vector<18x96xf32> to vector<18x8xf32>
    %85 = vector.extract_strided_slice %80 {offsets = [0, 64], sizes = [18, 8], strides = [1, 1]} : vector<18x96xf32> to vector<18x8xf32>
    %cst_51 = arith.constant dense<0.000000e+00> : vector<18x18xf32>
    %86 = tpu.matmul %83, %84, %cst_51 {dimension_numbers = #tpu.dot_dimension_numbers<[1], [1], [0], [0], [0, 0, 1, 0], [], []>} : vector<18x8xf32>, vector<18x8xf32>, vector<18x18xf32> -> vector<18x18xf32>
    %cst_52 = arith.constant 0.353553385 : f32
    %87 = vector.broadcast %cst_52 : f32 to vector<18x18xf32>
    %88 = arith.mulf %86, %87 : vector<18x18xf32>
    %89 = arith.addf %88, %73 : vector<18x18xf32>
    %cst_53 = arith.constant dense<0xFF800000> : vector<18xf32>
    %90 = vector.multi_reduction <maximumf>, %89, %cst_53 [1] : vector<18x18xf32> to vector<18xf32>
    %91 = vector.shape_cast %90 : vector<18xf32> to vector<18x1xf32>
    %92 = vector.broadcast %91 : vector<18x1xf32> to vector<18x18xf32>
    %93 = arith.subf %89, %92 : vector<18x18xf32>
    %94 = math.exp %93 : vector<18x18xf32>
    %cst_54 = arith.constant dense<0.000000e+00> : vector<18xf32>
    %95 = vector.multi_reduction <add>, %94, %cst_54 [1] : vector<18x18xf32> to vector<18xf32>
    %96 = vector.shape_cast %95 : vector<18xf32> to vector<18x1xf32>
    %97 = tpu.reciprocal %96 {approx = true} : vector<18x1xf32> -> vector<18x1xf32>
    %98 = vector.broadcast %97 : vector<18x1xf32> to vector<18x18xf32>
    %99 = arith.mulf %94, %98 : vector<18x18xf32>
    %cst_55 = arith.constant dense<0.000000e+00> : vector<18x8xf32>
    %100 = tpu.matmul %99, %85, %cst_55 {dimension_numbers = #tpu.dot_dimension_numbers<[1], [0], [0], [1], [0, 0, 1, 1], [], []>} : vector<18x18xf32>, vector<18x8xf32>, vector<18x8xf32> -> vector<18x8xf32>
    %c0_56 = arith.constant 0 : index
    %c0_57 = arith.constant 0 : index
    %c0_58 = arith.constant 0 : index
    %101 = vector.load %arg8[%c0_56, %c0_57, %c0_58] : memref<2x32x32xf32, #tpu.memory_space<vmem>>, vector<1x8x32xf32>
    %102 = vector.shape_cast %101 : vector<1x8x32xf32> to vector<8x32xf32>
    %cst_59 = arith.constant dense<0.000000e+00> : vector<18x32xf32>
    %103 = tpu.matmul %100, %102, %cst_59 {dimension_numbers = #tpu.dot_dimension_numbers<[1], [0], [0], [1], [0, 0, 1, 1], [], []>} : vector<18x8xf32>, vector<8x32xf32>, vector<18x32xf32> -> vector<18x32xf32>
    %104 = vector.broadcast %82 : vector<1x32xf32> to vector<18x32xf32>
    %105 = arith.addf %104, %103 : vector<18x32xf32>
    %106 = vector.extract_strided_slice %80 {offsets = [0, 8], sizes = [18, 8], strides = [1, 1]} : vector<18x96xf32> to vector<18x8xf32>
    %107 = vector.extract_strided_slice %80 {offsets = [0, 40], sizes = [18, 8], strides = [1, 1]} : vector<18x96xf32> to vector<18x8xf32>
    %108 = vector.extract_strided_slice %80 {offsets = [0, 72], sizes = [18, 8], strides = [1, 1]} : vector<18x96xf32> to vector<18x8xf32>
    %cst_60 = arith.constant dense<0.000000e+00> : vector<18x18xf32>
    %109 = tpu.matmul %106, %107, %cst_60 {dimension_numbers = #tpu.dot_dimension_numbers<[1], [1], [0], [0], [0, 0, 1, 0], [], []>} : vector<18x8xf32>, vector<18x8xf32>, vector<18x18xf32> -> vector<18x18xf32>
    %cst_61 = arith.constant 0.353553385 : f32
    %110 = vector.broadcast %cst_61 : f32 to vector<18x18xf32>
    %111 = arith.mulf %109, %110 : vector<18x18xf32>
    %112 = arith.addf %111, %73 : vector<18x18xf32>
    %cst_62 = arith.constant dense<0xFF800000> : vector<18xf32>
    %113 = vector.multi_reduction <maximumf>, %112, %cst_62 [1] : vector<18x18xf32> to vector<18xf32>
    %114 = vector.shape_cast %113 : vector<18xf32> to vector<18x1xf32>
    %115 = vector.broadcast %114 : vector<18x1xf32> to vector<18x18xf32>
    %116 = arith.subf %112, %115 : vector<18x18xf32>
    %117 = math.exp %116 : vector<18x18xf32>
    %cst_63 = arith.constant dense<0.000000e+00> : vector<18xf32>
    %118 = vector.multi_reduction <add>, %117, %cst_63 [1] : vector<18x18xf32> to vector<18xf32>
    %119 = vector.shape_cast %118 : vector<18xf32> to vector<18x1xf32>
    %120 = tpu.reciprocal %119 {approx = true} : vector<18x1xf32> -> vector<18x1xf32>
    %121 = vector.broadcast %120 : vector<18x1xf32> to vector<18x18xf32>
    %122 = arith.mulf %117, %121 : vector<18x18xf32>
    %cst_64 = arith.constant dense<0.000000e+00> : vector<18x8xf32>
    %123 = tpu.matmul %122, %108, %cst_64 {dimension_numbers = #tpu.dot_dimension_numbers<[1], [0], [0], [1], [0, 0, 1, 1], [], []>} : vector<18x18xf32>, vector<18x8xf32>, vector<18x8xf32> -> vector<18x8xf32>
    %c0_65 = arith.constant 0 : index
    %c8 = arith.constant 8 : index
    %c0_66 = arith.constant 0 : index
    %124 = vector.load %arg8[%c0_65, %c8, %c0_66] : memref<2x32x32xf32, #tpu.memory_space<vmem>>, vector<1x8x32xf32>
    %125 = vector.shape_cast %124 : vector<1x8x32xf32> to vector<8x32xf32>
    %cst_67 = arith.constant dense<0.000000e+00> : vector<18x32xf32>
    %126 = tpu.matmul %123, %125, %cst_67 {dimension_numbers = #tpu.dot_dimension_numbers<[1], [0], [0], [1], [0, 0, 1, 1], [], []>} : vector<18x8xf32>, vector<8x32xf32>, vector<18x32xf32> -> vector<18x32xf32>
    %127 = arith.addf %105, %126 : vector<18x32xf32>
    %128 = vector.extract_strided_slice %80 {offsets = [0, 16], sizes = [18, 8], strides = [1, 1]} : vector<18x96xf32> to vector<18x8xf32>
    %129 = vector.extract_strided_slice %80 {offsets = [0, 48], sizes = [18, 8], strides = [1, 1]} : vector<18x96xf32> to vector<18x8xf32>
    %130 = vector.extract_strided_slice %80 {offsets = [0, 80], sizes = [18, 8], strides = [1, 1]} : vector<18x96xf32> to vector<18x8xf32>
    %cst_68 = arith.constant dense<0.000000e+00> : vector<18x18xf32>
    %131 = tpu.matmul %128, %129, %cst_68 {dimension_numbers = #tpu.dot_dimension_numbers<[1], [1], [0], [0], [0, 0, 1, 0], [], []>} : vector<18x8xf32>, vector<18x8xf32>, vector<18x18xf32> -> vector<18x18xf32>
    %cst_69 = arith.constant 0.353553385 : f32
    %132 = vector.broadcast %cst_69 : f32 to vector<18x18xf32>
    %133 = arith.mulf %131, %132 : vector<18x18xf32>
    %134 = arith.addf %133, %73 : vector<18x18xf32>
    %cst_70 = arith.constant dense<0xFF800000> : vector<18xf32>
    %135 = vector.multi_reduction <maximumf>, %134, %cst_70 [1] : vector<18x18xf32> to vector<18xf32>
    %136 = vector.shape_cast %135 : vector<18xf32> to vector<18x1xf32>
    %137 = vector.broadcast %136 : vector<18x1xf32> to vector<18x18xf32>
    %138 = arith.subf %134, %137 : vector<18x18xf32>
    %139 = math.exp %138 : vector<18x18xf32>
    %cst_71 = arith.constant dense<0.000000e+00> : vector<18xf32>
    %140 = vector.multi_reduction <add>, %139, %cst_71 [1] : vector<18x18xf32> to vector<18xf32>
    %141 = vector.shape_cast %140 : vector<18xf32> to vector<18x1xf32>
    %142 = tpu.reciprocal %141 {approx = true} : vector<18x1xf32> -> vector<18x1xf32>
    %143 = vector.broadcast %142 : vector<18x1xf32> to vector<18x18xf32>
    %144 = arith.mulf %139, %143 : vector<18x18xf32>
    %cst_72 = arith.constant dense<0.000000e+00> : vector<18x8xf32>
    %145 = tpu.matmul %144, %130, %cst_72 {dimension_numbers = #tpu.dot_dimension_numbers<[1], [0], [0], [1], [0, 0, 1, 1], [], []>} : vector<18x18xf32>, vector<18x8xf32>, vector<18x8xf32> -> vector<18x8xf32>
    %c0_73 = arith.constant 0 : index
    %c16 = arith.constant 16 : index
    %c0_74 = arith.constant 0 : index
    %146 = vector.load %arg8[%c0_73, %c16, %c0_74] : memref<2x32x32xf32, #tpu.memory_space<vmem>>, vector<1x8x32xf32>
    %147 = vector.shape_cast %146 : vector<1x8x32xf32> to vector<8x32xf32>
    %cst_75 = arith.constant dense<0.000000e+00> : vector<18x32xf32>
    %148 = tpu.matmul %145, %147, %cst_75 {dimension_numbers = #tpu.dot_dimension_numbers<[1], [0], [0], [1], [0, 0, 1, 1], [], []>} : vector<18x8xf32>, vector<8x32xf32>, vector<18x32xf32> -> vector<18x32xf32>
    %149 = arith.addf %127, %148 : vector<18x32xf32>
    %150 = vector.extract_strided_slice %80 {offsets = [0, 24], sizes = [18, 8], strides = [1, 1]} : vector<18x96xf32> to vector<18x8xf32>
    %151 = vector.extract_strided_slice %80 {offsets = [0, 56], sizes = [18, 8], strides = [1, 1]} : vector<18x96xf32> to vector<18x8xf32>
    %152 = vector.extract_strided_slice %80 {offsets = [0, 88], sizes = [18, 8], strides = [1, 1]} : vector<18x96xf32> to vector<18x8xf32>
    %cst_76 = arith.constant dense<0.000000e+00> : vector<18x18xf32>
    %153 = tpu.matmul %150, %151, %cst_76 {dimension_numbers = #tpu.dot_dimension_numbers<[1], [1], [0], [0], [0, 0, 1, 0], [], []>} : vector<18x8xf32>, vector<18x8xf32>, vector<18x18xf32> -> vector<18x18xf32>
    %cst_77 = arith.constant 0.353553385 : f32
    %154 = vector.broadcast %cst_77 : f32 to vector<18x18xf32>
    %155 = arith.mulf %153, %154 : vector<18x18xf32>
    %156 = arith.addf %155, %73 : vector<18x18xf32>
    %cst_78 = arith.constant dense<0xFF800000> : vector<18xf32>
    %157 = vector.multi_reduction <maximumf>, %156, %cst_78 [1] : vector<18x18xf32> to vector<18xf32>
    %158 = vector.shape_cast %157 : vector<18xf32> to vector<18x1xf32>
    %159 = vector.broadcast %158 : vector<18x1xf32> to vector<18x18xf32>
    %160 = arith.subf %156, %159 : vector<18x18xf32>
    %161 = math.exp %160 : vector<18x18xf32>
    %cst_79 = arith.constant dense<0.000000e+00> : vector<18xf32>
    %162 = vector.multi_reduction <add>, %161, %cst_79 [1] : vector<18x18xf32> to vector<18xf32>
    %163 = vector.shape_cast %162 : vector<18xf32> to vector<18x1xf32>
    %164 = tpu.reciprocal %163 {approx = true} : vector<18x1xf32> -> vector<18x1xf32>
    %165 = vector.broadcast %164 : vector<18x1xf32> to vector<18x18xf32>
    %166 = arith.mulf %161, %165 : vector<18x18xf32>
    %cst_80 = arith.constant dense<0.000000e+00> : vector<18x8xf32>
    %167 = tpu.matmul %166, %152, %cst_80 {dimension_numbers = #tpu.dot_dimension_numbers<[1], [0], [0], [1], [0, 0, 1, 1], [], []>} : vector<18x18xf32>, vector<18x8xf32>, vector<18x8xf32> -> vector<18x8xf32>
    %c0_81 = arith.constant 0 : index
    %c24 = arith.constant 24 : index
    %c0_82 = arith.constant 0 : index
    %168 = vector.load %arg8[%c0_81, %c24, %c0_82] : memref<2x32x32xf32, #tpu.memory_space<vmem>>, vector<1x8x32xf32>
    %169 = vector.shape_cast %168 : vector<1x8x32xf32> to vector<8x32xf32>
    %cst_83 = arith.constant dense<0.000000e+00> : vector<18x32xf32>
    %170 = tpu.matmul %167, %169, %cst_83 {dimension_numbers = #tpu.dot_dimension_numbers<[1], [0], [0], [1], [0, 0, 1, 1], [], []>} : vector<18x8xf32>, vector<8x32xf32>, vector<18x32xf32> -> vector<18x32xf32>
    %171 = arith.addf %149, %170 : vector<18x32xf32>
    %172 = arith.addf %43, %171 : vector<18x32xf32>
    %c0_84 = arith.constant 0 : index
    %c0_85 = arith.constant 0 : index
    %c0_86 = arith.constant 0 : index
    %173 = vector.load %arg11[%c0_84, %c0_85, %c0_86] : memref<2x1x32xf32, #tpu.memory_space<vmem>>, vector<1x1x32xf32>
    %174 = vector.shape_cast %173 : vector<1x1x32xf32> to vector<1x32xf32>
    %c0_87 = arith.constant 0 : index
    %c0_88 = arith.constant 0 : index
    %c0_89 = arith.constant 0 : index
    %175 = vector.load %arg12[%c0_87, %c0_88, %c0_89] : memref<2x1x32xf32, #tpu.memory_space<vmem>>, vector<1x1x32xf32>
    %176 = vector.shape_cast %175 : vector<1x1x32xf32> to vector<1x32xf32>
    %cst_90 = arith.constant dense<0.000000e+00> : vector<18xf32>
    %177 = vector.multi_reduction <add>, %172, %cst_90 [1] : vector<18x32xf32> to vector<18xf32>
    %178 = vector.shape_cast %177 : vector<18xf32> to vector<18x1xf32>
    %cst_91 = arith.constant 3.200000e+01 : f32
    %179 = vector.broadcast %cst_91 : f32 to vector<18x1xf32>
    %180 = arith.divf %178, %179 : vector<18x1xf32>
    %181 = vector.broadcast %180 : vector<18x1xf32> to vector<18x32xf32>
    %182 = arith.subf %172, %181 : vector<18x32xf32>
    %183 = arith.mulf %182, %182 : vector<18x32xf32>
    %cst_92 = arith.constant dense<0.000000e+00> : vector<18xf32>
    %184 = vector.multi_reduction <add>, %183, %cst_92 [1] : vector<18x32xf32> to vector<18xf32>
    %185 = vector.shape_cast %184 : vector<18xf32> to vector<18x1xf32>
    %cst_93 = arith.constant 3.200000e+01 : f32
    %186 = vector.broadcast %cst_93 : f32 to vector<18x1xf32>
    %187 = arith.divf %185, %186 : vector<18x1xf32>
    %188 = vector.broadcast %180 : vector<18x1xf32> to vector<18x32xf32>
    %189 = arith.subf %172, %188 : vector<18x32xf32>
    %cst_94 = arith.constant 9.99999974E-6 : f32
    %190 = vector.broadcast %cst_94 : f32 to vector<18x1xf32>
    %191 = arith.addf %187, %190 : vector<18x1xf32>
    %192 = math.rsqrt %191 : vector<18x1xf32>
    %193 = vector.broadcast %192 : vector<18x1xf32> to vector<18x32xf32>
    %194 = arith.mulf %189, %193 : vector<18x32xf32>
    %195 = vector.broadcast %174 : vector<1x32xf32> to vector<18x32xf32>
    %196 = arith.mulf %194, %195 : vector<18x32xf32>
    %197 = vector.broadcast %176 : vector<1x32xf32> to vector<18x32xf32>
    %198 = arith.addf %196, %197 : vector<18x32xf32>
    %c0_95 = arith.constant 0 : index
    %c0_96 = arith.constant 0 : index
    %c0_97 = arith.constant 0 : index
    %199 = vector.load %arg10[%c0_95, %c0_96, %c0_97] : memref<2x1x32xf32, #tpu.memory_space<vmem>>, vector<1x1x32xf32>
    %200 = vector.shape_cast %199 : vector<1x1x32xf32> to vector<1x32xf32>
    %201 = vector.broadcast %200 : vector<1x32xf32> to vector<18x32xf32>
    %202 = arith.addf %198, %201 : vector<18x32xf32>
    %c0_98 = arith.constant 0 : index
    %c0_99 = arith.constant 0 : index
    %c0_100 = arith.constant 0 : index
    %203 = vector.load %arg13[%c0_98, %c0_99, %c0_100] : memref<2x1x32xf32, #tpu.memory_space<vmem>>, vector<1x1x32xf32>
    %204 = vector.shape_cast %203 : vector<1x1x32xf32> to vector<1x32xf32>
    %c0_101 = arith.constant 0 : index
    %c0_102 = arith.constant 0 : index
    %c0_103 = arith.constant 0 : index
    %205 = vector.load %arg14[%c0_101, %c0_102, %c0_103] : memref<2x1x32xf32, #tpu.memory_space<vmem>>, vector<1x1x32xf32>
    %206 = vector.shape_cast %205 : vector<1x1x32xf32> to vector<1x32xf32>
    %cst_104 = arith.constant dense<0.000000e+00> : vector<18xf32>
    %207 = vector.multi_reduction <add>, %202, %cst_104 [1] : vector<18x32xf32> to vector<18xf32>
    %208 = vector.shape_cast %207 : vector<18xf32> to vector<18x1xf32>
    %cst_105 = arith.constant 3.200000e+01 : f32
    %209 = vector.broadcast %cst_105 : f32 to vector<18x1xf32>
    %210 = arith.divf %208, %209 : vector<18x1xf32>
    %211 = vector.broadcast %210 : vector<18x1xf32> to vector<18x32xf32>
    %212 = arith.subf %202, %211 : vector<18x32xf32>
    %213 = arith.mulf %212, %212 : vector<18x32xf32>
    %cst_106 = arith.constant dense<0.000000e+00> : vector<18xf32>
    %214 = vector.multi_reduction <add>, %213, %cst_106 [1] : vector<18x32xf32> to vector<18xf32>
    %215 = vector.shape_cast %214 : vector<18xf32> to vector<18x1xf32>
    %cst_107 = arith.constant 3.200000e+01 : f32
    %216 = vector.broadcast %cst_107 : f32 to vector<18x1xf32>
    %217 = arith.divf %215, %216 : vector<18x1xf32>
    %218 = vector.broadcast %210 : vector<18x1xf32> to vector<18x32xf32>
    %219 = arith.subf %202, %218 : vector<18x32xf32>
    %cst_108 = arith.constant 9.99999974E-6 : f32
    %220 = vector.broadcast %cst_108 : f32 to vector<18x1xf32>
    %221 = arith.addf %217, %220 : vector<18x1xf32>
    %222 = math.rsqrt %221 : vector<18x1xf32>
    %223 = vector.broadcast %222 : vector<18x1xf32> to vector<18x32xf32>
    %224 = arith.mulf %219, %223 : vector<18x32xf32>
    %225 = vector.broadcast %204 : vector<1x32xf32> to vector<18x32xf32>
    %226 = arith.mulf %224, %225 : vector<18x32xf32>
    %227 = vector.broadcast %206 : vector<1x32xf32> to vector<18x32xf32>
    %228 = arith.addf %226, %227 : vector<18x32xf32>
    %c0_i32_109 = arith.constant 0 : i32
    %c0_i32_110 = arith.constant 0 : i32
    %c0_i32_111 = arith.constant 0 : i32
    %c0_i32_112 = arith.constant 0 : i32
    %c0_i32_113 = arith.constant 0 : i32
    %c0_i32_114 = arith.constant 0 : i32
    %229 = tpu.memref_slice %arg17[%c0_i32_109, %c0_i32_113, %c0_i32_114] : memref<2x32x2048xbf16, #tpu.memory_space<any>> -> memref<1x32x2048xbf16, #tpu.memory_space<any>>
    %230 = tpu.memref_squeeze %229 : memref<1x32x2048xbf16, #tpu.memory_space<any>> -> memref<32x2048xbf16, #tpu.memory_space<any>>
    %c0_i32_115 = arith.constant 0 : i32
    %c0_i32_116 = arith.constant 0 : i32
    %231 = tpu.memref_slice %arg24[%c0_i32_110, %c0_i32_115, %c0_i32_116] : memref<2x32x2048xbf16, #tpu.memory_space<vmem>> -> memref<1x32x2048xbf16, #tpu.memory_space<vmem>>
    %232 = tpu.memref_squeeze %231 : memref<1x32x2048xbf16, #tpu.memory_space<vmem>> -> memref<32x2048xbf16, #tpu.memory_space<vmem>>
    %233 = tpu.memref_slice %arg26[%c0_i32_111, %c0_i32_112] : memref<2x2x!tpu.dma_semaphore, #tpu.memory_space<semaphore_mem>> -> memref<1x1x!tpu.dma_semaphore, #tpu.memory_space<semaphore_mem>>
    %234 = tpu.memref_squeeze %233 : memref<1x1x!tpu.dma_semaphore, #tpu.memory_space<semaphore_mem>> -> memref<!tpu.dma_semaphore, #tpu.memory_space<semaphore_mem>>
    tpu.wait_dma2 semaphore(%234 : memref<!tpu.dma_semaphore, #tpu.memory_space<semaphore_mem>>) src(%230 : memref<32x2048xbf16, #tpu.memory_space<any>>) dst(%232 : memref<32x2048xbf16, #tpu.memory_space<vmem>>)
    %c0_i32_117 = arith.constant 0 : i32
    %c0_i32_118 = arith.constant 0 : i32
    %c1_i32_119 = arith.constant 1 : i32
    %c0_i32_120 = arith.constant 0 : i32
    %c0_i32_121 = arith.constant 0 : i32
    %c0_i32_122 = arith.constant 0 : i32
    %235 = tpu.memref_slice %arg19[%c0_i32_117, %c0_i32_121, %c0_i32_122] : memref<2x32x2048xbf16, #tpu.memory_space<any>> -> memref<1x32x2048xbf16, #tpu.memory_space<any>>
    %236 = tpu.memref_squeeze %235 : memref<1x32x2048xbf16, #tpu.memory_space<any>> -> memref<32x2048xbf16, #tpu.memory_space<any>>
    %c0_i32_123 = arith.constant 0 : i32
    %c0_i32_124 = arith.constant 0 : i32
    %237 = tpu.memref_slice %arg25[%c0_i32_118, %c0_i32_123, %c0_i32_124] : memref<2x32x2048xbf16, #tpu.memory_space<vmem>> -> memref<1x32x2048xbf16, #tpu.memory_space<vmem>>
    %238 = tpu.memref_squeeze %237 : memref<1x32x2048xbf16, #tpu.memory_space<vmem>> -> memref<32x2048xbf16, #tpu.memory_space<vmem>>
    %239 = tpu.memref_slice %arg26[%c1_i32_119, %c0_i32_120] : memref<2x2x!tpu.dma_semaphore, #tpu.memory_space<semaphore_mem>> -> memref<1x1x!tpu.dma_semaphore, #tpu.memory_space<semaphore_mem>>
    %240 = tpu.memref_squeeze %239 : memref<1x1x!tpu.dma_semaphore, #tpu.memory_space<semaphore_mem>> -> memref<!tpu.dma_semaphore, #tpu.memory_space<semaphore_mem>>
    tpu.wait_dma2 semaphore(%240 : memref<!tpu.dma_semaphore, #tpu.memory_space<semaphore_mem>>) src(%236 : memref<32x2048xbf16, #tpu.memory_space<any>>) dst(%238 : memref<32x2048xbf16, #tpu.memory_space<vmem>>)
    %c1_i32_125 = arith.constant 1 : i32
    %c1_i32_126 = arith.constant 1 : i32
    %c0_i32_127 = arith.constant 0 : i32
    %c1_i32_128 = arith.constant 1 : i32
    %c0_i32_129 = arith.constant 0 : i32
    %c0_i32_130 = arith.constant 0 : i32
    %241 = tpu.memref_slice %arg17[%c1_i32_125, %c0_i32_129, %c0_i32_130] : memref<2x32x2048xbf16, #tpu.memory_space<any>> -> memref<1x32x2048xbf16, #tpu.memory_space<any>>
    %242 = tpu.memref_squeeze %241 : memref<1x32x2048xbf16, #tpu.memory_space<any>> -> memref<32x2048xbf16, #tpu.memory_space<any>>
    %c0_i32_131 = arith.constant 0 : i32
    %c0_i32_132 = arith.constant 0 : i32
    %243 = tpu.memref_slice %arg24[%c1_i32_126, %c0_i32_131, %c0_i32_132] : memref<2x32x2048xbf16, #tpu.memory_space<vmem>> -> memref<1x32x2048xbf16, #tpu.memory_space<vmem>>
    %244 = tpu.memref_squeeze %243 : memref<1x32x2048xbf16, #tpu.memory_space<vmem>> -> memref<32x2048xbf16, #tpu.memory_space<vmem>>
    %245 = tpu.memref_slice %arg26[%c0_i32_127, %c1_i32_128] : memref<2x2x!tpu.dma_semaphore, #tpu.memory_space<semaphore_mem>> -> memref<1x1x!tpu.dma_semaphore, #tpu.memory_space<semaphore_mem>>
    %246 = tpu.memref_squeeze %245 : memref<1x1x!tpu.dma_semaphore, #tpu.memory_space<semaphore_mem>> -> memref<!tpu.dma_semaphore, #tpu.memory_space<semaphore_mem>>
    tpu.enqueue_dma source(%242 : memref<32x2048xbf16, #tpu.memory_space<any>>) target(%244 : memref<32x2048xbf16, #tpu.memory_space<vmem>>) target_semaphore(%246 : memref<!tpu.dma_semaphore, #tpu.memory_space<semaphore_mem>>)
    %c1_i32_133 = arith.constant 1 : i32
    %c1_i32_134 = arith.constant 1 : i32
    %c1_i32_135 = arith.constant 1 : i32
    %c1_i32_136 = arith.constant 1 : i32
    %c0_i32_137 = arith.constant 0 : i32
    %c0_i32_138 = arith.constant 0 : i32
    %247 = tpu.memref_slice %arg19[%c1_i32_133, %c0_i32_137, %c0_i32_138] : memref<2x32x2048xbf16, #tpu.memory_space<any>> -> memref<1x32x2048xbf16, #tpu.memory_space<any>>
    %248 = tpu.memref_squeeze %247 : memref<1x32x2048xbf16, #tpu.memory_space<any>> -> memref<32x2048xbf16, #tpu.memory_space<any>>
    %c0_i32_139 = arith.constant 0 : i32
    %c0_i32_140 = arith.constant 0 : i32
    %249 = tpu.memref_slice %arg25[%c1_i32_134, %c0_i32_139, %c0_i32_140] : memref<2x32x2048xbf16, #tpu.memory_space<vmem>> -> memref<1x32x2048xbf16, #tpu.memory_space<vmem>>
    %250 = tpu.memref_squeeze %249 : memref<1x32x2048xbf16, #tpu.memory_space<vmem>> -> memref<32x2048xbf16, #tpu.memory_space<vmem>>
    %251 = tpu.memref_slice %arg26[%c1_i32_135, %c1_i32_136] : memref<2x2x!tpu.dma_semaphore, #tpu.memory_space<semaphore_mem>> -> memref<1x1x!tpu.dma_semaphore, #tpu.memory_space<semaphore_mem>>
    %252 = tpu.memref_squeeze %251 : memref<1x1x!tpu.dma_semaphore, #tpu.memory_space<semaphore_mem>> -> memref<!tpu.dma_semaphore, #tpu.memory_space<semaphore_mem>>
    tpu.enqueue_dma source(%248 : memref<32x2048xbf16, #tpu.memory_space<any>>) target(%250 : memref<32x2048xbf16, #tpu.memory_space<vmem>>) target_semaphore(%252 : memref<!tpu.dma_semaphore, #tpu.memory_space<semaphore_mem>>)
    %253 = arith.truncf %228 : vector<18x32xf32> to vector<18x32xbf16>
    %cst_141 = arith.constant 0.000000e+00 : f32
    %254 = vector.broadcast %cst_141 : f32 to vector<18x32xf32>
    %c0_142 = arith.constant 0 : index
    %c0_143 = arith.constant 0 : index
    %c0_144 = arith.constant 0 : index
    %255 = vector.load %arg24[%c0_142, %c0_143, %c0_144] : memref<2x32x2048xbf16, #tpu.memory_space<vmem>>, vector<1x32x512xbf16>
    %256 = vector.shape_cast %255 : vector<1x32x512xbf16> to vector<32x512xbf16>
    %cst_145 = arith.constant dense<0.000000e+00> : vector<18x512xf32>
    %257 = tpu.matmul %253, %256, %cst_145 {dimension_numbers = #tpu.dot_dimension_numbers<[1], [0], [0], [1], [0, 0, 1, 1], [], []>} : vector<18x32xbf16>, vector<32x512xbf16>, vector<18x512xf32> -> vector<18x512xf32>
    %c0_146 = arith.constant 0 : index
    %c0_147 = arith.constant 0 : index
    %c0_148 = arith.constant 0 : index
    %258 = vector.load %arg18[%c0_146, %c0_147, %c0_148] : memref<2x1x2048xf32, #tpu.memory_space<vmem>>, vector<1x1x512xf32>
    %259 = vector.shape_cast %258 : vector<1x1x512xf32> to vector<1x512xf32>
    %260 = vector.broadcast %259 : vector<1x512xf32> to vector<18x512xf32>
    %261 = arith.addf %257, %260 : vector<18x512xf32>
    %cst_149 = arith.constant 0.000000e+00 : f32
    %262 = vector.broadcast %cst_149 : f32 to vector<18x512xf32>
    %263 = arith.maximumf %261, %262 : vector<18x512xf32>
    %264 = arith.truncf %263 : vector<18x512xf32> to vector<18x512xbf16>
    %c0_150 = arith.constant 0 : index
    %c0_151 = arith.constant 0 : index
    %c0_152 = arith.constant 0 : index
    %265 = vector.load %arg25[%c0_150, %c0_151, %c0_152] : memref<2x32x2048xbf16, #tpu.memory_space<vmem>>, vector<1x32x512xbf16>
    %266 = vector.shape_cast %265 : vector<1x32x512xbf16> to vector<32x512xbf16>
    %cst_153 = arith.constant dense<0.000000e+00> : vector<18x32xf32>
    %267 = tpu.matmul %264, %266, %cst_153 {dimension_numbers = #tpu.dot_dimension_numbers<[1], [1], [0], [0], [0, 0, 1, 0], [], []>} : vector<18x512xbf16>, vector<32x512xbf16>, vector<18x32xf32> -> vector<18x32xf32>
    %268 = arith.addf %254, %267 : vector<18x32xf32>
    %c0_154 = arith.constant 0 : index
    %c0_155 = arith.constant 0 : index
    %c512 = arith.constant 512 : index
    %269 = vector.load %arg24[%c0_154, %c0_155, %c512] : memref<2x32x2048xbf16, #tpu.memory_space<vmem>>, vector<1x32x512xbf16>
    %270 = vector.shape_cast %269 : vector<1x32x512xbf16> to vector<32x512xbf16>
    %cst_156 = arith.constant dense<0.000000e+00> : vector<18x512xf32>
    %271 = tpu.matmul %253, %270, %cst_156 {dimension_numbers = #tpu.dot_dimension_numbers<[1], [0], [0], [1], [0, 0, 1, 1], [], []>} : vector<18x32xbf16>, vector<32x512xbf16>, vector<18x512xf32> -> vector<18x512xf32>
    %c0_157 = arith.constant 0 : index
    %c0_158 = arith.constant 0 : index
    %c512_159 = arith.constant 512 : index
    %272 = vector.load %arg18[%c0_157, %c0_158, %c512_159] : memref<2x1x2048xf32, #tpu.memory_space<vmem>>, vector<1x1x512xf32>
    %273 = vector.shape_cast %272 : vector<1x1x512xf32> to vector<1x512xf32>
    %274 = vector.broadcast %273 : vector<1x512xf32> to vector<18x512xf32>
    %275 = arith.addf %271, %274 : vector<18x512xf32>
    %cst_160 = arith.constant 0.000000e+00 : f32
    %276 = vector.broadcast %cst_160 : f32 to vector<18x512xf32>
    %277 = arith.maximumf %275, %276 : vector<18x512xf32>
    %278 = arith.truncf %277 : vector<18x512xf32> to vector<18x512xbf16>
    %c0_161 = arith.constant 0 : index
    %c0_162 = arith.constant 0 : index
    %c512_163 = arith.constant 512 : index
    %279 = vector.load %arg25[%c0_161, %c0_162, %c512_163] : memref<2x32x2048xbf16, #tpu.memory_space<vmem>>, vector<1x32x512xbf16>
    %280 = vector.shape_cast %279 : vector<1x32x512xbf16> to vector<32x512xbf16>
    %cst_164 = arith.constant dense<0.000000e+00> : vector<18x32xf32>
    %281 = tpu.matmul %278, %280, %cst_164 {dimension_numbers = #tpu.dot_dimension_numbers<[1], [1], [0], [0], [0, 0, 1, 0], [], []>} : vector<18x512xbf16>, vector<32x512xbf16>, vector<18x32xf32> -> vector<18x32xf32>
    %282 = arith.addf %268, %281 : vector<18x32xf32>
    %c0_165 = arith.constant 0 : index
    %c0_166 = arith.constant 0 : index
    %c1024 = arith.constant 1024 : index
    %283 = vector.load %arg24[%c0_165, %c0_166, %c1024] : memref<2x32x2048xbf16, #tpu.memory_space<vmem>>, vector<1x32x512xbf16>
    %284 = vector.shape_cast %283 : vector<1x32x512xbf16> to vector<32x512xbf16>
    %cst_167 = arith.constant dense<0.000000e+00> : vector<18x512xf32>
    %285 = tpu.matmul %253, %284, %cst_167 {dimension_numbers = #tpu.dot_dimension_numbers<[1], [0], [0], [1], [0, 0, 1, 1], [], []>} : vector<18x32xbf16>, vector<32x512xbf16>, vector<18x512xf32> -> vector<18x512xf32>
    %c0_168 = arith.constant 0 : index
    %c0_169 = arith.constant 0 : index
    %c1024_170 = arith.constant 1024 : index
    %286 = vector.load %arg18[%c0_168, %c0_169, %c1024_170] : memref<2x1x2048xf32, #tpu.memory_space<vmem>>, vector<1x1x512xf32>
    %287 = vector.shape_cast %286 : vector<1x1x512xf32> to vector<1x512xf32>
    %288 = vector.broadcast %287 : vector<1x512xf32> to vector<18x512xf32>
    %289 = arith.addf %285, %288 : vector<18x512xf32>
    %cst_171 = arith.constant 0.000000e+00 : f32
    %290 = vector.broadcast %cst_171 : f32 to vector<18x512xf32>
    %291 = arith.maximumf %289, %290 : vector<18x512xf32>
    %292 = arith.truncf %291 : vector<18x512xf32> to vector<18x512xbf16>
    %c0_172 = arith.constant 0 : index
    %c0_173 = arith.constant 0 : index
    %c1024_174 = arith.constant 1024 : index
    %293 = vector.load %arg25[%c0_172, %c0_173, %c1024_174] : memref<2x32x2048xbf16, #tpu.memory_space<vmem>>, vector<1x32x512xbf16>
    %294 = vector.shape_cast %293 : vector<1x32x512xbf16> to vector<32x512xbf16>
    %cst_175 = arith.constant dense<0.000000e+00> : vector<18x32xf32>
    %295 = tpu.matmul %292, %294, %cst_175 {dimension_numbers = #tpu.dot_dimension_numbers<[1], [1], [0], [0], [0, 0, 1, 0], [], []>} : vector<18x512xbf16>, vector<32x512xbf16>, vector<18x32xf32> -> vector<18x32xf32>
    %296 = arith.addf %282, %295 : vector<18x32xf32>
    %c0_176 = arith.constant 0 : index
    %c0_177 = arith.constant 0 : index
    %c1536 = arith.constant 1536 : index
    %297 = vector.load %arg24[%c0_176, %c0_177, %c1536] : memref<2x32x2048xbf16, #tpu.memory_space<vmem>>, vector<1x32x512xbf16>
    %298 = vector.shape_cast %297 : vector<1x32x512xbf16> to vector<32x512xbf16>
    %cst_178 = arith.constant dense<0.000000e+00> : vector<18x512xf32>
    %299 = tpu.matmul %253, %298, %cst_178 {dimension_numbers = #tpu.dot_dimension_numbers<[1], [0], [0], [1], [0, 0, 1, 1], [], []>} : vector<18x32xbf16>, vector<32x512xbf16>, vector<18x512xf32> -> vector<18x512xf32>
    %c0_179 = arith.constant 0 : index
    %c0_180 = arith.constant 0 : index
    %c1536_181 = arith.constant 1536 : index
    %300 = vector.load %arg18[%c0_179, %c0_180, %c1536_181] : memref<2x1x2048xf32, #tpu.memory_space<vmem>>, vector<1x1x512xf32>
    %301 = vector.shape_cast %300 : vector<1x1x512xf32> to vector<1x512xf32>
    %302 = vector.broadcast %301 : vector<1x512xf32> to vector<18x512xf32>
    %303 = arith.addf %299, %302 : vector<18x512xf32>
    %cst_182 = arith.constant 0.000000e+00 : f32
    %304 = vector.broadcast %cst_182 : f32 to vector<18x512xf32>
    %305 = arith.maximumf %303, %304 : vector<18x512xf32>
    %306 = arith.truncf %305 : vector<18x512xf32> to vector<18x512xbf16>
    %c0_183 = arith.constant 0 : index
    %c0_184 = arith.constant 0 : index
    %c1536_185 = arith.constant 1536 : index
    %307 = vector.load %arg25[%c0_183, %c0_184, %c1536_185] : memref<2x32x2048xbf16, #tpu.memory_space<vmem>>, vector<1x32x512xbf16>
    %308 = vector.shape_cast %307 : vector<1x32x512xbf16> to vector<32x512xbf16>
    %cst_186 = arith.constant dense<0.000000e+00> : vector<18x32xf32>
    %309 = tpu.matmul %306, %308, %cst_186 {dimension_numbers = #tpu.dot_dimension_numbers<[1], [1], [0], [0], [0, 0, 1, 0], [], []>} : vector<18x512xbf16>, vector<32x512xbf16>, vector<18x32xf32> -> vector<18x32xf32>
    %310 = arith.addf %296, %309 : vector<18x32xf32>
    %311 = arith.addf %228, %310 : vector<18x32xf32>
    %c0_187 = arith.constant 0 : index
    %c0_188 = arith.constant 0 : index
    %c0_189 = arith.constant 0 : index
    %312 = vector.load %arg20[%c0_187, %c0_188, %c0_189] : memref<2x1x32xf32, #tpu.memory_space<vmem>>, vector<1x1x32xf32>
    %313 = vector.shape_cast %312 : vector<1x1x32xf32> to vector<1x32xf32>
    %314 = vector.broadcast %313 : vector<1x32xf32> to vector<18x32xf32>
    %315 = arith.addf %311, %314 : vector<18x32xf32>
    %c0_190 = arith.constant 0 : index
    %c0_191 = arith.constant 0 : index
    %c0_192 = arith.constant 0 : index
    %316 = vector.load %arg15[%c0_190, %c0_191, %c0_192] : memref<2x1x32xf32, #tpu.memory_space<vmem>>, vector<1x1x32xf32>
    %317 = vector.shape_cast %316 : vector<1x1x32xf32> to vector<1x32xf32>
    %c0_193 = arith.constant 0 : index
    %c0_194 = arith.constant 0 : index
    %c0_195 = arith.constant 0 : index
    %318 = vector.load %arg16[%c0_193, %c0_194, %c0_195] : memref<2x1x32xf32, #tpu.memory_space<vmem>>, vector<1x1x32xf32>
    %319 = vector.shape_cast %318 : vector<1x1x32xf32> to vector<1x32xf32>
    %cst_196 = arith.constant dense<0.000000e+00> : vector<18xf32>
    %320 = vector.multi_reduction <add>, %315, %cst_196 [1] : vector<18x32xf32> to vector<18xf32>
    %321 = vector.shape_cast %320 : vector<18xf32> to vector<18x1xf32>
    %cst_197 = arith.constant 3.200000e+01 : f32
    %322 = vector.broadcast %cst_197 : f32 to vector<18x1xf32>
    %323 = arith.divf %321, %322 : vector<18x1xf32>
    %324 = vector.broadcast %323 : vector<18x1xf32> to vector<18x32xf32>
    %325 = arith.subf %315, %324 : vector<18x32xf32>
    %326 = arith.mulf %325, %325 : vector<18x32xf32>
    %cst_198 = arith.constant dense<0.000000e+00> : vector<18xf32>
    %327 = vector.multi_reduction <add>, %326, %cst_198 [1] : vector<18x32xf32> to vector<18xf32>
    %328 = vector.shape_cast %327 : vector<18xf32> to vector<18x1xf32>
    %cst_199 = arith.constant 3.200000e+01 : f32
    %329 = vector.broadcast %cst_199 : f32 to vector<18x1xf32>
    %330 = arith.divf %328, %329 : vector<18x1xf32>
    %331 = vector.broadcast %323 : vector<18x1xf32> to vector<18x32xf32>
    %332 = arith.subf %315, %331 : vector<18x32xf32>
    %cst_200 = arith.constant 9.99999974E-6 : f32
    %333 = vector.broadcast %cst_200 : f32 to vector<18x1xf32>
    %334 = arith.addf %330, %333 : vector<18x1xf32>
    %335 = math.rsqrt %334 : vector<18x1xf32>
    %336 = vector.broadcast %335 : vector<18x1xf32> to vector<18x32xf32>
    %337 = arith.mulf %332, %336 : vector<18x32xf32>
    %338 = vector.broadcast %317 : vector<1x32xf32> to vector<18x32xf32>
    %339 = arith.mulf %337, %338 : vector<18x32xf32>
    %340 = vector.broadcast %319 : vector<1x32xf32> to vector<18x32xf32>
    %341 = arith.addf %339, %340 : vector<18x32xf32>
    %c1_201 = arith.constant 1 : index
    %c0_202 = arith.constant 0 : index
    %c0_203 = arith.constant 0 : index
    %342 = vector.load %arg6[%c1_201, %c0_202, %c0_203] : memref<2x32x96xf32, #tpu.memory_space<vmem>>, vector<1x32x96xf32>
    %343 = vector.shape_cast %342 : vector<1x32x96xf32> to vector<32x96xf32>
    %cst_204 = arith.constant dense<0.000000e+00> : vector<18x96xf32>
    %344 = tpu.matmul %341, %343, %cst_204 {dimension_numbers = #tpu.dot_dimension_numbers<[1], [0], [0], [1], [0, 0, 1, 1], [], []>} : vector<18x32xf32>, vector<32x96xf32>, vector<18x96xf32> -> vector<18x96xf32>
    %c1_205 = arith.constant 1 : index
    %c0_206 = arith.constant 0 : index
    %c0_207 = arith.constant 0 : index
    %345 = vector.load %arg7[%c1_205, %c0_206, %c0_207] : memref<2x1x96xf32, #tpu.memory_space<vmem>>, vector<1x1x96xf32>
    %346 = vector.shape_cast %345 : vector<1x1x96xf32> to vector<1x96xf32>
    %347 = vector.broadcast %346 : vector<1x96xf32> to vector<18x96xf32>
    %348 = arith.addf %344, %347 : vector<18x96xf32>
    %c1_208 = arith.constant 1 : index
    %c0_209 = arith.constant 0 : index
    %c0_210 = arith.constant 0 : index
    %349 = vector.load %arg9[%c1_208, %c0_209, %c0_210] : memref<2x1x32xf32, #tpu.memory_space<vmem>>, vector<1x1x32xf32>
    %350 = vector.shape_cast %349 : vector<1x1x32xf32> to vector<1x32xf32>
    %351 = vector.extract_strided_slice %348 {offsets = [0, 0], sizes = [18, 8], strides = [1, 1]} : vector<18x96xf32> to vector<18x8xf32>
    %352 = vector.extract_strided_slice %348 {offsets = [0, 32], sizes = [18, 8], strides = [1, 1]} : vector<18x96xf32> to vector<18x8xf32>
    %353 = vector.extract_strided_slice %348 {offsets = [0, 64], sizes = [18, 8], strides = [1, 1]} : vector<18x96xf32> to vector<18x8xf32>
    %cst_211 = arith.constant dense<0.000000e+00> : vector<18x18xf32>
    %354 = tpu.matmul %351, %352, %cst_211 {dimension_numbers = #tpu.dot_dimension_numbers<[1], [1], [0], [0], [0, 0, 1, 0], [], []>} : vector<18x8xf32>, vector<18x8xf32>, vector<18x18xf32> -> vector<18x18xf32>
    %cst_212 = arith.constant 0.353553385 : f32
    %355 = vector.broadcast %cst_212 : f32 to vector<18x18xf32>
    %356 = arith.mulf %354, %355 : vector<18x18xf32>
    %357 = arith.addf %356, %73 : vector<18x18xf32>
    %cst_213 = arith.constant dense<0xFF800000> : vector<18xf32>
    %358 = vector.multi_reduction <maximumf>, %357, %cst_213 [1] : vector<18x18xf32> to vector<18xf32>
    %359 = vector.shape_cast %358 : vector<18xf32> to vector<18x1xf32>
    %360 = vector.broadcast %359 : vector<18x1xf32> to vector<18x18xf32>
    %361 = arith.subf %357, %360 : vector<18x18xf32>
    %362 = math.exp %361 : vector<18x18xf32>
    %cst_214 = arith.constant dense<0.000000e+00> : vector<18xf32>
    %363 = vector.multi_reduction <add>, %362, %cst_214 [1] : vector<18x18xf32> to vector<18xf32>
    %364 = vector.shape_cast %363 : vector<18xf32> to vector<18x1xf32>
    %365 = tpu.reciprocal %364 {approx = true} : vector<18x1xf32> -> vector<18x1xf32>
    %366 = vector.broadcast %365 : vector<18x1xf32> to vector<18x18xf32>
    %367 = arith.mulf %362, %366 : vector<18x18xf32>
    %cst_215 = arith.constant dense<0.000000e+00> : vector<18x8xf32>
    %368 = tpu.matmul %367, %353, %cst_215 {dimension_numbers = #tpu.dot_dimension_numbers<[1], [0], [0], [1], [0, 0, 1, 1], [], []>} : vector<18x18xf32>, vector<18x8xf32>, vector<18x8xf32> -> vector<18x8xf32>
    %c1_216 = arith.constant 1 : index
    %c0_217 = arith.constant 0 : index
    %c0_218 = arith.constant 0 : index
    %369 = vector.load %arg8[%c1_216, %c0_217, %c0_218] : memref<2x32x32xf32, #tpu.memory_space<vmem>>, vector<1x8x32xf32>
    %370 = vector.shape_cast %369 : vector<1x8x32xf32> to vector<8x32xf32>
    %cst_219 = arith.constant dense<0.000000e+00> : vector<18x32xf32>
    %371 = tpu.matmul %368, %370, %cst_219 {dimension_numbers = #tpu.dot_dimension_numbers<[1], [0], [0], [1], [0, 0, 1, 1], [], []>} : vector<18x8xf32>, vector<8x32xf32>, vector<18x32xf32> -> vector<18x32xf32>
    %372 = vector.broadcast %350 : vector<1x32xf32> to vector<18x32xf32>
    %373 = arith.addf %372, %371 : vector<18x32xf32>
    %374 = vector.extract_strided_slice %348 {offsets = [0, 8], sizes = [18, 8], strides = [1, 1]} : vector<18x96xf32> to vector<18x8xf32>
    %375 = vector.extract_strided_slice %348 {offsets = [0, 40], sizes = [18, 8], strides = [1, 1]} : vector<18x96xf32> to vector<18x8xf32>
    %376 = vector.extract_strided_slice %348 {offsets = [0, 72], sizes = [18, 8], strides = [1, 1]} : vector<18x96xf32> to vector<18x8xf32>
    %cst_220 = arith.constant dense<0.000000e+00> : vector<18x18xf32>
    %377 = tpu.matmul %374, %375, %cst_220 {dimension_numbers = #tpu.dot_dimension_numbers<[1], [1], [0], [0], [0, 0, 1, 0], [], []>} : vector<18x8xf32>, vector<18x8xf32>, vector<18x18xf32> -> vector<18x18xf32>
    %cst_221 = arith.constant 0.353553385 : f32
    %378 = vector.broadcast %cst_221 : f32 to vector<18x18xf32>
    %379 = arith.mulf %377, %378 : vector<18x18xf32>
    %380 = arith.addf %379, %73 : vector<18x18xf32>
    %cst_222 = arith.constant dense<0xFF800000> : vector<18xf32>
    %381 = vector.multi_reduction <maximumf>, %380, %cst_222 [1] : vector<18x18xf32> to vector<18xf32>
    %382 = vector.shape_cast %381 : vector<18xf32> to vector<18x1xf32>
    %383 = vector.broadcast %382 : vector<18x1xf32> to vector<18x18xf32>
    %384 = arith.subf %380, %383 : vector<18x18xf32>
    %385 = math.exp %384 : vector<18x18xf32>
    %cst_223 = arith.constant dense<0.000000e+00> : vector<18xf32>
    %386 = vector.multi_reduction <add>, %385, %cst_223 [1] : vector<18x18xf32> to vector<18xf32>
    %387 = vector.shape_cast %386 : vector<18xf32> to vector<18x1xf32>
    %388 = tpu.reciprocal %387 {approx = true} : vector<18x1xf32> -> vector<18x1xf32>
    %389 = vector.broadcast %388 : vector<18x1xf32> to vector<18x18xf32>
    %390 = arith.mulf %385, %389 : vector<18x18xf32>
    %cst_224 = arith.constant dense<0.000000e+00> : vector<18x8xf32>
    %391 = tpu.matmul %390, %376, %cst_224 {dimension_numbers = #tpu.dot_dimension_numbers<[1], [0], [0], [1], [0, 0, 1, 1], [], []>} : vector<18x18xf32>, vector<18x8xf32>, vector<18x8xf32> -> vector<18x8xf32>
    %c1_225 = arith.constant 1 : index
    %c8_226 = arith.constant 8 : index
    %c0_227 = arith.constant 0 : index
    %392 = vector.load %arg8[%c1_225, %c8_226, %c0_227] : memref<2x32x32xf32, #tpu.memory_space<vmem>>, vector<1x8x32xf32>
    %393 = vector.shape_cast %392 : vector<1x8x32xf32> to vector<8x32xf32>
    %cst_228 = arith.constant dense<0.000000e+00> : vector<18x32xf32>
    %394 = tpu.matmul %391, %393, %cst_228 {dimension_numbers = #tpu.dot_dimension_numbers<[1], [0], [0], [1], [0, 0, 1, 1], [], []>} : vector<18x8xf32>, vector<8x32xf32>, vector<18x32xf32> -> vector<18x32xf32>
    %395 = arith.addf %373, %394 : vector<18x32xf32>
    %396 = vector.extract_strided_slice %348 {offsets = [0, 16], sizes = [18, 8], strides = [1, 1]} : vector<18x96xf32> to vector<18x8xf32>
    %397 = vector.extract_strided_slice %348 {offsets = [0, 48], sizes = [18, 8], strides = [1, 1]} : vector<18x96xf32> to vector<18x8xf32>
    %398 = vector.extract_strided_slice %348 {offsets = [0, 80], sizes = [18, 8], strides = [1, 1]} : vector<18x96xf32> to vector<18x8xf32>
    %cst_229 = arith.constant dense<0.000000e+00> : vector<18x18xf32>
    %399 = tpu.matmul %396, %397, %cst_229 {dimension_numbers = #tpu.dot_dimension_numbers<[1], [1], [0], [0], [0, 0, 1, 0], [], []>} : vector<18x8xf32>, vector<18x8xf32>, vector<18x18xf32> -> vector<18x18xf32>
    %cst_230 = arith.constant 0.353553385 : f32
    %400 = vector.broadcast %cst_230 : f32 to vector<18x18xf32>
    %401 = arith.mulf %399, %400 : vector<18x18xf32>
    %402 = arith.addf %401, %73 : vector<18x18xf32>
    %cst_231 = arith.constant dense<0xFF800000> : vector<18xf32>
    %403 = vector.multi_reduction <maximumf>, %402, %cst_231 [1] : vector<18x18xf32> to vector<18xf32>
    %404 = vector.shape_cast %403 : vector<18xf32> to vector<18x1xf32>
    %405 = vector.broadcast %404 : vector<18x1xf32> to vector<18x18xf32>
    %406 = arith.subf %402, %405 : vector<18x18xf32>
    %407 = math.exp %406 : vector<18x18xf32>
    %cst_232 = arith.constant dense<0.000000e+00> : vector<18xf32>
    %408 = vector.multi_reduction <add>, %407, %cst_232 [1] : vector<18x18xf32> to vector<18xf32>
    %409 = vector.shape_cast %408 : vector<18xf32> to vector<18x1xf32>
    %410 = tpu.reciprocal %409 {approx = true} : vector<18x1xf32> -> vector<18x1xf32>
    %411 = vector.broadcast %410 : vector<18x1xf32> to vector<18x18xf32>
    %412 = arith.mulf %407, %411 : vector<18x18xf32>
    %cst_233 = arith.constant dense<0.000000e+00> : vector<18x8xf32>
    %413 = tpu.matmul %412, %398, %cst_233 {dimension_numbers = #tpu.dot_dimension_numbers<[1], [0], [0], [1], [0, 0, 1, 1], [], []>} : vector<18x18xf32>, vector<18x8xf32>, vector<18x8xf32> -> vector<18x8xf32>
    %c1_234 = arith.constant 1 : index
    %c16_235 = arith.constant 16 : index
    %c0_236 = arith.constant 0 : index
    %414 = vector.load %arg8[%c1_234, %c16_235, %c0_236] : memref<2x32x32xf32, #tpu.memory_space<vmem>>, vector<1x8x32xf32>
    %415 = vector.shape_cast %414 : vector<1x8x32xf32> to vector<8x32xf32>
    %cst_237 = arith.constant dense<0.000000e+00> : vector<18x32xf32>
    %416 = tpu.matmul %413, %415, %cst_237 {dimension_numbers = #tpu.dot_dimension_numbers<[1], [0], [0], [1], [0, 0, 1, 1], [], []>} : vector<18x8xf32>, vector<8x32xf32>, vector<18x32xf32> -> vector<18x32xf32>
    %417 = arith.addf %395, %416 : vector<18x32xf32>
    %418 = vector.extract_strided_slice %348 {offsets = [0, 24], sizes = [18, 8], strides = [1, 1]} : vector<18x96xf32> to vector<18x8xf32>
    %419 = vector.extract_strided_slice %348 {offsets = [0, 56], sizes = [18, 8], strides = [1, 1]} : vector<18x96xf32> to vector<18x8xf32>
    %420 = vector.extract_strided_slice %348 {offsets = [0, 88], sizes = [18, 8], strides = [1, 1]} : vector<18x96xf32> to vector<18x8xf32>
    %cst_238 = arith.constant dense<0.000000e+00> : vector<18x18xf32>
    %421 = tpu.matmul %418, %419, %cst_238 {dimension_numbers = #tpu.dot_dimension_numbers<[1], [1], [0], [0], [0, 0, 1, 0], [], []>} : vector<18x8xf32>, vector<18x8xf32>, vector<18x18xf32> -> vector<18x18xf32>
    %cst_239 = arith.constant 0.353553385 : f32
    %422 = vector.broadcast %cst_239 : f32 to vector<18x18xf32>
    %423 = arith.mulf %421, %422 : vector<18x18xf32>
    %424 = arith.addf %423, %73 : vector<18x18xf32>
    %cst_240 = arith.constant dense<0xFF800000> : vector<18xf32>
    %425 = vector.multi_reduction <maximumf>, %424, %cst_240 [1] : vector<18x18xf32> to vector<18xf32>
    %426 = vector.shape_cast %425 : vector<18xf32> to vector<18x1xf32>
    %427 = vector.broadcast %426 : vector<18x1xf32> to vector<18x18xf32>
    %428 = arith.subf %424, %427 : vector<18x18xf32>
    %429 = math.exp %428 : vector<18x18xf32>
    %cst_241 = arith.constant dense<0.000000e+00> : vector<18xf32>
    %430 = vector.multi_reduction <add>, %429, %cst_241 [1] : vector<18x18xf32> to vector<18xf32>
    %431 = vector.shape_cast %430 : vector<18xf32> to vector<18x1xf32>
    %432 = tpu.reciprocal %431 {approx = true} : vector<18x1xf32> -> vector<18x1xf32>
    %433 = vector.broadcast %432 : vector<18x1xf32> to vector<18x18xf32>
    %434 = arith.mulf %429, %433 : vector<18x18xf32>
    %cst_242 = arith.constant dense<0.000000e+00> : vector<18x8xf32>
    %435 = tpu.matmul %434, %420, %cst_242 {dimension_numbers = #tpu.dot_dimension_numbers<[1], [0], [0], [1], [0, 0, 1, 1], [], []>} : vector<18x18xf32>, vector<18x8xf32>, vector<18x8xf32> -> vector<18x8xf32>
    %c1_243 = arith.constant 1 : index
    %c24_244 = arith.constant 24 : index
    %c0_245 = arith.constant 0 : index
    %436 = vector.load %arg8[%c1_243, %c24_244, %c0_245] : memref<2x32x32xf32, #tpu.memory_space<vmem>>, vector<1x8x32xf32>
    %437 = vector.shape_cast %436 : vector<1x8x32xf32> to vector<8x32xf32>
    %cst_246 = arith.constant dense<0.000000e+00> : vector<18x32xf32>
    %438 = tpu.matmul %435, %437, %cst_246 {dimension_numbers = #tpu.dot_dimension_numbers<[1], [0], [0], [1], [0, 0, 1, 1], [], []>} : vector<18x8xf32>, vector<8x32xf32>, vector<18x32xf32> -> vector<18x32xf32>
    %439 = arith.addf %417, %438 : vector<18x32xf32>
    %440 = arith.addf %341, %439 : vector<18x32xf32>
    %c1_247 = arith.constant 1 : index
    %c0_248 = arith.constant 0 : index
    %c0_249 = arith.constant 0 : index
    %441 = vector.load %arg11[%c1_247, %c0_248, %c0_249] : memref<2x1x32xf32, #tpu.memory_space<vmem>>, vector<1x1x32xf32>
    %442 = vector.shape_cast %441 : vector<1x1x32xf32> to vector<1x32xf32>
    %c1_250 = arith.constant 1 : index
    %c0_251 = arith.constant 0 : index
    %c0_252 = arith.constant 0 : index
    %443 = vector.load %arg12[%c1_250, %c0_251, %c0_252] : memref<2x1x32xf32, #tpu.memory_space<vmem>>, vector<1x1x32xf32>
    %444 = vector.shape_cast %443 : vector<1x1x32xf32> to vector<1x32xf32>
    %cst_253 = arith.constant dense<0.000000e+00> : vector<18xf32>
    %445 = vector.multi_reduction <add>, %440, %cst_253 [1] : vector<18x32xf32> to vector<18xf32>
    %446 = vector.shape_cast %445 : vector<18xf32> to vector<18x1xf32>
    %cst_254 = arith.constant 3.200000e+01 : f32
    %447 = vector.broadcast %cst_254 : f32 to vector<18x1xf32>
    %448 = arith.divf %446, %447 : vector<18x1xf32>
    %449 = vector.broadcast %448 : vector<18x1xf32> to vector<18x32xf32>
    %450 = arith.subf %440, %449 : vector<18x32xf32>
    %451 = arith.mulf %450, %450 : vector<18x32xf32>
    %cst_255 = arith.constant dense<0.000000e+00> : vector<18xf32>
    %452 = vector.multi_reduction <add>, %451, %cst_255 [1] : vector<18x32xf32> to vector<18xf32>
    %453 = vector.shape_cast %452 : vector<18xf32> to vector<18x1xf32>
    %cst_256 = arith.constant 3.200000e+01 : f32
    %454 = vector.broadcast %cst_256 : f32 to vector<18x1xf32>
    %455 = arith.divf %453, %454 : vector<18x1xf32>
    %456 = vector.broadcast %448 : vector<18x1xf32> to vector<18x32xf32>
    %457 = arith.subf %440, %456 : vector<18x32xf32>
    %cst_257 = arith.constant 9.99999974E-6 : f32
    %458 = vector.broadcast %cst_257 : f32 to vector<18x1xf32>
    %459 = arith.addf %455, %458 : vector<18x1xf32>
    %460 = math.rsqrt %459 : vector<18x1xf32>
    %461 = vector.broadcast %460 : vector<18x1xf32> to vector<18x32xf32>
    %462 = arith.mulf %457, %461 : vector<18x32xf32>
    %463 = vector.broadcast %442 : vector<1x32xf32> to vector<18x32xf32>
    %464 = arith.mulf %462, %463 : vector<18x32xf32>
    %465 = vector.broadcast %444 : vector<1x32xf32> to vector<18x32xf32>
    %466 = arith.addf %464, %465 : vector<18x32xf32>
    %c1_258 = arith.constant 1 : index
    %c0_259 = arith.constant 0 : index
    %c0_260 = arith.constant 0 : index
    %467 = vector.load %arg10[%c1_258, %c0_259, %c0_260] : memref<2x1x32xf32, #tpu.memory_space<vmem>>, vector<1x1x32xf32>
    %468 = vector.shape_cast %467 : vector<1x1x32xf32> to vector<1x32xf32>
    %469 = vector.broadcast %468 : vector<1x32xf32> to vector<18x32xf32>
    %470 = arith.addf %466, %469 : vector<18x32xf32>
    %c1_261 = arith.constant 1 : index
    %c0_262 = arith.constant 0 : index
    %c0_263 = arith.constant 0 : index
    %471 = vector.load %arg13[%c1_261, %c0_262, %c0_263] : memref<2x1x32xf32, #tpu.memory_space<vmem>>, vector<1x1x32xf32>
    %472 = vector.shape_cast %471 : vector<1x1x32xf32> to vector<1x32xf32>
    %c1_264 = arith.constant 1 : index
    %c0_265 = arith.constant 0 : index
    %c0_266 = arith.constant 0 : index
    %473 = vector.load %arg14[%c1_264, %c0_265, %c0_266] : memref<2x1x32xf32, #tpu.memory_space<vmem>>, vector<1x1x32xf32>
    %474 = vector.shape_cast %473 : vector<1x1x32xf32> to vector<1x32xf32>
    %cst_267 = arith.constant dense<0.000000e+00> : vector<18xf32>
    %475 = vector.multi_reduction <add>, %470, %cst_267 [1] : vector<18x32xf32> to vector<18xf32>
    %476 = vector.shape_cast %475 : vector<18xf32> to vector<18x1xf32>
    %cst_268 = arith.constant 3.200000e+01 : f32
    %477 = vector.broadcast %cst_268 : f32 to vector<18x1xf32>
    %478 = arith.divf %476, %477 : vector<18x1xf32>
    %479 = vector.broadcast %478 : vector<18x1xf32> to vector<18x32xf32>
    %480 = arith.subf %470, %479 : vector<18x32xf32>
    %481 = arith.mulf %480, %480 : vector<18x32xf32>
    %cst_269 = arith.constant dense<0.000000e+00> : vector<18xf32>
    %482 = vector.multi_reduction <add>, %481, %cst_269 [1] : vector<18x32xf32> to vector<18xf32>
    %483 = vector.shape_cast %482 : vector<18xf32> to vector<18x1xf32>
    %cst_270 = arith.constant 3.200000e+01 : f32
    %484 = vector.broadcast %cst_270 : f32 to vector<18x1xf32>
    %485 = arith.divf %483, %484 : vector<18x1xf32>
    %486 = vector.broadcast %478 : vector<18x1xf32> to vector<18x32xf32>
    %487 = arith.subf %470, %486 : vector<18x32xf32>
    %cst_271 = arith.constant 9.99999974E-6 : f32
    %488 = vector.broadcast %cst_271 : f32 to vector<18x1xf32>
    %489 = arith.addf %485, %488 : vector<18x1xf32>
    %490 = math.rsqrt %489 : vector<18x1xf32>
    %491 = vector.broadcast %490 : vector<18x1xf32> to vector<18x32xf32>
    %492 = arith.mulf %487, %491 : vector<18x32xf32>
    %493 = vector.broadcast %472 : vector<1x32xf32> to vector<18x32xf32>
    %494 = arith.mulf %492, %493 : vector<18x32xf32>
    %495 = vector.broadcast %474 : vector<1x32xf32> to vector<18x32xf32>
    %496 = arith.addf %494, %495 : vector<18x32xf32>
    %c1_i32_272 = arith.constant 1 : i32
    %c1_i32_273 = arith.constant 1 : i32
    %c0_i32_274 = arith.constant 0 : i32
    %c1_i32_275 = arith.constant 1 : i32
    %c0_i32_276 = arith.constant 0 : i32
    %c0_i32_277 = arith.constant 0 : i32
    %497 = tpu.memref_slice %arg17[%c1_i32_272, %c0_i32_276, %c0_i32_277] : memref<2x32x2048xbf16, #tpu.memory_space<any>> -> memref<1x32x2048xbf16, #tpu.memory_space<any>>
    %498 = tpu.memref_squeeze %497 : memref<1x32x2048xbf16, #tpu.memory_space<any>> -> memref<32x2048xbf16, #tpu.memory_space<any>>
    %c0_i32_278 = arith.constant 0 : i32
    %c0_i32_279 = arith.constant 0 : i32
    %499 = tpu.memref_slice %arg24[%c1_i32_273, %c0_i32_278, %c0_i32_279] : memref<2x32x2048xbf16, #tpu.memory_space<vmem>> -> memref<1x32x2048xbf16, #tpu.memory_space<vmem>>
    %500 = tpu.memref_squeeze %499 : memref<1x32x2048xbf16, #tpu.memory_space<vmem>> -> memref<32x2048xbf16, #tpu.memory_space<vmem>>
    %501 = tpu.memref_slice %arg26[%c0_i32_274, %c1_i32_275] : memref<2x2x!tpu.dma_semaphore, #tpu.memory_space<semaphore_mem>> -> memref<1x1x!tpu.dma_semaphore, #tpu.memory_space<semaphore_mem>>
    %502 = tpu.memref_squeeze %501 : memref<1x1x!tpu.dma_semaphore, #tpu.memory_space<semaphore_mem>> -> memref<!tpu.dma_semaphore, #tpu.memory_space<semaphore_mem>>
    tpu.wait_dma2 semaphore(%502 : memref<!tpu.dma_semaphore, #tpu.memory_space<semaphore_mem>>) src(%498 : memref<32x2048xbf16, #tpu.memory_space<any>>) dst(%500 : memref<32x2048xbf16, #tpu.memory_space<vmem>>)
    %c1_i32_280 = arith.constant 1 : i32
    %c1_i32_281 = arith.constant 1 : i32
    %c1_i32_282 = arith.constant 1 : i32
    %c1_i32_283 = arith.constant 1 : i32
    %c0_i32_284 = arith.constant 0 : i32
    %c0_i32_285 = arith.constant 0 : i32
    %503 = tpu.memref_slice %arg19[%c1_i32_280, %c0_i32_284, %c0_i32_285] : memref<2x32x2048xbf16, #tpu.memory_space<any>> -> memref<1x32x2048xbf16, #tpu.memory_space<any>>
    %504 = tpu.memref_squeeze %503 : memref<1x32x2048xbf16, #tpu.memory_space<any>> -> memref<32x2048xbf16, #tpu.memory_space<any>>
    %c0_i32_286 = arith.constant 0 : i32
    %c0_i32_287 = arith.constant 0 : i32
    %505 = tpu.memref_slice %arg25[%c1_i32_281, %c0_i32_286, %c0_i32_287] : memref<2x32x2048xbf16, #tpu.memory_space<vmem>> -> memref<1x32x2048xbf16, #tpu.memory_space<vmem>>
    %506 = tpu.memref_squeeze %505 : memref<1x32x2048xbf16, #tpu.memory_space<vmem>> -> memref<32x2048xbf16, #tpu.memory_space<vmem>>
    %507 = tpu.memref_slice %arg26[%c1_i32_282, %c1_i32_283] : memref<2x2x!tpu.dma_semaphore, #tpu.memory_space<semaphore_mem>> -> memref<1x1x!tpu.dma_semaphore, #tpu.memory_space<semaphore_mem>>
    %508 = tpu.memref_squeeze %507 : memref<1x1x!tpu.dma_semaphore, #tpu.memory_space<semaphore_mem>> -> memref<!tpu.dma_semaphore, #tpu.memory_space<semaphore_mem>>
    tpu.wait_dma2 semaphore(%508 : memref<!tpu.dma_semaphore, #tpu.memory_space<semaphore_mem>>) src(%504 : memref<32x2048xbf16, #tpu.memory_space<any>>) dst(%506 : memref<32x2048xbf16, #tpu.memory_space<vmem>>)
    %509 = arith.truncf %496 : vector<18x32xf32> to vector<18x32xbf16>
    %cst_288 = arith.constant 0.000000e+00 : f32
    %510 = vector.broadcast %cst_288 : f32 to vector<18x32xf32>
    %c1_289 = arith.constant 1 : index
    %c0_290 = arith.constant 0 : index
    %c0_291 = arith.constant 0 : index
    %511 = vector.load %arg24[%c1_289, %c0_290, %c0_291] : memref<2x32x2048xbf16, #tpu.memory_space<vmem>>, vector<1x32x512xbf16>
    %512 = vector.shape_cast %511 : vector<1x32x512xbf16> to vector<32x512xbf16>
    %cst_292 = arith.constant dense<0.000000e+00> : vector<18x512xf32>
    %513 = tpu.matmul %509, %512, %cst_292 {dimension_numbers = #tpu.dot_dimension_numbers<[1], [0], [0], [1], [0, 0, 1, 1], [], []>} : vector<18x32xbf16>, vector<32x512xbf16>, vector<18x512xf32> -> vector<18x512xf32>
    %c1_293 = arith.constant 1 : index
    %c0_294 = arith.constant 0 : index
    %c0_295 = arith.constant 0 : index
    %514 = vector.load %arg18[%c1_293, %c0_294, %c0_295] : memref<2x1x2048xf32, #tpu.memory_space<vmem>>, vector<1x1x512xf32>
    %515 = vector.shape_cast %514 : vector<1x1x512xf32> to vector<1x512xf32>
    %516 = vector.broadcast %515 : vector<1x512xf32> to vector<18x512xf32>
    %517 = arith.addf %513, %516 : vector<18x512xf32>
    %cst_296 = arith.constant 0.000000e+00 : f32
    %518 = vector.broadcast %cst_296 : f32 to vector<18x512xf32>
    %519 = arith.maximumf %517, %518 : vector<18x512xf32>
    %520 = arith.truncf %519 : vector<18x512xf32> to vector<18x512xbf16>
    %c1_297 = arith.constant 1 : index
    %c0_298 = arith.constant 0 : index
    %c0_299 = arith.constant 0 : index
    %521 = vector.load %arg25[%c1_297, %c0_298, %c0_299] : memref<2x32x2048xbf16, #tpu.memory_space<vmem>>, vector<1x32x512xbf16>
    %522 = vector.shape_cast %521 : vector<1x32x512xbf16> to vector<32x512xbf16>
    %cst_300 = arith.constant dense<0.000000e+00> : vector<18x32xf32>
    %523 = tpu.matmul %520, %522, %cst_300 {dimension_numbers = #tpu.dot_dimension_numbers<[1], [1], [0], [0], [0, 0, 1, 0], [], []>} : vector<18x512xbf16>, vector<32x512xbf16>, vector<18x32xf32> -> vector<18x32xf32>
    %524 = arith.addf %510, %523 : vector<18x32xf32>
    %c1_301 = arith.constant 1 : index
    %c0_302 = arith.constant 0 : index
    %c512_303 = arith.constant 512 : index
    %525 = vector.load %arg24[%c1_301, %c0_302, %c512_303] : memref<2x32x2048xbf16, #tpu.memory_space<vmem>>, vector<1x32x512xbf16>
    %526 = vector.shape_cast %525 : vector<1x32x512xbf16> to vector<32x512xbf16>
    %cst_304 = arith.constant dense<0.000000e+00> : vector<18x512xf32>
    %527 = tpu.matmul %509, %526, %cst_304 {dimension_numbers = #tpu.dot_dimension_numbers<[1], [0], [0], [1], [0, 0, 1, 1], [], []>} : vector<18x32xbf16>, vector<32x512xbf16>, vector<18x512xf32> -> vector<18x512xf32>
    %c1_305 = arith.constant 1 : index
    %c0_306 = arith.constant 0 : index
    %c512_307 = arith.constant 512 : index
    %528 = vector.load %arg18[%c1_305, %c0_306, %c512_307] : memref<2x1x2048xf32, #tpu.memory_space<vmem>>, vector<1x1x512xf32>
    %529 = vector.shape_cast %528 : vector<1x1x512xf32> to vector<1x512xf32>
    %530 = vector.broadcast %529 : vector<1x512xf32> to vector<18x512xf32>
    %531 = arith.addf %527, %530 : vector<18x512xf32>
    %cst_308 = arith.constant 0.000000e+00 : f32
    %532 = vector.broadcast %cst_308 : f32 to vector<18x512xf32>
    %533 = arith.maximumf %531, %532 : vector<18x512xf32>
    %534 = arith.truncf %533 : vector<18x512xf32> to vector<18x512xbf16>
    %c1_309 = arith.constant 1 : index
    %c0_310 = arith.constant 0 : index
    %c512_311 = arith.constant 512 : index
    %535 = vector.load %arg25[%c1_309, %c0_310, %c512_311] : memref<2x32x2048xbf16, #tpu.memory_space<vmem>>, vector<1x32x512xbf16>
    %536 = vector.shape_cast %535 : vector<1x32x512xbf16> to vector<32x512xbf16>
    %cst_312 = arith.constant dense<0.000000e+00> : vector<18x32xf32>
    %537 = tpu.matmul %534, %536, %cst_312 {dimension_numbers = #tpu.dot_dimension_numbers<[1], [1], [0], [0], [0, 0, 1, 0], [], []>} : vector<18x512xbf16>, vector<32x512xbf16>, vector<18x32xf32> -> vector<18x32xf32>
    %538 = arith.addf %524, %537 : vector<18x32xf32>
    %c1_313 = arith.constant 1 : index
    %c0_314 = arith.constant 0 : index
    %c1024_315 = arith.constant 1024 : index
    %539 = vector.load %arg24[%c1_313, %c0_314, %c1024_315] : memref<2x32x2048xbf16, #tpu.memory_space<vmem>>, vector<1x32x512xbf16>
    %540 = vector.shape_cast %539 : vector<1x32x512xbf16> to vector<32x512xbf16>
    %cst_316 = arith.constant dense<0.000000e+00> : vector<18x512xf32>
    %541 = tpu.matmul %509, %540, %cst_316 {dimension_numbers = #tpu.dot_dimension_numbers<[1], [0], [0], [1], [0, 0, 1, 1], [], []>} : vector<18x32xbf16>, vector<32x512xbf16>, vector<18x512xf32> -> vector<18x512xf32>
    %c1_317 = arith.constant 1 : index
    %c0_318 = arith.constant 0 : index
    %c1024_319 = arith.constant 1024 : index
    %542 = vector.load %arg18[%c1_317, %c0_318, %c1024_319] : memref<2x1x2048xf32, #tpu.memory_space<vmem>>, vector<1x1x512xf32>
    %543 = vector.shape_cast %542 : vector<1x1x512xf32> to vector<1x512xf32>
    %544 = vector.broadcast %543 : vector<1x512xf32> to vector<18x512xf32>
    %545 = arith.addf %541, %544 : vector<18x512xf32>
    %cst_320 = arith.constant 0.000000e+00 : f32
    %546 = vector.broadcast %cst_320 : f32 to vector<18x512xf32>
    %547 = arith.maximumf %545, %546 : vector<18x512xf32>
    %548 = arith.truncf %547 : vector<18x512xf32> to vector<18x512xbf16>
    %c1_321 = arith.constant 1 : index
    %c0_322 = arith.constant 0 : index
    %c1024_323 = arith.constant 1024 : index
    %549 = vector.load %arg25[%c1_321, %c0_322, %c1024_323] : memref<2x32x2048xbf16, #tpu.memory_space<vmem>>, vector<1x32x512xbf16>
    %550 = vector.shape_cast %549 : vector<1x32x512xbf16> to vector<32x512xbf16>
    %cst_324 = arith.constant dense<0.000000e+00> : vector<18x32xf32>
    %551 = tpu.matmul %548, %550, %cst_324 {dimension_numbers = #tpu.dot_dimension_numbers<[1], [1], [0], [0], [0, 0, 1, 0], [], []>} : vector<18x512xbf16>, vector<32x512xbf16>, vector<18x32xf32> -> vector<18x32xf32>
    %552 = arith.addf %538, %551 : vector<18x32xf32>
    %c1_325 = arith.constant 1 : index
    %c0_326 = arith.constant 0 : index
    %c1536_327 = arith.constant 1536 : index
    %553 = vector.load %arg24[%c1_325, %c0_326, %c1536_327] : memref<2x32x2048xbf16, #tpu.memory_space<vmem>>, vector<1x32x512xbf16>
    %554 = vector.shape_cast %553 : vector<1x32x512xbf16> to vector<32x512xbf16>
    %cst_328 = arith.constant dense<0.000000e+00> : vector<18x512xf32>
    %555 = tpu.matmul %509, %554, %cst_328 {dimension_numbers = #tpu.dot_dimension_numbers<[1], [0], [0], [1], [0, 0, 1, 1], [], []>} : vector<18x32xbf16>, vector<32x512xbf16>, vector<18x512xf32> -> vector<18x512xf32>
    %c1_329 = arith.constant 1 : index
    %c0_330 = arith.constant 0 : index
    %c1536_331 = arith.constant 1536 : index
    %556 = vector.load %arg18[%c1_329, %c0_330, %c1536_331] : memref<2x1x2048xf32, #tpu.memory_space<vmem>>, vector<1x1x512xf32>
    %557 = vector.shape_cast %556 : vector<1x1x512xf32> to vector<1x512xf32>
    %558 = vector.broadcast %557 : vector<1x512xf32> to vector<18x512xf32>
    %559 = arith.addf %555, %558 : vector<18x512xf32>
    %cst_332 = arith.constant 0.000000e+00 : f32
    %560 = vector.broadcast %cst_332 : f32 to vector<18x512xf32>
    %561 = arith.maximumf %559, %560 : vector<18x512xf32>
    %562 = arith.truncf %561 : vector<18x512xf32> to vector<18x512xbf16>
    %c1_333 = arith.constant 1 : index
    %c0_334 = arith.constant 0 : index
    %c1536_335 = arith.constant 1536 : index
    %563 = vector.load %arg25[%c1_333, %c0_334, %c1536_335] : memref<2x32x2048xbf16, #tpu.memory_space<vmem>>, vector<1x32x512xbf16>
    %564 = vector.shape_cast %563 : vector<1x32x512xbf16> to vector<32x512xbf16>
    %cst_336 = arith.constant dense<0.000000e+00> : vector<18x32xf32>
    %565 = tpu.matmul %562, %564, %cst_336 {dimension_numbers = #tpu.dot_dimension_numbers<[1], [1], [0], [0], [0, 0, 1, 0], [], []>} : vector<18x512xbf16>, vector<32x512xbf16>, vector<18x32xf32> -> vector<18x32xf32>
    %566 = arith.addf %552, %565 : vector<18x32xf32>
    %567 = arith.addf %496, %566 : vector<18x32xf32>
    %c1_337 = arith.constant 1 : index
    %c0_338 = arith.constant 0 : index
    %c0_339 = arith.constant 0 : index
    %568 = vector.load %arg20[%c1_337, %c0_338, %c0_339] : memref<2x1x32xf32, #tpu.memory_space<vmem>>, vector<1x1x32xf32>
    %569 = vector.shape_cast %568 : vector<1x1x32xf32> to vector<1x32xf32>
    %570 = vector.broadcast %569 : vector<1x32xf32> to vector<18x32xf32>
    %571 = arith.addf %567, %570 : vector<18x32xf32>
    %c1_340 = arith.constant 1 : index
    %c0_341 = arith.constant 0 : index
    %c0_342 = arith.constant 0 : index
    %572 = vector.load %arg15[%c1_340, %c0_341, %c0_342] : memref<2x1x32xf32, #tpu.memory_space<vmem>>, vector<1x1x32xf32>
    %573 = vector.shape_cast %572 : vector<1x1x32xf32> to vector<1x32xf32>
    %c1_343 = arith.constant 1 : index
    %c0_344 = arith.constant 0 : index
    %c0_345 = arith.constant 0 : index
    %574 = vector.load %arg16[%c1_343, %c0_344, %c0_345] : memref<2x1x32xf32, #tpu.memory_space<vmem>>, vector<1x1x32xf32>
    %575 = vector.shape_cast %574 : vector<1x1x32xf32> to vector<1x32xf32>
    %cst_346 = arith.constant dense<0.000000e+00> : vector<18xf32>
    %576 = vector.multi_reduction <add>, %571, %cst_346 [1] : vector<18x32xf32> to vector<18xf32>
    %577 = vector.shape_cast %576 : vector<18xf32> to vector<18x1xf32>
    %cst_347 = arith.constant 3.200000e+01 : f32
    %578 = vector.broadcast %cst_347 : f32 to vector<18x1xf32>
    %579 = arith.divf %577, %578 : vector<18x1xf32>
    %580 = vector.broadcast %579 : vector<18x1xf32> to vector<18x32xf32>
    %581 = arith.subf %571, %580 : vector<18x32xf32>
    %582 = arith.mulf %581, %581 : vector<18x32xf32>
    %cst_348 = arith.constant dense<0.000000e+00> : vector<18xf32>
    %583 = vector.multi_reduction <add>, %582, %cst_348 [1] : vector<18x32xf32> to vector<18xf32>
    %584 = vector.shape_cast %583 : vector<18xf32> to vector<18x1xf32>
    %cst_349 = arith.constant 3.200000e+01 : f32
    %585 = vector.broadcast %cst_349 : f32 to vector<18x1xf32>
    %586 = arith.divf %584, %585 : vector<18x1xf32>
    %587 = vector.broadcast %579 : vector<18x1xf32> to vector<18x32xf32>
    %588 = arith.subf %571, %587 : vector<18x32xf32>
    %cst_350 = arith.constant 9.99999974E-6 : f32
    %589 = vector.broadcast %cst_350 : f32 to vector<18x1xf32>
    %590 = arith.addf %586, %589 : vector<18x1xf32>
    %591 = math.rsqrt %590 : vector<18x1xf32>
    %592 = vector.broadcast %591 : vector<18x1xf32> to vector<18x32xf32>
    %593 = arith.mulf %588, %592 : vector<18x32xf32>
    %594 = vector.broadcast %573 : vector<1x32xf32> to vector<18x32xf32>
    %595 = arith.mulf %593, %594 : vector<18x32xf32>
    %596 = vector.broadcast %575 : vector<1x32xf32> to vector<18x32xf32>
    %597 = arith.addf %595, %596 : vector<18x32xf32>
    %c0_351 = arith.constant 0 : index
    %c0_352 = arith.constant 0 : index
    %598 = vector.load %arg21[%c0_351, %c0_352] : memref<32x32xf32, #tpu.memory_space<vmem>>, vector<32x32xf32>
    %cst_353 = arith.constant dense<0.000000e+00> : vector<18x32xf32>
    %599 = tpu.matmul %597, %598, %cst_353 {dimension_numbers = #tpu.dot_dimension_numbers<[1], [0], [0], [1], [0, 0, 1, 1], [], []>} : vector<18x32xf32>, vector<32x32xf32>, vector<18x32xf32> -> vector<18x32xf32>
    %c0_354 = arith.constant 0 : index
    %c0_355 = arith.constant 0 : index
    %600 = vector.load %arg22[%c0_354, %c0_355] : memref<1x32xf32, #tpu.memory_space<vmem>>, vector<1x32xf32>
    %601 = vector.broadcast %600 : vector<1x32xf32> to vector<18x32xf32>
    %602 = arith.addf %599, %601 : vector<18x32xf32>
    %603 = tpu.iota {dimensions = array<i32: 1>} : vector<18x32xi32>
    %c0_i32_356 = arith.constant 0 : i32
    %604 = vector.broadcast %c0_i32_356 : i32 to vector<18x32xi32>
    %605 = arith.cmpi sge, %603, %604 : vector<18x32xi32>
    %c16_i32 = arith.constant 16 : i32
    %606 = vector.broadcast %c16_i32 : i32 to vector<18x32xi32>
    %607 = arith.cmpi slt, %603, %606 : vector<18x32xi32>
    %608 = arith.andi %605, %607 : vector<18x32xi1>
    %c16_i32_357 = arith.constant 16 : i32
    %609 = vector.broadcast %c16_i32_357 : i32 to vector<18x32xi32>
    %610 = arith.cmpi sge, %603, %609 : vector<18x32xi32>
    %c32_i32 = arith.constant 32 : i32
    %611 = vector.broadcast %c32_i32 : i32 to vector<18x32xi32>
    %612 = arith.cmpi slt, %603, %611 : vector<18x32xi32>
    %613 = arith.andi %610, %612 : vector<18x32xi1>
    %cst_358 = arith.constant 0.000000e+00 : f32
    %614 = vector.broadcast %cst_358 : f32 to vector<18x32xf32>
    %cst_359 = arith.constant -1.000000e+30 : f32
    %615 = vector.broadcast %cst_359 : f32 to vector<18x32xf32>
    %616 = arith.select %608, %602, %615 : vector<18x32xi1>, vector<18x32xf32>
    %cst_360 = arith.constant dense<0xFF800000> : vector<18xf32>
    %617 = vector.multi_reduction <maximumf>, %616, %cst_360 [1] : vector<18x32xf32> to vector<18xf32>
    %618 = vector.shape_cast %617 : vector<18xf32> to vector<18x1xf32>
    %619 = vector.shape_cast %618 : vector<18x1xf32> to vector<18x1xf32>
    %620 = vector.broadcast %619 : vector<18x1xf32> to vector<18x32xf32>
    %621 = arith.select %608, %620, %614 : vector<18x32xi1>, vector<18x32xf32>
    %cst_361 = arith.constant -1.000000e+30 : f32
    %622 = vector.broadcast %cst_361 : f32 to vector<18x32xf32>
    %623 = arith.select %613, %602, %622 : vector<18x32xi1>, vector<18x32xf32>
    %cst_362 = arith.constant dense<0xFF800000> : vector<18xf32>
    %624 = vector.multi_reduction <maximumf>, %623, %cst_362 [1] : vector<18x32xf32> to vector<18xf32>
    %625 = vector.shape_cast %624 : vector<18xf32> to vector<18x1xf32>
    %626 = vector.shape_cast %625 : vector<18x1xf32> to vector<18x1xf32>
    %627 = vector.broadcast %626 : vector<18x1xf32> to vector<18x32xf32>
    %628 = arith.select %613, %627, %621 : vector<18x32xi1>, vector<18x32xf32>
    %629 = arith.subf %602, %628 : vector<18x32xf32>
    %630 = math.exp %629 : vector<18x32xf32>
    %cst_363 = arith.constant 1.000000e+00 : f32
    %631 = vector.broadcast %cst_363 : f32 to vector<18x32xf32>
    %cst_364 = arith.constant 0.000000e+00 : f32
    %632 = vector.broadcast %cst_364 : f32 to vector<18x32xf32>
    %633 = arith.select %608, %630, %632 : vector<18x32xi1>, vector<18x32xf32>
    %cst_365 = arith.constant dense<0.000000e+00> : vector<18xf32>
    %634 = vector.multi_reduction <add>, %633, %cst_365 [1] : vector<18x32xf32> to vector<18xf32>
    %635 = vector.shape_cast %634 : vector<18xf32> to vector<18x1xf32>
    %636 = vector.shape_cast %635 : vector<18x1xf32> to vector<18x1xf32>
    %637 = vector.broadcast %636 : vector<18x1xf32> to vector<18x32xf32>
    %638 = arith.select %608, %637, %631 : vector<18x32xi1>, vector<18x32xf32>
    %cst_366 = arith.constant 0.000000e+00 : f32
    %639 = vector.broadcast %cst_366 : f32 to vector<18x32xf32>
    %640 = arith.select %613, %630, %639 : vector<18x32xi1>, vector<18x32xf32>
    %cst_367 = arith.constant dense<0.000000e+00> : vector<18xf32>
    %641 = vector.multi_reduction <add>, %640, %cst_367 [1] : vector<18x32xf32> to vector<18xf32>
    %642 = vector.shape_cast %641 : vector<18xf32> to vector<18x1xf32>
    %643 = vector.shape_cast %642 : vector<18x1xf32> to vector<18x1xf32>
    %644 = vector.broadcast %643 : vector<18x1xf32> to vector<18x32xf32>
    %645 = arith.select %613, %644, %638 : vector<18x32xi1>, vector<18x32xf32>
    %646 = arith.divf %630, %645 : vector<18x32xf32>
    %c0_368 = arith.constant 0 : index
    %c0_369 = arith.constant 0 : index
    %647 = vector.load %arg23[%c0_368, %c0_369] : memref<18x32xf32, #tpu.memory_space<vmem>>, vector<18x32xf32>
    tpu.vector_store %arg23[%c0_368, %c0_369], %646 {strides = array<i32>} : memref<18x32xf32, #tpu.memory_space<vmem>>, vector<18x32xf32>,
    return
  }
}

</mosaic_0001>

<llo_original>
// kernel: tile.9
$region0: #{tile.9}
  %s0 = inlined_call_operand.vmem [shape: f32[2,9,32], index: 0, kind: input, shape index: {}]
  %s1 = inlined_call_operand.vmem [shape: f32[18,32], index: 1, kind: output, shape index: {}]
  %v2 = vld [vmem:[%s0] sm:$0xff]
  %vm3 = vcmask 261120
  %4 = vst.msk [vmem:[%s1] sm:$0xff] %vm3, %v2
  %s5 = scalar_lea.vmem %s0, 8
  %s6 = smov 3
  %v7 = vld [vmem:[%s5] ss:$8 sm:%s6]
  %vm8 = vcmask 261120
  %s9 = scalar_lea.vmem %s1, 8
  %10 = vst.msk [vmem:[%s9] sm:$0x3] %vm8, %v7
  %s11 = scalar_lea.vmem %s0, 17
  %v12 = vld [vmem:[%s11] sm:$0xff]
  %vm13 = vcmask 261120
  %s14 = scalar_lea.vmem %s1, 10
  %15 = vst.msk [vmem:[%s14] sm:$0xff] %vm13, %v12

// kernel: transformer3_forward.1
$region0: #{transformer3_forward.1}
  #allocation0 [shape = 'u32[]', space=smem, size = 0x4, offset = 0x4, fixed_abs, tag = 'smem constant byte address 0x4 - core index']
  #allocation1 [shape = 'u32[144,128]{1,0:T(1,128)}', space=vmem, size = 0x12000, scoped, tag = 'internal scratch']
  #allocation2 [shape = 'bf16[2,32,2048]{2,1,0:T(8,128)(2,1)}', space=vmem, size = 0x40000, scoped, tag = 'scratch operand']
  #allocation3 [shape = 'bf16[2,32,2048]{2,1,0:T(8,128)(2,1)}', space=vmem, size = 0x40000, scoped, tag = 'scratch operand']
  #allocation4 [shape = 's32[4]{0}', space=sflag, size = 0x10, scoped, tag = 'scratch operand']
  #allocation28 [shape = 's32[]', space=sflag, size = 0x4, offset = 0, fixed_abs, tag = 'sflag constant byte address 0x0 - dummy sync flag']
  #allocation29 [shape = 's32[]', space=sflag, size = 0x4, offset = 0, fixed_abs, tag = 'sflag constant byte address 0x0 - dummy sync flag']
  #allocation30 [shape = 'u32[]', space=smem, size = 0x4, offset = 0x44, fixed_abs, tag = 'smem constant byte address 0x44 - assertion arg 0']
  #allocation31 [shape = 'u32[]', space=smem, size = 0x4, offset = 0x48, fixed_abs, tag = 'smem constant byte address 0x48 - assertion arg 1']
  #allocation32 [shape = 's32[]', space=sflag, size = 0x4, offset = 0, fixed_abs, tag = 'sflag constant byte address 0x0 - dummy sync flag']
  #allocation33 [shape = 's32[]', space=sflag, size = 0x4, offset = 0, fixed_abs, tag = 'sflag constant byte address 0x0 - dummy sync flag']
  #allocation34 [shape = 's32[]', space=sflag, size = 0x4, offset = 0, fixed_abs, tag = 'sflag constant byte address 0x0 - dummy sync flag']
  #allocation35 [shape = 's32[]', space=sflag, size = 0x4, offset = 0, fixed_abs, tag = 'sflag constant byte address 0x0 - dummy sync flag']
  #allocation36 [shape = 's32[]', space=sflag, size = 0x4, offset = 0, fixed_abs, tag = 'sflag constant byte address 0x0 - dummy sync flag']
  #allocation37 [shape = 's32[]', space=sflag, size = 0x4, offset = 0, fixed_abs, tag = 'sflag constant byte address 0x0 - dummy sync flag']
  %s0 = inlined_call_operand.vmem [shape: f32[18,3], index: 0, kind: input, shape index: {}]
  %s1 = inlined_call_operand.vmem [shape: f32[18,32], index: 1, kind: input, shape index: {}]
  %s2 = inlined_call_operand.hbm [shape: f32[3,32], index: 2, kind: input, shape index: {}]
  %s3 = inlined_call_operand.hbm [shape: f32[1,32], index: 3, kind: input, shape index: {}]
  %s4 = inlined_call_operand.vmem [shape: f32[32,32], index: 4, kind: input, shape index: {}]
  %s5 = inlined_call_operand.hbm [shape: f32[1,32], index: 5, kind: input, shape index: {}]
  %s6 = inlined_call_operand.vmem [shape: f32[2,32,96], index: 6, kind: input, shape index: {}]
  %s7 = inlined_call_operand.hbm [shape: f32[2,1,96], index: 7, kind: input, shape index: {}]
  %s8 = inlined_call_operand.vmem [shape: f32[2,32,32], index: 8, kind: input, shape index: {}]
  %s9 = inlined_call_operand.hbm [shape: f32[2,1,32], index: 9, kind: input, shape index: {}]
  %s10 = inlined_call_operand.hbm [shape: f32[2,1,32], index: 10, kind: input, shape index: {}]
  %s11 = inlined_call_operand.hbm [shape: f32[2,1,32], index: 11, kind: input, shape index: {}]
  %s12 = inlined_call_operand.hbm [shape: f32[2,1,32], index: 12, kind: input, shape index: {}]
  %s13 = inlined_call_operand.hbm [shape: f32[2,1,32], index: 13, kind: input, shape index: {}]
  %s14 = inlined_call_operand.hbm [shape: f32[2,1,32], index: 14, kind: input, shape index: {}]
  %s15 = inlined_call_operand.hbm [shape: f32[2,1,32], index: 15, kind: input, shape index: {}]
  %s16 = inlined_call_operand.hbm [shape: f32[2,1,32], index: 16, kind: input, shape index: {}]
  %s17 = inlined_call_operand.hbm [shape: bf16[2,32,2048], index: 17, kind: input, shape index: {}]
  %s18 = inlined_call_operand.vmem [shape: f32[2,1,2048], index: 18, kind: input, shape index: {}]
  %s19 = inlined_call_operand.hbm [shape: bf16[2,32,2048], index: 19, kind: input, shape index: {}]
  %s20 = inlined_call_operand.hbm [shape: f32[2,1,32], index: 20, kind: input, shape index: {}]
  %s21 = inlined_call_operand.hbm [shape: f32[32,32], index: 21, kind: input, shape index: {}]
  %s22 = inlined_call_operand.hbm [shape: f32[1,32], index: 22, kind: input, shape index: {}]
  %s23 = inlined_call_operand.vmem [shape: f32[18,32], index: 23, kind: output, shape index: {}]
  %s24 = sld [smem:[#allocation0]]
  $region170: #{transformer3_forward.1} parent=0
    _
  %s26 = ssub.s32 1, %s24
  %s27 = scalar_select 0, %s26, %s24
  $region1: #{transformer3_forward.1} parent=0
    #allocation5 [shape = 'u8[2048]{0}', space=vmem, size = 0x800, scoped, tag = 'input window, operand 2, single buffered']
    #allocation6 [shape = 's32[1]{0}', space=sflag, size = 0x4, scoped, tag = 'scoped memory for transformer3_forward.1']
    #allocation7 [shape = 'u8[512]{0}', space=vmem, size = 0x400, scoped, tag = 'input window, operand 3, single buffered']
    #allocation8 [shape = 's32[1]{0}', space=sflag, size = 0x4, scoped, tag = 'scoped memory for transformer3_forward.1']
    #allocation9 [shape = 'u8[512]{0}', space=vmem, size = 0x400, scoped, tag = 'input window, operand 5, single buffered']
    #allocation10 [shape = 'u8[1024]{0}', space=vmem, size = 0x400, scoped, tag = 'input window, operand 7, single buffered']
    #allocation11 [shape = 's32[1]{0}', space=sflag, size = 0x4, scoped, tag = 'scoped memory for transformer3_forward.1']
    #allocation12 [shape = 'u8[1024]{0}', space=vmem, size = 0x400, scoped, tag = 'input window, operand 9, single buffered']
    #allocation13 [shape = 'u8[1024]{0}', space=vmem, size = 0x400, scoped, tag = 'input window, operand 10, single buffered']
    #allocation14 [shape = 's32[1]{0}', space=sflag, size = 0x4, scoped, tag = 'scoped memory for transformer3_forward.1']
    #allocation15 [shape = 'u8[1024]{0}', space=vmem, size = 0x400, scoped, tag = 'input window, operand 11, single buffered']
    #allocation16 [shape = 'u8[1024]{0}', space=vmem, size = 0x400, scoped, tag = 'input window, operand 12, single buffered']
    #allocation17 [shape = 's32[1]{0}', space=sflag, size = 0x4, scoped, tag = 'scoped memory for transformer3_forward.1']
    #allocation18 [shape = 'u8[1024]{0}', space=vmem, size = 0x400, scoped, tag = 'input window, operand 13, single buffered']
    #allocation19 [shape = 'u8[1024]{0}', space=vmem, size = 0x400, scoped, tag = 'input window, operand 14, single buffered']
    #allocation20 [shape = 's32[1]{0}', space=sflag, size = 0x4, scoped, tag = 'scoped memory for transformer3_forward.1']
    #allocation21 [shape = 'u8[1024]{0}', space=vmem, size = 0x400, scoped, tag = 'input window, operand 15, single buffered']
    #allocation22 [shape = 'u8[1024]{0}', space=vmem, size = 0x400, scoped, tag = 'input window, operand 16, single buffered']
    #allocation23 [shape = 's32[1]{0}', space=sflag, size = 0x4, scoped, tag = 'scoped memory for transformer3_forward.1']
    #allocation24 [shape = 'u8[1024]{0}', space=vmem, size = 0x400, scoped, tag = 'input window, operand 20, single buffered']
    #allocation25 [shape = 'u8[16384]{0}', space=vmem, size = 0x4000, scoped, tag = 'input window, operand 21, single buffered']
    #allocation26 [shape = 's32[1]{0}', space=sflag, size = 0x4, scoped, tag = 'scoped memory for transformer3_forward.1']
    #allocation27 [shape = 'u8[512]{0}', space=vmem, size = 0x400, scoped, tag = 'input window, operand 22, single buffered']
    %28 = vsyncpa [#allocation6], 0
    %29 = vsyncpa [#allocation8], 0
    %30 = vsyncpa [#allocation11], 0
    %31 = vsyncpa [#allocation14], 0
    %32 = vsyncpa [#allocation17], 0
    %33 = vsyncpa [#allocation20], 0
    %34 = vsyncpa [#allocation23], 0
    %35 = vsyncpa [#allocation26], 0
    // Predicated region
    $region2: #{transformer3_forward.1} parent=1 // pred_check
      _
    $region3: #{transformer3_forward.1} parent=1 // pred_check_branch
      %37 = sbr.rel (0) target = $region5
    $region4: #{transformer3_forward.1} parent=1 // pred_region
      _
    $region5: #{transformer3_forward.1} parent=1 // pred_fallthru
      _
    // Predicated region
    $region6: #{transformer3_forward.1} parent=1 // pred_check
      _
    $region7: #{transformer3_forward.1} parent=1 // pred_check_branch
      %39 = sbr.rel (0) target = $region9
    $region8: #{transformer3_forward.1} parent=1 // pred_region
      _
    $region9: #{transformer3_forward.1} parent=1 // pred_fallthru
      _
    // Predicated region
    $region10: #{transformer3_forward.1} parent=1 // pred_check
      _
    $region11: #{transformer3_forward.1} parent=1 // pred_check_branch
      %41 = sbr.rel (0) target = $region13
    $region12: #{transformer3_forward.1} parent=1 // pred_region
      %s43 = ssub.s32 64, 64
      %44 = vsyncadd [#allocation6], %s43
      %s46 = sshll.u32 [#allocation5], 4
      %s47 = int_to_ptr.vmem [resolvable:$true] %s46
      %49 = dma.hbm_to_vmem [thread:$0]  %s2, 64, %s47, [#allocation6]
    $region13: #{transformer3_forward.1} parent=1 // pred_fallthru
      _
    // Predicated region
    $region14: #{transformer3_forward.1} parent=1 // pred_check
      _
    $region15: #{transformer3_forward.1} parent=1 // pred_check_branch
      %51 = sbr.rel (0) target = $region17
    $region16: #{transformer3_forward.1} parent=1 // pred_region
      %s53 = ssub.s32 16, 16
      %54 = vsyncadd [#allocation8], %s53
      %s56 = sshll.u32 [#allocation7], 4
      %s57 = int_to_ptr.vmem [resolvable:$true] %s56
      %59 = dma.hbm_to_vmem [thread:$0]  %s3, 16, %s57, [#allocation8]
    $region17: #{transformer3_forward.1} parent=1 // pred_fallthru
      _
    // Predicated region
    $region18: #{transformer3_forward.1} parent=1 // pred_check
      _
    $region19: #{transformer3_forward.1} parent=1 // pred_check_branch
      %61 = sbr.rel (0) target = $region21
    $region20: #{transformer3_forward.1} parent=1 // pred_region
      _
    $region21: #{transformer3_forward.1} parent=1 // pred_fallthru
      _
    // Predicated region
    $region22: #{transformer3_forward.1} parent=1 // pred_check
      _
    $region23: #{transformer3_forward.1} parent=1 // pred_check_branch
      %63 = sbr.rel (0) target = $region25
    $region24: #{transformer3_forward.1} parent=1 // pred_region
      %s65 = ssub.s32 16, 16
      %66 = vsyncadd [#allocation8], %s65
      %s68 = sshll.u32 [#allocation9], 4
      %s69 = int_to_ptr.vmem [resolvable:$true] %s68
      %71 = dma.hbm_to_vmem [thread:$0]  %s5, 16, %s69, [#allocation8]
    $region25: #{transformer3_forward.1} parent=1 // pred_fallthru
      _
    // Predicated region
    $region26: #{transformer3_forward.1} parent=1 // pred_check
      _
    $region27: #{transformer3_forward.1} parent=1 // pred_check_branch
      %73 = sbr.rel (0) target = $region29
    $region28: #{transformer3_forward.1} parent=1 // pred_region
      _
    $region29: #{transformer3_forward.1} parent=1 // pred_fallthru
      _
    // Predicated region
    $region30: #{transformer3_forward.1} parent=1 // pred_check
      _
    $region31: #{transformer3_forward.1} parent=1 // pred_check_branch
      %75 = sbr.rel (0) target = $region33
    $region32: #{transformer3_forward.1} parent=1 // pred_region
      %s77 = ssub.s32 32, 32
      %78 = vsyncadd [#allocation11], %s77
      %s79 = sshll.u32 [#allocation10], 4
      %s80 = int_to_ptr.vmem [resolvable:$true] %s79
      %85 = dma.hbm_to_vmem [thread:$0]  %s7, 32, %s80, [#allocation11], 16, 16, 1
    $region33: #{transformer3_forward.1} parent=1 // pred_fallthru
      _
    // Predicated region
    $region34: #{transformer3_forward.1} parent=1 // pred_check
      _
    $region35: #{transformer3_forward.1} parent=1 // pred_check_branch
      %87 = sbr.rel (0) target = $region37
    $region36: #{transformer3_forward.1} parent=1 // pred_region
      _
    $region37: #{transformer3_forward.1} parent=1 // pred_fallthru
      _
    // Predicated region
    $region38: #{transformer3_forward.1} parent=1 // pred_check
      _
    $region39: #{transformer3_forward.1} parent=1 // pred_check_branch
      %89 = sbr.rel (0) target = $region41
    $region40: #{transformer3_forward.1} parent=1 // pred_region
      %s91 = ssub.s32 32, 32
      %92 = vsyncadd [#allocation11], %s91
      %s93 = sshll.u32 [#allocation12], 4
      %s94 = int_to_ptr.vmem [resolvable:$true] %s93
      %99 = dma.hbm_to_vmem [thread:$0]  %s9, 32, %s94, [#allocation11], 16, 16, 1
    $region41: #{transformer3_forward.1} parent=1 // pred_fallthru
      _
    // Predicated region
    $region42: #{transformer3_forward.1} parent=1 // pred_check
      _
    $region43: #{transformer3_forward.1} parent=1 // pred_check_branch
      %101 = sbr.rel (0) target = $region45
    $region44: #{transformer3_forward.1} parent=1 // pred_region
      %s103 = ssub.s32 32, 32
      %104 = vsyncadd [#allocation14], %s103
      %s105 = sshll.u32 [#allocation13], 4
      %s106 = int_to_ptr.vmem [resolvable:$true] %s105
      %111 = dma.hbm_to_vmem [thread:$0]  %s10, 32, %s106, [#allocation14], 16, 16, 1
    $region45: #{transformer3_forward.1} parent=1 // pred_fallthru
      _
    // Predicated region
    $region46: #{transformer3_forward.1} parent=1 // pred_check
      _
    $region47: #{transformer3_forward.1} parent=1 // pred_check_branch
      %113 = sbr.rel (0) target = $region49
    $region48: #{transformer3_forward.1} parent=1 // pred_region
      %s115 = ssub.s32 32, 32
      %116 = vsyncadd [#allocation14], %s115
      %s117 = sshll.u32 [#allocation15], 4
      %s118 = int_to_ptr.vmem [resolvable:$true] %s117
      %123 = dma.hbm_to_vmem [thread:$0]  %s11, 32, %s118, [#allocation14], 16, 16, 1
    $region49: #{transformer3_forward.1} parent=1 // pred_fallthru
      _
    // Predicated region
    $region50: #{transformer3_forward.1} parent=1 // pred_check
      _
    $region51: #{transformer3_forward.1} parent=1 // pred_check_branch
      %125 = sbr.rel (0) target = $region53
    $region52: #{transformer3_forward.1} parent=1 // pred_region
      %s127 = ssub.s32 32, 32
      %128 = vsyncadd [#allocation17], %s127
      %s129 = sshll.u32 [#allocation16], 4
      %s130 = int_to_ptr.vmem [resolvable:$true] %s129
      %135 = dma.hbm_to_vmem [thread:$0]  %s12, 32, %s130, [#allocation17], 16, 16, 1
    $region53: #{transformer3_forward.1} parent=1 // pred_fallthru
      _
    // Predicated region
    $region54: #{transformer3_forward.1} parent=1 // pred_check
      _
    $region55: #{transformer3_forward.1} parent=1 // pred_check_branch
      %137 = sbr.rel (0) target = $region57
    $region56: #{transformer3_forward.1} parent=1 // pred_region
      %s139 = ssub.s32 32, 32
      %140 = vsyncadd [#allocation17], %s139
      %s141 = sshll.u32 [#allocation18], 4
      %s142 = int_to_ptr.vmem [resolvable:$true] %s141
      %147 = dma.hbm_to_vmem [thread:$0]  %s13, 32, %s142, [#allocation17], 16, 16, 1
    $region57: #{transformer3_forward.1} parent=1 // pred_fallthru
      _
    // Predicated region
    $region58: #{transformer3_forward.1} parent=1 // pred_check
      _
    $region59: #{transformer3_forward.1} parent=1 // pred_check_branch
      %149 = sbr.rel (0) target = $region61
    $region60: #{transformer3_forward.1} parent=1 // pred_region
      %s151 = ssub.s32 32, 32
      %152 = vsyncadd [#allocation20], %s151
      %s153 = sshll.u32 [#allocation19], 4
      %s154 = int_to_ptr.vmem [resolvable:$true] %s153
      %159 = dma.hbm_to_vmem [thread:$0]  %s14, 32, %s154, [#allocation20], 16, 16, 1
    $region61: #{transformer3_forward.1} parent=1 // pred_fallthru
      _
    // Predicated region
    $region62: #{transformer3_forward.1} parent=1 // pred_check
      _
    $region63: #{transformer3_forward.1} parent=1 // pred_check_branch
      %161 = sbr.rel (0) target = $region65
    $region64: #{transformer3_forward.1} parent=1 // pred_region
      %s163 = ssub.s32 32, 32
      %164 = vsyncadd [#allocation20], %s163
      %s165 = sshll.u32 [#allocation21], 4
      %s166 = int_to_ptr.vmem [resolvable:$true] %s165
      %171 = dma.hbm_to_vmem [thread:$0]  %s15, 32, %s166, [#allocation20], 16, 16, 1
    $region65: #{transformer3_forward.1} parent=1 // pred_fallthru
      _
    // Predicated region
    $region66: #{transformer3_forward.1} parent=1 // pred_check
      _
    $region67: #{transformer3_forward.1} parent=1 // pred_check_branch
      %173 = sbr.rel (0) target = $region69
    $region68: #{transformer3_forward.1} parent=1 // pred_region
      %s175 = ssub.s32 32, 32
      %176 = vsyncadd [#allocation23], %s175
      %s177 = sshll.u32 [#allocation22], 4
      %s178 = int_to_ptr.vmem [resolvable:$true] %s177
      %183 = dma.hbm_to_vmem [thread:$0]  %s16, 32, %s178, [#allocation23], 16, 16, 1
    $region69: #{transformer3_forward.1} parent=1 // pred_fallthru
      _
    // Predicated region
    $region70: #{transformer3_forward.1} parent=1 // pred_check
      _
    $region71: #{transformer3_forward.1} parent=1 // pred_check_branch
      %185 = sbr.rel (0) target = $region73
    $region72: #{transformer3_forward.1} parent=1 // pred_region
      _
    $region73: #{transformer3_forward.1} parent=1 // pred_fallthru
      _
    // Predicated region
    $region74: #{transformer3_forward.1} parent=1 // pred_check
      _
    $region75: #{transformer3_forward.1} parent=1 // pred_check_branch
      %187 = sbr.rel (0) target = $region77
    $region76: #{transformer3_forward.1} parent=1 // pred_region
      %s189 = ssub.s32 32, 32
      %190 = vsyncadd [#allocation23], %s189
      %s191 = sshll.u32 [#allocation24], 4
      %s192 = int_to_ptr.vmem [resolvable:$true] %s191
      %197 = dma.hbm_to_vmem [thread:$0]  %s20, 32, %s192, [#allocation23], 16, 16, 1
    $region77: #{transformer3_forward.1} parent=1 // pred_fallthru
      _
    // Predicated region
    $region78: #{transformer3_forward.1} parent=1 // pred_check
      _
    $region79: #{transformer3_forward.1} parent=1 // pred_check_branch
      %199 = sbr.rel (0) target = $region81
    $region80: #{transformer3_forward.1} parent=1 // pred_region
      %s201 = ssub.s32 512, 512
      %202 = vsyncadd [#allocation26], %s201
      %s203 = sshll.u32 [#allocation25], 4
      %s204 = int_to_ptr.vmem [resolvable:$true] %s203
      %209 = dma.hbm_to_vmem [thread:$0]  %s21, 512, %s204, [#allocation26], 128, 128, 8
    $region81: #{transformer3_forward.1} parent=1 // pred_fallthru
      _
    // Predicated region
    $region82: #{transformer3_forward.1} parent=1 // pred_check
      _
    $region83: #{transformer3_forward.1} parent=1 // pred_check_branch
      %211 = sbr.rel (0) target = $region85
    $region84: #{transformer3_forward.1} parent=1 // pred_region
      %s213 = ssub.s32 16, 16
      %214 = vsyncadd [#allocation26], %s213
      %s216 = sshll.u32 [#allocation27], 4
      %s217 = int_to_ptr.vmem [resolvable:$true] %s216
      %219 = dma.hbm_to_vmem [thread:$0]  %s22, 16, %s217, [#allocation26]
    $region85: #{transformer3_forward.1} parent=1 // pred_fallthru
      _
    // Predicated region
    $region86: #{transformer3_forward.1} parent=1 // pred_check
      _
    $region87: #{transformer3_forward.1} parent=1 // pred_check_branch
      %221 = sbr.rel (0) target = $region89
    $region88: #{transformer3_forward.1} parent=1 // pred_region
      %222 = dma.done [#allocation6], 64
    $region89: #{transformer3_forward.1} parent=1 // pred_fallthru
      _
    // Predicated region
    $region90: #{transformer3_forward.1} parent=1 // pred_check
      _
    $region91: #{transformer3_forward.1} parent=1 // pred_check_branch
      %224 = sbr.rel (0) target = $region93
    $region92: #{transformer3_forward.1} parent=1 // pred_region
      %225 = dma.done [#allocation8], 16
    $region93: #{transformer3_forward.1} parent=1 // pred_fallthru
      _
    // Predicated region
    $region94: #{transformer3_forward.1} parent=1 // pred_check
      _
    $region95: #{transformer3_forward.1} parent=1 // pred_check_branch
      %227 = sbr.rel (0) target = $region97
    $region96: #{transformer3_forward.1} parent=1 // pred_region
      %228 = dma.done [#allocation8], 16
    $region97: #{transformer3_forward.1} parent=1 // pred_fallthru
      _
    // Predicated region
    $region98: #{transformer3_forward.1} parent=1 // pred_check
      _
    $region99: #{transformer3_forward.1} parent=1 // pred_check_branch
      %230 = sbr.rel (0) target = $region101
    $region100: #{transformer3_forward.1} parent=1 // pred_region
      %231 = dma.done [#allocation11], 32
    $region101: #{transformer3_forward.1} parent=1 // pred_fallthru
      _
    // Predicated region
    $region102: #{transformer3_forward.1} parent=1 // pred_check
      _
    $region103: #{transformer3_forward.1} parent=1 // pred_check_branch
      %233 = sbr.rel (0) target = $region105
    $region104: #{transformer3_forward.1} parent=1 // pred_region
      %234 = dma.done [#allocation11], 32
    $region105: #{transformer3_forward.1} parent=1 // pred_fallthru
      _
    // Predicated region
    $region106: #{transformer3_forward.1} parent=1 // pred_check
      _
    $region107: #{transformer3_forward.1} parent=1 // pred_check_branch
      %236 = sbr.rel (0) target = $region109
    $region108: #{transformer3_forward.1} parent=1 // pred_region
      %237 = dma.done [#allocation14], 32
    $region109: #{transformer3_forward.1} parent=1 // pred_fallthru
      _
    // Predicated region
    $region110: #{transformer3_forward.1} parent=1 // pred_check
      _
    $region111: #{transformer3_forward.1} parent=1 // pred_check_branch
      %239 = sbr.rel (0) target = $region113
    $region112: #{transformer3_forward.1} parent=1 // pred_region
      %240 = dma.done [#allocation14], 32
    $region113: #{transformer3_forward.1} parent=1 // pred_fallthru
      _
    // Predicated region
    $region114: #{transformer3_forward.1} parent=1 // pred_check
      _
    $region115: #{transformer3_forward.1} parent=1 // pred_check_branch
      %242 = sbr.rel (0) target = $region117
    $region116: #{transformer3_forward.1} parent=1 // pred_region
      %243 = dma.done [#allocation17], 32
    $region117: #{transformer3_forward.1} parent=1 // pred_fallthru
      _
    // Predicated region
    $region118: #{transformer3_forward.1} parent=1 // pred_check
      _
    $region119: #{transformer3_forward.1} parent=1 // pred_check_branch
      %245 = sbr.rel (0) target = $region121
    $region120: #{transformer3_forward.1} parent=1 // pred_region
      %246 = dma.done [#allocation17], 32
    $region121: #{transformer3_forward.1} parent=1 // pred_fallthru
      _
    // Predicated region
    $region122: #{transformer3_forward.1} parent=1 // pred_check
      _
    $region123: #{transformer3_forward.1} parent=1 // pred_check_branch
      %248 = sbr.rel (0) target = $region125
    $region124: #{transformer3_forward.1} parent=1 // pred_region
      %249 = dma.done [#allocation20], 32
    $region125: #{transformer3_forward.1} parent=1 // pred_fallthru
      _
    // Predicated region
    $region126: #{transformer3_forward.1} parent=1 // pred_check
      _
    $region127: #{transformer3_forward.1} parent=1 // pred_check_branch
      %251 = sbr.rel (0) target = $region129
    $region128: #{transformer3_forward.1} parent=1 // pred_region
      %252 = dma.done [#allocation20], 32
    $region129: #{transformer3_forward.1} parent=1 // pred_fallthru
      _
    // Predicated region
    $region130: #{transformer3_forward.1} parent=1 // pred_check
      _
    $region131: #{transformer3_forward.1} parent=1 // pred_check_branch
      %254 = sbr.rel (0) target = $region133
    $region132: #{transformer3_forward.1} parent=1 // pred_region
      %255 = dma.done [#allocation23], 32
    $region133: #{transformer3_forward.1} parent=1 // pred_fallthru
      _
    // Predicated region
    $region134: #{transformer3_forward.1} parent=1 // pred_check
      _
    $region135: #{transformer3_forward.1} parent=1 // pred_check_branch
      %257 = sbr.rel (0) target = $region137
    $region136: #{transformer3_forward.1} parent=1 // pred_region
      %258 = dma.done [#allocation23], 32
    $region137: #{transformer3_forward.1} parent=1 // pred_fallthru
      _
    // Predicated region
    $region138: #{transformer3_forward.1} parent=1 // pred_check
      _
    $region139: #{transformer3_forward.1} parent=1 // pred_check_branch
      %260 = sbr.rel (0) target = $region141
    $region140: #{transformer3_forward.1} parent=1 // pred_region
      %261 = dma.done [#allocation26], 512
    $region141: #{transformer3_forward.1} parent=1 // pred_fallthru
      _
    // Predicated region
    $region142: #{transformer3_forward.1} parent=1 // pred_check
      _
    $region143: #{transformer3_forward.1} parent=1 // pred_check_branch
      %263 = sbr.rel (0) target = $region145
    $region144: #{transformer3_forward.1} parent=1 // pred_region
      %264 = dma.done [#allocation26], 16
    $region145: #{transformer3_forward.1} parent=1 // pred_fallthru
      _
    // Predicated region
    $region146: #{transformer3_forward.1} parent=1 // pred_check
      _
    $region147: #{transformer3_forward.1} parent=1 // pred_check_branch
      %267 = sbr.rel target = $region149
    $region148: #{transformer3_forward.1} parent=1 // pred_region
      %268 = sst [smem:[#allocation30]] [#allocation29]
      %269 = sst [smem:[#allocation31]] [#allocation28]
    $region149: #{transformer3_forward.1} parent=1 // pred_fallthru
      _
    %271 = shalt.err (0)
    %s273 = sshll.u32 [#allocation2], 4
    %s274 = int_to_ptr.vmem [resolvable:$true] %s273
    %276 = dma.hbm_to_vmem [thread:$0]  %s17, 4096, %s274, [#allocation4]
    %s277 = scalar_lea.sflag [#allocation4], 2
    // Predicated region
    $region150: #{transformer3_forward.1} parent=1 // pred_check
      _
    $region151: #{transformer3_forward.1} parent=1 // pred_check_branch
      %279 = sbr.rel target = $region153
    $region152: #{transformer3_forward.1} parent=1 // pred_region
      %280 = sst [smem:[#allocation30]] [#allocation33]
      %281 = sst [smem:[#allocation31]] [#allocation32]
    $region153: #{transformer3_forward.1} parent=1 // pred_fallthru
      _
    %283 = shalt.err (0)
    %s285 = sshll.u32 [#allocation3], 4
    %s286 = int_to_ptr.vmem [resolvable:$true] %s285
    %288 = dma.hbm_to_vmem [thread:$0]  %s19, 4096, %s286, %s277
    %v289 = vld [vmem:[#allocation7] sm:$0x1]
    %v290 = vld [vmem:[%s0] sm:$0xff]
    %v291 = vld [vmem:[%s0 + $0x8] sm:$0xff]
    %v292 = vld [vmem:[%s0 + $0x10] sm:$0x3]
    %v293 = vld [vmem:[#allocation5] sm:$0x1]
    %295 = vset.pattern.permute.xlu0 0
    %296 = vperm.xlu0 %295, %v290
    %v297 = vpop.permute.xlu0 %296
    %300 = vset.pattern.permute.xlu0 0
    %301 = vperm.xlu0 %300, %v291
    %v302 = vpop.permute.xlu0 %301
    %305 = vset.pattern.permute.xlu0 0
    %306 = vperm.xlu0 %305, %v292
    %v307 = vpop.permute.xlu0 %306
    %v309 = vlaneseq
    %v310 = vshrl.u32 %v309, 7
    %v311 = vsub.s32 0, %v310
    %v312 = vrot.slane %v293, %v311
    %v313 = vmul.f32 %v297, %v312
    %v314 = vmul.f32 %v302, %v312
    %v315 = vmul.f32 %v307, %v312
    %v317 = vlaneseq
    %v318 = vshrl.u32 %v317, 7
    %v319 = vsub.s32 0, %v318
    %v320 = vrot.slane %v289, %v319
    %v322 = vadd.f32 %v320, %v313
    %v323 = vadd.f32 %v320, %v314
    %v324 = vadd.f32 %v320, %v315
    %v325 = vld [vmem:[#allocation5 + $0x1] sm:$0x1]
    %326 = vset.pattern.permute.xlu0 1
    %327 = vperm.xlu0 %326, %v290
    %v328 = vpop.permute.xlu0 %327
    %330 = vset.pattern.permute.xlu0 1
    %331 = vperm.xlu0 %330, %v291
    %v332 = vpop.permute.xlu0 %331
    %334 = vset.pattern.permute.xlu0 1
    %335 = vperm.xlu0 %334, %v292
    %v336 = vpop.permute.xlu0 %335
    %v338 = vlaneseq
    %v339 = vshrl.u32 %v338, 7
    %v340 = vsub.s32 0, %v339
    %v341 = vrot.slane %v325, %v340
    %v342 = vmul.f32 %v328, %v341
    %v343 = vmul.f32 %v332, %v341
    %v344 = vmul.f32 %v336, %v341
    %v345 = vadd.f32 %v322, %v342
    %v346 = vadd.f32 %v323, %v343
    %v347 = vadd.f32 %v324, %v344
    %v348 = vld [vmem:[#allocation5 + $0x2] sm:$0x1]
    %349 = vset.pattern.permute.xlu0 2
    %350 = vperm.xlu0 %349, %v290
    %v351 = vpop.permute.xlu0 %350
    %353 = vset.pattern.permute.xlu0 2
    %354 = vperm.xlu0 %353, %v291
    %v355 = vpop.permute.xlu0 %354
    %357 = vset.pattern.permute.xlu0 2
    %358 = vperm.xlu0 %357, %v292
    %v359 = vpop.permute.xlu0 %358
    %v361 = vlaneseq
    %v362 = vshrl.u32 %v361, 7
    %v363 = vsub.s32 0, %v362
    %v364 = vrot.slane %v348, %v363
    %v365 = vmul.f32 %v351, %v364
    %v366 = vmul.f32 %v355, %v364
    %v367 = vmul.f32 %v359, %v364
    %v368 = vadd.f32 %v345, %v365
    %v369 = vadd.f32 %v346, %v366
    %v370 = vadd.f32 %v347, %v367
    %vm371 = vcmp.ge.f32.partialorder %v368, 0.0
    %vm372 = vcmp.ge.f32.partialorder %v369, 0.0
    %vm373 = vcmp.ge.f32.partialorder %v370, 0.0
    %v374 = vmul.f32 %v368, 0.01
    %v375 = vmul.f32 %v369, 0.01
    %v376 = vmul.f32 %v370, 0.01
    %v377 = vsel %vm371, %v368, %v374
    %v378 = vsel %vm372, %v369, %v375
    %v379 = vsel %vm373, %v370, %v376
    %v380 = vld [vmem:[%s4] sm:$0xff]
    %v381 = vld [vmem:[%s4 + $0x8] sm:$0xff]
    %v382 = vld [vmem:[%s4 + $0x10] sm:$0xff]
    %v383 = vld [vmem:[%s4 + $0x18] sm:$0xff]
    %v384 = vld [vmem:[#allocation9] sm:$0x1]
    %v386 = vlaneseq
    %v387 = vshrl.u32 %v386, 7
    %v388 = vsub.s32 0, %v387
    %v389 = vrot.slane %v384, %v388
    %vm391 = vcmask 261120
    %v393 = vsel %vm391, %v377, 0
    %v396 = vsel %vm391, %v378, 0
    %v399 = vsel %vm391, %v379, 0
    %401 = vmatprep.subr.mxu0 0.0
    %402 = vmatpush1.msra.mxu0 0.0
    %403 = vmatprep.subr.mxu0 0.0
    %404 = vmatpush1.msra.mxu0 0.0
    %405 = vmatprep.subr.mxu0 0.0
    %406 = vmatpush1.msra.mxu0 0.0
    %407 = vmatprep.subr.mxu0 0.0
    %408 = vmatpush1.msra.mxu0 0.0
    %409 = vmatprep.subr.mxu0 0.0
    %410 = vmatpush1.msra.mxu0 0.0
    %411 = vmatprep.subr.mxu0 0.0
    %412 = vmatpush1.msra.mxu0 0.0
    %413 = vmatprep.subr.mxu0 0.0
    %414 = vmatpush1.msra.mxu0 0.0
    %415 = vmatprep.subr.mxu0 0.0
    %416 = vmatpush1.msra.mxu0 0.0
    %417 = vmatprep.subr.mxu0 0.0
    %418 = vmatpush1.msra.mxu0 0.0
    %419 = vmatprep.subr.mxu0 0.0
    %420 = vmatpush1.msra.mxu0 0.0
    %421 = vmatprep.subr.mxu0 0.0
    %422 = vmatpush1.msra.mxu0 0.0
    %423 = vmatprep.subr.mxu0 0.0
    %424 = vmatpush1.msra.mxu0 0.0
    %425 = vmatprep.subr.mxu0 0.0
    %426 = vmatpush1.msra.mxu0 %v383
    %427 = vmatprep.subr.mxu0 0.0
    %428 = vmatpush1.msra.mxu0 %v382
    %429 = vmatprep.subr.mxu0 0.0
    %430 = vmatpush1.msra.mxu0 %v381
    %431 = vmatprep.subr.mxu0 0.0
    %432 = vmatpush1.msra.mxu0 %v380
    %433 = vmatprep.subr.mxu0 0.0
    %434 = vmatpush2.msra.mxu0 0.0
    %435 = vmatprep.subr.mxu0 0.0
    %436 = vmatpush2.msra.mxu0 0.0
    %437 = vmatprep.subr.mxu0 0.0
    %438 = vmatpush2.msra.mxu0 0.0
    %439 = vmatprep.subr.mxu0 0.0
    %440 = vmatpush2.msra.mxu0 0.0
    %441 = vmatprep.subr.mxu0 0.0
    %442 = vmatpush2.msra.mxu0 0.0
    %443 = vmatprep.subr.mxu0 0.0
    %444 = vmatpush2.msra.mxu0 0.0
    %445 = vmatprep.subr.mxu0 0.0
    %446 = vmatpush2.msra.mxu0 0.0
    %447 = vmatprep.subr.mxu0 0.0
    %448 = vmatpush2.msra.mxu0 0.0
    %449 = vmatprep.subr.mxu0 0.0
    %450 = vmatpush2.msra.mxu0 0.0
    %451 = vmatprep.subr.mxu0 0.0
    %452 = vmatpush2.msra.mxu0 0.0
    %453 = vmatprep.subr.mxu0 0.0
    %454 = vmatpush2.msra.mxu0 0.0
    %455 = vmatprep.subr.mxu0 0.0
    %456 = vmatpush2.msra.mxu0 0.0
    %457 = vmatprep.subr.mxu0 0.0
    %458 = vmatpush2.msra.mxu0 0.0
    %459 = vmatprep.subr.mxu0 0.0
    %460 = vmatpush2.msra.mxu0 0.0
    %461 = vmatprep.subr.mxu0 0.0
    %462 = vmatpush2.msra.mxu0 0.0
    %463 = vmatprep.subr.mxu0 0.0
    %464 = vmatpush2.msra.mxu0 0.0
    %465 = vmatprep.mubr.f32.mxu0 0.0
    %466 = vmatmul.mubr.f32.gmra.mxu0 %v393
    %v467 = vpop.f32.mrf.mxu0
    %v468 = vadd.f32 %v389, %v467
    %v469 = vpop.f32.mrf.mxu0
    %470 = vmatprep.mubr.f32.mxu0 0.0
    %471 = vmatmul.mubr.f32.gmra.mxu0 %v396
    %v472 = vpop.f32.mrf.mxu0
    %v473 = vadd.f32 %v389, %v472
    %v474 = vpop.f32.mrf.mxu0
    %475 = vmatprep.mubr.f32.mxu0 0.0
    %476 = vmatmul.mubr.f32.gmra.mxu0 %v399
    %v477 = vpop.f32.mrf.mxu0
    %v478 = vadd.f32 %v389, %v477
    %v479 = vpop.f32.mrf.mxu0
    %480 = vdwg.mxu0
    %v481 = vld [vmem:[%s1] sm:$0xff]
    %v482 = vld [vmem:[%s1 + $0x8] sm:$0xff]
    %v483 = vld [vmem:[%s1 + $0x10] sm:$0x3]
    %v484 = vadd.f32 %v468, %v481
    %v485 = vadd.f32 %v473, %v482
    %v486 = vadd.f32 %v478, %v483
    %v487 = vlaneseq
    %v488 = vshrl.u32 %v487, 7
    %v489 = vadd.s32 %v488, 8
    %v490 = vadd.s32 %v488, 16
    %v491 = vlaneseq
    %v492 = vand.u32 %v491, 127
    %vm493 = vcmp.ge.s32.totalorder %v488, 0
    %vm494 = vcmp.ge.s32.totalorder %v489, 0
    %vm495 = vcmp.ge.s32.totalorder %v490, 0
    %vm496 = vcmp.lt.s32.totalorder %v488, 9
    %vm497 = vcmp.lt.s32.totalorder %v489, 9
    %vm498 = vcmp.lt.s32.totalorder %v490, 9
    %vm499 = vmand %vm493, %vm496
    %vm500 = vmand %vm494, %vm497
    %vm501 = vmand %vm495, %vm498
    %vm502 = vcmp.ge.s32.totalorder %v492, 0
    %vm503 = vmand %vm499, %vm502
    %vm504 = vmand %vm500, %vm502
    %vm505 = vmand %vm501, %vm502
    %vm506 = vcmp.lt.s32.totalorder %v492, 9
    %vm507 = vmand %vm503, %vm506
    %vm508 = vmand %vm504, %vm506
    %vm509 = vmand %vm505, %vm506
    %vm510 = vcmp.ge.s32.totalorder %v488, 9
    %vm511 = vcmp.ge.s32.totalorder %v489, 9
    %vm512 = vcmp.ge.s32.totalorder %v490, 9
    %vm513 = vcmp.lt.s32.totalorder %v488, 18
    %vm514 = vcmp.lt.s32.totalorder %v489, 18
    %vm515 = vcmp.lt.s32.totalorder %v490, 18
    %vm516 = vmand %vm510, %vm513
    %vm517 = vmand %vm511, %vm514
    %vm518 = vmand %vm512, %vm515
    %vm519 = vcmp.ge.s32.totalorder %v492, 9
    %vm520 = vmand %vm516, %vm519
    %vm521 = vmand %vm517, %vm519
    %vm522 = vmand %vm518, %vm519
    %vm523 = vcmp.lt.s32.totalorder %v492, 18
    %vm524 = vmand %vm520, %vm523
    %vm525 = vmand %vm521, %vm523
    %vm526 = vmand %vm522, %vm523
    %vm527 = vmor %vm507, %vm524
    %vm528 = vmor %vm508, %vm525
    %vm529 = vmor %vm509, %vm526
    %vm530 = vcmp.le.s32.totalorder %v492, %v488
    %vm531 = vcmp.le.s32.totalorder %v492, %v489
    %vm532 = vcmp.le.s32.totalorder %v492, %v490
    %vm533 = vmand %vm527, %vm530
    %vm534 = vmand %vm528, %vm531
    %vm535 = vmand %vm529, %vm532
    %v536 = vsel %vm533, 0.0, -1e+09
    %v537 = vsel %vm534, 0.0, -1e+09
    %v538 = vsel %vm535, 0.0, -1e+09
    %v539 = vld [vmem:[%s6] sm:$0xff]
    %v540 = vld [vmem:[%s6 + $0x8] sm:$0xff]
    %v541 = vld [vmem:[%s6 + $0x10] sm:$0xff]
    %v542 = vld [vmem:[%s6 + $0x18] sm:$0xff]
    %v543 = vld [vmem:[#allocation10] sm:$0x1]
    %v545 = vlaneseq
    %v546 = vshrl.u32 %v545, 7
    %v547 = vsub.s32 0, %v546
    %v548 = vrot.slane %v543, %v547
    %v551 = vsel %vm391, %v484, 0
    %v554 = vsel %vm391, %v485, 0
    %v557 = vsel %vm391, %v486, 0
    %559 = vmatprep.subr.mxu0 0.0
    %560 = vmatpush1.msra.mxu0 0.0
    %561 = vmatprep.subr.mxu0 0.0
    %562 = vmatpush1.msra.mxu0 0.0
    %563 = vmatprep.subr.mxu0 0.0
    %564 = vmatpush1.msra.mxu0 0.0
    %565 = vmatprep.subr.mxu0 0.0
    %566 = vmatpush1.msra.mxu0 0.0
    %567 = vmatprep.subr.mxu0 0.0
    %568 = vmatpush1.msra.mxu0 0.0
    %569 = vmatprep.subr.mxu0 0.0
    %570 = vmatpush1.msra.mxu0 0.0
    %571 = vmatprep.subr.mxu0 0.0
    %572 = vmatpush1.msra.mxu0 0.0
    %573 = vmatprep.subr.mxu0 0.0
    %574 = vmatpush1.msra.mxu0 0.0
    %575 = vmatprep.subr.mxu0 0.0
    %576 = vmatpush1.msra.mxu0 0.0
    %577 = vmatprep.subr.mxu0 0.0
    %578 = vmatpush1.msra.mxu0 0.0
    %579 = vmatprep.subr.mxu0 0.0
    %580 = vmatpush1.msra.mxu0 0.0
    %581 = vmatprep.subr.mxu0 0.0
    %582 = vmatpush1.msra.mxu0 0.0
    %583 = vmatprep.subr.mxu0 0.0
    %584 = vmatpush1.msra.mxu0 %v542
    %585 = vmatprep.subr.mxu0 0.0
    %586 = vmatpush1.msra.mxu0 %v541
    %587 = vmatprep.subr.mxu0 0.0
    %588 = vmatpush1.msra.mxu0 %v540
    %589 = vmatprep.subr.mxu0 0.0
    %590 = vmatpush1.msra.mxu0 %v539
    %591 = vmatprep.subr.mxu0 0.0
    %592 = vmatpush2.msra.mxu0 0.0
    %593 = vmatprep.subr.mxu0 0.0
    %594 = vmatpush2.msra.mxu0 0.0
    %595 = vmatprep.subr.mxu0 0.0
    %596 = vmatpush2.msra.mxu0 0.0
    %597 = vmatprep.subr.mxu0 0.0
    %598 = vmatpush2.msra.mxu0 0.0
    %599 = vmatprep.subr.mxu0 0.0
    %600 = vmatpush2.msra.mxu0 0.0
    %601 = vmatprep.subr.mxu0 0.0
    %602 = vmatpush2.msra.mxu0 0.0
    %603 = vmatprep.subr.mxu0 0.0
    %604 = vmatpush2.msra.mxu0 0.0
    %605 = vmatprep.subr.mxu0 0.0
    %606 = vmatpush2.msra.mxu0 0.0
    %607 = vmatprep.subr.mxu0 0.0
    %608 = vmatpush2.msra.mxu0 0.0
    %609 = vmatprep.subr.mxu0 0.0
    %610 = vmatpush2.msra.mxu0 0.0
    %611 = vmatprep.subr.mxu0 0.0
    %612 = vmatpush2.msra.mxu0 0.0
    %613 = vmatprep.subr.mxu0 0.0
    %614 = vmatpush2.msra.mxu0 0.0
    %615 = vmatprep.subr.mxu0 0.0
    %616 = vmatpush2.msra.mxu0 0.0
    %617 = vmatprep.subr.mxu0 0.0
    %618 = vmatpush2.msra.mxu0 0.0
    %619 = vmatprep.subr.mxu0 0.0
    %620 = vmatpush2.msra.mxu0 0.0
    %621 = vmatprep.subr.mxu0 0.0
    %622 = vmatpush2.msra.mxu0 0.0
    %623 = vmatprep.mubr.f32.mxu0 0.0
    %624 = vmatmul.mubr.f32.gmra.mxu0 %v551
    %v625 = vpop.f32.mrf.mxu0
    %v626 = vadd.f32 %v548, %v625
    %v627 = vpop.f32.mrf.mxu0
    %628 = vmatprep.mubr.f32.mxu0 0.0
    %629 = vmatmul.mubr.f32.gmra.mxu0 %v554
    %v630 = vpop.f32.mrf.mxu0
    %v631 = vadd.f32 %v548, %v630
    %v632 = vpop.f32.mrf.mxu0
    %633 = vmatprep.mubr.f32.mxu0 0.0
    %634 = vmatmul.mubr.f32.gmra.mxu0 %v557
    %v635 = vpop.f32.mrf.mxu0
    %v636 = vadd.f32 %v548, %v635
    %v637 = vpop.f32.mrf.mxu0
    %638 = vdwg.mxu0
    %v639 = vld [vmem:[#allocation12] sm:$0x1]
    %643 = vrot.lane.b32.xlu0 %v626, 96
    %v644 = vpop.permute.xlu0 %643
    %645 = vrot.lane.b32.xlu0 %v631, 96
    %v646 = vpop.permute.xlu0 %645
    %647 = vrot.lane.b32.xlu0 %v636, 96
    %v648 = vpop.permute.xlu0 %647
    %vm649 = vcmask 64512
    %v650 = vsel %vm649, %v626, 0
    %v652 = vsel %vm649, %v631, 0
    %v654 = vsel %vm649, %v636, 0
    %v656 = vsel %vm649, %v644, 0
    %v658 = vsel %vm649, %v646, 0
    %v660 = vsel %vm649, %v648, 0
    %662 = vmatprep.subr.mxu0 0.0
    %663 = vmatpush1.xpose.msra.mxu0 0.0
    %664 = vmatprep.subr.mxu0 0.0
    %665 = vmatpush1.xpose.msra.mxu0 0.0
    %666 = vmatprep.subr.mxu0 0.0
    %667 = vmatpush1.xpose.msra.mxu0 0.0
    %668 = vmatprep.subr.mxu0 0.0
    %669 = vmatpush1.xpose.msra.mxu0 0.0
    %670 = vmatprep.subr.mxu0 0.0
    %671 = vmatpush1.xpose.msra.mxu0 0.0
    %672 = vmatprep.subr.mxu0 0.0
    %673 = vmatpush1.xpose.msra.mxu0 0.0
    %674 = vmatprep.subr.mxu0 0.0
    %675 = vmatpush1.xpose.msra.mxu0 0.0
    %676 = vmatprep.subr.mxu0 0.0
    %677 = vmatpush1.xpose.msra.mxu0 0.0
    %678 = vmatprep.subr.mxu0 0.0
    %679 = vmatpush1.xpose.msra.mxu0 0.0
    %680 = vmatprep.subr.mxu0 0.0
    %681 = vmatpush1.xpose.msra.mxu0 0.0
    %682 = vmatprep.subr.mxu0 0.0
    %683 = vmatpush1.xpose.msra.mxu0 0.0
    %684 = vmatprep.subr.mxu0 0.0
    %685 = vmatpush1.xpose.msra.mxu0 0.0
    %686 = vmatprep.subr.mxu0 0.0
    %687 = vmatpush1.xpose.msra.mxu0 0.0
    %688 = vmatprep.subr.mxu0 0.0
    %689 = vmatpush1.xpose.msra.mxu0 %v660
    %690 = vmatprep.subr.mxu0 0.0
    %691 = vmatpush1.xpose.msra.mxu0 %v658
    %692 = vmatprep.subr.mxu0 0.0
    %693 = vmatpush1.xpose.msra.mxu0 %v656
    %694 = vmatprep.subr.mxu0 0.0
    %695 = vmatpush2.xpose.msra.mxu0 0.0
    %696 = vmatprep.subr.mxu0 0.0
    %697 = vmatpush2.xpose.msra.mxu0 0.0
    %698 = vmatprep.subr.mxu0 0.0
    %699 = vmatpush2.xpose.msra.mxu0 0.0
    %700 = vmatprep.subr.mxu0 0.0
    %701 = vmatpush2.xpose.msra.mxu0 0.0
    %702 = vmatprep.subr.mxu0 0.0
    %703 = vmatpush2.xpose.msra.mxu0 0.0
    %704 = vmatprep.subr.mxu0 0.0
    %705 = vmatpush2.xpose.msra.mxu0 0.0
    %706 = vmatprep.subr.mxu0 0.0
    %707 = vmatpush2.xpose.msra.mxu0 0.0
    %708 = vmatprep.subr.mxu0 0.0
    %709 = vmatpush2.xpose.msra.mxu0 0.0
    %710 = vmatprep.subr.mxu0 0.0
    %711 = vmatpush2.xpose.msra.mxu0 0.0
    %712 = vmatprep.subr.mxu0 0.0
    %713 = vmatpush2.xpose.msra.mxu0 0.0
    %714 = vmatprep.subr.mxu0 0.0
    %715 = vmatpush2.xpose.msra.mxu0 0.0
    %716 = vmatprep.subr.mxu0 0.0
    %717 = vmatpush2.xpose.msra.mxu0 0.0
    %718 = vmatprep.subr.mxu0 0.0
    %719 = vmatpush2.xpose.msra.mxu0 0.0
    %720 = vmatprep.subr.mxu0 0.0
    %721 = vmatpush2.xpose.msra.mxu0 0.0
    %722 = vmatprep.subr.mxu0 0.0
    %723 = vmatpush2.xpose.msra.mxu0 0.0
    %724 = vmatprep.subr.mxu0 0.0
    %725 = vmatpush2.xpose.msra.mxu0 0.0
    %726 = vmatprep.mubr.f32.mxu0 0.0
    %727 = vmatmul.mubr.f32.gmra.mxu0 %v650
    %v728 = vpop.f32.mrf.mxu0
    %v729 = vadd.f32 0.0, %v728
    %v730 = vpop.f32.mrf.mxu0
    %731 = vmatprep.mubr.f32.mxu0 0.0
    %732 = vmatmul.mubr.f32.gmra.mxu0 %v652
    %v733 = vpop.f32.mrf.mxu0
    %v734 = vadd.f32 0.0, %v733
    %v735 = vpop.f32.mrf.mxu0
    %736 = vmatprep.mubr.f32.mxu0 0.0
    %737 = vmatmul.mubr.f32.gmra.mxu0 %v654
    %v738 = vpop.f32.mrf.mxu0
    %v739 = vadd.f32 0.0, %v738
    %v740 = vpop.f32.mrf.mxu0
    %741 = vdwg.mxu0
    %v742 = vmul.f32 %v729, 0.35355338
    %v743 = vmul.f32 %v734, 0.35355338
    %v744 = vmul.f32 %v739, 0.35355338
    %v745 = vadd.f32 %v742, %v536
    %v746 = vadd.f32 %v743, %v537
    %v747 = vadd.f32 %v744, %v538
    %vm748 = vcmask 146432
    %v749 = vsel %vm748, %v745, -inf
    %750 = vmax.xlane.f32.xlu0 %v749
    %v751 = vpop.xlane.xlu0 %750
    %v752 = vsel %vm748, %v746, -inf
    %753 = vmax.xlane.f32.xlu0 %v752
    %v754 = vpop.xlane.xlu0 %753
    %vm755 = vcmask 140288
    %v756 = vsel %vm755, %v747, -inf
    %757 = vmax.xlane.f32.xlu0 %v756
    %v758 = vpop.xlane.xlu0 %757
    %v759 = vsub.f32 %v745, %v751
    %v760 = vsub.f32 %v746, %v754
    %v761 = vsub.f32 %v747, %v758
    %v762 = vmul.f32 %v759, 1.442695
    %v763 = vpow.pop %v762
    %v764 = vmul.f32 %v760, 1.442695
    %v765 = vpow.pop %v764
    %v766 = vmul.f32 %v761, 1.442695
    %v767 = vpow.pop %v766
    %v768 = vsel %vm748, %v763, 0.0
    %769 = vadd.xlane.f32.xlu0 %v768
    %v770 = vpop.xlane.xlu0 %769
    %v771 = vsel %vm748, %v765, 0.0
    %772 = vadd.xlane.f32.xlu0 %v771
    %v773 = vpop.xlane.xlu0 %772
    %v774 = vsel %vm755, %v767, 0.0
    %775 = vadd.xlane.f32.xlu0 %v774
    %v776 = vpop.xlane.xlu0 %775
    %v777 = vrcp.pop %v770
    %v778 = vrcp.pop %v773
    %v779 = vrcp.pop %v776
    %v780 = vmul.f32 %v763, %v777
    %v781 = vmul.f32 %v765, %v778
    %v782 = vmul.f32 %v767, %v779
    %783 = vrot.lane.b32.xlu0 %v626, 64
    %v784 = vpop.permute.xlu0 %783
    %785 = vrot.lane.b32.xlu0 %v631, 64
    %v786 = vpop.permute.xlu0 %785
    %787 = vrot.lane.b32.xlu0 %v636, 64
    %v788 = vpop.permute.xlu0 %787
    %v792 = vsel %vm748, %v780, 0
    %v795 = vsel %vm748, %v781, 0
    %v798 = vsel %vm748, %v782, 0
    %vm800 = vcmask 1041408
    %v801 = vsel %vm800, %v788, 0
    %803 = vmatprep.subr.mxu0 0.0
    %804 = vmatpush1.msra.mxu0 0.0
    %805 = vmatprep.subr.mxu0 0.0
    %806 = vmatpush1.msra.mxu0 0.0
    %807 = vmatprep.subr.mxu0 0.0
    %808 = vmatpush1.msra.mxu0 0.0
    %809 = vmatprep.subr.mxu0 0.0
    %810 = vmatpush1.msra.mxu0 0.0
    %811 = vmatprep.subr.mxu0 0.0
    %812 = vmatpush1.msra.mxu0 0.0
    %813 = vmatprep.subr.mxu0 0.0
    %814 = vmatpush1.msra.mxu0 0.0
    %815 = vmatprep.subr.mxu0 0.0
    %816 = vmatpush1.msra.mxu0 0.0
    %817 = vmatprep.subr.mxu0 0.0
    %818 = vmatpush1.msra.mxu0 0.0
    %819 = vmatprep.subr.mxu0 0.0
    %820 = vmatpush1.msra.mxu0 0.0
    %821 = vmatprep.subr.mxu0 0.0
    %822 = vmatpush1.msra.mxu0 0.0
    %823 = vmatprep.subr.mxu0 0.0
    %824 = vmatpush1.msra.mxu0 0.0
    %825 = vmatprep.subr.mxu0 0.0
    %826 = vmatpush1.msra.mxu0 0.0
    %827 = vmatprep.subr.mxu0 0.0
    %828 = vmatpush1.msra.mxu0 0.0
    %829 = vmatprep.subr.mxu0 0.0
    %830 = vmatpush1.msra.mxu0 %v801
    %831 = vmatprep.subr.mxu0 0.0
    %832 = vmatpush1.msra.mxu0 %v786
    %833 = vmatprep.subr.mxu0 0.0
    %834 = vmatpush1.msra.mxu0 %v784
    %835 = vmatprep.subr.mxu0 0.0
    %836 = vmatpush2.msra.mxu0 0.0
    %837 = vmatprep.subr.mxu0 0.0
    %838 = vmatpush2.msra.mxu0 0.0
    %839 = vmatprep.subr.mxu0 0.0
    %840 = vmatpush2.msra.mxu0 0.0
    %841 = vmatprep.subr.mxu0 0.0
    %842 = vmatpush2.msra.mxu0 0.0
    %843 = vmatprep.subr.mxu0 0.0
    %844 = vmatpush2.msra.mxu0 0.0
    %845 = vmatprep.subr.mxu0 0.0
    %846 = vmatpush2.msra.mxu0 0.0
    %847 = vmatprep.subr.mxu0 0.0
    %848 = vmatpush2.msra.mxu0 0.0
    %849 = vmatprep.subr.mxu0 0.0
    %850 = vmatpush2.msra.mxu0 0.0
    %851 = vmatprep.subr.mxu0 0.0
    %852 = vmatpush2.msra.mxu0 0.0
    %853 = vmatprep.subr.mxu0 0.0
    %854 = vmatpush2.msra.mxu0 0.0
    %855 = vmatprep.subr.mxu0 0.0
    %856 = vmatpush2.msra.mxu0 0.0
    %857 = vmatprep.subr.mxu0 0.0
    %858 = vmatpush2.msra.mxu0 0.0
    %859 = vmatprep.subr.mxu0 0.0
    %860 = vmatpush2.msra.mxu0 0.0
    %861 = vmatprep.subr.mxu0 0.0
    %862 = vmatpush2.msra.mxu0 0.0
    %863 = vmatprep.subr.mxu0 0.0
    %864 = vmatpush2.msra.mxu0 0.0
    %865 = vmatprep.subr.mxu0 0.0
    %866 = vmatpush2.msra.mxu0 0.0
    %867 = vmatprep.mubr.f32.mxu0 0.0
    %868 = vmatmul.mubr.f32.gmra.mxu0 %v792
    %v869 = vpop.f32.mrf.mxu0
    %v870 = vadd.f32 0.0, %v869
    %v871 = vpop.f32.mrf.mxu0
    %872 = vmatprep.mubr.f32.mxu0 0.0
    %873 = vmatmul.mubr.f32.gmra.mxu0 %v795
    %v874 = vpop.f32.mrf.mxu0
    %v875 = vadd.f32 0.0, %v874
    %v876 = vpop.f32.mrf.mxu0
    %877 = vmatprep.mubr.f32.mxu0 0.0
    %878 = vmatmul.mubr.f32.gmra.mxu0 %v798
    %v879 = vpop.f32.mrf.mxu0
    %v880 = vadd.f32 0.0, %v879
    %v881 = vpop.f32.mrf.mxu0
    %882 = vdwg.mxu0
    %v883 = vld [vmem:[%s8] sm:$0xff]
    %v885 = vsel %vm649, %v870, 0
    %v888 = vsel %vm649, %v875, 0
    %v891 = vsel %vm649, %v880, 0
    %893 = vmatprep.subr.mxu0 0.0
    %894 = vmatpush1.msra.mxu0 0.0
    %895 = vmatprep.subr.mxu0 0.0
    %896 = vmatpush1.msra.mxu0 0.0
    %897 = vmatprep.subr.mxu0 0.0
    %898 = vmatpush1.msra.mxu0 0.0
    %899 = vmatprep.subr.mxu0 0.0
    %900 = vmatpush1.msra.mxu0 0.0
    %901 = vmatprep.subr.mxu0 0.0
    %902 = vmatpush1.msra.mxu0 0.0
    %903 = vmatprep.subr.mxu0 0.0
    %904 = vmatpush1.msra.mxu0 0.0
    %905 = vmatprep.subr.mxu0 0.0
    %906 = vmatpush1.msra.mxu0 0.0
    %907 = vmatprep.subr.mxu0 0.0
    %908 = vmatpush1.msra.mxu0 0.0
    %909 = vmatprep.subr.mxu0 0.0
    %910 = vmatpush1.msra.mxu0 0.0
    %911 = vmatprep.subr.mxu0 0.0
    %912 = vmatpush1.msra.mxu0 0.0
    %913 = vmatprep.subr.mxu0 0.0
    %914 = vmatpush1.msra.mxu0 0.0
    %915 = vmatprep.subr.mxu0 0.0
    %916 = vmatpush1.msra.mxu0 0.0
    %917 = vmatprep.subr.mxu0 0.0
    %918 = vmatpush1.msra.mxu0 0.0
    %919 = vmatprep.subr.mxu0 0.0
    %920 = vmatpush1.msra.mxu0 0.0
    %921 = vmatprep.subr.mxu0 0.0
    %922 = vmatpush1.msra.mxu0 0.0
    %923 = vmatprep.subr.mxu0 0.0
    %924 = vmatpush1.msra.mxu0 %v883
    %925 = vmatprep.subr.mxu0 0.0
    %926 = vmatpush2.msra.mxu0 0.0
    %927 = vmatprep.subr.mxu0 0.0
    %928 = vmatpush2.msra.mxu0 0.0
    %929 = vmatprep.subr.mxu0 0.0
    %930 = vmatpush2.msra.mxu0 0.0
    %931 = vmatprep.subr.mxu0 0.0
    %932 = vmatpush2.msra.mxu0 0.0
    %933 = vmatprep.subr.mxu0 0.0
    %934 = vmatpush2.msra.mxu0 0.0
    %935 = vmatprep.subr.mxu0 0.0
    %936 = vmatpush2.msra.mxu0 0.0
    %937 = vmatprep.subr.mxu0 0.0
    %938 = vmatpush2.msra.mxu0 0.0
    %939 = vmatprep.subr.mxu0 0.0
    %940 = vmatpush2.msra.mxu0 0.0
    %941 = vmatprep.subr.mxu0 0.0
    %942 = vmatpush2.msra.mxu0 0.0
    %943 = vmatprep.subr.mxu0 0.0
    %944 = vmatpush2.msra.mxu0 0.0
    %945 = vmatprep.subr.mxu0 0.0
    %946 = vmatpush2.msra.mxu0 0.0
    %947 = vmatprep.subr.mxu0 0.0
    %948 = vmatpush2.msra.mxu0 0.0
    %949 = vmatprep.subr.mxu0 0.0
    %950 = vmatpush2.msra.mxu0 0.0
    %951 = vmatprep.subr.mxu0 0.0
    %952 = vmatpush2.msra.mxu0 0.0
    %953 = vmatprep.subr.mxu0 0.0
    %954 = vmatpush2.msra.mxu0 0.0
    %955 = vmatprep.subr.mxu0 0.0
    %956 = vmatpush2.msra.mxu0 0.0
    %957 = vmatprep.mubr.f32.mxu0 0.0
    %958 = vmatmul.mubr.f32.gmra.mxu0 %v885
    %v959 = vpop.f32.mrf.mxu0
    %v960 = vadd.f32 0.0, %v959
    %v961 = vpop.f32.mrf.mxu0
    %962 = vmatprep.mubr.f32.mxu0 0.0
    %963 = vmatmul.mubr.f32.gmra.mxu0 %v888
    %v964 = vpop.f32.mrf.mxu0
    %v965 = vadd.f32 0.0, %v964
    %v966 = vpop.f32.mrf.mxu0
    %967 = vmatprep.mubr.f32.mxu0 0.0
    %968 = vmatmul.mubr.f32.gmra.mxu0 %v891
    %v969 = vpop.f32.mrf.mxu0
    %v970 = vadd.f32 0.0, %v969
    %v971 = vpop.f32.mrf.mxu0
    %972 = vdwg.mxu0
    %v974 = vlaneseq
    %v975 = vshrl.u32 %v974, 7
    %v976 = vsub.s32 0, %v975
    %v977 = vrot.slane %v639, %v976
    %v979 = vadd.f32 %v977, %v960
    %v980 = vadd.f32 %v977, %v965
    %v981 = vadd.f32 %v977, %v970
    %982 = vrot.lane.b32.xlu0 %v626, 120
    %v983 = vpop.permute.xlu0 %982
    %984 = vrot.lane.b32.xlu0 %v631, 120
    %v985 = vpop.permute.xlu0 %984
    %986 = vrot.lane.b32.xlu0 %v636, 120
    %v987 = vpop.permute.xlu0 %986
    %988 = vrot.lane.b32.xlu0 %v626, 88
    %v989 = vpop.permute.xlu0 %988
    %990 = vrot.lane.b32.xlu0 %v631, 88
    %v991 = vpop.permute.xlu0 %990
    %992 = vrot.lane.b32.xlu0 %v636, 88
    %v993 = vpop.permute.xlu0 %992
    %v994 = vsel %vm649, %v983, 0
    %v996 = vsel %vm649, %v985, 0
    %v998 = vsel %vm649, %v987, 0
    %v1000 = vsel %vm649, %v989, 0
    %v1002 = vsel %vm649, %v991, 0
    %v1004 = vsel %vm649, %v993, 0
    %1006 = vmatprep.subr.mxu0 0.0
    %1007 = vmatpush1.xpose.msra.mxu0 0.0
    %1008 = vmatprep.subr.mxu0 0.0
    %1009 = vmatpush1.xpose.msra.mxu0 0.0
    %1010 = vmatprep.subr.mxu0 0.0
    %1011 = vmatpush1.xpose.msra.mxu0 0.0
    %1012 = vmatprep.subr.mxu0 0.0
    %1013 = vmatpush1.xpose.msra.mxu0 0.0
    %1014 = vmatprep.subr.mxu0 0.0
    %1015 = vmatpush1.xpose.msra.mxu0 0.0
    %1016 = vmatprep.subr.mxu0 0.0
    %1017 = vmatpush1.xpose.msra.mxu0 0.0
    %1018 = vmatprep.subr.mxu0 0.0
    %1019 = vmatpush1.xpose.msra.mxu0 0.0
    %1020 = vmatprep.subr.mxu0 0.0
    %1021 = vmatpush1.xpose.msra.mxu0 0.0
    %1022 = vmatprep.subr.mxu0 0.0
    %1023 = vmatpush1.xpose.msra.mxu0 0.0
    %1024 = vmatprep.subr.mxu0 0.0
    %1025 = vmatpush1.xpose.msra.mxu0 0.0
    %1026 = vmatprep.subr.mxu0 0.0
    %1027 = vmatpush1.xpose.msra.mxu0 0.0
    %1028 = vmatprep.subr.mxu0 0.0
    %1029 = vmatpush1.xpose.msra.mxu0 0.0
    %1030 = vmatprep.subr.mxu0 0.0
    %1031 = vmatpush1.xpose.msra.mxu0 0.0
    %1032 = vmatprep.subr.mxu0 0.0
    %1033 = vmatpush1.xpose.msra.mxu0 %v1004
    %1034 = vmatprep.subr.mxu0 0.0
    %1035 = vmatpush1.xpose.msra.mxu0 %v1002
    %1036 = vmatprep.subr.mxu0 0.0
    %1037 = vmatpush1.xpose.msra.mxu0 %v1000
    %1038 = vmatprep.subr.mxu0 0.0
    %1039 = vmatpush2.xpose.msra.mxu0 0.0
    %1040 = vmatprep.subr.mxu0 0.0
    %1041 = vmatpush2.xpose.msra.mxu0 0.0
    %1042 = vmatprep.subr.mxu0 0.0
    %1043 = vmatpush2.xpose.msra.mxu0 0.0
    %1044 = vmatprep.subr.mxu0 0.0
    %1045 = vmatpush2.xpose.msra.mxu0 0.0
    %1046 = vmatprep.subr.mxu0 0.0
    %1047 = vmatpush2.xpose.msra.mxu0 0.0
    %1048 = vmatprep.subr.mxu0 0.0
    %1049 = vmatpush2.xpose.msra.mxu0 0.0
    %1050 = vmatprep.subr.mxu0 0.0
    %1051 = vmatpush2.xpose.msra.mxu0 0.0
    %1052 = vmatprep.subr.mxu0 0.0
    %1053 = vmatpush2.xpose.msra.mxu0 0.0
    %1054 = vmatprep.subr.mxu0 0.0
    %1055 = vmatpush2.xpose.msra.mxu0 0.0
    %1056 = vmatprep.subr.mxu0 0.0
    %1057 = vmatpush2.xpose.msra.mxu0 0.0
    %1058 = vmatprep.subr.mxu0 0.0
    %1059 = vmatpush2.xpose.msra.mxu0 0.0
    %1060 = vmatprep.subr.mxu0 0.0
    %1061 = vmatpush2.xpose.msra.mxu0 0.0
    %1062 = vmatprep.subr.mxu0 0.0
    %1063 = vmatpush2.xpose.msra.mxu0 0.0
    %1064 = vmatprep.subr.mxu0 0.0
    %1065 = vmatpush2.xpose.msra.mxu0 0.0
    %1066 = vmatprep.subr.mxu0 0.0
    %1067 = vmatpush2.xpose.msra.mxu0 0.0
    %1068 = vmatprep.subr.mxu0 0.0
    %1069 = vmatpush2.xpose.msra.mxu0 0.0
    %1070 = vmatprep.mubr.f32.mxu0 0.0
    %1071 = vmatmul.mubr.f32.gmra.mxu0 %v994
    %v1072 = vpop.f32.mrf.mxu0
    %v1073 = vadd.f32 0.0, %v1072
    %v1074 = vpop.f32.mrf.mxu0
    %1075 = vmatprep.mubr.f32.mxu0 0.0
    %1076 = vmatmul.mubr.f32.gmra.mxu0 %v996
    %v1077 = vpop.f32.mrf.mxu0
    %v1078 = vadd.f32 0.0, %v1077
    %v1079 = vpop.f32.mrf.mxu0
    %1080 = vmatprep.mubr.f32.mxu0 0.0
    %1081 = vmatmul.mubr.f32.gmra.mxu0 %v998
    %v1082 = vpop.f32.mrf.mxu0
    %v1083 = vadd.f32 0.0, %v1082
    %v1084 = vpop.f32.mrf.mxu0
    %1085 = vdwg.mxu0
    %v1086 = vmul.f32 %v1073, 0.35355338
    %v1087 = vmul.f32 %v1078, 0.35355338
    %v1088 = vmul.f32 %v1083, 0.35355338
    %v1089 = vadd.f32 %v1086, %v536
    %v1090 = vadd.f32 %v1087, %v537
    %v1091 = vadd.f32 %v1088, %v538
    %v1092 = vsel %vm748, %v1089, -inf
    %1093 = vmax.xlane.f32.xlu0 %v1092
    %v1094 = vpop.xlane.xlu0 %1093
    %v1095 = vsel %vm748, %v1090, -inf
    %1096 = vmax.xlane.f32.xlu0 %v1095
    %v1097 = vpop.xlane.xlu0 %1096
    %v1098 = vsel %vm755, %v1091, -inf
    %1099 = vmax.xlane.f32.xlu0 %v1098
    %v1100 = vpop.xlane.xlu0 %1099
    %v1101 = vsub.f32 %v1089, %v1094
    %v1102 = vsub.f32 %v1090, %v1097
    %v1103 = vsub.f32 %v1091, %v1100
    %v1104 = vmul.f32 %v1101, 1.442695
    %v1105 = vpow.pop %v1104
    %v1106 = vmul.f32 %v1102, 1.442695
    %v1107 = vpow.pop %v1106
    %v1108 = vmul.f32 %v1103, 1.442695
    %v1109 = vpow.pop %v1108
    %v1110 = vsel %vm748, %v1105, 0.0
    %1111 = vadd.xlane.f32.xlu0 %v1110
    %v1112 = vpop.xlane.xlu0 %1111
    %v1113 = vsel %vm748, %v1107, 0.0
    %1114 = vadd.xlane.f32.xlu0 %v1113
    %v1115 = vpop.xlane.xlu0 %1114
    %v1116 = vsel %vm755, %v1109, 0.0
    %1117 = vadd.xlane.f32.xlu0 %v1116
    %v1118 = vpop.xlane.xlu0 %1117
    %v1119 = vrcp.pop %v1112
    %v1120 = vrcp.pop %v1115
    %v1121 = vrcp.pop %v1118
    %v1122 = vmul.f32 %v1105, %v1119
    %v1123 = vmul.f32 %v1107, %v1120
    %v1124 = vmul.f32 %v1109, %v1121
    %1125 = vrot.lane.b32.xlu0 %v626, 56
    %v1126 = vpop.permute.xlu0 %1125
    %1127 = vrot.lane.b32.xlu0 %v631, 56
    %v1128 = vpop.permute.xlu0 %1127
    %1129 = vrot.lane.b32.xlu0 %v636, 56
    %v1130 = vpop.permute.xlu0 %1129
    %v1134 = vsel %vm748, %v1122, 0
    %v1137 = vsel %vm748, %v1123, 0
    %v1140 = vsel %vm748, %v1124, 0
    %v1142 = vsel %vm800, %v1130, 0
    %1144 = vmatprep.subr.mxu0 0.0
    %1145 = vmatpush1.msra.mxu0 0.0
    %1146 = vmatprep.subr.mxu0 0.0
    %1147 = vmatpush1.msra.mxu0 0.0
    %1148 = vmatprep.subr.mxu0 0.0
    %1149 = vmatpush1.msra.mxu0 0.0
    %1150 = vmatprep.subr.mxu0 0.0
    %1151 = vmatpush1.msra.mxu0 0.0
    %1152 = vmatprep.subr.mxu0 0.0
    %1153 = vmatpush1.msra.mxu0 0.0
    %1154 = vmatprep.subr.mxu0 0.0
    %1155 = vmatpush1.msra.mxu0 0.0
    %1156 = vmatprep.subr.mxu0 0.0
    %1157 = vmatpush1.msra.mxu0 0.0
    %1158 = vmatprep.subr.mxu0 0.0
    %1159 = vmatpush1.msra.mxu0 0.0
    %1160 = vmatprep.subr.mxu0 0.0
    %1161 = vmatpush1.msra.mxu0 0.0
    %1162 = vmatprep.subr.mxu0 0.0
    %1163 = vmatpush1.msra.mxu0 0.0
    %1164 = vmatprep.subr.mxu0 0.0
    %1165 = vmatpush1.msra.mxu0 0.0
    %1166 = vmatprep.subr.mxu0 0.0
    %1167 = vmatpush1.msra.mxu0 0.0
    %1168 = vmatprep.subr.mxu0 0.0
    %1169 = vmatpush1.msra.mxu0 0.0
    %1170 = vmatprep.subr.mxu0 0.0
    %1171 = vmatpush1.msra.mxu0 %v1142
    %1172 = vmatprep.subr.mxu0 0.0
    %1173 = vmatpush1.msra.mxu0 %v1128
    %1174 = vmatprep.subr.mxu0 0.0
    %1175 = vmatpush1.msra.mxu0 %v1126
    %1176 = vmatprep.subr.mxu0 0.0
    %1177 = vmatpush2.msra.mxu0 0.0
    %1178 = vmatprep.subr.mxu0 0.0
    %1179 = vmatpush2.msra.mxu0 0.0
    %1180 = vmatprep.subr.mxu0 0.0
    %1181 = vmatpush2.msra.mxu0 0.0
    %1182 = vmatprep.subr.mxu0 0.0
    %1183 = vmatpush2.msra.mxu0 0.0
    %1184 = vmatprep.subr.mxu0 0.0
    %1185 = vmatpush2.msra.mxu0 0.0
    %1186 = vmatprep.subr.mxu0 0.0
    %1187 = vmatpush2.msra.mxu0 0.0
    %1188 = vmatprep.subr.mxu0 0.0
    %1189 = vmatpush2.msra.mxu0 0.0
    %1190 = vmatprep.subr.mxu0 0.0
    %1191 = vmatpush2.msra.mxu0 0.0
    %1192 = vmatprep.subr.mxu0 0.0
    %1193 = vmatpush2.msra.mxu0 0.0
    %1194 = vmatprep.subr.mxu0 0.0
    %1195 = vmatpush2.msra.mxu0 0.0
    %1196 = vmatprep.subr.mxu0 0.0
    %1197 = vmatpush2.msra.mxu0 0.0
    %1198 = vmatprep.subr.mxu0 0.0
    %1199 = vmatpush2.msra.mxu0 0.0
    %1200 = vmatprep.subr.mxu0 0.0
    %1201 = vmatpush2.msra.mxu0 0.0
    %1202 = vmatprep.subr.mxu0 0.0
    %1203 = vmatpush2.msra.mxu0 0.0
    %1204 = vmatprep.subr.mxu0 0.0
    %1205 = vmatpush2.msra.mxu0 0.0
    %1206 = vmatprep.subr.mxu0 0.0
    %1207 = vmatpush2.msra.mxu0 0.0
    %1208 = vmatprep.mubr.f32.mxu0 0.0
    %1209 = vmatmul.mubr.f32.gmra.mxu0 %v1134
    %v1210 = vpop.f32.mrf.mxu0
    %v1211 = vadd.f32 0.0, %v1210
    %v1212 = vpop.f32.mrf.mxu0
    %1213 = vmatprep.mubr.f32.mxu0 0.0
    %1214 = vmatmul.mubr.f32.gmra.mxu0 %v1137
    %v1215 = vpop.f32.mrf.mxu0
    %v1216 = vadd.f32 0.0, %v1215
    %v1217 = vpop.f32.mrf.mxu0
    %1218 = vmatprep.mubr.f32.mxu0 0.0
    %1219 = vmatmul.mubr.f32.gmra.mxu0 %v1140
    %v1220 = vpop.f32.mrf.mxu0
    %v1221 = vadd.f32 0.0, %v1220
    %v1222 = vpop.f32.mrf.mxu0
    %1223 = vdwg.mxu0
    %v1224 = vld [vmem:[%s8 + $0x8] sm:$0xff]
    %v1226 = vsel %vm649, %v1211, 0
    %v1229 = vsel %vm649, %v1216, 0
    %v1232 = vsel %vm649, %v1221, 0
    %1234 = vmatprep.subr.mxu0 0.0
    %1235 = vmatpush1.msra.mxu0 0.0
    %1236 = vmatprep.subr.mxu0 0.0
    %1237 = vmatpush1.msra.mxu0 0.0
    %1238 = vmatprep.subr.mxu0 0.0
    %1239 = vmatpush1.msra.mxu0 0.0
    %1240 = vmatprep.subr.mxu0 0.0
    %1241 = vmatpush1.msra.mxu0 0.0
    %1242 = vmatprep.subr.mxu0 0.0
    %1243 = vmatpush1.msra.mxu0 0.0
    %1244 = vmatprep.subr.mxu0 0.0
    %1245 = vmatpush1.msra.mxu0 0.0
    %1246 = vmatprep.subr.mxu0 0.0
    %1247 = vmatpush1.msra.mxu0 0.0
    %1248 = vmatprep.subr.mxu0 0.0
    %1249 = vmatpush1.msra.mxu0 0.0
    %1250 = vmatprep.subr.mxu0 0.0
    %1251 = vmatpush1.msra.mxu0 0.0
    %1252 = vmatprep.subr.mxu0 0.0
    %1253 = vmatpush1.msra.mxu0 0.0
    %1254 = vmatprep.subr.mxu0 0.0
    %1255 = vmatpush1.msra.mxu0 0.0
    %1256 = vmatprep.subr.mxu0 0.0
    %1257 = vmatpush1.msra.mxu0 0.0
    %1258 = vmatprep.subr.mxu0 0.0
    %1259 = vmatpush1.msra.mxu0 0.0
    %1260 = vmatprep.subr.mxu0 0.0
    %1261 = vmatpush1.msra.mxu0 0.0
    %1262 = vmatprep.subr.mxu0 0.0
    %1263 = vmatpush1.msra.mxu0 0.0
    %1264 = vmatprep.subr.mxu0 0.0
    %1265 = vmatpush1.msra.mxu0 %v1224
    %1266 = vmatprep.subr.mxu0 0.0
    %1267 = vmatpush2.msra.mxu0 0.0
    %1268 = vmatprep.subr.mxu0 0.0
    %1269 = vmatpush2.msra.mxu0 0.0
    %1270 = vmatprep.subr.mxu0 0.0
    %1271 = vmatpush2.msra.mxu0 0.0
    %1272 = vmatprep.subr.mxu0 0.0
    %1273 = vmatpush2.msra.mxu0 0.0
    %1274 = vmatprep.subr.mxu0 0.0
    %1275 = vmatpush2.msra.mxu0 0.0
    %1276 = vmatprep.subr.mxu0 0.0
    %1277 = vmatpush2.msra.mxu0 0.0
    %1278 = vmatprep.subr.mxu0 0.0
    %1279 = vmatpush2.msra.mxu0 0.0
    %1280 = vmatprep.subr.mxu0 0.0
    %1281 = vmatpush2.msra.mxu0 0.0
    %1282 = vmatprep.subr.mxu0 0.0
    %1283 = vmatpush2.msra.mxu0 0.0
    %1284 = vmatprep.subr.mxu0 0.0
    %1285 = vmatpush2.msra.mxu0 0.0
    %1286 = vmatprep.subr.mxu0 0.0
    %1287 = vmatpush2.msra.mxu0 0.0
    %1288 = vmatprep.subr.mxu0 0.0
    %1289 = vmatpush2.msra.mxu0 0.0
    %1290 = vmatprep.subr.mxu0 0.0
    %1291 = vmatpush2.msra.mxu0 0.0
    %1292 = vmatprep.subr.mxu0 0.0
    %1293 = vmatpush2.msra.mxu0 0.0
    %1294 = vmatprep.subr.mxu0 0.0
    %1295 = vmatpush2.msra.mxu0 0.0
    %1296 = vmatprep.subr.mxu0 0.0
    %1297 = vmatpush2.msra.mxu0 0.0
    %1298 = vmatprep.mubr.f32.mxu0 0.0
    %1299 = vmatmul.mubr.f32.gmra.mxu0 %v1226
    %v1300 = vpop.f32.mrf.mxu0
    %v1301 = vadd.f32 0.0, %v1300
    %v1302 = vpop.f32.mrf.mxu0
    %1303 = vmatprep.mubr.f32.mxu0 0.0
    %1304 = vmatmul.mubr.f32.gmra.mxu0 %v1229
    %v1305 = vpop.f32.mrf.mxu0
    %v1306 = vadd.f32 0.0, %v1305
    %v1307 = vpop.f32.mrf.mxu0
    %1308 = vmatprep.mubr.f32.mxu0 0.0
    %1309 = vmatmul.mubr.f32.gmra.mxu0 %v1232
    %v1310 = vpop.f32.mrf.mxu0
    %v1311 = vadd.f32 0.0, %v1310
    %v1312 = vpop.f32.mrf.mxu0
    %1313 = vdwg.mxu0
    %v1314 = vadd.f32 %v979, %v1301
    %v1315 = vadd.f32 %v980, %v1306
    %v1316 = vadd.f32 %v981, %v1311
    %1317 = vrot.lane.b32.xlu0 %v626, 112
    %v1318 = vpop.permute.xlu0 %1317
    %1319 = vrot.lane.b32.xlu0 %v631, 112
    %v1320 = vpop.permute.xlu0 %1319
    %1321 = vrot.lane.b32.xlu0 %v636, 112
    %v1322 = vpop.permute.xlu0 %1321
    %1323 = vrot.lane.b32.xlu0 %v626, 80
    %v1324 = vpop.permute.xlu0 %1323
    %1325 = vrot.lane.b32.xlu0 %v631, 80
    %v1326 = vpop.permute.xlu0 %1325
    %1327 = vrot.lane.b32.xlu0 %v636, 80
    %v1328 = vpop.permute.xlu0 %1327
    %v1329 = vsel %vm649, %v1318, 0
    %v1331 = vsel %vm649, %v1320, 0
    %v1333 = vsel %vm649, %v1322, 0
    %v1335 = vsel %vm649, %v1324, 0
    %v1337 = vsel %vm649, %v1326, 0
    %v1339 = vsel %vm649, %v1328, 0
    %1341 = vmatprep.subr.mxu0 0.0
    %1342 = vmatpush1.xpose.msra.mxu0 0.0
    %1343 = vmatprep.subr.mxu0 0.0
    %1344 = vmatpush1.xpose.msra.mxu0 0.0
    %1345 = vmatprep.subr.mxu0 0.0
    %1346 = vmatpush1.xpose.msra.mxu0 0.0
    %1347 = vmatprep.subr.mxu0 0.0
    %1348 = vmatpush1.xpose.msra.mxu0 0.0
    %1349 = vmatprep.subr.mxu0 0.0
    %1350 = vmatpush1.xpose.msra.mxu0 0.0
    %1351 = vmatprep.subr.mxu0 0.0
    %1352 = vmatpush1.xpose.msra.mxu0 0.0
    %1353 = vmatprep.subr.mxu0 0.0
    %1354 = vmatpush1.xpose.msra.mxu0 0.0
    %1355 = vmatprep.subr.mxu0 0.0
    %1356 = vmatpush1.xpose.msra.mxu0 0.0
    %1357 = vmatprep.subr.mxu0 0.0
    %1358 = vmatpush1.xpose.msra.mxu0 0.0
    %1359 = vmatprep.subr.mxu0 0.0
    %1360 = vmatpush1.xpose.msra.mxu0 0.0
    %1361 = vmatprep.subr.mxu0 0.0
    %1362 = vmatpush1.xpose.msra.mxu0 0.0
    %1363 = vmatprep.subr.mxu0 0.0
    %1364 = vmatpush1.xpose.msra.mxu0 0.0
    %1365 = vmatprep.subr.mxu0 0.0
    %1366 = vmatpush1.xpose.msra.mxu0 0.0
    %1367 = vmatprep.subr.mxu0 0.0
    %1368 = vmatpush1.xpose.msra.mxu0 %v1339
    %1369 = vmatprep.subr.mxu0 0.0
    %1370 = vmatpush1.xpose.msra.mxu0 %v1337
    %1371 = vmatprep.subr.mxu0 0.0
    %1372 = vmatpush1.xpose.msra.mxu0 %v1335
    %1373 = vmatprep.subr.mxu0 0.0
    %1374 = vmatpush2.xpose.msra.mxu0 0.0
    %1375 = vmatprep.subr.mxu0 0.0
    %1376 = vmatpush2.xpose.msra.mxu0 0.0
    %1377 = vmatprep.subr.mxu0 0.0
    %1378 = vmatpush2.xpose.msra.mxu0 0.0
    %1379 = vmatprep.subr.mxu0 0.0
    %1380 = vmatpush2.xpose.msra.mxu0 0.0
    %1381 = vmatprep.subr.mxu0 0.0
    %1382 = vmatpush2.xpose.msra.mxu0 0.0
    %1383 = vmatprep.subr.mxu0 0.0
    %1384 = vmatpush2.xpose.msra.mxu0 0.0
    %1385 = vmatprep.subr.mxu0 0.0
    %1386 = vmatpush2.xpose.msra.mxu0 0.0
    %1387 = vmatprep.subr.mxu0 0.0
    %1388 = vmatpush2.xpose.msra.mxu0 0.0
    %1389 = vmatprep.subr.mxu0 0.0
    %1390 = vmatpush2.xpose.msra.mxu0 0.0
    %1391 = vmatprep.subr.mxu0 0.0
    %1392 = vmatpush2.xpose.msra.mxu0 0.0
    %1393 = vmatprep.subr.mxu0 0.0
    %1394 = vmatpush2.xpose.msra.mxu0 0.0
    %1395 = vmatprep.subr.mxu0 0.0
    %1396 = vmatpush2.xpose.msra.mxu0 0.0
    %1397 = vmatprep.subr.mxu0 0.0
    %1398 = vmatpush2.xpose.msra.mxu0 0.0
    %1399 = vmatprep.subr.mxu0 0.0
    %1400 = vmatpush2.xpose.msra.mxu0 0.0
    %1401 = vmatprep.subr.mxu0 0.0
    %1402 = vmatpush2.xpose.msra.mxu0 0.0
    %1403 = vmatprep.subr.mxu0 0.0
    %1404 = vmatpush2.xpose.msra.mxu0 0.0
    %1405 = vmatprep.mubr.f32.mxu0 0.0
    %1406 = vmatmul.mubr.f32.gmra.mxu0 %v1329
    %v1407 = vpop.f32.mrf.mxu0
    %v1408 = vadd.f32 0.0, %v1407
    %v1409 = vpop.f32.mrf.mxu0
    %1410 = vmatprep.mubr.f32.mxu0 0.0
    %1411 = vmatmul.mubr.f32.gmra.mxu0 %v1331
    %v1412 = vpop.f32.mrf.mxu0
    %v1413 = vadd.f32 0.0, %v1412
    %v1414 = vpop.f32.mrf.mxu0
    %1415 = vmatprep.mubr.f32.mxu0 0.0
    %1416 = vmatmul.mubr.f32.gmra.mxu0 %v1333
    %v1417 = vpop.f32.mrf.mxu0
    %v1418 = vadd.f32 0.0, %v1417
    %v1419 = vpop.f32.mrf.mxu0
    %1420 = vdwg.mxu0
    %v1421 = vmul.f32 %v1408, 0.35355338
    %v1422 = vmul.f32 %v1413, 0.35355338
    %v1423 = vmul.f32 %v1418, 0.35355338
    %v1424 = vadd.f32 %v1421, %v536
    %v1425 = vadd.f32 %v1422, %v537
    %v1426 = vadd.f32 %v1423, %v538
    %v1427 = vsel %vm748, %v1424, -inf
    %1428 = vmax.xlane.f32.xlu0 %v1427
    %v1429 = vpop.xlane.xlu0 %1428
    %v1430 = vsel %vm748, %v1425, -inf
    %1431 = vmax.xlane.f32.xlu0 %v1430
    %v1432 = vpop.xlane.xlu0 %1431
    %v1433 = vsel %vm755, %v1426, -inf
    %1434 = vmax.xlane.f32.xlu0 %v1433
    %v1435 = vpop.xlane.xlu0 %1434
    %v1436 = vsub.f32 %v1424, %v1429
    %v1437 = vsub.f32 %v1425, %v1432
    %v1438 = vsub.f32 %v1426, %v1435
    %v1439 = vmul.f32 %v1436, 1.442695
    %v1440 = vpow.pop %v1439
    %v1441 = vmul.f32 %v1437, 1.442695
    %v1442 = vpow.pop %v1441
    %v1443 = vmul.f32 %v1438, 1.442695
    %v1444 = vpow.pop %v1443
    %v1445 = vsel %vm748, %v1440, 0.0
    %1446 = vadd.xlane.f32.xlu0 %v1445
    %v1447 = vpop.xlane.xlu0 %1446
    %v1448 = vsel %vm748, %v1442, 0.0
    %1449 = vadd.xlane.f32.xlu0 %v1448
    %v1450 = vpop.xlane.xlu0 %1449
    %v1451 = vsel %vm755, %v1444, 0.0
    %1452 = vadd.xlane.f32.xlu0 %v1451
    %v1453 = vpop.xlane.xlu0 %1452
    %v1454 = vrcp.pop %v1447
    %v1455 = vrcp.pop %v1450
    %v1456 = vrcp.pop %v1453
    %v1457 = vmul.f32 %v1440, %v1454
    %v1458 = vmul.f32 %v1442, %v1455
    %v1459 = vmul.f32 %v1444, %v1456
    %1460 = vrot.lane.b32.xlu0 %v626, 48
    %v1461 = vpop.permute.xlu0 %1460
    %1462 = vrot.lane.b32.xlu0 %v631, 48
    %v1463 = vpop.permute.xlu0 %1462
    %1464 = vrot.lane.b32.xlu0 %v636, 48
    %v1465 = vpop.permute.xlu0 %1464
    %v1469 = vsel %vm748, %v1457, 0
    %v1472 = vsel %vm748, %v1458, 0
    %v1475 = vsel %vm748, %v1459, 0
    %v1477 = vsel %vm800, %v1465, 0
    %1479 = vmatprep.subr.mxu0 0.0
    %1480 = vmatpush1.msra.mxu0 0.0
    %1481 = vmatprep.subr.mxu0 0.0
    %1482 = vmatpush1.msra.mxu0 0.0
    %1483 = vmatprep.subr.mxu0 0.0
    %1484 = vmatpush1.msra.mxu0 0.0
    %1485 = vmatprep.subr.mxu0 0.0
    %1486 = vmatpush1.msra.mxu0 0.0
    %1487 = vmatprep.subr.mxu0 0.0
    %1488 = vmatpush1.msra.mxu0 0.0
    %1489 = vmatprep.subr.mxu0 0.0
    %1490 = vmatpush1.msra.mxu0 0.0
    %1491 = vmatprep.subr.mxu0 0.0
    %1492 = vmatpush1.msra.mxu0 0.0
    %1493 = vmatprep.subr.mxu0 0.0
    %1494 = vmatpush1.msra.mxu0 0.0
    %1495 = vmatprep.subr.mxu0 0.0
    %1496 = vmatpush1.msra.mxu0 0.0
    %1497 = vmatprep.subr.mxu0 0.0
    %1498 = vmatpush1.msra.mxu0 0.0
    %1499 = vmatprep.subr.mxu0 0.0
    %1500 = vmatpush1.msra.mxu0 0.0
    %1501 = vmatprep.subr.mxu0 0.0
    %1502 = vmatpush1.msra.mxu0 0.0
    %1503 = vmatprep.subr.mxu0 0.0
    %1504 = vmatpush1.msra.mxu0 0.0
    %1505 = vmatprep.subr.mxu0 0.0
    %1506 = vmatpush1.msra.mxu0 %v1477
    %1507 = vmatprep.subr.mxu0 0.0
    %1508 = vmatpush1.msra.mxu0 %v1463
    %1509 = vmatprep.subr.mxu0 0.0
    %1510 = vmatpush1.msra.mxu0 %v1461
    %1511 = vmatprep.subr.mxu0 0.0
    %1512 = vmatpush2.msra.mxu0 0.0
    %1513 = vmatprep.subr.mxu0 0.0
    %1514 = vmatpush2.msra.mxu0 0.0
    %1515 = vmatprep.subr.mxu0 0.0
    %1516 = vmatpush2.msra.mxu0 0.0
    %1517 = vmatprep.subr.mxu0 0.0
    %1518 = vmatpush2.msra.mxu0 0.0
    %1519 = vmatprep.subr.mxu0 0.0
    %1520 = vmatpush2.msra.mxu0 0.0
    %1521 = vmatprep.subr.mxu0 0.0
    %1522 = vmatpush2.msra.mxu0 0.0
    %1523 = vmatprep.subr.mxu0 0.0
    %1524 = vmatpush2.msra.mxu0 0.0
    %1525 = vmatprep.subr.mxu0 0.0
    %1526 = vmatpush2.msra.mxu0 0.0
    %1527 = vmatprep.subr.mxu0 0.0
    %1528 = vmatpush2.msra.mxu0 0.0
    %1529 = vmatprep.subr.mxu0 0.0
    %1530 = vmatpush2.msra.mxu0 0.0
    %1531 = vmatprep.subr.mxu0 0.0
    %1532 = vmatpush2.msra.mxu0 0.0
    %1533 = vmatprep.subr.mxu0 0.0
    %1534 = vmatpush2.msra.mxu0 0.0
    %1535 = vmatprep.subr.mxu0 0.0
    %1536 = vmatpush2.msra.mxu0 0.0
    %1537 = vmatprep.subr.mxu0 0.0
    %1538 = vmatpush2.msra.mxu0 0.0
    %1539 = vmatprep.subr.mxu0 0.0
    %1540 = vmatpush2.msra.mxu0 0.0
    %1541 = vmatprep.subr.mxu0 0.0
    %1542 = vmatpush2.msra.mxu0 0.0
    %1543 = vmatprep.mubr.f32.mxu0 0.0
    %1544 = vmatmul.mubr.f32.gmra.mxu0 %v1469
    %v1545 = vpop.f32.mrf.mxu0
    %v1546 = vadd.f32 0.0, %v1545
    %v1547 = vpop.f32.mrf.mxu0
    %1548 = vmatprep.mubr.f32.mxu0 0.0
    %1549 = vmatmul.mubr.f32.gmra.mxu0 %v1472
    %v1550 = vpop.f32.mrf.mxu0
    %v1551 = vadd.f32 0.0, %v1550
    %v1552 = vpop.f32.mrf.mxu0
    %1553 = vmatprep.mubr.f32.mxu0 0.0
    %1554 = vmatmul.mubr.f32.gmra.mxu0 %v1475
    %v1555 = vpop.f32.mrf.mxu0
    %v1556 = vadd.f32 0.0, %v1555
    %v1557 = vpop.f32.mrf.mxu0
    %1558 = vdwg.mxu0
    %v1559 = vld [vmem:[%s8 + $0x10] sm:$0xff]
    %v1561 = vsel %vm649, %v1546, 0
    %v1564 = vsel %vm649, %v1551, 0
    %v1567 = vsel %vm649, %v1556, 0
    %1569 = vmatprep.subr.mxu0 0.0
    %1570 = vmatpush1.msra.mxu0 0.0
    %1571 = vmatprep.subr.mxu0 0.0
    %1572 = vmatpush1.msra.mxu0 0.0
    %1573 = vmatprep.subr.mxu0 0.0
    %1574 = vmatpush1.msra.mxu0 0.0
    %1575 = vmatprep.subr.mxu0 0.0
    %1576 = vmatpush1.msra.mxu0 0.0
    %1577 = vmatprep.subr.mxu0 0.0
    %1578 = vmatpush1.msra.mxu0 0.0
    %1579 = vmatprep.subr.mxu0 0.0
    %1580 = vmatpush1.msra.mxu0 0.0
    %1581 = vmatprep.subr.mxu0 0.0
    %1582 = vmatpush1.msra.mxu0 0.0
    %1583 = vmatprep.subr.mxu0 0.0
    %1584 = vmatpush1.msra.mxu0 0.0
    %1585 = vmatprep.subr.mxu0 0.0
    %1586 = vmatpush1.msra.mxu0 0.0
    %1587 = vmatprep.subr.mxu0 0.0
    %1588 = vmatpush1.msra.mxu0 0.0
    %1589 = vmatprep.subr.mxu0 0.0
    %1590 = vmatpush1.msra.mxu0 0.0
    %1591 = vmatprep.subr.mxu0 0.0
    %1592 = vmatpush1.msra.mxu0 0.0
    %1593 = vmatprep.subr.mxu0 0.0
    %1594 = vmatpush1.msra.mxu0 0.0
    %1595 = vmatprep.subr.mxu0 0.0
    %1596 = vmatpush1.msra.mxu0 0.0
    %1597 = vmatprep.subr.mxu0 0.0
    %1598 = vmatpush1.msra.mxu0 0.0
    %1599 = vmatprep.subr.mxu0 0.0
    %1600 = vmatpush1.msra.mxu0 %v1559
    %1601 = vmatprep.subr.mxu0 0.0
    %1602 = vmatpush2.msra.mxu0 0.0
    %1603 = vmatprep.subr.mxu0 0.0
    %1604 = vmatpush2.msra.mxu0 0.0
    %1605 = vmatprep.subr.mxu0 0.0
    %1606 = vmatpush2.msra.mxu0 0.0
    %1607 = vmatprep.subr.mxu0 0.0
    %1608 = vmatpush2.msra.mxu0 0.0
    %1609 = vmatprep.subr.mxu0 0.0
    %1610 = vmatpush2.msra.mxu0 0.0
    %1611 = vmatprep.subr.mxu0 0.0
    %1612 = vmatpush2.msra.mxu0 0.0
    %1613 = vmatprep.subr.mxu0 0.0
    %1614 = vmatpush2.msra.mxu0 0.0
    %1615 = vmatprep.subr.mxu0 0.0
    %1616 = vmatpush2.msra.mxu0 0.0
    %1617 = vmatprep.subr.mxu0 0.0
    %1618 = vmatpush2.msra.mxu0 0.0
    %1619 = vmatprep.subr.mxu0 0.0
    %1620 = vmatpush2.msra.mxu0 0.0
    %1621 = vmatprep.subr.mxu0 0.0
    %1622 = vmatpush2.msra.mxu0 0.0
    %1623 = vmatprep.subr.mxu0 0.0
    %1624 = vmatpush2.msra.mxu0 0.0
    %1625 = vmatprep.subr.mxu0 0.0
    %1626 = vmatpush2.msra.mxu0 0.0
    %1627 = vmatprep.subr.mxu0 0.0
    %1628 = vmatpush2.msra.mxu0 0.0
    %1629 = vmatprep.subr.mxu0 0.0
    %1630 = vmatpush2.msra.mxu0 0.0
    %1631 = vmatprep.subr.mxu0 0.0
    %1632 = vmatpush2.msra.mxu0 0.0
    %1633 = vmatprep.mubr.f32.mxu0 0.0
    %1634 = vmatmul.mubr.f32.gmra.mxu0 %v1561
    %v1635 = vpop.f32.mrf.mxu0
    %v1636 = vadd.f32 0.0, %v1635
    %v1637 = vpop.f32.mrf.mxu0
    %1638 = vmatprep.mubr.f32.mxu0 0.0
    %1639 = vmatmul.mubr.f32.gmra.mxu0 %v1564
    %v1640 = vpop.f32.mrf.mxu0
    %v1641 = vadd.f32 0.0, %v1640
    %v1642 = vpop.f32.mrf.mxu0
    %1643 = vmatprep.mubr.f32.mxu0 0.0
    %1644 = vmatmul.mubr.f32.gmra.mxu0 %v1567
    %v1645 = vpop.f32.mrf.mxu0
    %v1646 = vadd.f32 0.0, %v1645
    %v1647 = vpop.f32.mrf.mxu0
    %1648 = vdwg.mxu0
    %v1649 = vadd.f32 %v1314, %v1636
    %v1650 = vadd.f32 %v1315, %v1641
    %v1651 = vadd.f32 %v1316, %v1646
    %1652 = vrot.lane.b32.xlu0 %v626, 104
    %v1653 = vpop.permute.xlu0 %1652
    %1654 = vrot.lane.b32.xlu0 %v631, 104
    %v1655 = vpop.permute.xlu0 %1654
    %1656 = vrot.lane.b32.xlu0 %v636, 104
    %v1657 = vpop.permute.xlu0 %1656
    %1658 = vrot.lane.b32.xlu0 %v626, 72
    %v1659 = vpop.permute.xlu0 %1658
    %1660 = vrot.lane.b32.xlu0 %v631, 72
    %v1661 = vpop.permute.xlu0 %1660
    %1662 = vrot.lane.b32.xlu0 %v636, 72
    %v1663 = vpop.permute.xlu0 %1662
    %v1664 = vsel %vm649, %v1653, 0
    %v1666 = vsel %vm649, %v1655, 0
    %v1668 = vsel %vm649, %v1657, 0
    %v1670 = vsel %vm649, %v1659, 0
    %v1672 = vsel %vm649, %v1661, 0
    %v1674 = vsel %vm649, %v1663, 0
    %1676 = vmatprep.subr.mxu0 0.0
    %1677 = vmatpush1.xpose.msra.mxu0 0.0
    %1678 = vmatprep.subr.mxu0 0.0
    %1679 = vmatpush1.xpose.msra.mxu0 0.0
    %1680 = vmatprep.subr.mxu0 0.0
    %1681 = vmatpush1.xpose.msra.mxu0 0.0
    %1682 = vmatprep.subr.mxu0 0.0
    %1683 = vmatpush1.xpose.msra.mxu0 0.0
    %1684 = vmatprep.subr.mxu0 0.0
    %1685 = vmatpush1.xpose.msra.mxu0 0.0
    %1686 = vmatprep.subr.mxu0 0.0
    %1687 = vmatpush1.xpose.msra.mxu0 0.0
    %1688 = vmatprep.subr.mxu0 0.0
    %1689 = vmatpush1.xpose.msra.mxu0 0.0
    %1690 = vmatprep.subr.mxu0 0.0
    %1691 = vmatpush1.xpose.msra.mxu0 0.0
    %1692 = vmatprep.subr.mxu0 0.0
    %1693 = vmatpush1.xpose.msra.mxu0 0.0
    %1694 = vmatprep.subr.mxu0 0.0
    %1695 = vmatpush1.xpose.msra.mxu0 0.0
    %1696 = vmatprep.subr.mxu0 0.0
    %1697 = vmatpush1.xpose.msra.mxu0 0.0
    %1698 = vmatprep.subr.mxu0 0.0
    %1699 = vmatpush1.xpose.msra.mxu0 0.0
    %1700 = vmatprep.subr.mxu0 0.0
    %1701 = vmatpush1.xpose.msra.mxu0 0.0
    %1702 = vmatprep.subr.mxu0 0.0
    %1703 = vmatpush1.xpose.msra.mxu0 %v1674
    %1704 = vmatprep.subr.mxu0 0.0
    %1705 = vmatpush1.xpose.msra.mxu0 %v1672
    %1706 = vmatprep.subr.mxu0 0.0
    %1707 = vmatpush1.xpose.msra.mxu0 %v1670
    %1708 = vmatprep.subr.mxu0 0.0
    %1709 = vmatpush2.xpose.msra.mxu0 0.0
    %1710 = vmatprep.subr.mxu0 0.0
    %1711 = vmatpush2.xpose.msra.mxu0 0.0
    %1712 = vmatprep.subr.mxu0 0.0
    %1713 = vmatpush2.xpose.msra.mxu0 0.0
    %1714 = vmatprep.subr.mxu0 0.0
    %1715 = vmatpush2.xpose.msra.mxu0 0.0
    %1716 = vmatprep.subr.mxu0 0.0
    %1717 = vmatpush2.xpose.msra.mxu0 0.0
    %1718 = vmatprep.subr.mxu0 0.0
    %1719 = vmatpush2.xpose.msra.mxu0 0.0
    %1720 = vmatprep.subr.mxu0 0.0
    %1721 = vmatpush2.xpose.msra.mxu0 0.0
    %1722 = vmatprep.subr.mxu0 0.0
    %1723 = vmatpush2.xpose.msra.mxu0 0.0
    %1724 = vmatprep.subr.mxu0 0.0
    %1725 = vmatpush2.xpose.msra.mxu0 0.0
    %1726 = vmatprep.subr.mxu0 0.0
    %1727 = vmatpush2.xpose.msra.mxu0 0.0
    %1728 = vmatprep.subr.mxu0 0.0
    %1729 = vmatpush2.xpose.msra.mxu0 0.0
    %1730 = vmatprep.subr.mxu0 0.0
    %1731 = vmatpush2.xpose.msra.mxu0 0.0
    %1732 = vmatprep.subr.mxu0 0.0
    %1733 = vmatpush2.xpose.msra.mxu0 0.0
    %1734 = vmatprep.subr.mxu0 0.0
    %1735 = vmatpush2.xpose.msra.mxu0 0.0
    %1736 = vmatprep.subr.mxu0 0.0
    %1737 = vmatpush2.xpose.msra.mxu0 0.0
    %1738 = vmatprep.subr.mxu0 0.0
    %1739 = vmatpush2.xpose.msra.mxu0 0.0
    %1740 = vmatprep.mubr.f32.mxu0 0.0
    %1741 = vmatmul.mubr.f32.gmra.mxu0 %v1664
    %v1742 = vpop.f32.mrf.mxu0
    %v1743 = vadd.f32 0.0, %v1742
    %v1744 = vpop.f32.mrf.mxu0
    %1745 = vmatprep.mubr.f32.mxu0 0.0
    %1746 = vmatmul.mubr.f32.gmra.mxu0 %v1666
    %v1747 = vpop.f32.mrf.mxu0
    %v1748 = vadd.f32 0.0, %v1747
    %v1749 = vpop.f32.mrf.mxu0
    %1750 = vmatprep.mubr.f32.mxu0 0.0
    %1751 = vmatmul.mubr.f32.gmra.mxu0 %v1668
    %v1752 = vpop.f32.mrf.mxu0
    %v1753 = vadd.f32 0.0, %v1752
    %v1754 = vpop.f32.mrf.mxu0
    %1755 = vdwg.mxu0
    %v1756 = vmul.f32 %v1743, 0.35355338
    %v1757 = vmul.f32 %v1748, 0.35355338
    %v1758 = vmul.f32 %v1753, 0.35355338
    %v1759 = vadd.f32 %v1756, %v536
    %v1760 = vadd.f32 %v1757, %v537
    %v1761 = vadd.f32 %v1758, %v538
    %v1762 = vsel %vm748, %v1759, -inf
    %1763 = vmax.xlane.f32.xlu0 %v1762
    %v1764 = vpop.xlane.xlu0 %1763
    %v1765 = vsel %vm748, %v1760, -inf
    %1766 = vmax.xlane.f32.xlu0 %v1765
    %v1767 = vpop.xlane.xlu0 %1766
    %v1768 = vsel %vm755, %v1761, -inf
    %1769 = vmax.xlane.f32.xlu0 %v1768
    %v1770 = vpop.xlane.xlu0 %1769
    %v1771 = vsub.f32 %v1759, %v1764
    %v1772 = vsub.f32 %v1760, %v1767
    %v1773 = vsub.f32 %v1761, %v1770
    %v1774 = vmul.f32 %v1771, 1.442695
    %v1775 = vpow.pop %v1774
    %v1776 = vmul.f32 %v1772, 1.442695
    %v1777 = vpow.pop %v1776
    %v1778 = vmul.f32 %v1773, 1.442695
    %v1779 = vpow.pop %v1778
    %v1780 = vsel %vm748, %v1775, 0.0
    %1781 = vadd.xlane.f32.xlu0 %v1780
    %v1782 = vpop.xlane.xlu0 %1781
    %v1783 = vsel %vm748, %v1777, 0.0
    %1784 = vadd.xlane.f32.xlu0 %v1783
    %v1785 = vpop.xlane.xlu0 %1784
    %v1786 = vsel %vm755, %v1779, 0.0
    %1787 = vadd.xlane.f32.xlu0 %v1786
    %v1788 = vpop.xlane.xlu0 %1787
    %v1789 = vrcp.pop %v1782
    %v1790 = vrcp.pop %v1785
    %v1791 = vrcp.pop %v1788
    %v1792 = vmul.f32 %v1775, %v1789
    %v1793 = vmul.f32 %v1777, %v1790
    %v1794 = vmul.f32 %v1779, %v1791
    %1795 = vrot.lane.b32.xlu0 %v626, 40
    %v1796 = vpop.permute.xlu0 %1795
    %1797 = vrot.lane.b32.xlu0 %v631, 40
    %v1798 = vpop.permute.xlu0 %1797
    %1799 = vrot.lane.b32.xlu0 %v636, 40
    %v1800 = vpop.permute.xlu0 %1799
    %v1804 = vsel %vm748, %v1792, 0
    %v1807 = vsel %vm748, %v1793, 0
    %v1810 = vsel %vm748, %v1794, 0
    %v1812 = vsel %vm800, %v1800, 0
    %1814 = vmatprep.subr.mxu0 0.0
    %1815 = vmatpush1.msra.mxu0 0.0
    %1816 = vmatprep.subr.mxu0 0.0
    %1817 = vmatpush1.msra.mxu0 0.0
    %1818 = vmatprep.subr.mxu0 0.0
    %1819 = vmatpush1.msra.mxu0 0.0
    %1820 = vmatprep.subr.mxu0 0.0
    %1821 = vmatpush1.msra.mxu0 0.0
    %1822 = vmatprep.subr.mxu0 0.0
    %1823 = vmatpush1.msra.mxu0 0.0
    %1824 = vmatprep.subr.mxu0 0.0
    %1825 = vmatpush1.msra.mxu0 0.0
    %1826 = vmatprep.subr.mxu0 0.0
    %1827 = vmatpush1.msra.mxu0 0.0
    %1828 = vmatprep.subr.mxu0 0.0
    %1829 = vmatpush1.msra.mxu0 0.0
    %1830 = vmatprep.subr.mxu0 0.0
    %1831 = vmatpush1.msra.mxu0 0.0
    %1832 = vmatprep.subr.mxu0 0.0
    %1833 = vmatpush1.msra.mxu0 0.0
    %1834 = vmatprep.subr.mxu0 0.0
    %1835 = vmatpush1.msra.mxu0 0.0
    %1836 = vmatprep.subr.mxu0 0.0
    %1837 = vmatpush1.msra.mxu0 0.0
    %1838 = vmatprep.subr.mxu0 0.0
    %1839 = vmatpush1.msra.mxu0 0.0
    %1840 = vmatprep.subr.mxu0 0.0
    %1841 = vmatpush1.msra.mxu0 %v1812
    %1842 = vmatprep.subr.mxu0 0.0
    %1843 = vmatpush1.msra.mxu0 %v1798
    %1844 = vmatprep.subr.mxu0 0.0
    %1845 = vmatpush1.msra.mxu0 %v1796
    %1846 = vmatprep.subr.mxu0 0.0
    %1847 = vmatpush2.msra.mxu0 0.0
    %1848 = vmatprep.subr.mxu0 0.0
    %1849 = vmatpush2.msra.mxu0 0.0
    %1850 = vmatprep.subr.mxu0 0.0
    %1851 = vmatpush2.msra.mxu0 0.0
    %1852 = vmatprep.subr.mxu0 0.0
    %1853 = vmatpush2.msra.mxu0 0.0
    %1854 = vmatprep.subr.mxu0 0.0
    %1855 = vmatpush2.msra.mxu0 0.0
    %1856 = vmatprep.subr.mxu0 0.0
    %1857 = vmatpush2.msra.mxu0 0.0
    %1858 = vmatprep.subr.mxu0 0.0
    %1859 = vmatpush2.msra.mxu0 0.0
    %1860 = vmatprep.subr.mxu0 0.0
    %1861 = vmatpush2.msra.mxu0 0.0
    %1862 = vmatprep.subr.mxu0 0.0
    %1863 = vmatpush2.msra.mxu0 0.0
    %1864 = vmatprep.subr.mxu0 0.0
    %1865 = vmatpush2.msra.mxu0 0.0
    %1866 = vmatprep.subr.mxu0 0.0
    %1867 = vmatpush2.msra.mxu0 0.0
    %1868 = vmatprep.subr.mxu0 0.0
    %1869 = vmatpush2.msra.mxu0 0.0
    %1870 = vmatprep.subr.mxu0 0.0
    %1871 = vmatpush2.msra.mxu0 0.0
    %1872 = vmatprep.subr.mxu0 0.0
    %1873 = vmatpush2.msra.mxu0 0.0
    %1874 = vmatprep.subr.mxu0 0.0
    %1875 = vmatpush2.msra.mxu0 0.0
    %1876 = vmatprep.subr.mxu0 0.0
    %1877 = vmatpush2.msra.mxu0 0.0
    %1878 = vmatprep.mubr.f32.mxu0 0.0
    %1879 = vmatmul.mubr.f32.gmra.mxu0 %v1804
    %v1880 = vpop.f32.mrf.mxu0
    %v1881 = vadd.f32 0.0, %v1880
    %v1882 = vpop.f32.mrf.mxu0
    %1883 = vmatprep.mubr.f32.mxu0 0.0
    %1884 = vmatmul.mubr.f32.gmra.mxu0 %v1807
    %v1885 = vpop.f32.mrf.mxu0
    %v1886 = vadd.f32 0.0, %v1885
    %v1887 = vpop.f32.mrf.mxu0
    %1888 = vmatprep.mubr.f32.mxu0 0.0
    %1889 = vmatmul.mubr.f32.gmra.mxu0 %v1810
    %v1890 = vpop.f32.mrf.mxu0
    %v1891 = vadd.f32 0.0, %v1890
    %v1892 = vpop.f32.mrf.mxu0
    %1893 = vdwg.mxu0
    %v1894 = vld [vmem:[%s8 + $0x18] sm:$0xff]
    %v1896 = vsel %vm649, %v1881, 0
    %v1899 = vsel %vm649, %v1886, 0
    %v1902 = vsel %vm649, %v1891, 0
    %1904 = vmatprep.subr.mxu0 0.0
    %1905 = vmatpush1.msra.mxu0 0.0
    %1906 = vmatprep.subr.mxu0 0.0
    %1907 = vmatpush1.msra.mxu0 0.0
    %1908 = vmatprep.subr.mxu0 0.0
    %1909 = vmatpush1.msra.mxu0 0.0
    %1910 = vmatprep.subr.mxu0 0.0
    %1911 = vmatpush1.msra.mxu0 0.0
    %1912 = vmatprep.subr.mxu0 0.0
    %1913 = vmatpush1.msra.mxu0 0.0
    %1914 = vmatprep.subr.mxu0 0.0
    %1915 = vmatpush1.msra.mxu0 0.0
    %1916 = vmatprep.subr.mxu0 0.0
    %1917 = vmatpush1.msra.mxu0 0.0
    %1918 = vmatprep.subr.mxu0 0.0
    %1919 = vmatpush1.msra.mxu0 0.0
    %1920 = vmatprep.subr.mxu0 0.0
    %1921 = vmatpush1.msra.mxu0 0.0
    %1922 = vmatprep.subr.mxu0 0.0
    %1923 = vmatpush1.msra.mxu0 0.0
    %1924 = vmatprep.subr.mxu0 0.0
    %1925 = vmatpush1.msra.mxu0 0.0
    %1926 = vmatprep.subr.mxu0 0.0
    %1927 = vmatpush1.msra.mxu0 0.0
    %1928 = vmatprep.subr.mxu0 0.0
    %1929 = vmatpush1.msra.mxu0 0.0
    %1930 = vmatprep.subr.mxu0 0.0
    %1931 = vmatpush1.msra.mxu0 0.0
    %1932 = vmatprep.subr.mxu0 0.0
    %1933 = vmatpush1.msra.mxu0 0.0
    %1934 = vmatprep.subr.mxu0 0.0
    %1935 = vmatpush1.msra.mxu0 %v1894
    %1936 = vmatprep.subr.mxu0 0.0
    %1937 = vmatpush2.msra.mxu0 0.0
    %1938 = vmatprep.subr.mxu0 0.0
    %1939 = vmatpush2.msra.mxu0 0.0
    %1940 = vmatprep.subr.mxu0 0.0
    %1941 = vmatpush2.msra.mxu0 0.0
    %1942 = vmatprep.subr.mxu0 0.0
    %1943 = vmatpush2.msra.mxu0 0.0
    %1944 = vmatprep.subr.mxu0 0.0
    %1945 = vmatpush2.msra.mxu0 0.0
    %1946 = vmatprep.subr.mxu0 0.0
    %1947 = vmatpush2.msra.mxu0 0.0
    %1948 = vmatprep.subr.mxu0 0.0
    %1949 = vmatpush2.msra.mxu0 0.0
    %1950 = vmatprep.subr.mxu0 0.0
    %1951 = vmatpush2.msra.mxu0 0.0
    %1952 = vmatprep.subr.mxu0 0.0
    %1953 = vmatpush2.msra.mxu0 0.0
    %1954 = vmatprep.subr.mxu0 0.0
    %1955 = vmatpush2.msra.mxu0 0.0
    %1956 = vmatprep.subr.mxu0 0.0
    %1957 = vmatpush2.msra.mxu0 0.0
    %1958 = vmatprep.subr.mxu0 0.0
    %1959 = vmatpush2.msra.mxu0 0.0
    %1960 = vmatprep.subr.mxu0 0.0
    %1961 = vmatpush2.msra.mxu0 0.0
    %1962 = vmatprep.subr.mxu0 0.0
    %1963 = vmatpush2.msra.mxu0 0.0
    %1964 = vmatprep.subr.mxu0 0.0
    %1965 = vmatpush2.msra.mxu0 0.0
    %1966 = vmatprep.subr.mxu0 0.0
    %1967 = vmatpush2.msra.mxu0 0.0
    %1968 = vmatprep.mubr.f32.mxu0 0.0
    %1969 = vmatmul.mubr.f32.gmra.mxu0 %v1896
    %v1970 = vpop.f32.mrf.mxu0
    %v1971 = vadd.f32 0.0, %v1970
    %v1972 = vpop.f32.mrf.mxu0
    %1973 = vmatprep.mubr.f32.mxu0 0.0
    %1974 = vmatmul.mubr.f32.gmra.mxu0 %v1899
    %v1975 = vpop.f32.mrf.mxu0
    %v1976 = vadd.f32 0.0, %v1975
    %v1977 = vpop.f32.mrf.mxu0
    %1978 = vmatprep.mubr.f32.mxu0 0.0
    %1979 = vmatmul.mubr.f32.gmra.mxu0 %v1902
    %v1980 = vpop.f32.mrf.mxu0
    %v1981 = vadd.f32 0.0, %v1980
    %v1982 = vpop.f32.mrf.mxu0
    %1983 = vdwg.mxu0
    %v1984 = vadd.f32 %v1649, %v1971
    %v1985 = vadd.f32 %v1650, %v1976
    %v1986 = vadd.f32 %v1651, %v1981
    %v1987 = vadd.f32 %v484, %v1984
    %v1988 = vadd.f32 %v485, %v1985
    %v1989 = vadd.f32 %v486, %v1986
    %v1990 = vld [vmem:[#allocation15] sm:$0x1]
    %v1991 = vld [vmem:[#allocation16] sm:$0x1]
    %v1992 = vsel %vm391, %v1987, 0.0
    %1993 = vadd.xlane.f32.xlu0 %v1992
    %v1994 = vpop.xlane.xlu0 %1993
    %v1995 = vsel %vm391, %v1988, 0.0
    %1996 = vadd.xlane.f32.xlu0 %v1995
    %v1997 = vpop.xlane.xlu0 %1996
    %vm1998 = vcmask 254976
    %v1999 = vsel %vm1998, %v1989, 0.0
    %2000 = vadd.xlane.f32.xlu0 %v1999
    %v2001 = vpop.xlane.xlu0 %2000
    %v2002 = vrcp.pop 32.0
    %v2003 = vmul.f32 %v1994, %v2002
    %v2004 = vmul.f32 %v1997, %v2002
    %v2005 = vmul.f32 %v2001, %v2002
    %v2006 = vsub.f32 %v1987, %v2003
    %v2007 = vsub.f32 %v1988, %v2004
    %v2008 = vsub.f32 %v1989, %v2005
    %v2009 = vmul.f32 %v2006, %v2006
    %v2010 = vmul.f32 %v2007, %v2007
    %v2011 = vmul.f32 %v2008, %v2008
    %v2012 = vsel %vm391, %v2009, 0.0
    %2013 = vadd.xlane.f32.xlu0 %v2012
    %v2014 = vpop.xlane.xlu0 %2013
    %v2015 = vsel %vm391, %v2010, 0.0
    %2016 = vadd.xlane.f32.xlu0 %v2015
    %v2017 = vpop.xlane.xlu0 %2016
    %v2018 = vsel %vm1998, %v2011, 0.0
    %2019 = vadd.xlane.f32.xlu0 %v2018
    %v2020 = vpop.xlane.xlu0 %2019
    %v2021 = vmul.f32 %v2014, %v2002
    %v2022 = vmul.f32 %v2017, %v2002
    %v2023 = vmul.f32 %v2020, %v2002
    %v2024 = vadd.f32 %v2021, 1e-05
    %v2025 = vadd.f32 %v2022, 1e-05
    %v2026 = vadd.f32 %v2023, 1e-05
    %v2027 = vrsqrt.pop %v2024
    %v2028 = vrsqrt.pop %v2025
    %v2029 = vrsqrt.pop %v2026
    %v2030 = vmul.f32 %v2006, %v2027
    %v2031 = vmul.f32 %v2007, %v2028
    %v2032 = vmul.f32 %v2008, %v2029
    %v2034 = vlaneseq
    %v2035 = vshrl.u32 %v2034, 7
    %v2036 = vsub.s32 0, %v2035
    %v2037 = vrot.slane %v1990, %v2036
    %v2039 = vmul.f32 %v2030, %v2037
    %v2040 = vmul.f32 %v2031, %v2037
    %v2041 = vmul.f32 %v2032, %v2037
    %v2043 = vlaneseq
    %v2044 = vshrl.u32 %v2043, 7
    %v2045 = vsub.s32 0, %v2044
    %v2046 = vrot.slane %v1991, %v2045
    %v2048 = vadd.f32 %v2039, %v2046
    %v2049 = vadd.f32 %v2040, %v2046
    %v2050 = vadd.f32 %v2041, %v2046
    %v2051 = vld [vmem:[#allocation13] sm:$0x1]
    %v2053 = vlaneseq
    %v2054 = vshrl.u32 %v2053, 7
    %v2055 = vsub.s32 0, %v2054
    %v2056 = vrot.slane %v2051, %v2055
    %v2058 = vadd.f32 %v2048, %v2056
    %v2059 = vadd.f32 %v2049, %v2056
    %v2060 = vadd.f32 %v2050, %v2056
    %v2061 = vld [vmem:[#allocation18] sm:$0x1]
    %v2062 = vld [vmem:[#allocation19] sm:$0x1]
    %v2063 = vsel %vm391, %v2058, 0.0
    %2064 = vadd.xlane.f32.xlu0 %v2063
    %v2065 = vpop.xlane.xlu0 %2064
    %v2066 = vsel %vm391, %v2059, 0.0
    %2067 = vadd.xlane.f32.xlu0 %v2066
    %v2068 = vpop.xlane.xlu0 %2067
    %v2069 = vsel %vm1998, %v2060, 0.0
    %2070 = vadd.xlane.f32.xlu0 %v2069
    %v2071 = vpop.xlane.xlu0 %2070
    %v2072 = vmul.f32 %v2065, %v2002
    %v2073 = vmul.f32 %v2068, %v2002
    %v2074 = vmul.f32 %v2071, %v2002
    %v2075 = vsub.f32 %v2058, %v2072
    %v2076 = vsub.f32 %v2059, %v2073
    %v2077 = vsub.f32 %v2060, %v2074
    %v2078 = vmul.f32 %v2075, %v2075
    %v2079 = vmul.f32 %v2076, %v2076
    %v2080 = vmul.f32 %v2077, %v2077
    %v2081 = vsel %vm391, %v2078, 0.0
    %2082 = vadd.xlane.f32.xlu0 %v2081
    %v2083 = vpop.xlane.xlu0 %2082
    %v2084 = vsel %vm391, %v2079, 0.0
    %2085 = vadd.xlane.f32.xlu0 %v2084
    %v2086 = vpop.xlane.xlu0 %2085
    %v2087 = vsel %vm1998, %v2080, 0.0
    %2088 = vadd.xlane.f32.xlu0 %v2087
    %v2089 = vpop.xlane.xlu0 %2088
    %v2090 = vmul.f32 %v2083, %v2002
    %v2091 = vmul.f32 %v2086, %v2002
    %v2092 = vmul.f32 %v2089, %v2002
    %v2093 = vadd.f32 %v2090, 1e-05
    %v2094 = vadd.f32 %v2091, 1e-05
    %v2095 = vadd.f32 %v2092, 1e-05
    %v2096 = vrsqrt.pop %v2093
    %v2097 = vrsqrt.pop %v2094
    %v2098 = vrsqrt.pop %v2095
    %v2099 = vmul.f32 %v2075, %v2096
    %v2100 = vmul.f32 %v2076, %v2097
    %v2101 = vmul.f32 %v2077, %v2098
    %v2103 = vlaneseq
    %v2104 = vshrl.u32 %v2103, 7
    %v2105 = vsub.s32 0, %v2104
    %v2106 = vrot.slane %v2061, %v2105
    %v2108 = vmul.f32 %v2099, %v2106
    %v2109 = vmul.f32 %v2100, %v2106
    %v2110 = vmul.f32 %v2101, %v2106
    %v2112 = vlaneseq
    %v2113 = vshrl.u32 %v2112, 7
    %v2114 = vsub.s32 0, %v2113
    %v2115 = vrot.slane %v2062, %v2114
    %v2117 = vadd.f32 %v2108, %v2115
    %v2118 = vadd.f32 %v2109, %v2115
    %v2119 = vadd.f32 %v2110, %v2115
    %s2120 = smul.u32 4, 4
    %s2121 = smul.u32 %s2120, 16
    %s2122 = sshll.u32 %s2121, 4
    %2123 = dma.done [#allocation4], %s2122
    %s2124 = sshll.u32 %s2121, 4
    %2125 = dma.done %s277, %s2124
    %s2126 = scalar_lea.hbm %s17, 4096
    %s2127 = scalar_lea.vmem [#allocation2], 256
    %s2128 = scalar_lea.sflag [#allocation4], 1
    // Predicated region
    $region154: #{transformer3_forward.1} parent=1 // pred_check
      _
    $region155: #{transformer3_forward.1} parent=1 // pred_check_branch
      %2130 = sbr.rel target = $region157
    $region156: #{transformer3_forward.1} parent=1 // pred_region
      %2131 = sst [smem:[#allocation30]] [#allocation35]
      %2132 = sst [smem:[#allocation31]] [#allocation34]
    $region157: #{transformer3_forward.1} parent=1 // pred_fallthru
      _
    %2134 = shalt.err (0)
    %s2136 = sshll.u32 %s2127, 4
    %s2137 = int_to_ptr.vmem [resolvable:$true] %s2136
    %2139 = dma.hbm_to_vmem [thread:$0]  %s2126, 4096, %s2137, %s2128
    %s2140 = scalar_lea.hbm %s19, 4096
    %s2141 = scalar_lea.vmem [#allocation3], 256
    %s2142 = scalar_lea.sflag [#allocation4], 3
    // Predicated region
    $region158: #{transformer3_forward.1} parent=1 // pred_check
      _
    $region159: #{transformer3_forward.1} parent=1 // pred_check_branch
      %2144 = sbr.rel target = $region161
    $region160: #{transformer3_forward.1} parent=1 // pred_region
      %2145 = sst [smem:[#allocation30]] [#allocation37]
      %2146 = sst [smem:[#allocation31]] [#allocation36]
    $region161: #{transformer3_forward.1} parent=1 // pred_fallthru
      _
    %2148 = shalt.err (0)
    %s2150 = sshll.u32 %s2141, 4
    %s2151 = int_to_ptr.vmem [resolvable:$true] %s2150
    %2153 = dma.hbm_to_vmem [thread:$0]  %s2140, 4096, %s2151, %s2142
    %v2154 = vpack.c.bf16 %v2118, %v2117
    %v2155 = vpack.c.bf16 %v2119, %v2119
    %v2156 = vld [vmem:[#allocation2] sm:$0xff]
    %v2157 = vld [vmem:[#allocation2 + $0x8] sm:$0xff]
    %v2158 = vld [vmem:[#allocation2 + $0x40] sm:$0xff]
    %v2159 = vld [vmem:[#allocation2 + $0x48] sm:$0xff]
    %v2160 = vld [vmem:[#allocation2 + $0x80] sm:$0xff]
    %v2161 = vld [vmem:[#allocation2 + $0x88] sm:$0xff]
    %v2162 = vld [vmem:[#allocation2 + $0xc0] sm:$0xff]
    %v2163 = vld [vmem:[#allocation2 + $0xc8] sm:$0xff]
    %v2164 = vld [vmem:[%s18] sm:$0xf]
    %v2166 = vlaneseq
    %v2167 = vshrl.u32 %v2166, 7
    %v2168 = vsub.s32 0, %v2167
    %v2169 = vrot.slane %v2164, %v2168
    %v2170 = vlaneseq
    %v2171 = vshrl.u32 %v2170, 7
    %v2172 = vsub.s32 1, %v2171
    %v2173 = vrot.slane %v2164, %v2172
    %v2174 = vlaneseq
    %v2175 = vshrl.u32 %v2174, 7
    %v2176 = vsub.s32 2, %v2175
    %v2177 = vrot.slane %v2164, %v2176
    %v2178 = vlaneseq
    %v2179 = vshrl.u32 %v2178, 7
    %v2180 = vsub.s32 3, %v2179
    %v2181 = vrot.slane %v2164, %v2180
    %v2194 = vunpack.c.l.b16 %v2156
    %v2195 = vunpack.c.h.b16 %v2156
    %v2196 = vunpack.c.l.b16 %v2157
    %v2197 = vunpack.c.h.b16 %v2157
    %v2198 = vunpack.c.l.b16 %v2158
    %v2199 = vunpack.c.h.b16 %v2158
    %v2200 = vunpack.c.l.b16 %v2159
    %v2201 = vunpack.c.h.b16 %v2159
    %v2202 = vunpack.c.l.b16 %v2160
    %v2203 = vunpack.c.h.b16 %v2160
    %v2204 = vunpack.c.l.b16 %v2161
    %v2205 = vunpack.c.h.b16 %v2161
    %v2206 = vunpack.c.l.b16 %v2162
    %v2207 = vunpack.c.h.b16 %v2162
    %v2208 = vunpack.c.l.b16 %v2163
    %v2209 = vunpack.c.h.b16 %v2163
    %v2210 = vpack.c.b16 %v2198, %v2194
    %v2211 = vpack.c.b16 %v2199, %v2195
    %v2212 = vpack.c.b16 %v2200, %v2196
    %v2213 = vpack.c.b16 %v2201, %v2197
    %v2214 = vpack.c.b16 %v2206, %v2202
    %v2215 = vpack.c.b16 %v2207, %v2203
    %v2216 = vpack.c.b16 %v2208, %v2204
    %v2217 = vpack.c.b16 %v2209, %v2205
    %v2227 = vsel %vm391, %v2154, 0
    %v2230 = vsel %vm391, %v2155, 0
    %2232 = vmatprep.subr.bf16.mxu0 0
    %2233 = vmatpush1.bf16.msra.mxu0 0
    %2234 = vmatprep.subr.bf16.mxu0 0
    %2235 = vmatpush1.bf16.msra.mxu0 0
    %2236 = vmatprep.subr.bf16.mxu0 0
    %2237 = vmatpush1.bf16.msra.mxu0 0
    %2238 = vmatprep.subr.bf16.mxu0 0
    %2239 = vmatpush1.bf16.msra.mxu0 0
    %2240 = vmatprep.subr.bf16.mxu0 0
    %2241 = vmatpush1.bf16.msra.mxu0 0
    %2242 = vmatprep.subr.bf16.mxu0 0
    %2243 = vmatpush1.bf16.msra.mxu0 0
    %2244 = vmatprep.subr.bf16.mxu0 %v2215
    %2245 = vmatpush1.bf16.msra.mxu0 %v2214
    %2246 = vmatprep.subr.bf16.mxu0 %v2211
    %2247 = vmatpush1.bf16.msra.mxu0 %v2210
    %2248 = vmatprep.subr.bf16.mxu0 0
    %2249 = vmatpush2.bf16.msra.mxu0 0
    %2250 = vmatprep.subr.bf16.mxu0 0
    %2251 = vmatpush2.bf16.msra.mxu0 0
    %2252 = vmatprep.subr.bf16.mxu0 0
    %2253 = vmatpush2.bf16.msra.mxu0 0
    %2254 = vmatprep.subr.bf16.mxu0 0
    %2255 = vmatpush2.bf16.msra.mxu0 0
    %2256 = vmatprep.subr.bf16.mxu0 0
    %2257 = vmatpush2.bf16.msra.mxu0 0
    %2258 = vmatprep.subr.bf16.mxu0 0
    %2259 = vmatpush2.bf16.msra.mxu0 0
    %2260 = vmatprep.subr.bf16.mxu0 0
    %2261 = vmatpush2.bf16.msra.mxu0 0
    %2262 = vmatprep.subr.bf16.mxu0 0
    %2263 = vmatpush2.bf16.msra.mxu0 0
    %2264 = vmatprep.mubr.bf16.mxu0 0
    %2265 = vmatmul.mubr.bf16.gmra.mxu0 %v2227
    %v2266 = vpop.f32.mrf.mxu0
    %v2267 = vadd.f32 %v2169, %v2266
    %v2268 = vpop.f32.mrf.mxu0
    %v2269 = vadd.f32 %v2173, %v2268
    %v2270 = vpop.f32.mrf.mxu0
    %v2271 = vadd.f32 %v2169, %v2270
    %v2272 = vpop.f32.mrf.mxu0
    %v2273 = vadd.f32 %v2173, %v2272
    %2274 = vmatprep.mubr.bf16.mxu0 0
    %2275 = vmatmul.mubr.bf16.gmra.mxu0 %v2230
    %v2276 = vpop.f32.mrf.mxu0
    %v2277 = vadd.f32 %v2169, %v2276
    %v2278 = vpop.f32.mrf.mxu0
    %v2279 = vadd.f32 %v2173, %v2278
    %v2280 = vpop.f32.mrf.mxu0
    %v2281 = vpop.f32.mrf.mxu0
    %2282 = vdwg.mxu0
    %2283 = vmatprep.subr.bf16.mxu0 0
    %2284 = vmatpush1.bf16.msra.mxu0 0
    %2285 = vmatprep.subr.bf16.mxu0 0
    %2286 = vmatpush1.bf16.msra.mxu0 0
    %2287 = vmatprep.subr.bf16.mxu0 0
    %2288 = vmatpush1.bf16.msra.mxu0 0
    %2289 = vmatprep.subr.bf16.mxu0 0
    %2290 = vmatpush1.bf16.msra.mxu0 0
    %2291 = vmatprep.subr.bf16.mxu0 0
    %2292 = vmatpush1.bf16.msra.mxu0 0
    %2293 = vmatprep.subr.bf16.mxu0 0
    %2294 = vmatpush1.bf16.msra.mxu0 0
    %2295 = vmatprep.subr.bf16.mxu0 %v2217
    %2296 = vmatpush1.bf16.msra.mxu0 %v2216
    %2297 = vmatprep.subr.bf16.mxu0 %v2213
    %2298 = vmatpush1.bf16.msra.mxu0 %v2212
    %2299 = vmatprep.subr.bf16.mxu0 0
    %2300 = vmatpush2.bf16.msra.mxu0 0
    %2301 = vmatprep.subr.bf16.mxu0 0
    %2302 = vmatpush2.bf16.msra.mxu0 0
    %2303 = vmatprep.subr.bf16.mxu0 0
    %2304 = vmatpush2.bf16.msra.mxu0 0
    %2305 = vmatprep.subr.bf16.mxu0 0
    %2306 = vmatpush2.bf16.msra.mxu0 0
    %2307 = vmatprep.subr.bf16.mxu0 0
    %2308 = vmatpush2.bf16.msra.mxu0 0
    %2309 = vmatprep.subr.bf16.mxu0 0
    %2310 = vmatpush2.bf16.msra.mxu0 0
    %2311 = vmatprep.subr.bf16.mxu0 0
    %2312 = vmatpush2.bf16.msra.mxu0 0
    %2313 = vmatprep.subr.bf16.mxu0 0
    %2314 = vmatpush2.bf16.msra.mxu0 0
    %2315 = vmatprep.mubr.bf16.mxu0 0
    %2316 = vmatmul.mubr.bf16.gmra.mxu0 %v2227
    %v2317 = vpop.f32.mrf.mxu0
    %v2318 = vadd.f32 %v2177, %v2317
    %v2319 = vpop.f32.mrf.mxu0
    %v2320 = vadd.f32 %v2181, %v2319
    %v2321 = vpop.f32.mrf.mxu0
    %v2322 = vadd.f32 %v2177, %v2321
    %v2323 = vpop.f32.mrf.mxu0
    %v2324 = vadd.f32 %v2181, %v2323
    %2325 = vmatprep.mubr.bf16.mxu0 0
    %2326 = vmatmul.mubr.bf16.gmra.mxu0 %v2230
    %v2327 = vpop.f32.mrf.mxu0
    %v2328 = vadd.f32 %v2177, %v2327
    %v2329 = vpop.f32.mrf.mxu0
    %v2330 = vadd.f32 %v2181, %v2329
    %v2331 = vpop.f32.mrf.mxu0
    %v2332 = vpop.f32.mrf.mxu0
    %2333 = vdwg.mxu0
    %v2334 = vmax.f32 %v2267, 0.0
    %v2335 = vmax.f32 %v2269, 0.0
    %v2336 = vmax.f32 %v2318, 0.0
    %v2337 = vmax.f32 %v2320, 0.0
    %v2338 = vmax.f32 %v2271, 0.0
    %v2339 = vmax.f32 %v2273, 0.0
    %v2340 = vmax.f32 %v2322, 0.0
    %v2341 = vmax.f32 %v2324, 0.0
    %v2342 = vmax.f32 %v2277, 0.0
    %v2343 = vmax.f32 %v2279, 0.0
    %v2344 = vmax.f32 %v2328, 0.0
    %v2345 = vmax.f32 %v2330, 0.0
    %v2346 = vpack.c.bf16 %v2338, %v2334
    %v2347 = vpack.c.bf16 %v2339, %v2335
    %v2348 = vpack.c.bf16 %v2340, %v2336
    %v2349 = vpack.c.bf16 %v2341, %v2337
    %v2350 = vpack.c.bf16 %v2342, %v2342
    %v2351 = vpack.c.bf16 %v2343, %v2343
    %v2352 = vpack.c.bf16 %v2344, %v2344
    %v2353 = vpack.c.bf16 %v2345, %v2345
    %v2354 = vld [vmem:[#allocation3] sm:$0xff]
    %v2355 = vld [vmem:[#allocation3 + $0x8] sm:$0xff]
    %v2356 = vld [vmem:[#allocation3 + $0x40] sm:$0xff]
    %v2357 = vld [vmem:[#allocation3 + $0x48] sm:$0xff]
    %v2358 = vld [vmem:[#allocation3 + $0x80] sm:$0xff]
    %v2359 = vld [vmem:[#allocation3 + $0x88] sm:$0xff]
    %v2360 = vld [vmem:[#allocation3 + $0xc0] sm:$0xff]
    %v2361 = vld [vmem:[#allocation3 + $0xc8] sm:$0xff]
    %v2362 = vld [vmem:[#allocation2 + $0x10] sm:$0xff]
    %v2363 = vld [vmem:[#allocation2 + $0x18] sm:$0xff]
    %v2364 = vld [vmem:[#allocation2 + $0x50] sm:$0xff]
    %v2365 = vld [vmem:[#allocation2 + $0x58] sm:$0xff]
    %v2366 = vld [vmem:[#allocation2 + $0x90] sm:$0xff]
    %v2367 = vld [vmem:[#allocation2 + $0x98] sm:$0xff]
    %v2368 = vld [vmem:[#allocation2 + $0xd0] sm:$0xff]
    %v2369 = vld [vmem:[#allocation2 + $0xd8] sm:$0xff]
    %v2370 = vld [vmem:[%s18 + $0x4] sm:$0xf]
    %v2372 = vlaneseq
    %v2373 = vshrl.u32 %v2372, 7
    %v2374 = vsub.s32 0, %v2373
    %v2375 = vrot.slane %v2370, %v2374
    %v2376 = vlaneseq
    %v2377 = vshrl.u32 %v2376, 7
    %v2378 = vsub.s32 1, %v2377
    %v2379 = vrot.slane %v2370, %v2378
    %v2380 = vlaneseq
    %v2381 = vshrl.u32 %v2380, 7
    %v2382 = vsub.s32 2, %v2381
    %v2383 = vrot.slane %v2370, %v2382
    %v2384 = vlaneseq
    %v2385 = vshrl.u32 %v2384, 7
    %v2386 = vsub.s32 3, %v2385
    %v2387 = vrot.slane %v2370, %v2386
    %v2400 = vunpack.c.l.b16 %v2362
    %v2401 = vunpack.c.h.b16 %v2362
    %v2402 = vunpack.c.l.b16 %v2363
    %v2403 = vunpack.c.h.b16 %v2363
    %v2404 = vunpack.c.l.b16 %v2364
    %v2405 = vunpack.c.h.b16 %v2364
    %v2406 = vunpack.c.l.b16 %v2365
    %v2407 = vunpack.c.h.b16 %v2365
    %v2408 = vunpack.c.l.b16 %v2366
    %v2409 = vunpack.c.h.b16 %v2366
    %v2410 = vunpack.c.l.b16 %v2367
    %v2411 = vunpack.c.h.b16 %v2367
    %v2412 = vunpack.c.l.b16 %v2368
    %v2413 = vunpack.c.h.b16 %v2368
    %v2414 = vunpack.c.l.b16 %v2369
    %v2415 = vunpack.c.h.b16 %v2369
    %v2416 = vpack.c.b16 %v2404, %v2400
    %v2417 = vpack.c.b16 %v2405, %v2401
    %v2418 = vpack.c.b16 %v2406, %v2402
    %v2419 = vpack.c.b16 %v2407, %v2403
    %v2420 = vpack.c.b16 %v2412, %v2408
    %v2421 = vpack.c.b16 %v2413, %v2409
    %v2422 = vpack.c.b16 %v2414, %v2410
    %v2423 = vpack.c.b16 %v2415, %v2411
    %2432 = vmatprep.subr.bf16.mxu0 0
    %2433 = vmatpush1.bf16.msra.mxu0 0
    %2434 = vmatprep.subr.bf16.mxu0 0
    %2435 = vmatpush1.bf16.msra.mxu0 0
    %2436 = vmatprep.subr.bf16.mxu0 0
    %2437 = vmatpush1.bf16.msra.mxu0 0
    %2438 = vmatprep.subr.bf16.mxu0 0
    %2439 = vmatpush1.bf16.msra.mxu0 0
    %2440 = vmatprep.subr.bf16.mxu0 0
    %2441 = vmatpush1.bf16.msra.mxu0 0
    %2442 = vmatprep.subr.bf16.mxu0 0
    %2443 = vmatpush1.bf16.msra.mxu0 0
    %2444 = vmatprep.subr.bf16.mxu0 %v2421
    %2445 = vmatpush1.bf16.msra.mxu0 %v2420
    %2446 = vmatprep.subr.bf16.mxu0 %v2417
    %2447 = vmatpush1.bf16.msra.mxu0 %v2416
    %2448 = vmatprep.subr.bf16.mxu0 0
    %2449 = vmatpush2.bf16.msra.mxu0 0
    %2450 = vmatprep.subr.bf16.mxu0 0
    %2451 = vmatpush2.bf16.msra.mxu0 0
    %2452 = vmatprep.subr.bf16.mxu0 0
    %2453 = vmatpush2.bf16.msra.mxu0 0
    %2454 = vmatprep.subr.bf16.mxu0 0
    %2455 = vmatpush2.bf16.msra.mxu0 0
    %2456 = vmatprep.subr.bf16.mxu0 0
    %2457 = vmatpush2.bf16.msra.mxu0 0
    %2458 = vmatprep.subr.bf16.mxu0 0
    %2459 = vmatpush2.bf16.msra.mxu0 0
    %2460 = vmatprep.subr.bf16.mxu0 0
    %2461 = vmatpush2.bf16.msra.mxu0 0
    %2462 = vmatprep.subr.bf16.mxu0 0
    %2463 = vmatpush2.bf16.msra.mxu0 0
    %2464 = vmatprep.mubr.bf16.mxu0 0
    %2465 = vmatmul.mubr.bf16.gmra.mxu0 %v2227
    %v2466 = vpop.f32.mrf.mxu0
    %v2467 = vadd.f32 %v2375, %v2466
    %v2468 = vpop.f32.mrf.mxu0
    %v2469 = vadd.f32 %v2379, %v2468
    %v2470 = vpop.f32.mrf.mxu0
    %v2471 = vadd.f32 %v2375, %v2470
    %v2472 = vpop.f32.mrf.mxu0
    %v2473 = vadd.f32 %v2379, %v2472
    %2474 = vmatprep.mubr.bf16.mxu0 0
    %2475 = vmatmul.mubr.bf16.gmra.mxu0 %v2230
    %v2476 = vpop.f32.mrf.mxu0
    %v2477 = vadd.f32 %v2375, %v2476
    %v2478 = vpop.f32.mrf.mxu0
    %v2479 = vadd.f32 %v2379, %v2478
    %v2480 = vpop.f32.mrf.mxu0
    %v2481 = vpop.f32.mrf.mxu0
    %2482 = vdwg.mxu0
    %2483 = vmatprep.subr.bf16.mxu0 0
    %2484 = vmatpush1.bf16.msra.mxu0 0
    %2485 = vmatprep.subr.bf16.mxu0 0
    %2486 = vmatpush1.bf16.msra.mxu0 0
    %2487 = vmatprep.subr.bf16.mxu0 0
    %2488 = vmatpush1.bf16.msra.mxu0 0
    %2489 = vmatprep.subr.bf16.mxu0 0
    %2490 = vmatpush1.bf16.msra.mxu0 0
    %2491 = vmatprep.subr.bf16.mxu0 0
    %2492 = vmatpush1.bf16.msra.mxu0 0
    %2493 = vmatprep.subr.bf16.mxu0 0
    %2494 = vmatpush1.bf16.msra.mxu0 0
    %2495 = vmatprep.subr.bf16.mxu0 %v2423
    %2496 = vmatpush1.bf16.msra.mxu0 %v2422
    %2497 = vmatprep.subr.bf16.mxu0 %v2419
    %2498 = vmatpush1.bf16.msra.mxu0 %v2418
    %2499 = vmatprep.subr.bf16.mxu0 0
    %2500 = vmatpush2.bf16.msra.mxu0 0
    %2501 = vmatprep.subr.bf16.mxu0 0
    %2502 = vmatpush2.bf16.msra.mxu0 0
    %2503 = vmatprep.subr.bf16.mxu0 0
    %2504 = vmatpush2.bf16.msra.mxu0 0
    %2505 = vmatprep.subr.bf16.mxu0 0
    %2506 = vmatpush2.bf16.msra.mxu0 0
    %2507 = vmatprep.subr.bf16.mxu0 0
    %2508 = vmatpush2.bf16.msra.mxu0 0
    %2509 = vmatprep.subr.bf16.mxu0 0
    %2510 = vmatpush2.bf16.msra.mxu0 0
    %2511 = vmatprep.subr.bf16.mxu0 0
    %2512 = vmatpush2.bf16.msra.mxu0 0
    %2513 = vmatprep.subr.bf16.mxu0 0
    %2514 = vmatpush2.bf16.msra.mxu0 0
    %2515 = vmatprep.mubr.bf16.mxu0 0
    %2516 = vmatmul.mubr.bf16.gmra.mxu0 %v2227
    %v2517 = vpop.f32.mrf.mxu0
    %v2518 = vadd.f32 %v2383, %v2517
    %v2519 = vpop.f32.mrf.mxu0
    %v2520 = vadd.f32 %v2387, %v2519
    %v2521 = vpop.f32.mrf.mxu0
    %v2522 = vadd.f32 %v2383, %v2521
    %v2523 = vpop.f32.mrf.mxu0
    %v2524 = vadd.f32 %v2387, %v2523
    %2525 = vmatprep.mubr.bf16.mxu0 0
    %2526 = vmatmul.mubr.bf16.gmra.mxu0 %v2230
    %v2527 = vpop.f32.mrf.mxu0
    %v2528 = vadd.f32 %v2383, %v2527
    %v2529 = vpop.f32.mrf.mxu0
    %v2530 = vadd.f32 %v2387, %v2529
    %v2531 = vpop.f32.mrf.mxu0
    %v2532 = vpop.f32.mrf.mxu0
    %2533 = vdwg.mxu0
    %v2534 = vmax.f32 %v2467, 0.0
    %v2535 = vmax.f32 %v2469, 0.0
    %v2536 = vmax.f32 %v2518, 0.0
    %v2537 = vmax.f32 %v2520, 0.0
    %v2538 = vmax.f32 %v2471, 0.0
    %v2539 = vmax.f32 %v2473, 0.0
    %v2540 = vmax.f32 %v2522, 0.0
    %v2541 = vmax.f32 %v2524, 0.0
    %v2542 = vmax.f32 %v2477, 0.0
    %v2543 = vmax.f32 %v2479, 0.0
    %v2544 = vmax.f32 %v2528, 0.0
    %v2545 = vmax.f32 %v2530, 0.0
    %v2546 = vpack.c.bf16 %v2538, %v2534
    %v2547 = vpack.c.bf16 %v2539, %v2535
    %v2548 = vpack.c.bf16 %v2540, %v2536
    %v2549 = vpack.c.bf16 %v2541, %v2537
    %v2550 = vpack.c.bf16 %v2542, %v2542
    %v2551 = vpack.c.bf16 %v2543, %v2543
    %v2552 = vpack.c.bf16 %v2544, %v2544
    %v2553 = vpack.c.bf16 %v2545, %v2545
    %v2554 = vld [vmem:[#allocation3 + $0x10] sm:$0xff]
    %v2555 = vld [vmem:[#allocation3 + $0x18] sm:$0xff]
    %v2556 = vld [vmem:[#allocation3 + $0x50] sm:$0xff]
    %v2557 = vld [vmem:[#allocation3 + $0x58] sm:$0xff]
    %v2558 = vld [vmem:[#allocation3 + $0x90] sm:$0xff]
    %v2559 = vld [vmem:[#allocation3 + $0x98] sm:$0xff]
    %v2560 = vld [vmem:[#allocation3 + $0xd0] sm:$0xff]
    %v2561 = vld [vmem:[#allocation3 + $0xd8] sm:$0xff]
    %v2570 = vunpack.c.l.b16 %v2554
    %v2571 = vunpack.c.h.b16 %v2554
    %v2572 = vunpack.c.l.b16 %v2555
    %v2573 = vunpack.c.h.b16 %v2555
    %v2574 = vunpack.c.l.b16 %v2556
    %v2575 = vunpack.c.h.b16 %v2556
    %v2576 = vunpack.c.l.b16 %v2557
    %v2577 = vunpack.c.h.b16 %v2557
    %v2578 = vunpack.c.l.b16 %v2558
    %v2579 = vunpack.c.h.b16 %v2558
    %v2580 = vunpack.c.l.b16 %v2559
    %v2581 = vunpack.c.h.b16 %v2559
    %v2582 = vunpack.c.l.b16 %v2560
    %v2583 = vunpack.c.h.b16 %v2560
    %v2584 = vunpack.c.l.b16 %v2561
    %v2585 = vunpack.c.h.b16 %v2561
    %v2586 = vpack.c.b16 %v2574, %v2570
    %v2587 = vpack.c.b16 %v2575, %v2571
    %v2588 = vpack.c.b16 %v2576, %v2572
    %v2589 = vpack.c.b16 %v2577, %v2573
    %v2590 = vpack.c.b16 %v2582, %v2578
    %v2591 = vpack.c.b16 %v2583, %v2579
    %v2592 = vpack.c.b16 %v2584, %v2580
    %v2593 = vpack.c.b16 %v2585, %v2581
    %2602 = vmatprep.subr.bf16.mxu0 0
    %2603 = vmatpush1.bf16.xpose.msra.mxu0 0
    %2604 = vmatprep.subr.bf16.mxu0 0
    %2605 = vmatpush1.bf16.xpose.msra.mxu0 0
    %2606 = vmatprep.subr.bf16.mxu0 0
    %2607 = vmatpush1.bf16.xpose.msra.mxu0 0
    %2608 = vmatprep.subr.bf16.mxu0 0
    %2609 = vmatpush1.bf16.xpose.msra.mxu0 0
    %2610 = vmatprep.subr.bf16.mxu0 0
    %2611 = vmatpush1.bf16.xpose.msra.mxu0 0
    %2612 = vmatprep.subr.bf16.mxu0 0
    %2613 = vmatpush1.bf16.xpose.msra.mxu0 0
    %2614 = vmatprep.subr.bf16.mxu0 %v2591
    %2615 = vmatpush1.bf16.xpose.msra.mxu0 %v2590
    %2616 = vmatprep.subr.bf16.mxu0 %v2587
    %2617 = vmatpush1.bf16.xpose.msra.mxu0 %v2586
    %2618 = vmatprep.subr.bf16.mxu0 0
    %2619 = vmatpush2.bf16.xpose.msra.mxu0 0
    %2620 = vmatprep.subr.bf16.mxu0 0
    %2621 = vmatpush2.bf16.xpose.msra.mxu0 0
    %2622 = vmatprep.subr.bf16.mxu0 0
    %2623 = vmatpush2.bf16.xpose.msra.mxu0 0
    %2624 = vmatprep.subr.bf16.mxu0 0
    %2625 = vmatpush2.bf16.xpose.msra.mxu0 0
    %2626 = vmatprep.subr.bf16.mxu0 0
    %2627 = vmatpush2.bf16.xpose.msra.mxu0 0
    %2628 = vmatprep.subr.bf16.mxu0 0
    %2629 = vmatpush2.bf16.xpose.msra.mxu0 0
    %2630 = vmatprep.subr.bf16.mxu0 0
    %2631 = vmatpush2.bf16.xpose.msra.mxu0 0
    %2632 = vmatprep.subr.bf16.mxu0 0
    %2633 = vmatpush2.bf16.xpose.msra.mxu0 0
    %2634 = vmatprep.mubr.bf16.mxu0 %v2547
    %2635 = vmatmul.mubr.bf16.gmra.mxu0 %v2546
    %v2636 = vpop.f32.mrf.mxu0
    %v2637 = vadd.f32 0.0, %v2636
    %v2638 = vpop.f32.mrf.mxu0
    %v2639 = vpop.f32.mrf.mxu0
    %v2640 = vadd.f32 0.0, %v2639
    %v2641 = vpop.f32.mrf.mxu0
    %2642 = vmatprep.mubr.bf16.mxu0 %v2551
    %2643 = vmatmul.mubr.bf16.gmra.mxu0 %v2550
    %v2644 = vpop.f32.mrf.mxu0
    %v2645 = vadd.f32 0.0, %v2644
    %v2646 = vpop.f32.mrf.mxu0
    %v2647 = vpop.f32.mrf.mxu0
    %v2648 = vpop.f32.mrf.mxu0
    %2649 = vdwg.mxu0
    %2650 = vmatprep.subr.bf16.mxu0 0
    %2651 = vmatpush1.bf16.xpose.msra.mxu0 0
    %2652 = vmatprep.subr.bf16.mxu0 0
    %2653 = vmatpush1.bf16.xpose.msra.mxu0 0
    %2654 = vmatprep.subr.bf16.mxu0 0
    %2655 = vmatpush1.bf16.xpose.msra.mxu0 0
    %2656 = vmatprep.subr.bf16.mxu0 0
    %2657 = vmatpush1.bf16.xpose.msra.mxu0 0
    %2658 = vmatprep.subr.bf16.mxu0 0
    %2659 = vmatpush1.bf16.xpose.msra.mxu0 0
    %2660 = vmatprep.subr.bf16.mxu0 0
    %2661 = vmatpush1.bf16.xpose.msra.mxu0 0
    %2662 = vmatprep.subr.bf16.mxu0 %v2593
    %2663 = vmatpush1.bf16.xpose.msra.mxu0 %v2592
    %2664 = vmatprep.subr.bf16.mxu0 %v2589
    %2665 = vmatpush1.bf16.xpose.msra.mxu0 %v2588
    %2666 = vmatprep.subr.bf16.mxu0 0
    %2667 = vmatpush2.bf16.xpose.msra.mxu0 0
    %2668 = vmatprep.subr.bf16.mxu0 0
    %2669 = vmatpush2.bf16.xpose.msra.mxu0 0
    %2670 = vmatprep.subr.bf16.mxu0 0
    %2671 = vmatpush2.bf16.xpose.msra.mxu0 0
    %2672 = vmatprep.subr.bf16.mxu0 0
    %2673 = vmatpush2.bf16.xpose.msra.mxu0 0
    %2674 = vmatprep.subr.bf16.mxu0 0
    %2675 = vmatpush2.bf16.xpose.msra.mxu0 0
    %2676 = vmatprep.subr.bf16.mxu0 0
    %2677 = vmatpush2.bf16.xpose.msra.mxu0 0
    %2678 = vmatprep.subr.bf16.mxu0 0
    %2679 = vmatpush2.bf16.xpose.msra.mxu0 0
    %2680 = vmatprep.subr.bf16.mxu0 0
    %2681 = vmatpush2.bf16.xpose.msra.mxu0 0
    %2682 = vmatprep.mubr.bf16.mxu0 %v2549
    %2683 = vmatmul.mubr.bf16.gmra.mxu0 %v2548
    %v2684 = vpop.f32.mrf.mxu0
    %v2685 = vadd.f32 %v2637, %v2684
    %v2686 = vpop.f32.mrf.mxu0
    %v2687 = vpop.f32.mrf.mxu0
    %v2688 = vadd.f32 %v2640, %v2687
    %v2689 = vpop.f32.mrf.mxu0
    %2690 = vmatprep.mubr.bf16.mxu0 %v2553
    %2691 = vmatmul.mubr.bf16.gmra.mxu0 %v2552
    %v2692 = vpop.f32.mrf.mxu0
    %v2693 = vadd.f32 %v2645, %v2692
    %v2694 = vpop.f32.mrf.mxu0
    %v2695 = vpop.f32.mrf.mxu0
    %v2696 = vpop.f32.mrf.mxu0
    %2697 = vdwg.mxu0
    %v2706 = vunpack.c.l.b16 %v2354
    %v2707 = vunpack.c.h.b16 %v2354
    %v2708 = vunpack.c.l.b16 %v2355
    %v2709 = vunpack.c.h.b16 %v2355
    %v2710 = vunpack.c.l.b16 %v2356
    %v2711 = vunpack.c.h.b16 %v2356
    %v2712 = vunpack.c.l.b16 %v2357
    %v2713 = vunpack.c.h.b16 %v2357
    %v2714 = vunpack.c.l.b16 %v2358
    %v2715 = vunpack.c.h.b16 %v2358
    %v2716 = vunpack.c.l.b16 %v2359
    %v2717 = vunpack.c.h.b16 %v2359
    %v2718 = vunpack.c.l.b16 %v2360
    %v2719 = vunpack.c.h.b16 %v2360
    %v2720 = vunpack.c.l.b16 %v2361
    %v2721 = vunpack.c.h.b16 %v2361
    %v2722 = vpack.c.b16 %v2710, %v2706
    %v2723 = vpack.c.b16 %v2711, %v2707
    %v2724 = vpack.c.b16 %v2712, %v2708
    %v2725 = vpack.c.b16 %v2713, %v2709
    %v2726 = vpack.c.b16 %v2718, %v2714
    %v2727 = vpack.c.b16 %v2719, %v2715
    %v2728 = vpack.c.b16 %v2720, %v2716
    %v2729 = vpack.c.b16 %v2721, %v2717
    %2738 = vmatprep.subr.bf16.mxu0 0
    %2739 = vmatpush1.bf16.xpose.msra.mxu0 0
    %2740 = vmatprep.subr.bf16.mxu0 0
    %2741 = vmatpush1.bf16.xpose.msra.mxu0 0
    %2742 = vmatprep.subr.bf16.mxu0 0
    %2743 = vmatpush1.bf16.xpose.msra.mxu0 0
    %2744 = vmatprep.subr.bf16.mxu0 0
    %2745 = vmatpush1.bf16.xpose.msra.mxu0 0
    %2746 = vmatprep.subr.bf16.mxu0 0
    %2747 = vmatpush1.bf16.xpose.msra.mxu0 0
    %2748 = vmatprep.subr.bf16.mxu0 0
    %2749 = vmatpush1.bf16.xpose.msra.mxu0 0
    %2750 = vmatprep.subr.bf16.mxu0 %v2727
    %2751 = vmatpush1.bf16.xpose.msra.mxu0 %v2726
    %2752 = vmatprep.subr.bf16.mxu0 %v2723
    %2753 = vmatpush1.bf16.xpose.msra.mxu0 %v2722
    %2754 = vmatprep.subr.bf16.mxu0 0
    %2755 = vmatpush2.bf16.xpose.msra.mxu0 0
    %2756 = vmatprep.subr.bf16.mxu0 0
    %2757 = vmatpush2.bf16.xpose.msra.mxu0 0
    %2758 = vmatprep.subr.bf16.mxu0 0
    %2759 = vmatpush2.bf16.xpose.msra.mxu0 0
    %2760 = vmatprep.subr.bf16.mxu0 0
    %2761 = vmatpush2.bf16.xpose.msra.mxu0 0
    %2762 = vmatprep.subr.bf16.mxu0 0
    %2763 = vmatpush2.bf16.xpose.msra.mxu0 0
    %2764 = vmatprep.subr.bf16.mxu0 0
    %2765 = vmatpush2.bf16.xpose.msra.mxu0 0
    %2766 = vmatprep.subr.bf16.mxu0 0
    %2767 = vmatpush2.bf16.xpose.msra.mxu0 0
    %2768 = vmatprep.subr.bf16.mxu0 0
    %2769 = vmatpush2.bf16.xpose.msra.mxu0 0
    %2770 = vmatprep.mubr.bf16.mxu0 %v2347
    %2771 = vmatmul.mubr.bf16.gmra.mxu0 %v2346
    %v2772 = vpop.f32.mrf.mxu0
    %v2773 = vadd.f32 %v2685, %v2772
    %v2774 = vpop.f32.mrf.mxu0
    %v2775 = vpop.f32.mrf.mxu0
    %v2776 = vadd.f32 %v2688, %v2775
    %v2777 = vpop.f32.mrf.mxu0
    %2778 = vmatprep.mubr.bf16.mxu0 %v2351
    %2779 = vmatmul.mubr.bf16.gmra.mxu0 %v2350
    %v2780 = vpop.f32.mrf.mxu0
    %v2781 = vadd.f32 %v2693, %v2780
    %v2782 = vpop.f32.mrf.mxu0
    %v2783 = vpop.f32.mrf.mxu0
    %v2784 = vpop.f32.mrf.mxu0
    %2785 = vdwg.mxu0
    %2786 = vmatprep.subr.bf16.mxu0 0
    %2787 = vmatpush1.bf16.xpose.msra.mxu0 0
    %2788 = vmatprep.subr.bf16.mxu0 0
    %2789 = vmatpush1.bf16.xpose.msra.mxu0 0
    %2790 = vmatprep.subr.bf16.mxu0 0
    %2791 = vmatpush1.bf16.xpose.msra.mxu0 0
    %2792 = vmatprep.subr.bf16.mxu0 0
    %2793 = vmatpush1.bf16.xpose.msra.mxu0 0
    %2794 = vmatprep.subr.bf16.mxu0 0
    %2795 = vmatpush1.bf16.xpose.msra.mxu0 0
    %2796 = vmatprep.subr.bf16.mxu0 0
    %2797 = vmatpush1.bf16.xpose.msra.mxu0 0
    %2798 = vmatprep.subr.bf16.mxu0 %v2729
    %2799 = vmatpush1.bf16.xpose.msra.mxu0 %v2728
    %2800 = vmatprep.subr.bf16.mxu0 %v2725
    %2801 = vmatpush1.bf16.xpose.msra.mxu0 %v2724
    %2802 = vmatprep.subr.bf16.mxu0 0
    %2803 = vmatpush2.bf16.xpose.msra.mxu0 0
    %2804 = vmatprep.subr.bf16.mxu0 0
    %2805 = vmatpush2.bf16.xpose.msra.mxu0 0
    %2806 = vmatprep.subr.bf16.mxu0 0
    %2807 = vmatpush2.bf16.xpose.msra.mxu0 0
    %2808 = vmatprep.subr.bf16.mxu0 0
    %2809 = vmatpush2.bf16.xpose.msra.mxu0 0
    %2810 = vmatprep.subr.bf16.mxu0 0
    %2811 = vmatpush2.bf16.xpose.msra.mxu0 0
    %2812 = vmatprep.subr.bf16.mxu0 0
    %2813 = vmatpush2.bf16.xpose.msra.mxu0 0
    %2814 = vmatprep.subr.bf16.mxu0 0
    %2815 = vmatpush2.bf16.xpose.msra.mxu0 0
    %2816 = vmatprep.subr.bf16.mxu0 0
    %2817 = vmatpush2.bf16.xpose.msra.mxu0 0
    %2818 = vmatprep.mubr.bf16.mxu0 %v2349
    %2819 = vmatmul.mubr.bf16.gmra.mxu0 %v2348
    %v2820 = vpop.f32.mrf.mxu0
    %v2821 = vadd.f32 %v2773, %v2820
    %v2822 = vpop.f32.mrf.mxu0
    %v2823 = vpop.f32.mrf.mxu0
    %v2824 = vadd.f32 %v2776, %v2823
    %v2825 = vpop.f32.mrf.mxu0
    %2826 = vmatprep.mubr.bf16.mxu0 %v2353
    %2827 = vmatmul.mubr.bf16.gmra.mxu0 %v2352
    %v2828 = vpop.f32.mrf.mxu0
    %v2829 = vadd.f32 %v2781, %v2828
    %v2830 = vpop.f32.mrf.mxu0
    %v2831 = vpop.f32.mrf.mxu0
    %v2832 = vpop.f32.mrf.mxu0
    %2833 = vdwg.mxu0
    %v2834 = vld [vmem:[#allocation2 + $0x20] sm:$0xff]
    %v2835 = vld [vmem:[#allocation2 + $0x28] sm:$0xff]
    %v2836 = vld [vmem:[#allocation2 + $0x60] sm:$0xff]
    %v2837 = vld [vmem:[#allocation2 + $0x68] sm:$0xff]
    %v2838 = vld [vmem:[#allocation2 + $0xa0] sm:$0xff]
    %v2839 = vld [vmem:[#allocation2 + $0xa8] sm:$0xff]
    %v2840 = vld [vmem:[#allocation2 + $0xe0] sm:$0xff]
    %v2841 = vld [vmem:[#allocation2 + $0xe8] sm:$0xff]
    %v2842 = vld [vmem:[%s18 + $0x8] sm:$0xf]
    %v2844 = vlaneseq
    %v2845 = vshrl.u32 %v2844, 7
    %v2846 = vsub.s32 0, %v2845
    %v2847 = vrot.slane %v2842, %v2846
    %v2848 = vlaneseq
    %v2849 = vshrl.u32 %v2848, 7
    %v2850 = vsub.s32 1, %v2849
    %v2851 = vrot.slane %v2842, %v2850
    %v2852 = vlaneseq
    %v2853 = vshrl.u32 %v2852, 7
    %v2854 = vsub.s32 2, %v2853
    %v2855 = vrot.slane %v2842, %v2854
    %v2856 = vlaneseq
    %v2857 = vshrl.u32 %v2856, 7
    %v2858 = vsub.s32 3, %v2857
    %v2859 = vrot.slane %v2842, %v2858
    %v2872 = vunpack.c.l.b16 %v2834
    %v2873 = vunpack.c.h.b16 %v2834
    %v2874 = vunpack.c.l.b16 %v2835
    %v2875 = vunpack.c.h.b16 %v2835
    %v2876 = vunpack.c.l.b16 %v2836
    %v2877 = vunpack.c.h.b16 %v2836
    %v2878 = vunpack.c.l.b16 %v2837
    %v2879 = vunpack.c.h.b16 %v2837
    %v2880 = vunpack.c.l.b16 %v2838
    %v2881 = vunpack.c.h.b16 %v2838
    %v2882 = vunpack.c.l.b16 %v2839
    %v2883 = vunpack.c.h.b16 %v2839
    %v2884 = vunpack.c.l.b16 %v2840
    %v2885 = vunpack.c.h.b16 %v2840
    %v2886 = vunpack.c.l.b16 %v2841
    %v2887 = vunpack.c.h.b16 %v2841
    %v2888 = vpack.c.b16 %v2876, %v2872
    %v2889 = vpack.c.b16 %v2877, %v2873
    %v2890 = vpack.c.b16 %v2878, %v2874
    %v2891 = vpack.c.b16 %v2879, %v2875
    %v2892 = vpack.c.b16 %v2884, %v2880
    %v2893 = vpack.c.b16 %v2885, %v2881
    %v2894 = vpack.c.b16 %v2886, %v2882
    %v2895 = vpack.c.b16 %v2887, %v2883
    %2904 = vmatprep.subr.bf16.mxu0 0
    %2905 = vmatpush1.bf16.msra.mxu0 0
    %2906 = vmatprep.subr.bf16.mxu0 0
    %2907 = vmatpush1.bf16.msra.mxu0 0
    %2908 = vmatprep.subr.bf16.mxu0 0
    %2909 = vmatpush1.bf16.msra.mxu0 0
    %2910 = vmatprep.subr.bf16.mxu0 0
    %2911 = vmatpush1.bf16.msra.mxu0 0
    %2912 = vmatprep.subr.bf16.mxu0 0
    %2913 = vmatpush1.bf16.msra.mxu0 0
    %2914 = vmatprep.subr.bf16.mxu0 0
    %2915 = vmatpush1.bf16.msra.mxu0 0
    %2916 = vmatprep.subr.bf16.mxu0 %v2893
    %2917 = vmatpush1.bf16.msra.mxu0 %v2892
    %2918 = vmatprep.subr.bf16.mxu0 %v2889
    %2919 = vmatpush1.bf16.msra.mxu0 %v2888
    %2920 = vmatprep.subr.bf16.mxu0 0
    %2921 = vmatpush2.bf16.msra.mxu0 0
    %2922 = vmatprep.subr.bf16.mxu0 0
    %2923 = vmatpush2.bf16.msra.mxu0 0
    %2924 = vmatprep.subr.bf16.mxu0 0
    %2925 = vmatpush2.bf16.msra.mxu0 0
    %2926 = vmatprep.subr.bf16.mxu0 0
    %2927 = vmatpush2.bf16.msra.mxu0 0
    %2928 = vmatprep.subr.bf16.mxu0 0
    %2929 = vmatpush2.bf16.msra.mxu0 0
    %2930 = vmatprep.subr.bf16.mxu0 0
    %2931 = vmatpush2.bf16.msra.mxu0 0
    %2932 = vmatprep.subr.bf16.mxu0 0
    %2933 = vmatpush2.bf16.msra.mxu0 0
    %2934 = vmatprep.subr.bf16.mxu0 0
    %2935 = vmatpush2.bf16.msra.mxu0 0
    %2936 = vmatprep.mubr.bf16.mxu0 0
    %2937 = vmatmul.mubr.bf16.gmra.mxu0 %v2227
    %v2938 = vpop.f32.mrf.mxu0
    %v2939 = vadd.f32 %v2847, %v2938
    %v2940 = vpop.f32.mrf.mxu0
    %v2941 = vadd.f32 %v2851, %v2940
    %v2942 = vpop.f32.mrf.mxu0
    %v2943 = vadd.f32 %v2847, %v2942
    %v2944 = vpop.f32.mrf.mxu0
    %v2945 = vadd.f32 %v2851, %v2944
    %2946 = vmatprep.mubr.bf16.mxu0 0
    %2947 = vmatmul.mubr.bf16.gmra.mxu0 %v2230
    %v2948 = vpop.f32.mrf.mxu0
    %v2949 = vadd.f32 %v2847, %v2948
    %v2950 = vpop.f32.mrf.mxu0
    %v2951 = vadd.f32 %v2851, %v2950
    %v2952 = vpop.f32.mrf.mxu0
    %v2953 = vpop.f32.mrf.mxu0
    %2954 = vdwg.mxu0
    %2955 = vmatprep.subr.bf16.mxu0 0
    %2956 = vmatpush1.bf16.msra.mxu0 0
    %2957 = vmatprep.subr.bf16.mxu0 0
    %2958 = vmatpush1.bf16.msra.mxu0 0
    %2959 = vmatprep.subr.bf16.mxu0 0
    %2960 = vmatpush1.bf16.msra.mxu0 0
    %2961 = vmatprep.subr.bf16.mxu0 0
    %2962 = vmatpush1.bf16.msra.mxu0 0
    %2963 = vmatprep.subr.bf16.mxu0 0
    %2964 = vmatpush1.bf16.msra.mxu0 0
    %2965 = vmatprep.subr.bf16.mxu0 0
    %2966 = vmatpush1.bf16.msra.mxu0 0
    %2967 = vmatprep.subr.bf16.mxu0 %v2895
    %2968 = vmatpush1.bf16.msra.mxu0 %v2894
    %2969 = vmatprep.subr.bf16.mxu0 %v2891
    %2970 = vmatpush1.bf16.msra.mxu0 %v2890
    %2971 = vmatprep.subr.bf16.mxu0 0
    %2972 = vmatpush2.bf16.msra.mxu0 0
    %2973 = vmatprep.subr.bf16.mxu0 0
    %2974 = vmatpush2.bf16.msra.mxu0 0
    %2975 = vmatprep.subr.bf16.mxu0 0
    %2976 = vmatpush2.bf16.msra.mxu0 0
    %2977 = vmatprep.subr.bf16.mxu0 0
    %2978 = vmatpush2.bf16.msra.mxu0 0
    %2979 = vmatprep.subr.bf16.mxu0 0
    %2980 = vmatpush2.bf16.msra.mxu0 0
    %2981 = vmatprep.subr.bf16.mxu0 0
    %2982 = vmatpush2.bf16.msra.mxu0 0
    %2983 = vmatprep.subr.bf16.mxu0 0
    %2984 = vmatpush2.bf16.msra.mxu0 0
    %2985 = vmatprep.subr.bf16.mxu0 0
    %2986 = vmatpush2.bf16.msra.mxu0 0
    %2987 = vmatprep.mubr.bf16.mxu0 0
    %2988 = vmatmul.mubr.bf16.gmra.mxu0 %v2227
    %v2989 = vpop.f32.mrf.mxu0
    %v2990 = vadd.f32 %v2855, %v2989
    %v2991 = vpop.f32.mrf.mxu0
    %v2992 = vadd.f32 %v2859, %v2991
    %v2993 = vpop.f32.mrf.mxu0
    %v2994 = vadd.f32 %v2855, %v2993
    %v2995 = vpop.f32.mrf.mxu0
    %v2996 = vadd.f32 %v2859, %v2995
    %2997 = vmatprep.mubr.bf16.mxu0 0
    %2998 = vmatmul.mubr.bf16.gmra.mxu0 %v2230
    %v2999 = vpop.f32.mrf.mxu0
    %v3000 = vadd.f32 %v2855, %v2999
    %v3001 = vpop.f32.mrf.mxu0
    %v3002 = vadd.f32 %v2859, %v3001
    %v3003 = vpop.f32.mrf.mxu0
    %v3004 = vpop.f32.mrf.mxu0
    %3005 = vdwg.mxu0
    %v3006 = vmax.f32 %v2939, 0.0
    %v3007 = vmax.f32 %v2941, 0.0
    %v3008 = vmax.f32 %v2990, 0.0
    %v3009 = vmax.f32 %v2992, 0.0
    %v3010 = vmax.f32 %v2943, 0.0
    %v3011 = vmax.f32 %v2945, 0.0
    %v3012 = vmax.f32 %v2994, 0.0
    %v3013 = vmax.f32 %v2996, 0.0
    %v3014 = vmax.f32 %v2949, 0.0
    %v3015 = vmax.f32 %v2951, 0.0
    %v3016 = vmax.f32 %v3000, 0.0
    %v3017 = vmax.f32 %v3002, 0.0
    %v3018 = vpack.c.bf16 %v3010, %v3006
    %v3019 = vpack.c.bf16 %v3011, %v3007
    %v3020 = vpack.c.bf16 %v3012, %v3008
    %v3021 = vpack.c.bf16 %v3013, %v3009
    %v3022 = vpack.c.bf16 %v3014, %v3014
    %v3023 = vpack.c.bf16 %v3015, %v3015
    %v3024 = vpack.c.bf16 %v3016, %v3016
    %v3025 = vpack.c.bf16 %v3017, %v3017
    %v3026 = vld [vmem:[#allocation3 + $0x20] sm:$0xff]
    %v3027 = vld [vmem:[#allocation3 + $0x28] sm:$0xff]
    %v3028 = vld [vmem:[#allocation3 + $0x60] sm:$0xff]
    %v3029 = vld [vmem:[#allocation3 + $0x68] sm:$0xff]
    %v3030 = vld [vmem:[#allocation3 + $0xa0] sm:$0xff]
    %v3031 = vld [vmem:[#allocation3 + $0xa8] sm:$0xff]
    %v3032 = vld [vmem:[#allocation3 + $0xe0] sm:$0xff]
    %v3033 = vld [vmem:[#allocation3 + $0xe8] sm:$0xff]
    %v3042 = vunpack.c.l.b16 %v3026
    %v3043 = vunpack.c.h.b16 %v3026
    %v3044 = vunpack.c.l.b16 %v3027
    %v3045 = vunpack.c.h.b16 %v3027
    %v3046 = vunpack.c.l.b16 %v3028
    %v3047 = vunpack.c.h.b16 %v3028
    %v3048 = vunpack.c.l.b16 %v3029
    %v3049 = vunpack.c.h.b16 %v3029
    %v3050 = vunpack.c.l.b16 %v3030
    %v3051 = vunpack.c.h.b16 %v3030
    %v3052 = vunpack.c.l.b16 %v3031
    %v3053 = vunpack.c.h.b16 %v3031
    %v3054 = vunpack.c.l.b16 %v3032
    %v3055 = vunpack.c.h.b16 %v3032
    %v3056 = vunpack.c.l.b16 %v3033
    %v3057 = vunpack.c.h.b16 %v3033
    %v3058 = vpack.c.b16 %v3046, %v3042
    %v3059 = vpack.c.b16 %v3047, %v3043
    %v3060 = vpack.c.b16 %v3048, %v3044
    %v3061 = vpack.c.b16 %v3049, %v3045
    %v3062 = vpack.c.b16 %v3054, %v3050
    %v3063 = vpack.c.b16 %v3055, %v3051
    %v3064 = vpack.c.b16 %v3056, %v3052
    %v3065 = vpack.c.b16 %v3057, %v3053
    %3074 = vmatprep.subr.bf16.mxu0 0
    %3075 = vmatpush1.bf16.xpose.msra.mxu0 0
    %3076 = vmatprep.subr.bf16.mxu0 0
    %3077 = vmatpush1.bf16.xpose.msra.mxu0 0
    %3078 = vmatprep.subr.bf16.mxu0 0
    %3079 = vmatpush1.bf16.xpose.msra.mxu0 0
    %3080 = vmatprep.subr.bf16.mxu0 0
    %3081 = vmatpush1.bf16.xpose.msra.mxu0 0
    %3082 = vmatprep.subr.bf16.mxu0 0
    %3083 = vmatpush1.bf16.xpose.msra.mxu0 0
    %3084 = vmatprep.subr.bf16.mxu0 0
    %3085 = vmatpush1.bf16.xpose.msra.mxu0 0
    %3086 = vmatprep.subr.bf16.mxu0 %v3063
    %3087 = vmatpush1.bf16.xpose.msra.mxu0 %v3062
    %3088 = vmatprep.subr.bf16.mxu0 %v3059
    %3089 = vmatpush1.bf16.xpose.msra.mxu0 %v3058
    %3090 = vmatprep.subr.bf16.mxu0 0
    %3091 = vmatpush2.bf16.xpose.msra.mxu0 0
    %3092 = vmatprep.subr.bf16.mxu0 0
    %3093 = vmatpush2.bf16.xpose.msra.mxu0 0
    %3094 = vmatprep.subr.bf16.mxu0 0
    %3095 = vmatpush2.bf16.xpose.msra.mxu0 0
    %3096 = vmatprep.subr.bf16.mxu0 0
    %3097 = vmatpush2.bf16.xpose.msra.mxu0 0
    %3098 = vmatprep.subr.bf16.mxu0 0
    %3099 = vmatpush2.bf16.xpose.msra.mxu0 0
    %3100 = vmatprep.subr.bf16.mxu0 0
    %3101 = vmatpush2.bf16.xpose.msra.mxu0 0
    %3102 = vmatprep.subr.bf16.mxu0 0
    %3103 = vmatpush2.bf16.xpose.msra.mxu0 0
    %3104 = vmatprep.subr.bf16.mxu0 0
    %3105 = vmatpush2.bf16.xpose.msra.mxu0 0
    %3106 = vmatprep.mubr.bf16.mxu0 %v3019
    %3107 = vmatmul.mubr.bf16.gmra.mxu0 %v3018
    %v3108 = vpop.f32.mrf.mxu0
    %v3109 = vadd.f32 0.0, %v3108
    %v3110 = vpop.f32.mrf.mxu0
    %v3111 = vpop.f32.mrf.mxu0
    %v3112 = vadd.f32 0.0, %v3111
    %v3113 = vpop.f32.mrf.mxu0
    %3114 = vmatprep.mubr.bf16.mxu0 %v3023
    %3115 = vmatmul.mubr.bf16.gmra.mxu0 %v3022
    %v3116 = vpop.f32.mrf.mxu0
    %v3117 = vadd.f32 0.0, %v3116
    %v3118 = vpop.f32.mrf.mxu0
    %v3119 = vpop.f32.mrf.mxu0
    %v3120 = vpop.f32.mrf.mxu0
    %3121 = vdwg.mxu0
    %3122 = vmatprep.subr.bf16.mxu0 0
    %3123 = vmatpush1.bf16.xpose.msra.mxu0 0
    %3124 = vmatprep.subr.bf16.mxu0 0
    %3125 = vmatpush1.bf16.xpose.msra.mxu0 0
    %3126 = vmatprep.subr.bf16.mxu0 0
    %3127 = vmatpush1.bf16.xpose.msra.mxu0 0
    %3128 = vmatprep.subr.bf16.mxu0 0
    %3129 = vmatpush1.bf16.xpose.msra.mxu0 0
    %3130 = vmatprep.subr.bf16.mxu0 0
    %3131 = vmatpush1.bf16.xpose.msra.mxu0 0
    %3132 = vmatprep.subr.bf16.mxu0 0
    %3133 = vmatpush1.bf16.xpose.msra.mxu0 0
    %3134 = vmatprep.subr.bf16.mxu0 %v3065
    %3135 = vmatpush1.bf16.xpose.msra.mxu0 %v3064
    %3136 = vmatprep.subr.bf16.mxu0 %v3061
    %3137 = vmatpush1.bf16.xpose.msra.mxu0 %v3060
    %3138 = vmatprep.subr.bf16.mxu0 0
    %3139 = vmatpush2.bf16.xpose.msra.mxu0 0
    %3140 = vmatprep.subr.bf16.mxu0 0
    %3141 = vmatpush2.bf16.xpose.msra.mxu0 0
    %3142 = vmatprep.subr.bf16.mxu0 0
    %3143 = vmatpush2.bf16.xpose.msra.mxu0 0
    %3144 = vmatprep.subr.bf16.mxu0 0
    %3145 = vmatpush2.bf16.xpose.msra.mxu0 0
    %3146 = vmatprep.subr.bf16.mxu0 0
    %3147 = vmatpush2.bf16.xpose.msra.mxu0 0
    %3148 = vmatprep.subr.bf16.mxu0 0
    %3149 = vmatpush2.bf16.xpose.msra.mxu0 0
    %3150 = vmatprep.subr.bf16.mxu0 0
    %3151 = vmatpush2.bf16.xpose.msra.mxu0 0
    %3152 = vmatprep.subr.bf16.mxu0 0
    %3153 = vmatpush2.bf16.xpose.msra.mxu0 0
    %3154 = vmatprep.mubr.bf16.mxu0 %v3021
    %3155 = vmatmul.mubr.bf16.gmra.mxu0 %v3020
    %v3156 = vpop.f32.mrf.mxu0
    %v3157 = vadd.f32 %v3109, %v3156
    %v3158 = vpop.f32.mrf.mxu0
    %v3159 = vpop.f32.mrf.mxu0
    %v3160 = vadd.f32 %v3112, %v3159
    %v3161 = vpop.f32.mrf.mxu0
    %3162 = vmatprep.mubr.bf16.mxu0 %v3025
    %3163 = vmatmul.mubr.bf16.gmra.mxu0 %v3024
    %v3164 = vpop.f32.mrf.mxu0
    %v3165 = vadd.f32 %v3117, %v3164
    %v3166 = vpop.f32.mrf.mxu0
    %v3167 = vpop.f32.mrf.mxu0
    %v3168 = vpop.f32.mrf.mxu0
    %3169 = vdwg.mxu0
    %v3170 = vadd.f32 %v2821, %v3157
    %v3171 = vadd.f32 %v2824, %v3160
    %v3172 = vadd.f32 %v2829, %v3165
    %v3173 = vld [vmem:[#allocation2 + $0x30] sm:$0xff]
    %v3174 = vld [vmem:[#allocation2 + $0x38] sm:$0xff]
    %v3175 = vld [vmem:[#allocation2 + $0x70] sm:$0xff]
    %v3176 = vld [vmem:[#allocation2 + $0x78] sm:$0xff]
    %v3177 = vld [vmem:[#allocation2 + $0xb0] sm:$0xff]
    %v3178 = vld [vmem:[#allocation2 + $0xb8] sm:$0xff]
    %v3179 = vld [vmem:[#allocation2 + $0xf0] sm:$0xff]
    %v3180 = vld [vmem:[#allocation2 + $0xf8] sm:$0xff]
    %v3181 = vld [vmem:[%s18 + $0xc] sm:$0xf]
    %v3183 = vlaneseq
    %v3184 = vshrl.u32 %v3183, 7
    %v3185 = vsub.s32 0, %v3184
    %v3186 = vrot.slane %v3181, %v3185
    %v3187 = vlaneseq
    %v3188 = vshrl.u32 %v3187, 7
    %v3189 = vsub.s32 1, %v3188
    %v3190 = vrot.slane %v3181, %v3189
    %v3191 = vlaneseq
    %v3192 = vshrl.u32 %v3191, 7
    %v3193 = vsub.s32 2, %v3192
    %v3194 = vrot.slane %v3181, %v3193
    %v3195 = vlaneseq
    %v3196 = vshrl.u32 %v3195, 7
    %v3197 = vsub.s32 3, %v3196
    %v3198 = vrot.slane %v3181, %v3197
    %v3211 = vunpack.c.l.b16 %v3173
    %v3212 = vunpack.c.h.b16 %v3173
    %v3213 = vunpack.c.l.b16 %v3174
    %v3214 = vunpack.c.h.b16 %v3174
    %v3215 = vunpack.c.l.b16 %v3175
    %v3216 = vunpack.c.h.b16 %v3175
    %v3217 = vunpack.c.l.b16 %v3176
    %v3218 = vunpack.c.h.b16 %v3176
    %v3219 = vunpack.c.l.b16 %v3177
    %v3220 = vunpack.c.h.b16 %v3177
    %v3221 = vunpack.c.l.b16 %v3178
    %v3222 = vunpack.c.h.b16 %v3178
    %v3223 = vunpack.c.l.b16 %v3179
    %v3224 = vunpack.c.h.b16 %v3179
    %v3225 = vunpack.c.l.b16 %v3180
    %v3226 = vunpack.c.h.b16 %v3180
    %v3227 = vpack.c.b16 %v3215, %v3211
    %v3228 = vpack.c.b16 %v3216, %v3212
    %v3229 = vpack.c.b16 %v3217, %v3213
    %v3230 = vpack.c.b16 %v3218, %v3214
    %v3231 = vpack.c.b16 %v3223, %v3219
    %v3232 = vpack.c.b16 %v3224, %v3220
    %v3233 = vpack.c.b16 %v3225, %v3221
    %v3234 = vpack.c.b16 %v3226, %v3222
    %3243 = vmatprep.subr.bf16.mxu0 0
    %3244 = vmatpush1.bf16.msra.mxu0 0
    %3245 = vmatprep.subr.bf16.mxu0 0
    %3246 = vmatpush1.bf16.msra.mxu0 0
    %3247 = vmatprep.subr.bf16.mxu0 0
    %3248 = vmatpush1.bf16.msra.mxu0 0
    %3249 = vmatprep.subr.bf16.mxu0 0
    %3250 = vmatpush1.bf16.msra.mxu0 0
    %3251 = vmatprep.subr.bf16.mxu0 0
    %3252 = vmatpush1.bf16.msra.mxu0 0
    %3253 = vmatprep.subr.bf16.mxu0 0
    %3254 = vmatpush1.bf16.msra.mxu0 0
    %3255 = vmatprep.subr.bf16.mxu0 %v3232
    %3256 = vmatpush1.bf16.msra.mxu0 %v3231
    %3257 = vmatprep.subr.bf16.mxu0 %v3228
    %3258 = vmatpush1.bf16.msra.mxu0 %v3227
    %3259 = vmatprep.subr.bf16.mxu0 0
    %3260 = vmatpush2.bf16.msra.mxu0 0
    %3261 = vmatprep.subr.bf16.mxu0 0
    %3262 = vmatpush2.bf16.msra.mxu0 0
    %3263 = vmatprep.subr.bf16.mxu0 0
    %3264 = vmatpush2.bf16.msra.mxu0 0
    %3265 = vmatprep.subr.bf16.mxu0 0
    %3266 = vmatpush2.bf16.msra.mxu0 0
    %3267 = vmatprep.subr.bf16.mxu0 0
    %3268 = vmatpush2.bf16.msra.mxu0 0
    %3269 = vmatprep.subr.bf16.mxu0 0
    %3270 = vmatpush2.bf16.msra.mxu0 0
    %3271 = vmatprep.subr.bf16.mxu0 0
    %3272 = vmatpush2.bf16.msra.mxu0 0
    %3273 = vmatprep.subr.bf16.mxu0 0
    %3274 = vmatpush2.bf16.msra.mxu0 0
    %3275 = vmatprep.mubr.bf16.mxu0 0
    %3276 = vmatmul.mubr.bf16.gmra.mxu0 %v2227
    %v3277 = vpop.f32.mrf.mxu0
    %v3278 = vadd.f32 %v3186, %v3277
    %v3279 = vpop.f32.mrf.mxu0
    %v3280 = vadd.f32 %v3190, %v3279
    %v3281 = vpop.f32.mrf.mxu0
    %v3282 = vadd.f32 %v3186, %v3281
    %v3283 = vpop.f32.mrf.mxu0
    %v3284 = vadd.f32 %v3190, %v3283
    %3285 = vmatprep.mubr.bf16.mxu0 0
    %3286 = vmatmul.mubr.bf16.gmra.mxu0 %v2230
    %v3287 = vpop.f32.mrf.mxu0
    %v3288 = vadd.f32 %v3186, %v3287
    %v3289 = vpop.f32.mrf.mxu0
    %v3290 = vadd.f32 %v3190, %v3289
    %v3291 = vpop.f32.mrf.mxu0
    %v3292 = vpop.f32.mrf.mxu0
    %3293 = vdwg.mxu0
    %3294 = vmatprep.subr.bf16.mxu0 0
    %3295 = vmatpush1.bf16.msra.mxu0 0
    %3296 = vmatprep.subr.bf16.mxu0 0
    %3297 = vmatpush1.bf16.msra.mxu0 0
    %3298 = vmatprep.subr.bf16.mxu0 0
    %3299 = vmatpush1.bf16.msra.mxu0 0
    %3300 = vmatprep.subr.bf16.mxu0 0
    %3301 = vmatpush1.bf16.msra.mxu0 0
    %3302 = vmatprep.subr.bf16.mxu0 0
    %3303 = vmatpush1.bf16.msra.mxu0 0
    %3304 = vmatprep.subr.bf16.mxu0 0
    %3305 = vmatpush1.bf16.msra.mxu0 0
    %3306 = vmatprep.subr.bf16.mxu0 %v3234
    %3307 = vmatpush1.bf16.msra.mxu0 %v3233
    %3308 = vmatprep.subr.bf16.mxu0 %v3230
    %3309 = vmatpush1.bf16.msra.mxu0 %v3229
    %3310 = vmatprep.subr.bf16.mxu0 0
    %3311 = vmatpush2.bf16.msra.mxu0 0
    %3312 = vmatprep.subr.bf16.mxu0 0
    %3313 = vmatpush2.bf16.msra.mxu0 0
    %3314 = vmatprep.subr.bf16.mxu0 0
    %3315 = vmatpush2.bf16.msra.mxu0 0
    %3316 = vmatprep.subr.bf16.mxu0 0
    %3317 = vmatpush2.bf16.msra.mxu0 0
    %3318 = vmatprep.subr.bf16.mxu0 0
    %3319 = vmatpush2.bf16.msra.mxu0 0
    %3320 = vmatprep.subr.bf16.mxu0 0
    %3321 = vmatpush2.bf16.msra.mxu0 0
    %3322 = vmatprep.subr.bf16.mxu0 0
    %3323 = vmatpush2.bf16.msra.mxu0 0
    %3324 = vmatprep.subr.bf16.mxu0 0
    %3325 = vmatpush2.bf16.msra.mxu0 0
    %3326 = vmatprep.mubr.bf16.mxu0 0
    %3327 = vmatmul.mubr.bf16.gmra.mxu0 %v2227
    %v3328 = vpop.f32.mrf.mxu0
    %v3329 = vadd.f32 %v3194, %v3328
    %v3330 = vpop.f32.mrf.mxu0
    %v3331 = vadd.f32 %v3198, %v3330
    %v3332 = vpop.f32.mrf.mxu0
    %v3333 = vadd.f32 %v3194, %v3332
    %v3334 = vpop.f32.mrf.mxu0
    %v3335 = vadd.f32 %v3198, %v3334
    %3336 = vmatprep.mubr.bf16.mxu0 0
    %3337 = vmatmul.mubr.bf16.gmra.mxu0 %v2230
    %v3338 = vpop.f32.mrf.mxu0
    %v3339 = vadd.f32 %v3194, %v3338
    %v3340 = vpop.f32.mrf.mxu0
    %v3341 = vadd.f32 %v3198, %v3340
    %v3342 = vpop.f32.mrf.mxu0
    %v3343 = vpop.f32.mrf.mxu0
    %3344 = vdwg.mxu0
    %v3345 = vmax.f32 %v3278, 0.0
    %v3346 = vmax.f32 %v3280, 0.0
    %v3347 = vmax.f32 %v3329, 0.0
    %v3348 = vmax.f32 %v3331, 0.0
    %v3349 = vmax.f32 %v3282, 0.0
    %v3350 = vmax.f32 %v3284, 0.0
    %v3351 = vmax.f32 %v3333, 0.0
    %v3352 = vmax.f32 %v3335, 0.0
    %v3353 = vmax.f32 %v3288, 0.0
    %v3354 = vmax.f32 %v3290, 0.0
    %v3355 = vmax.f32 %v3339, 0.0
    %v3356 = vmax.f32 %v3341, 0.0
    %v3357 = vpack.c.bf16 %v3349, %v3345
    %v3358 = vpack.c.bf16 %v3350, %v3346
    %v3359 = vpack.c.bf16 %v3351, %v3347
    %v3360 = vpack.c.bf16 %v3352, %v3348
    %v3361 = vpack.c.bf16 %v3353, %v3353
    %v3362 = vpack.c.bf16 %v3354, %v3354
    %v3363 = vpack.c.bf16 %v3355, %v3355
    %v3364 = vpack.c.bf16 %v3356, %v3356
    %v3365 = vld [vmem:[#allocation3 + $0x30] sm:$0xff]
    %v3366 = vld [vmem:[#allocation3 + $0x38] sm:$0xff]
    %v3367 = vld [vmem:[#allocation3 + $0x70] sm:$0xff]
    %v3368 = vld [vmem:[#allocation3 + $0x78] sm:$0xff]
    %v3369 = vld [vmem:[#allocation3 + $0xb0] sm:$0xff]
    %v3370 = vld [vmem:[#allocation3 + $0xb8] sm:$0xff]
    %v3371 = vld [vmem:[#allocation3 + $0xf0] sm:$0xff]
    %v3372 = vld [vmem:[#allocation3 + $0xf8] sm:$0xff]
    %v3381 = vunpack.c.l.b16 %v3365
    %v3382 = vunpack.c.h.b16 %v3365
    %v3383 = vunpack.c.l.b16 %v3366
    %v3384 = vunpack.c.h.b16 %v3366
    %v3385 = vunpack.c.l.b16 %v3367
    %v3386 = vunpack.c.h.b16 %v3367
    %v3387 = vunpack.c.l.b16 %v3368
    %v3388 = vunpack.c.h.b16 %v3368
    %v3389 = vunpack.c.l.b16 %v3369
    %v3390 = vunpack.c.h.b16 %v3369
    %v3391 = vunpack.c.l.b16 %v3370
    %v3392 = vunpack.c.h.b16 %v3370
    %v3393 = vunpack.c.l.b16 %v3371
    %v3394 = vunpack.c.h.b16 %v3371
    %v3395 = vunpack.c.l.b16 %v3372
    %v3396 = vunpack.c.h.b16 %v3372
    %v3397 = vpack.c.b16 %v3385, %v3381
    %v3398 = vpack.c.b16 %v3386, %v3382
    %v3399 = vpack.c.b16 %v3387, %v3383
    %v3400 = vpack.c.b16 %v3388, %v3384
    %v3401 = vpack.c.b16 %v3393, %v3389
    %v3402 = vpack.c.b16 %v3394, %v3390
    %v3403 = vpack.c.b16 %v3395, %v3391
    %v3404 = vpack.c.b16 %v3396, %v3392
    %3413 = vmatprep.subr.bf16.mxu0 0
    %3414 = vmatpush1.bf16.xpose.msra.mxu0 0
    %3415 = vmatprep.subr.bf16.mxu0 0
    %3416 = vmatpush1.bf16.xpose.msra.mxu0 0
    %3417 = vmatprep.subr.bf16.mxu0 0
    %3418 = vmatpush1.bf16.xpose.msra.mxu0 0
    %3419 = vmatprep.subr.bf16.mxu0 0
    %3420 = vmatpush1.bf16.xpose.msra.mxu0 0
    %3421 = vmatprep.subr.bf16.mxu0 0
    %3422 = vmatpush1.bf16.xpose.msra.mxu0 0
    %3423 = vmatprep.subr.bf16.mxu0 0
    %3424 = vmatpush1.bf16.xpose.msra.mxu0 0
    %3425 = vmatprep.subr.bf16.mxu0 %v3402
    %3426 = vmatpush1.bf16.xpose.msra.mxu0 %v3401
    %3427 = vmatprep.subr.bf16.mxu0 %v3398
    %3428 = vmatpush1.bf16.xpose.msra.mxu0 %v3397
    %3429 = vmatprep.subr.bf16.mxu0 0
    %3430 = vmatpush2.bf16.xpose.msra.mxu0 0
    %3431 = vmatprep.subr.bf16.mxu0 0
    %3432 = vmatpush2.bf16.xpose.msra.mxu0 0
    %3433 = vmatprep.subr.bf16.mxu0 0
    %3434 = vmatpush2.bf16.xpose.msra.mxu0 0
    %3435 = vmatprep.subr.bf16.mxu0 0
    %3436 = vmatpush2.bf16.xpose.msra.mxu0 0
    %3437 = vmatprep.subr.bf16.mxu0 0
    %3438 = vmatpush2.bf16.xpose.msra.mxu0 0
    %3439 = vmatprep.subr.bf16.mxu0 0
    %3440 = vmatpush2.bf16.xpose.msra.mxu0 0
    %3441 = vmatprep.subr.bf16.mxu0 0
    %3442 = vmatpush2.bf16.xpose.msra.mxu0 0
    %3443 = vmatprep.subr.bf16.mxu0 0
    %3444 = vmatpush2.bf16.xpose.msra.mxu0 0
    %3445 = vmatprep.mubr.bf16.mxu0 %v3358
    %3446 = vmatmul.mubr.bf16.gmra.mxu0 %v3357
    %v3447 = vpop.f32.mrf.mxu0
    %v3448 = vadd.f32 0.0, %v3447
    %v3449 = vpop.f32.mrf.mxu0
    %v3450 = vpop.f32.mrf.mxu0
    %v3451 = vadd.f32 0.0, %v3450
    %v3452 = vpop.f32.mrf.mxu0
    %3453 = vmatprep.mubr.bf16.mxu0 %v3362
    %3454 = vmatmul.mubr.bf16.gmra.mxu0 %v3361
    %v3455 = vpop.f32.mrf.mxu0
    %v3456 = vadd.f32 0.0, %v3455
    %v3457 = vpop.f32.mrf.mxu0
    %v3458 = vpop.f32.mrf.mxu0
    %v3459 = vpop.f32.mrf.mxu0
    %3460 = vdwg.mxu0
    %3461 = vmatprep.subr.bf16.mxu0 0
    %3462 = vmatpush1.bf16.xpose.msra.mxu0 0
    %3463 = vmatprep.subr.bf16.mxu0 0
    %3464 = vmatpush1.bf16.xpose.msra.mxu0 0
    %3465 = vmatprep.subr.bf16.mxu0 0
    %3466 = vmatpush1.bf16.xpose.msra.mxu0 0
    %3467 = vmatprep.subr.bf16.mxu0 0
    %3468 = vmatpush1.bf16.xpose.msra.mxu0 0
    %3469 = vmatprep.subr.bf16.mxu0 0
    %3470 = vmatpush1.bf16.xpose.msra.mxu0 0
    %3471 = vmatprep.subr.bf16.mxu0 0
    %3472 = vmatpush1.bf16.xpose.msra.mxu0 0
    %3473 = vmatprep.subr.bf16.mxu0 %v3404
    %3474 = vmatpush1.bf16.xpose.msra.mxu0 %v3403
    %3475 = vmatprep.subr.bf16.mxu0 %v3400
    %3476 = vmatpush1.bf16.xpose.msra.mxu0 %v3399
    %3477 = vmatprep.subr.bf16.mxu0 0
    %3478 = vmatpush2.bf16.xpose.msra.mxu0 0
    %3479 = vmatprep.subr.bf16.mxu0 0
    %3480 = vmatpush2.bf16.xpose.msra.mxu0 0
    %3481 = vmatprep.subr.bf16.mxu0 0
    %3482 = vmatpush2.bf16.xpose.msra.mxu0 0
    %3483 = vmatprep.subr.bf16.mxu0 0
    %3484 = vmatpush2.bf16.xpose.msra.mxu0 0
    %3485 = vmatprep.subr.bf16.mxu0 0
    %3486 = vmatpush2.bf16.xpose.msra.mxu0 0
    %3487 = vmatprep.subr.bf16.mxu0 0
    %3488 = vmatpush2.bf16.xpose.msra.mxu0 0
    %3489 = vmatprep.subr.bf16.mxu0 0
    %3490 = vmatpush2.bf16.xpose.msra.mxu0 0
    %3491 = vmatprep.subr.bf16.mxu0 0
    %3492 = vmatpush2.bf16.xpose.msra.mxu0 0
    %3493 = vmatprep.mubr.bf16.mxu0 %v3360
    %3494 = vmatmul.mubr.bf16.gmra.mxu0 %v3359
    %v3495 = vpop.f32.mrf.mxu0
    %v3496 = vadd.f32 %v3448, %v3495
    %v3497 = vpop.f32.mrf.mxu0
    %v3498 = vpop.f32.mrf.mxu0
    %v3499 = vadd.f32 %v3451, %v3498
    %v3500 = vpop.f32.mrf.mxu0
    %3501 = vmatprep.mubr.bf16.mxu0 %v3364
    %3502 = vmatmul.mubr.bf16.gmra.mxu0 %v3363
    %v3503 = vpop.f32.mrf.mxu0
    %v3504 = vadd.f32 %v3456, %v3503
    %v3505 = vpop.f32.mrf.mxu0
    %v3506 = vpop.f32.mrf.mxu0
    %v3507 = vpop.f32.mrf.mxu0
    %3508 = vdwg.mxu0
    %v3509 = vadd.f32 %v3170, %v3496
    %v3510 = vadd.f32 %v3171, %v3499
    %v3511 = vadd.f32 %v3172, %v3504
    %v3512 = vadd.f32 %v2117, %v3509
    %v3513 = vadd.f32 %v2118, %v3510
    %v3514 = vadd.f32 %v2119, %v3511
    %v3515 = vld [vmem:[#allocation24] sm:$0x1]
    %v3517 = vlaneseq
    %v3518 = vshrl.u32 %v3517, 7
    %v3519 = vsub.s32 0, %v3518
    %v3520 = vrot.slane %v3515, %v3519
    %v3522 = vadd.f32 %v3512, %v3520
    %v3523 = vadd.f32 %v3513, %v3520
    %v3524 = vadd.f32 %v3514, %v3520
    %v3525 = vld [vmem:[#allocation21] sm:$0x1]
    %v3526 = vld [vmem:[#allocation22] sm:$0x1]
    %v3527 = vsel %vm391, %v3522, 0.0
    %3528 = vadd.xlane.f32.xlu0 %v3527
    %v3529 = vpop.xlane.xlu0 %3528
    %v3530 = vsel %vm391, %v3523, 0.0
    %3531 = vadd.xlane.f32.xlu0 %v3530
    %v3532 = vpop.xlane.xlu0 %3531
    %v3533 = vsel %vm1998, %v3524, 0.0
    %3534 = vadd.xlane.f32.xlu0 %v3533
    %v3535 = vpop.xlane.xlu0 %3534
    %v3536 = vmul.f32 %v3529, %v2002
    %v3537 = vmul.f32 %v3532, %v2002
    %v3538 = vmul.f32 %v3535, %v2002
    %v3539 = vsub.f32 %v3522, %v3536
    %v3540 = vsub.f32 %v3523, %v3537
    %v3541 = vsub.f32 %v3524, %v3538
    %v3542 = vmul.f32 %v3539, %v3539
    %v3543 = vmul.f32 %v3540, %v3540
    %v3544 = vmul.f32 %v3541, %v3541
    %v3545 = vsel %vm391, %v3542, 0.0
    %3546 = vadd.xlane.f32.xlu0 %v3545
    %v3547 = vpop.xlane.xlu0 %3546
    %v3548 = vsel %vm391, %v3543, 0.0
    %3549 = vadd.xlane.f32.xlu0 %v3548
    %v3550 = vpop.xlane.xlu0 %3549
    %v3551 = vsel %vm1998, %v3544, 0.0
    %3552 = vadd.xlane.f32.xlu0 %v3551
    %v3553 = vpop.xlane.xlu0 %3552
    %v3554 = vmul.f32 %v3547, %v2002
    %v3555 = vmul.f32 %v3550, %v2002
    %v3556 = vmul.f32 %v3553, %v2002
    %v3557 = vadd.f32 %v3554, 1e-05
    %v3558 = vadd.f32 %v3555, 1e-05
    %v3559 = vadd.f32 %v3556, 1e-05
    %v3560 = vrsqrt.pop %v3557
    %v3561 = vrsqrt.pop %v3558
    %v3562 = vrsqrt.pop %v3559
    %v3563 = vmul.f32 %v3539, %v3560
    %v3564 = vmul.f32 %v3540, %v3561
    %v3565 = vmul.f32 %v3541, %v3562
    %v3567 = vlaneseq
    %v3568 = vshrl.u32 %v3567, 7
    %v3569 = vsub.s32 0, %v3568
    %v3570 = vrot.slane %v3525, %v3569
    %v3572 = vmul.f32 %v3563, %v3570
    %v3573 = vmul.f32 %v3564, %v3570
    %v3574 = vmul.f32 %v3565, %v3570
    %v3576 = vlaneseq
    %v3577 = vshrl.u32 %v3576, 7
    %v3578 = vsub.s32 0, %v3577
    %v3579 = vrot.slane %v3526, %v3578
    %v3581 = vadd.f32 %v3572, %v3579
    %v3582 = vadd.f32 %v3573, %v3579
    %v3583 = vadd.f32 %v3574, %v3579
    %s3584 = scalar_lea.vmem %s6, 32
    %v3585 = vld [vmem:[%s3584] sm:$0xff]
    %v3586 = vld [vmem:[%s3584 + $0x8] sm:$0xff]
    %v3587 = vld [vmem:[%s3584 + $0x10] sm:$0xff]
    %v3588 = vld [vmem:[%s3584 + $0x18] sm:$0xff]
    %s3589 = scalar_lea.vmem [#allocation10], 1
    %v3590 = vld [vmem:[%s3589] sm:$0x1]
    %v3592 = vlaneseq
    %v3593 = vshrl.u32 %v3592, 7
    %v3594 = vsub.s32 0, %v3593
    %v3595 = vrot.slane %v3590, %v3594
    %v3598 = vsel %vm391, %v3581, 0
    %v3601 = vsel %vm391, %v3582, 0
    %v3604 = vsel %vm391, %v3583, 0
    %3606 = vmatprep.subr.mxu0 0.0
    %3607 = vmatpush1.msra.mxu0 0.0
    %3608 = vmatprep.subr.mxu0 0.0
    %3609 = vmatpush1.msra.mxu0 0.0
    %3610 = vmatprep.subr.mxu0 0.0
    %3611 = vmatpush1.msra.mxu0 0.0
    %3612 = vmatprep.subr.mxu0 0.0
    %3613 = vmatpush1.msra.mxu0 0.0
    %3614 = vmatprep.subr.mxu0 0.0
    %3615 = vmatpush1.msra.mxu0 0.0
    %3616 = vmatprep.subr.mxu0 0.0
    %3617 = vmatpush1.msra.mxu0 0.0
    %3618 = vmatprep.subr.mxu0 0.0
    %3619 = vmatpush1.msra.mxu0 0.0
    %3620 = vmatprep.subr.mxu0 0.0
    %3621 = vmatpush1.msra.mxu0 0.0
    %3622 = vmatprep.subr.mxu0 0.0
    %3623 = vmatpush1.msra.mxu0 0.0
    %3624 = vmatprep.subr.mxu0 0.0
    %3625 = vmatpush1.msra.mxu0 0.0
    %3626 = vmatprep.subr.mxu0 0.0
    %3627 = vmatpush1.msra.mxu0 0.0
    %3628 = vmatprep.subr.mxu0 0.0
    %3629 = vmatpush1.msra.mxu0 0.0
    %3630 = vmatprep.subr.mxu0 0.0
    %3631 = vmatpush1.msra.mxu0 %v3588
    %3632 = vmatprep.subr.mxu0 0.0
    %3633 = vmatpush1.msra.mxu0 %v3587
    %3634 = vmatprep.subr.mxu0 0.0
    %3635 = vmatpush1.msra.mxu0 %v3586
    %3636 = vmatprep.subr.mxu0 0.0
    %3637 = vmatpush1.msra.mxu0 %v3585
    %3638 = vmatprep.subr.mxu0 0.0
    %3639 = vmatpush2.msra.mxu0 0.0
    %3640 = vmatprep.subr.mxu0 0.0
    %3641 = vmatpush2.msra.mxu0 0.0
    %3642 = vmatprep.subr.mxu0 0.0
    %3643 = vmatpush2.msra.mxu0 0.0
    %3644 = vmatprep.subr.mxu0 0.0
    %3645 = vmatpush2.msra.mxu0 0.0
    %3646 = vmatprep.subr.mxu0 0.0
    %3647 = vmatpush2.msra.mxu0 0.0
    %3648 = vmatprep.subr.mxu0 0.0
    %3649 = vmatpush2.msra.mxu0 0.0
    %3650 = vmatprep.subr.mxu0 0.0
    %3651 = vmatpush2.msra.mxu0 0.0
    %3652 = vmatprep.subr.mxu0 0.0
    %3653 = vmatpush2.msra.mxu0 0.0
    %3654 = vmatprep.subr.mxu0 0.0
    %3655 = vmatpush2.msra.mxu0 0.0
    %3656 = vmatprep.subr.mxu0 0.0
    %3657 = vmatpush2.msra.mxu0 0.0
    %3658 = vmatprep.subr.mxu0 0.0
    %3659 = vmatpush2.msra.mxu0 0.0
    %3660 = vmatprep.subr.mxu0 0.0
    %3661 = vmatpush2.msra.mxu0 0.0
    %3662 = vmatprep.subr.mxu0 0.0
    %3663 = vmatpush2.msra.mxu0 0.0
    %3664 = vmatprep.subr.mxu0 0.0
    %3665 = vmatpush2.msra.mxu0 0.0
    %3666 = vmatprep.subr.mxu0 0.0
    %3667 = vmatpush2.msra.mxu0 0.0
    %3668 = vmatprep.subr.mxu0 0.0
    %3669 = vmatpush2.msra.mxu0 0.0
    %3670 = vmatprep.mubr.f32.mxu0 0.0
    %3671 = vmatmul.mubr.f32.gmra.mxu0 %v3598
    %v3672 = vpop.f32.mrf.mxu0
    %v3673 = vadd.f32 %v3595, %v3672
    %v3674 = vpop.f32.mrf.mxu0
    %3675 = vmatprep.mubr.f32.mxu0 0.0
    %3676 = vmatmul.mubr.f32.gmra.mxu0 %v3601
    %v3677 = vpop.f32.mrf.mxu0
    %v3678 = vadd.f32 %v3595, %v3677
    %v3679 = vpop.f32.mrf.mxu0
    %3680 = vmatprep.mubr.f32.mxu0 0.0
    %3681 = vmatmul.mubr.f32.gmra.mxu0 %v3604
    %v3682 = vpop.f32.mrf.mxu0
    %v3683 = vadd.f32 %v3595, %v3682
    %v3684 = vpop.f32.mrf.mxu0
    %3685 = vdwg.mxu0
    %s3686 = scalar_lea.vmem [#allocation12], 1
    %v3687 = vld [vmem:[%s3686] sm:$0x1]
    %3691 = vrot.lane.b32.xlu0 %v3673, 96
    %v3692 = vpop.permute.xlu0 %3691
    %3693 = vrot.lane.b32.xlu0 %v3678, 96
    %v3694 = vpop.permute.xlu0 %3693
    %3695 = vrot.lane.b32.xlu0 %v3683, 96
    %v3696 = vpop.permute.xlu0 %3695
    %v3697 = vsel %vm649, %v3673, 0
    %v3699 = vsel %vm649, %v3678, 0
    %v3701 = vsel %vm649, %v3683, 0
    %v3703 = vsel %vm649, %v3692, 0
    %v3705 = vsel %vm649, %v3694, 0
    %v3707 = vsel %vm649, %v3696, 0
    %3709 = vmatprep.subr.mxu0 0.0
    %3710 = vmatpush1.xpose.msra.mxu0 0.0
    %3711 = vmatprep.subr.mxu0 0.0
    %3712 = vmatpush1.xpose.msra.mxu0 0.0
    %3713 = vmatprep.subr.mxu0 0.0
    %3714 = vmatpush1.xpose.msra.mxu0 0.0
    %3715 = vmatprep.subr.mxu0 0.0
    %3716 = vmatpush1.xpose.msra.mxu0 0.0
    %3717 = vmatprep.subr.mxu0 0.0
    %3718 = vmatpush1.xpose.msra.mxu0 0.0
    %3719 = vmatprep.subr.mxu0 0.0
    %3720 = vmatpush1.xpose.msra.mxu0 0.0
    %3721 = vmatprep.subr.mxu0 0.0
    %3722 = vmatpush1.xpose.msra.mxu0 0.0
    %3723 = vmatprep.subr.mxu0 0.0
    %3724 = vmatpush1.xpose.msra.mxu0 0.0
    %3725 = vmatprep.subr.mxu0 0.0
    %3726 = vmatpush1.xpose.msra.mxu0 0.0
    %3727 = vmatprep.subr.mxu0 0.0
    %3728 = vmatpush1.xpose.msra.mxu0 0.0
    %3729 = vmatprep.subr.mxu0 0.0
    %3730 = vmatpush1.xpose.msra.mxu0 0.0
    %3731 = vmatprep.subr.mxu0 0.0
    %3732 = vmatpush1.xpose.msra.mxu0 0.0
    %3733 = vmatprep.subr.mxu0 0.0
    %3734 = vmatpush1.xpose.msra.mxu0 0.0
    %3735 = vmatprep.subr.mxu0 0.0
    %3736 = vmatpush1.xpose.msra.mxu0 %v3707
    %3737 = vmatprep.subr.mxu0 0.0
    %3738 = vmatpush1.xpose.msra.mxu0 %v3705
    %3739 = vmatprep.subr.mxu0 0.0
    %3740 = vmatpush1.xpose.msra.mxu0 %v3703
    %3741 = vmatprep.subr.mxu0 0.0
    %3742 = vmatpush2.xpose.msra.mxu0 0.0
    %3743 = vmatprep.subr.mxu0 0.0
    %3744 = vmatpush2.xpose.msra.mxu0 0.0
    %3745 = vmatprep.subr.mxu0 0.0
    %3746 = vmatpush2.xpose.msra.mxu0 0.0
    %3747 = vmatprep.subr.mxu0 0.0
    %3748 = vmatpush2.xpose.msra.mxu0 0.0
    %3749 = vmatprep.subr.mxu0 0.0
    %3750 = vmatpush2.xpose.msra.mxu0 0.0
    %3751 = vmatprep.subr.mxu0 0.0
    %3752 = vmatpush2.xpose.msra.mxu0 0.0
    %3753 = vmatprep.subr.mxu0 0.0
    %3754 = vmatpush2.xpose.msra.mxu0 0.0
    %3755 = vmatprep.subr.mxu0 0.0
    %3756 = vmatpush2.xpose.msra.mxu0 0.0
    %3757 = vmatprep.subr.mxu0 0.0
    %3758 = vmatpush2.xpose.msra.mxu0 0.0
    %3759 = vmatprep.subr.mxu0 0.0
    %3760 = vmatpush2.xpose.msra.mxu0 0.0
    %3761 = vmatprep.subr.mxu0 0.0
    %3762 = vmatpush2.xpose.msra.mxu0 0.0
    %3763 = vmatprep.subr.mxu0 0.0
    %3764 = vmatpush2.xpose.msra.mxu0 0.0
    %3765 = vmatprep.subr.mxu0 0.0
    %3766 = vmatpush2.xpose.msra.mxu0 0.0
    %3767 = vmatprep.subr.mxu0 0.0
    %3768 = vmatpush2.xpose.msra.mxu0 0.0
    %3769 = vmatprep.subr.mxu0 0.0
    %3770 = vmatpush2.xpose.msra.mxu0 0.0
    %3771 = vmatprep.subr.mxu0 0.0
    %3772 = vmatpush2.xpose.msra.mxu0 0.0
    %3773 = vmatprep.mubr.f32.mxu0 0.0
    %3774 = vmatmul.mubr.f32.gmra.mxu0 %v3697
    %v3775 = vpop.f32.mrf.mxu0
    %v3776 = vadd.f32 0.0, %v3775
    %v3777 = vpop.f32.mrf.mxu0
    %3778 = vmatprep.mubr.f32.mxu0 0.0
    %3779 = vmatmul.mubr.f32.gmra.mxu0 %v3699
    %v3780 = vpop.f32.mrf.mxu0
    %v3781 = vadd.f32 0.0, %v3780
    %v3782 = vpop.f32.mrf.mxu0
    %3783 = vmatprep.mubr.f32.mxu0 0.0
    %3784 = vmatmul.mubr.f32.gmra.mxu0 %v3701
    %v3785 = vpop.f32.mrf.mxu0
    %v3786 = vadd.f32 0.0, %v3785
    %v3787 = vpop.f32.mrf.mxu0
    %3788 = vdwg.mxu0
    %v3789 = vmul.f32 %v3776, 0.35355338
    %v3790 = vmul.f32 %v3781, 0.35355338
    %v3791 = vmul.f32 %v3786, 0.35355338
    %v3792 = vadd.f32 %v3789, %v536
    %v3793 = vadd.f32 %v3790, %v537
    %v3794 = vadd.f32 %v3791, %v538
    %v3795 = vsel %vm748, %v3792, -inf
    %3796 = vmax.xlane.f32.xlu0 %v3795
    %v3797 = vpop.xlane.xlu0 %3796
    %v3798 = vsel %vm748, %v3793, -inf
    %3799 = vmax.xlane.f32.xlu0 %v3798
    %v3800 = vpop.xlane.xlu0 %3799
    %v3801 = vsel %vm755, %v3794, -inf
    %3802 = vmax.xlane.f32.xlu0 %v3801
    %v3803 = vpop.xlane.xlu0 %3802
    %v3804 = vsub.f32 %v3792, %v3797
    %v3805 = vsub.f32 %v3793, %v3800
    %v3806 = vsub.f32 %v3794, %v3803
    %v3807 = vmul.f32 %v3804, 1.442695
    %v3808 = vpow.pop %v3807
    %v3809 = vmul.f32 %v3805, 1.442695
    %v3810 = vpow.pop %v3809
    %v3811 = vmul.f32 %v3806, 1.442695
    %v3812 = vpow.pop %v3811
    %v3813 = vsel %vm748, %v3808, 0.0
    %3814 = vadd.xlane.f32.xlu0 %v3813
    %v3815 = vpop.xlane.xlu0 %3814
    %v3816 = vsel %vm748, %v3810, 0.0
    %3817 = vadd.xlane.f32.xlu0 %v3816
    %v3818 = vpop.xlane.xlu0 %3817
    %v3819 = vsel %vm755, %v3812, 0.0
    %3820 = vadd.xlane.f32.xlu0 %v3819
    %v3821 = vpop.xlane.xlu0 %3820
    %v3822 = vrcp.pop %v3815
    %v3823 = vrcp.pop %v3818
    %v3824 = vrcp.pop %v3821
    %v3825 = vmul.f32 %v3808, %v3822
    %v3826 = vmul.f32 %v3810, %v3823
    %v3827 = vmul.f32 %v3812, %v3824
    %3828 = vrot.lane.b32.xlu0 %v3673, 64
    %v3829 = vpop.permute.xlu0 %3828
    %3830 = vrot.lane.b32.xlu0 %v3678, 64
    %v3831 = vpop.permute.xlu0 %3830
    %3832 = vrot.lane.b32.xlu0 %v3683, 64
    %v3833 = vpop.permute.xlu0 %3832
    %v3837 = vsel %vm748, %v3825, 0
    %v3840 = vsel %vm748, %v3826, 0
    %v3843 = vsel %vm748, %v3827, 0
    %v3845 = vsel %vm800, %v3833, 0
    %3847 = vmatprep.subr.mxu0 0.0
    %3848 = vmatpush1.msra.mxu0 0.0
    %3849 = vmatprep.subr.mxu0 0.0
    %3850 = vmatpush1.msra.mxu0 0.0
    %3851 = vmatprep.subr.mxu0 0.0
    %3852 = vmatpush1.msra.mxu0 0.0
    %3853 = vmatprep.subr.mxu0 0.0
    %3854 = vmatpush1.msra.mxu0 0.0
    %3855 = vmatprep.subr.mxu0 0.0
    %3856 = vmatpush1.msra.mxu0 0.0
    %3857 = vmatprep.subr.mxu0 0.0
    %3858 = vmatpush1.msra.mxu0 0.0
    %3859 = vmatprep.subr.mxu0 0.0
    %3860 = vmatpush1.msra.mxu0 0.0
    %3861 = vmatprep.subr.mxu0 0.0
    %3862 = vmatpush1.msra.mxu0 0.0
    %3863 = vmatprep.subr.mxu0 0.0
    %3864 = vmatpush1.msra.mxu0 0.0
    %3865 = vmatprep.subr.mxu0 0.0
    %3866 = vmatpush1.msra.mxu0 0.0
    %3867 = vmatprep.subr.mxu0 0.0
    %3868 = vmatpush1.msra.mxu0 0.0
    %3869 = vmatprep.subr.mxu0 0.0
    %3870 = vmatpush1.msra.mxu0 0.0
    %3871 = vmatprep.subr.mxu0 0.0
    %3872 = vmatpush1.msra.mxu0 0.0
    %3873 = vmatprep.subr.mxu0 0.0
    %3874 = vmatpush1.msra.mxu0 %v3845
    %3875 = vmatprep.subr.mxu0 0.0
    %3876 = vmatpush1.msra.mxu0 %v3831
    %3877 = vmatprep.subr.mxu0 0.0
    %3878 = vmatpush1.msra.mxu0 %v3829
    %3879 = vmatprep.subr.mxu0 0.0
    %3880 = vmatpush2.msra.mxu0 0.0
    %3881 = vmatprep.subr.mxu0 0.0
    %3882 = vmatpush2.msra.mxu0 0.0
    %3883 = vmatprep.subr.mxu0 0.0
    %3884 = vmatpush2.msra.mxu0 0.0
    %3885 = vmatprep.subr.mxu0 0.0
    %3886 = vmatpush2.msra.mxu0 0.0
    %3887 = vmatprep.subr.mxu0 0.0
    %3888 = vmatpush2.msra.mxu0 0.0
    %3889 = vmatprep.subr.mxu0 0.0
    %3890 = vmatpush2.msra.mxu0 0.0
    %3891 = vmatprep.subr.mxu0 0.0
    %3892 = vmatpush2.msra.mxu0 0.0
    %3893 = vmatprep.subr.mxu0 0.0
    %3894 = vmatpush2.msra.mxu0 0.0
    %3895 = vmatprep.subr.mxu0 0.0
    %3896 = vmatpush2.msra.mxu0 0.0
    %3897 = vmatprep.subr.mxu0 0.0
    %3898 = vmatpush2.msra.mxu0 0.0
    %3899 = vmatprep.subr.mxu0 0.0
    %3900 = vmatpush2.msra.mxu0 0.0
    %3901 = vmatprep.subr.mxu0 0.0
    %3902 = vmatpush2.msra.mxu0 0.0
    %3903 = vmatprep.subr.mxu0 0.0
    %3904 = vmatpush2.msra.mxu0 0.0
    %3905 = vmatprep.subr.mxu0 0.0
    %3906 = vmatpush2.msra.mxu0 0.0
    %3907 = vmatprep.subr.mxu0 0.0
    %3908 = vmatpush2.msra.mxu0 0.0
    %3909 = vmatprep.subr.mxu0 0.0
    %3910 = vmatpush2.msra.mxu0 0.0
    %3911 = vmatprep.mubr.f32.mxu0 0.0
    %3912 = vmatmul.mubr.f32.gmra.mxu0 %v3837
    %v3913 = vpop.f32.mrf.mxu0
    %v3914 = vadd.f32 0.0, %v3913
    %v3915 = vpop.f32.mrf.mxu0
    %3916 = vmatprep.mubr.f32.mxu0 0.0
    %3917 = vmatmul.mubr.f32.gmra.mxu0 %v3840
    %v3918 = vpop.f32.mrf.mxu0
    %v3919 = vadd.f32 0.0, %v3918
    %v3920 = vpop.f32.mrf.mxu0
    %3921 = vmatprep.mubr.f32.mxu0 0.0
    %3922 = vmatmul.mubr.f32.gmra.mxu0 %v3843
    %v3923 = vpop.f32.mrf.mxu0
    %v3924 = vadd.f32 0.0, %v3923
    %v3925 = vpop.f32.mrf.mxu0
    %3926 = vdwg.mxu0
    %s3927 = scalar_lea.vmem %s8, 32
    %v3928 = vld [vmem:[%s3927] sm:$0xff]
    %v3930 = vsel %vm649, %v3914, 0
    %v3933 = vsel %vm649, %v3919, 0
    %v3936 = vsel %vm649, %v3924, 0
    %3938 = vmatprep.subr.mxu0 0.0
    %3939 = vmatpush1.msra.mxu0 0.0
    %3940 = vmatprep.subr.mxu0 0.0
    %3941 = vmatpush1.msra.mxu0 0.0
    %3942 = vmatprep.subr.mxu0 0.0
    %3943 = vmatpush1.msra.mxu0 0.0
    %3944 = vmatprep.subr.mxu0 0.0
    %3945 = vmatpush1.msra.mxu0 0.0
    %3946 = vmatprep.subr.mxu0 0.0
    %3947 = vmatpush1.msra.mxu0 0.0
    %3948 = vmatprep.subr.mxu0 0.0
    %3949 = vmatpush1.msra.mxu0 0.0
    %3950 = vmatprep.subr.mxu0 0.0
    %3951 = vmatpush1.msra.mxu0 0.0
    %3952 = vmatprep.subr.mxu0 0.0
    %3953 = vmatpush1.msra.mxu0 0.0
    %3954 = vmatprep.subr.mxu0 0.0
    %3955 = vmatpush1.msra.mxu0 0.0
    %3956 = vmatprep.subr.mxu0 0.0
    %3957 = vmatpush1.msra.mxu0 0.0
    %3958 = vmatprep.subr.mxu0 0.0
    %3959 = vmatpush1.msra.mxu0 0.0
    %3960 = vmatprep.subr.mxu0 0.0
    %3961 = vmatpush1.msra.mxu0 0.0
    %3962 = vmatprep.subr.mxu0 0.0
    %3963 = vmatpush1.msra.mxu0 0.0
    %3964 = vmatprep.subr.mxu0 0.0
    %3965 = vmatpush1.msra.mxu0 0.0
    %3966 = vmatprep.subr.mxu0 0.0
    %3967 = vmatpush1.msra.mxu0 0.0
    %3968 = vmatprep.subr.mxu0 0.0
    %3969 = vmatpush1.msra.mxu0 %v3928
    %3970 = vmatprep.subr.mxu0 0.0
    %3971 = vmatpush2.msra.mxu0 0.0
    %3972 = vmatprep.subr.mxu0 0.0
    %3973 = vmatpush2.msra.mxu0 0.0
    %3974 = vmatprep.subr.mxu0 0.0
    %3975 = vmatpush2.msra.mxu0 0.0
    %3976 = vmatprep.subr.mxu0 0.0
    %3977 = vmatpush2.msra.mxu0 0.0
    %3978 = vmatprep.subr.mxu0 0.0
    %3979 = vmatpush2.msra.mxu0 0.0
    %3980 = vmatprep.subr.mxu0 0.0
    %3981 = vmatpush2.msra.mxu0 0.0
    %3982 = vmatprep.subr.mxu0 0.0
    %3983 = vmatpush2.msra.mxu0 0.0
    %3984 = vmatprep.subr.mxu0 0.0
    %3985 = vmatpush2.msra.mxu0 0.0
    %3986 = vmatprep.subr.mxu0 0.0
    %3987 = vmatpush2.msra.mxu0 0.0
    %3988 = vmatprep.subr.mxu0 0.0
    %3989 = vmatpush2.msra.mxu0 0.0
    %3990 = vmatprep.subr.mxu0 0.0
    %3991 = vmatpush2.msra.mxu0 0.0
    %3992 = vmatprep.subr.mxu0 0.0
    %3993 = vmatpush2.msra.mxu0 0.0
    %3994 = vmatprep.subr.mxu0 0.0
    %3995 = vmatpush2.msra.mxu0 0.0
    %3996 = vmatprep.subr.mxu0 0.0
    %3997 = vmatpush2.msra.mxu0 0.0
    %3998 = vmatprep.subr.mxu0 0.0
    %3999 = vmatpush2.msra.mxu0 0.0
    %4000 = vmatprep.subr.mxu0 0.0
    %4001 = vmatpush2.msra.mxu0 0.0
    %4002 = vmatprep.mubr.f32.mxu0 0.0
    %4003 = vmatmul.mubr.f32.gmra.mxu0 %v3930
    %v4004 = vpop.f32.mrf.mxu0
    %v4005 = vadd.f32 0.0, %v4004
    %v4006 = vpop.f32.mrf.mxu0
    %4007 = vmatprep.mubr.f32.mxu0 0.0
    %4008 = vmatmul.mubr.f32.gmra.mxu0 %v3933
    %v4009 = vpop.f32.mrf.mxu0
    %v4010 = vadd.f32 0.0, %v4009
    %v4011 = vpop.f32.mrf.mxu0
    %4012 = vmatprep.mubr.f32.mxu0 0.0
    %4013 = vmatmul.mubr.f32.gmra.mxu0 %v3936
    %v4014 = vpop.f32.mrf.mxu0
    %v4015 = vadd.f32 0.0, %v4014
    %v4016 = vpop.f32.mrf.mxu0
    %4017 = vdwg.mxu0
    %v4019 = vlaneseq
    %v4020 = vshrl.u32 %v4019, 7
    %v4021 = vsub.s32 0, %v4020
    %v4022 = vrot.slane %v3687, %v4021
    %v4024 = vadd.f32 %v4022, %v4005
    %v4025 = vadd.f32 %v4022, %v4010
    %v4026 = vadd.f32 %v4022, %v4015
    %4027 = vrot.lane.b32.xlu0 %v3673, 120
    %v4028 = vpop.permute.xlu0 %4027
    %4029 = vrot.lane.b32.xlu0 %v3678, 120
    %v4030 = vpop.permute.xlu0 %4029
    %4031 = vrot.lane.b32.xlu0 %v3683, 120
    %v4032 = vpop.permute.xlu0 %4031
    %4033 = vrot.lane.b32.xlu0 %v3673, 88
    %v4034 = vpop.permute.xlu0 %4033
    %4035 = vrot.lane.b32.xlu0 %v3678, 88
    %v4036 = vpop.permute.xlu0 %4035
    %4037 = vrot.lane.b32.xlu0 %v3683, 88
    %v4038 = vpop.permute.xlu0 %4037
    %v4039 = vsel %vm649, %v4028, 0
    %v4041 = vsel %vm649, %v4030, 0
    %v4043 = vsel %vm649, %v4032, 0
    %v4045 = vsel %vm649, %v4034, 0
    %v4047 = vsel %vm649, %v4036, 0
    %v4049 = vsel %vm649, %v4038, 0
    %4051 = vmatprep.subr.mxu0 0.0
    %4052 = vmatpush1.xpose.msra.mxu0 0.0
    %4053 = vmatprep.subr.mxu0 0.0
    %4054 = vmatpush1.xpose.msra.mxu0 0.0
    %4055 = vmatprep.subr.mxu0 0.0
    %4056 = vmatpush1.xpose.msra.mxu0 0.0
    %4057 = vmatprep.subr.mxu0 0.0
    %4058 = vmatpush1.xpose.msra.mxu0 0.0
    %4059 = vmatprep.subr.mxu0 0.0
    %4060 = vmatpush1.xpose.msra.mxu0 0.0
    %4061 = vmatprep.subr.mxu0 0.0
    %4062 = vmatpush1.xpose.msra.mxu0 0.0
    %4063 = vmatprep.subr.mxu0 0.0
    %4064 = vmatpush1.xpose.msra.mxu0 0.0
    %4065 = vmatprep.subr.mxu0 0.0
    %4066 = vmatpush1.xpose.msra.mxu0 0.0
    %4067 = vmatprep.subr.mxu0 0.0
    %4068 = vmatpush1.xpose.msra.mxu0 0.0
    %4069 = vmatprep.subr.mxu0 0.0
    %4070 = vmatpush1.xpose.msra.mxu0 0.0
    %4071 = vmatprep.subr.mxu0 0.0
    %4072 = vmatpush1.xpose.msra.mxu0 0.0
    %4073 = vmatprep.subr.mxu0 0.0
    %4074 = vmatpush1.xpose.msra.mxu0 0.0
    %4075 = vmatprep.subr.mxu0 0.0
    %4076 = vmatpush1.xpose.msra.mxu0 0.0
    %4077 = vmatprep.subr.mxu0 0.0
    %4078 = vmatpush1.xpose.msra.mxu0 %v4049
    %4079 = vmatprep.subr.mxu0 0.0
    %4080 = vmatpush1.xpose.msra.mxu0 %v4047
    %4081 = vmatprep.subr.mxu0 0.0
    %4082 = vmatpush1.xpose.msra.mxu0 %v4045
    %4083 = vmatprep.subr.mxu0 0.0
    %4084 = vmatpush2.xpose.msra.mxu0 0.0
    %4085 = vmatprep.subr.mxu0 0.0
    %4086 = vmatpush2.xpose.msra.mxu0 0.0
    %4087 = vmatprep.subr.mxu0 0.0
    %4088 = vmatpush2.xpose.msra.mxu0 0.0
    %4089 = vmatprep.subr.mxu0 0.0
    %4090 = vmatpush2.xpose.msra.mxu0 0.0
    %4091 = vmatprep.subr.mxu0 0.0
    %4092 = vmatpush2.xpose.msra.mxu0 0.0
    %4093 = vmatprep.subr.mxu0 0.0
    %4094 = vmatpush2.xpose.msra.mxu0 0.0
    %4095 = vmatprep.subr.mxu0 0.0
    %4096 = vmatpush2.xpose.msra.mxu0 0.0
    %4097 = vmatprep.subr.mxu0 0.0
    %4098 = vmatpush2.xpose.msra.mxu0 0.0
    %4099 = vmatprep.subr.mxu0 0.0
    %4100 = vmatpush2.xpose.msra.mxu0 0.0
    %4101 = vmatprep.subr.mxu0 0.0
    %4102 = vmatpush2.xpose.msra.mxu0 0.0
    %4103 = vmatprep.subr.mxu0 0.0
    %4104 = vmatpush2.xpose.msra.mxu0 0.0
    %4105 = vmatprep.subr.mxu0 0.0
    %4106 = vmatpush2.xpose.msra.mxu0 0.0
    %4107 = vmatprep.subr.mxu0 0.0
    %4108 = vmatpush2.xpose.msra.mxu0 0.0
    %4109 = vmatprep.subr.mxu0 0.0
    %4110 = vmatpush2.xpose.msra.mxu0 0.0
    %4111 = vmatprep.subr.mxu0 0.0
    %4112 = vmatpush2.xpose.msra.mxu0 0.0
    %4113 = vmatprep.subr.mxu0 0.0
    %4114 = vmatpush2.xpose.msra.mxu0 0.0
    %4115 = vmatprep.mubr.f32.mxu0 0.0
    %4116 = vmatmul.mubr.f32.gmra.mxu0 %v4039
    %v4117 = vpop.f32.mrf.mxu0
    %v4118 = vadd.f32 0.0, %v4117
    %v4119 = vpop.f32.mrf.mxu0
    %4120 = vmatprep.mubr.f32.mxu0 0.0
    %4121 = vmatmul.mubr.f32.gmra.mxu0 %v4041
    %v4122 = vpop.f32.mrf.mxu0
    %v4123 = vadd.f32 0.0, %v4122
    %v4124 = vpop.f32.mrf.mxu0
    %4125 = vmatprep.mubr.f32.mxu0 0.0
    %4126 = vmatmul.mubr.f32.gmra.mxu0 %v4043
    %v4127 = vpop.f32.mrf.mxu0
    %v4128 = vadd.f32 0.0, %v4127
    %v4129 = vpop.f32.mrf.mxu0
    %4130 = vdwg.mxu0
    %v4131 = vmul.f32 %v4118, 0.35355338
    %v4132 = vmul.f32 %v4123, 0.35355338
    %v4133 = vmul.f32 %v4128, 0.35355338
    %v4134 = vadd.f32 %v4131, %v536
    %v4135 = vadd.f32 %v4132, %v537
    %v4136 = vadd.f32 %v4133, %v538
    %v4137 = vsel %vm748, %v4134, -inf
    %4138 = vmax.xlane.f32.xlu0 %v4137
    %v4139 = vpop.xlane.xlu0 %4138
    %v4140 = vsel %vm748, %v4135, -inf
    %4141 = vmax.xlane.f32.xlu0 %v4140
    %v4142 = vpop.xlane.xlu0 %4141
    %v4143 = vsel %vm755, %v4136, -inf
    %4144 = vmax.xlane.f32.xlu0 %v4143
    %v4145 = vpop.xlane.xlu0 %4144
    %v4146 = vsub.f32 %v4134, %v4139
    %v4147 = vsub.f32 %v4135, %v4142
    %v4148 = vsub.f32 %v4136, %v4145
    %v4149 = vmul.f32 %v4146, 1.442695
    %v4150 = vpow.pop %v4149
    %v4151 = vmul.f32 %v4147, 1.442695
    %v4152 = vpow.pop %v4151
    %v4153 = vmul.f32 %v4148, 1.442695
    %v4154 = vpow.pop %v4153
    %v4155 = vsel %vm748, %v4150, 0.0
    %4156 = vadd.xlane.f32.xlu0 %v4155
    %v4157 = vpop.xlane.xlu0 %4156
    %v4158 = vsel %vm748, %v4152, 0.0
    %4159 = vadd.xlane.f32.xlu0 %v4158
    %v4160 = vpop.xlane.xlu0 %4159
    %v4161 = vsel %vm755, %v4154, 0.0
    %4162 = vadd.xlane.f32.xlu0 %v4161
    %v4163 = vpop.xlane.xlu0 %4162
    %v4164 = vrcp.pop %v4157
    %v4165 = vrcp.pop %v4160
    %v4166 = vrcp.pop %v4163
    %v4167 = vmul.f32 %v4150, %v4164
    %v4168 = vmul.f32 %v4152, %v4165
    %v4169 = vmul.f32 %v4154, %v4166
    %4170 = vrot.lane.b32.xlu0 %v3673, 56
    %v4171 = vpop.permute.xlu0 %4170
    %4172 = vrot.lane.b32.xlu0 %v3678, 56
    %v4173 = vpop.permute.xlu0 %4172
    %4174 = vrot.lane.b32.xlu0 %v3683, 56
    %v4175 = vpop.permute.xlu0 %4174
    %v4179 = vsel %vm748, %v4167, 0
    %v4182 = vsel %vm748, %v4168, 0
    %v4185 = vsel %vm748, %v4169, 0
    %v4187 = vsel %vm800, %v4175, 0
    %4189 = vmatprep.subr.mxu0 0.0
    %4190 = vmatpush1.msra.mxu0 0.0
    %4191 = vmatprep.subr.mxu0 0.0
    %4192 = vmatpush1.msra.mxu0 0.0
    %4193 = vmatprep.subr.mxu0 0.0
    %4194 = vmatpush1.msra.mxu0 0.0
    %4195 = vmatprep.subr.mxu0 0.0
    %4196 = vmatpush1.msra.mxu0 0.0
    %4197 = vmatprep.subr.mxu0 0.0
    %4198 = vmatpush1.msra.mxu0 0.0
    %4199 = vmatprep.subr.mxu0 0.0
    %4200 = vmatpush1.msra.mxu0 0.0
    %4201 = vmatprep.subr.mxu0 0.0
    %4202 = vmatpush1.msra.mxu0 0.0
    %4203 = vmatprep.subr.mxu0 0.0
    %4204 = vmatpush1.msra.mxu0 0.0
    %4205 = vmatprep.subr.mxu0 0.0
    %4206 = vmatpush1.msra.mxu0 0.0
    %4207 = vmatprep.subr.mxu0 0.0
    %4208 = vmatpush1.msra.mxu0 0.0
    %4209 = vmatprep.subr.mxu0 0.0
    %4210 = vmatpush1.msra.mxu0 0.0
    %4211 = vmatprep.subr.mxu0 0.0
    %4212 = vmatpush1.msra.mxu0 0.0
    %4213 = vmatprep.subr.mxu0 0.0
    %4214 = vmatpush1.msra.mxu0 0.0
    %4215 = vmatprep.subr.mxu0 0.0
    %4216 = vmatpush1.msra.mxu0 %v4187
    %4217 = vmatprep.subr.mxu0 0.0
    %4218 = vmatpush1.msra.mxu0 %v4173
    %4219 = vmatprep.subr.mxu0 0.0
    %4220 = vmatpush1.msra.mxu0 %v4171
    %4221 = vmatprep.subr.mxu0 0.0
    %4222 = vmatpush2.msra.mxu0 0.0
    %4223 = vmatprep.subr.mxu0 0.0
    %4224 = vmatpush2.msra.mxu0 0.0
    %4225 = vmatprep.subr.mxu0 0.0
    %4226 = vmatpush2.msra.mxu0 0.0
    %4227 = vmatprep.subr.mxu0 0.0
    %4228 = vmatpush2.msra.mxu0 0.0
    %4229 = vmatprep.subr.mxu0 0.0
    %4230 = vmatpush2.msra.mxu0 0.0
    %4231 = vmatprep.subr.mxu0 0.0
    %4232 = vmatpush2.msra.mxu0 0.0
    %4233 = vmatprep.subr.mxu0 0.0
    %4234 = vmatpush2.msra.mxu0 0.0
    %4235 = vmatprep.subr.mxu0 0.0
    %4236 = vmatpush2.msra.mxu0 0.0
    %4237 = vmatprep.subr.mxu0 0.0
    %4238 = vmatpush2.msra.mxu0 0.0
    %4239 = vmatprep.subr.mxu0 0.0
    %4240 = vmatpush2.msra.mxu0 0.0
    %4241 = vmatprep.subr.mxu0 0.0
    %4242 = vmatpush2.msra.mxu0 0.0
    %4243 = vmatprep.subr.mxu0 0.0
    %4244 = vmatpush2.msra.mxu0 0.0
    %4245 = vmatprep.subr.mxu0 0.0
    %4246 = vmatpush2.msra.mxu0 0.0
    %4247 = vmatprep.subr.mxu0 0.0
    %4248 = vmatpush2.msra.mxu0 0.0
    %4249 = vmatprep.subr.mxu0 0.0
    %4250 = vmatpush2.msra.mxu0 0.0
    %4251 = vmatprep.subr.mxu0 0.0
    %4252 = vmatpush2.msra.mxu0 0.0
    %4253 = vmatprep.mubr.f32.mxu0 0.0
    %4254 = vmatmul.mubr.f32.gmra.mxu0 %v4179
    %v4255 = vpop.f32.mrf.mxu0
    %v4256 = vadd.f32 0.0, %v4255
    %v4257 = vpop.f32.mrf.mxu0
    %4258 = vmatprep.mubr.f32.mxu0 0.0
    %4259 = vmatmul.mubr.f32.gmra.mxu0 %v4182
    %v4260 = vpop.f32.mrf.mxu0
    %v4261 = vadd.f32 0.0, %v4260
    %v4262 = vpop.f32.mrf.mxu0
    %4263 = vmatprep.mubr.f32.mxu0 0.0
    %4264 = vmatmul.mubr.f32.gmra.mxu0 %v4185
    %v4265 = vpop.f32.mrf.mxu0
    %v4266 = vadd.f32 0.0, %v4265
    %v4267 = vpop.f32.mrf.mxu0
    %4268 = vdwg.mxu0
    %v4269 = vld [vmem:[%s3927 + $0x8] sm:$0xff]
    %v4271 = vsel %vm649, %v4256, 0
    %v4274 = vsel %vm649, %v4261, 0
    %v4277 = vsel %vm649, %v4266, 0
    %4279 = vmatprep.subr.mxu0 0.0
    %4280 = vmatpush1.msra.mxu0 0.0
    %4281 = vmatprep.subr.mxu0 0.0
    %4282 = vmatpush1.msra.mxu0 0.0
    %4283 = vmatprep.subr.mxu0 0.0
    %4284 = vmatpush1.msra.mxu0 0.0
    %4285 = vmatprep.subr.mxu0 0.0
    %4286 = vmatpush1.msra.mxu0 0.0
    %4287 = vmatprep.subr.mxu0 0.0
    %4288 = vmatpush1.msra.mxu0 0.0
    %4289 = vmatprep.subr.mxu0 0.0
    %4290 = vmatpush1.msra.mxu0 0.0
    %4291 = vmatprep.subr.mxu0 0.0
    %4292 = vmatpush1.msra.mxu0 0.0
    %4293 = vmatprep.subr.mxu0 0.0
    %4294 = vmatpush1.msra.mxu0 0.0
    %4295 = vmatprep.subr.mxu0 0.0
    %4296 = vmatpush1.msra.mxu0 0.0
    %4297 = vmatprep.subr.mxu0 0.0
    %4298 = vmatpush1.msra.mxu0 0.0
    %4299 = vmatprep.subr.mxu0 0.0
    %4300 = vmatpush1.msra.mxu0 0.0
    %4301 = vmatprep.subr.mxu0 0.0
    %4302 = vmatpush1.msra.mxu0 0.0
    %4303 = vmatprep.subr.mxu0 0.0
    %4304 = vmatpush1.msra.mxu0 0.0
    %4305 = vmatprep.subr.mxu0 0.0
    %4306 = vmatpush1.msra.mxu0 0.0
    %4307 = vmatprep.subr.mxu0 0.0
    %4308 = vmatpush1.msra.mxu0 0.0
    %4309 = vmatprep.subr.mxu0 0.0
    %4310 = vmatpush1.msra.mxu0 %v4269
    %4311 = vmatprep.subr.mxu0 0.0
    %4312 = vmatpush2.msra.mxu0 0.0
    %4313 = vmatprep.subr.mxu0 0.0
    %4314 = vmatpush2.msra.mxu0 0.0
    %4315 = vmatprep.subr.mxu0 0.0
    %4316 = vmatpush2.msra.mxu0 0.0
    %4317 = vmatprep.subr.mxu0 0.0
    %4318 = vmatpush2.msra.mxu0 0.0
    %4319 = vmatprep.subr.mxu0 0.0
    %4320 = vmatpush2.msra.mxu0 0.0
    %4321 = vmatprep.subr.mxu0 0.0
    %4322 = vmatpush2.msra.mxu0 0.0
    %4323 = vmatprep.subr.mxu0 0.0
    %4324 = vmatpush2.msra.mxu0 0.0
    %4325 = vmatprep.subr.mxu0 0.0
    %4326 = vmatpush2.msra.mxu0 0.0
    %4327 = vmatprep.subr.mxu0 0.0
    %4328 = vmatpush2.msra.mxu0 0.0
    %4329 = vmatprep.subr.mxu0 0.0
    %4330 = vmatpush2.msra.mxu0 0.0
    %4331 = vmatprep.subr.mxu0 0.0
    %4332 = vmatpush2.msra.mxu0 0.0
    %4333 = vmatprep.subr.mxu0 0.0
    %4334 = vmatpush2.msra.mxu0 0.0
    %4335 = vmatprep.subr.mxu0 0.0
    %4336 = vmatpush2.msra.mxu0 0.0
    %4337 = vmatprep.subr.mxu0 0.0
    %4338 = vmatpush2.msra.mxu0 0.0
    %4339 = vmatprep.subr.mxu0 0.0
    %4340 = vmatpush2.msra.mxu0 0.0
    %4341 = vmatprep.subr.mxu0 0.0
    %4342 = vmatpush2.msra.mxu0 0.0
    %4343 = vmatprep.mubr.f32.mxu0 0.0
    %4344 = vmatmul.mubr.f32.gmra.mxu0 %v4271
    %v4345 = vpop.f32.mrf.mxu0
    %v4346 = vadd.f32 0.0, %v4345
    %v4347 = vpop.f32.mrf.mxu0
    %4348 = vmatprep.mubr.f32.mxu0 0.0
    %4349 = vmatmul.mubr.f32.gmra.mxu0 %v4274
    %v4350 = vpop.f32.mrf.mxu0
    %v4351 = vadd.f32 0.0, %v4350
    %v4352 = vpop.f32.mrf.mxu0
    %4353 = vmatprep.mubr.f32.mxu0 0.0
    %4354 = vmatmul.mubr.f32.gmra.mxu0 %v4277
    %v4355 = vpop.f32.mrf.mxu0
    %v4356 = vadd.f32 0.0, %v4355
    %v4357 = vpop.f32.mrf.mxu0
    %4358 = vdwg.mxu0
    %v4359 = vadd.f32 %v4024, %v4346
    %v4360 = vadd.f32 %v4025, %v4351
    %v4361 = vadd.f32 %v4026, %v4356
    %4362 = vrot.lane.b32.xlu0 %v3673, 112
    %v4363 = vpop.permute.xlu0 %4362
    %4364 = vrot.lane.b32.xlu0 %v3678, 112
    %v4365 = vpop.permute.xlu0 %4364
    %4366 = vrot.lane.b32.xlu0 %v3683, 112
    %v4367 = vpop.permute.xlu0 %4366
    %4368 = vrot.lane.b32.xlu0 %v3673, 80
    %v4369 = vpop.permute.xlu0 %4368
    %4370 = vrot.lane.b32.xlu0 %v3678, 80
    %v4371 = vpop.permute.xlu0 %4370
    %4372 = vrot.lane.b32.xlu0 %v3683, 80
    %v4373 = vpop.permute.xlu0 %4372
    %v4374 = vsel %vm649, %v4363, 0
    %v4376 = vsel %vm649, %v4365, 0
    %v4378 = vsel %vm649, %v4367, 0
    %v4380 = vsel %vm649, %v4369, 0
    %v4382 = vsel %vm649, %v4371, 0
    %v4384 = vsel %vm649, %v4373, 0
    %4386 = vmatprep.subr.mxu0 0.0
    %4387 = vmatpush1.xpose.msra.mxu0 0.0
    %4388 = vmatprep.subr.mxu0 0.0
    %4389 = vmatpush1.xpose.msra.mxu0 0.0
    %4390 = vmatprep.subr.mxu0 0.0
    %4391 = vmatpush1.xpose.msra.mxu0 0.0
    %4392 = vmatprep.subr.mxu0 0.0
    %4393 = vmatpush1.xpose.msra.mxu0 0.0
    %4394 = vmatprep.subr.mxu0 0.0
    %4395 = vmatpush1.xpose.msra.mxu0 0.0
    %4396 = vmatprep.subr.mxu0 0.0
    %4397 = vmatpush1.xpose.msra.mxu0 0.0
    %4398 = vmatprep.subr.mxu0 0.0
    %4399 = vmatpush1.xpose.msra.mxu0 0.0
    %4400 = vmatprep.subr.mxu0 0.0
    %4401 = vmatpush1.xpose.msra.mxu0 0.0
    %4402 = vmatprep.subr.mxu0 0.0
    %4403 = vmatpush1.xpose.msra.mxu0 0.0
    %4404 = vmatprep.subr.mxu0 0.0
    %4405 = vmatpush1.xpose.msra.mxu0 0.0
    %4406 = vmatprep.subr.mxu0 0.0
    %4407 = vmatpush1.xpose.msra.mxu0 0.0
    %4408 = vmatprep.subr.mxu0 0.0
    %4409 = vmatpush1.xpose.msra.mxu0 0.0
    %4410 = vmatprep.subr.mxu0 0.0
    %4411 = vmatpush1.xpose.msra.mxu0 0.0
    %4412 = vmatprep.subr.mxu0 0.0
    %4413 = vmatpush1.xpose.msra.mxu0 %v4384
    %4414 = vmatprep.subr.mxu0 0.0
    %4415 = vmatpush1.xpose.msra.mxu0 %v4382
    %4416 = vmatprep.subr.mxu0 0.0
    %4417 = vmatpush1.xpose.msra.mxu0 %v4380
    %4418 = vmatprep.subr.mxu0 0.0
    %4419 = vmatpush2.xpose.msra.mxu0 0.0
    %4420 = vmatprep.subr.mxu0 0.0
    %4421 = vmatpush2.xpose.msra.mxu0 0.0
    %4422 = vmatprep.subr.mxu0 0.0
    %4423 = vmatpush2.xpose.msra.mxu0 0.0
    %4424 = vmatprep.subr.mxu0 0.0
    %4425 = vmatpush2.xpose.msra.mxu0 0.0
    %4426 = vmatprep.subr.mxu0 0.0
    %4427 = vmatpush2.xpose.msra.mxu0 0.0
    %4428 = vmatprep.subr.mxu0 0.0
    %4429 = vmatpush2.xpose.msra.mxu0 0.0
    %4430 = vmatprep.subr.mxu0 0.0
    %4431 = vmatpush2.xpose.msra.mxu0 0.0
    %4432 = vmatprep.subr.mxu0 0.0
    %4433 = vmatpush2.xpose.msra.mxu0 0.0
    %4434 = vmatprep.subr.mxu0 0.0
    %4435 = vmatpush2.xpose.msra.mxu0 0.0
    %4436 = vmatprep.subr.mxu0 0.0
    %4437 = vmatpush2.xpose.msra.mxu0 0.0
    %4438 = vmatprep.subr.mxu0 0.0
    %4439 = vmatpush2.xpose.msra.mxu0 0.0
    %4440 = vmatprep.subr.mxu0 0.0
    %4441 = vmatpush2.xpose.msra.mxu0 0.0
    %4442 = vmatprep.subr.mxu0 0.0
    %4443 = vmatpush2.xpose.msra.mxu0 0.0
    %4444 = vmatprep.subr.mxu0 0.0
    %4445 = vmatpush2.xpose.msra.mxu0 0.0
    %4446 = vmatprep.subr.mxu0 0.0
    %4447 = vmatpush2.xpose.msra.mxu0 0.0
    %4448 = vmatprep.subr.mxu0 0.0
    %4449 = vmatpush2.xpose.msra.mxu0 0.0
    %4450 = vmatprep.mubr.f32.mxu0 0.0
    %4451 = vmatmul.mubr.f32.gmra.mxu0 %v4374
    %v4452 = vpop.f32.mrf.mxu0
    %v4453 = vadd.f32 0.0, %v4452
    %v4454 = vpop.f32.mrf.mxu0
    %4455 = vmatprep.mubr.f32.mxu0 0.0
    %4456 = vmatmul.mubr.f32.gmra.mxu0 %v4376
    %v4457 = vpop.f32.mrf.mxu0
    %v4458 = vadd.f32 0.0, %v4457
    %v4459 = vpop.f32.mrf.mxu0
    %4460 = vmatprep.mubr.f32.mxu0 0.0
    %4461 = vmatmul.mubr.f32.gmra.mxu0 %v4378
    %v4462 = vpop.f32.mrf.mxu0
    %v4463 = vadd.f32 0.0, %v4462
    %v4464 = vpop.f32.mrf.mxu0
    %4465 = vdwg.mxu0
    %v4466 = vmul.f32 %v4453, 0.35355338
    %v4467 = vmul.f32 %v4458, 0.35355338
    %v4468 = vmul.f32 %v4463, 0.35355338
    %v4469 = vadd.f32 %v4466, %v536
    %v4470 = vadd.f32 %v4467, %v537
    %v4471 = vadd.f32 %v4468, %v538
    %v4472 = vsel %vm748, %v4469, -inf
    %4473 = vmax.xlane.f32.xlu0 %v4472
    %v4474 = vpop.xlane.xlu0 %4473
    %v4475 = vsel %vm748, %v4470, -inf
    %4476 = vmax.xlane.f32.xlu0 %v4475
    %v4477 = vpop.xlane.xlu0 %4476
    %v4478 = vsel %vm755, %v4471, -inf
    %4479 = vmax.xlane.f32.xlu0 %v4478
    %v4480 = vpop.xlane.xlu0 %4479
    %v4481 = vsub.f32 %v4469, %v4474
    %v4482 = vsub.f32 %v4470, %v4477
    %v4483 = vsub.f32 %v4471, %v4480
    %v4484 = vmul.f32 %v4481, 1.442695
    %v4485 = vpow.pop %v4484
    %v4486 = vmul.f32 %v4482, 1.442695
    %v4487 = vpow.pop %v4486
    %v4488 = vmul.f32 %v4483, 1.442695
    %v4489 = vpow.pop %v4488
    %v4490 = vsel %vm748, %v4485, 0.0
    %4491 = vadd.xlane.f32.xlu0 %v4490
    %v4492 = vpop.xlane.xlu0 %4491
    %v4493 = vsel %vm748, %v4487, 0.0
    %4494 = vadd.xlane.f32.xlu0 %v4493
    %v4495 = vpop.xlane.xlu0 %4494
    %v4496 = vsel %vm755, %v4489, 0.0
    %4497 = vadd.xlane.f32.xlu0 %v4496
    %v4498 = vpop.xlane.xlu0 %4497
    %v4499 = vrcp.pop %v4492
    %v4500 = vrcp.pop %v4495
    %v4501 = vrcp.pop %v4498
    %v4502 = vmul.f32 %v4485, %v4499
    %v4503 = vmul.f32 %v4487, %v4500
    %v4504 = vmul.f32 %v4489, %v4501
    %4505 = vrot.lane.b32.xlu0 %v3673, 48
    %v4506 = vpop.permute.xlu0 %4505
    %4507 = vrot.lane.b32.xlu0 %v3678, 48
    %v4508 = vpop.permute.xlu0 %4507
    %4509 = vrot.lane.b32.xlu0 %v3683, 48
    %v4510 = vpop.permute.xlu0 %4509
    %v4514 = vsel %vm748, %v4502, 0
    %v4517 = vsel %vm748, %v4503, 0
    %v4520 = vsel %vm748, %v4504, 0
    %v4522 = vsel %vm800, %v4510, 0
    %4524 = vmatprep.subr.mxu0 0.0
    %4525 = vmatpush1.msra.mxu0 0.0
    %4526 = vmatprep.subr.mxu0 0.0
    %4527 = vmatpush1.msra.mxu0 0.0
    %4528 = vmatprep.subr.mxu0 0.0
    %4529 = vmatpush1.msra.mxu0 0.0
    %4530 = vmatprep.subr.mxu0 0.0
    %4531 = vmatpush1.msra.mxu0 0.0
    %4532 = vmatprep.subr.mxu0 0.0
    %4533 = vmatpush1.msra.mxu0 0.0
    %4534 = vmatprep.subr.mxu0 0.0
    %4535 = vmatpush1.msra.mxu0 0.0
    %4536 = vmatprep.subr.mxu0 0.0
    %4537 = vmatpush1.msra.mxu0 0.0
    %4538 = vmatprep.subr.mxu0 0.0
    %4539 = vmatpush1.msra.mxu0 0.0
    %4540 = vmatprep.subr.mxu0 0.0
    %4541 = vmatpush1.msra.mxu0 0.0
    %4542 = vmatprep.subr.mxu0 0.0
    %4543 = vmatpush1.msra.mxu0 0.0
    %4544 = vmatprep.subr.mxu0 0.0
    %4545 = vmatpush1.msra.mxu0 0.0
    %4546 = vmatprep.subr.mxu0 0.0
    %4547 = vmatpush1.msra.mxu0 0.0
    %4548 = vmatprep.subr.mxu0 0.0
    %4549 = vmatpush1.msra.mxu0 0.0
    %4550 = vmatprep.subr.mxu0 0.0
    %4551 = vmatpush1.msra.mxu0 %v4522
    %4552 = vmatprep.subr.mxu0 0.0
    %4553 = vmatpush1.msra.mxu0 %v4508
    %4554 = vmatprep.subr.mxu0 0.0
    %4555 = vmatpush1.msra.mxu0 %v4506
    %4556 = vmatprep.subr.mxu0 0.0
    %4557 = vmatpush2.msra.mxu0 0.0
    %4558 = vmatprep.subr.mxu0 0.0
    %4559 = vmatpush2.msra.mxu0 0.0
    %4560 = vmatprep.subr.mxu0 0.0
    %4561 = vmatpush2.msra.mxu0 0.0
    %4562 = vmatprep.subr.mxu0 0.0
    %4563 = vmatpush2.msra.mxu0 0.0
    %4564 = vmatprep.subr.mxu0 0.0
    %4565 = vmatpush2.msra.mxu0 0.0
    %4566 = vmatprep.subr.mxu0 0.0
    %4567 = vmatpush2.msra.mxu0 0.0
    %4568 = vmatprep.subr.mxu0 0.0
    %4569 = vmatpush2.msra.mxu0 0.0
    %4570 = vmatprep.subr.mxu0 0.0
    %4571 = vmatpush2.msra.mxu0 0.0
    %4572 = vmatprep.subr.mxu0 0.0
    %4573 = vmatpush2.msra.mxu0 0.0
    %4574 = vmatprep.subr.mxu0 0.0
    %4575 = vmatpush2.msra.mxu0 0.0
    %4576 = vmatprep.subr.mxu0 0.0
    %4577 = vmatpush2.msra.mxu0 0.0
    %4578 = vmatprep.subr.mxu0 0.0
    %4579 = vmatpush2.msra.mxu0 0.0
    %4580 = vmatprep.subr.mxu0 0.0
    %4581 = vmatpush2.msra.mxu0 0.0
    %4582 = vmatprep.subr.mxu0 0.0
    %4583 = vmatpush2.msra.mxu0 0.0
    %4584 = vmatprep.subr.mxu0 0.0
    %4585 = vmatpush2.msra.mxu0 0.0
    %4586 = vmatprep.subr.mxu0 0.0
    %4587 = vmatpush2.msra.mxu0 0.0
    %4588 = vmatprep.mubr.f32.mxu0 0.0
    %4589 = vmatmul.mubr.f32.gmra.mxu0 %v4514
    %v4590 = vpop.f32.mrf.mxu0
    %v4591 = vadd.f32 0.0, %v4590
    %v4592 = vpop.f32.mrf.mxu0
    %4593 = vmatprep.mubr.f32.mxu0 0.0
    %4594 = vmatmul.mubr.f32.gmra.mxu0 %v4517
    %v4595 = vpop.f32.mrf.mxu0
    %v4596 = vadd.f32 0.0, %v4595
    %v4597 = vpop.f32.mrf.mxu0
    %4598 = vmatprep.mubr.f32.mxu0 0.0
    %4599 = vmatmul.mubr.f32.gmra.mxu0 %v4520
    %v4600 = vpop.f32.mrf.mxu0
    %v4601 = vadd.f32 0.0, %v4600
    %v4602 = vpop.f32.mrf.mxu0
    %4603 = vdwg.mxu0
    %v4604 = vld [vmem:[%s3927 + $0x10] sm:$0xff]
    %v4606 = vsel %vm649, %v4591, 0
    %v4609 = vsel %vm649, %v4596, 0
    %v4612 = vsel %vm649, %v4601, 0
    %4614 = vmatprep.subr.mxu0 0.0
    %4615 = vmatpush1.msra.mxu0 0.0
    %4616 = vmatprep.subr.mxu0 0.0
    %4617 = vmatpush1.msra.mxu0 0.0
    %4618 = vmatprep.subr.mxu0 0.0
    %4619 = vmatpush1.msra.mxu0 0.0
    %4620 = vmatprep.subr.mxu0 0.0
    %4621 = vmatpush1.msra.mxu0 0.0
    %4622 = vmatprep.subr.mxu0 0.0
    %4623 = vmatpush1.msra.mxu0 0.0
    %4624 = vmatprep.subr.mxu0 0.0
    %4625 = vmatpush1.msra.mxu0 0.0
    %4626 = vmatprep.subr.mxu0 0.0
    %4627 = vmatpush1.msra.mxu0 0.0
    %4628 = vmatprep.subr.mxu0 0.0
    %4629 = vmatpush1.msra.mxu0 0.0
    %4630 = vmatprep.subr.mxu0 0.0
    %4631 = vmatpush1.msra.mxu0 0.0
    %4632 = vmatprep.subr.mxu0 0.0
    %4633 = vmatpush1.msra.mxu0 0.0
    %4634 = vmatprep.subr.mxu0 0.0
    %4635 = vmatpush1.msra.mxu0 0.0
    %4636 = vmatprep.subr.mxu0 0.0
    %4637 = vmatpush1.msra.mxu0 0.0
    %4638 = vmatprep.subr.mxu0 0.0
    %4639 = vmatpush1.msra.mxu0 0.0
    %4640 = vmatprep.subr.mxu0 0.0
    %4641 = vmatpush1.msra.mxu0 0.0
    %4642 = vmatprep.subr.mxu0 0.0
    %4643 = vmatpush1.msra.mxu0 0.0
    %4644 = vmatprep.subr.mxu0 0.0
    %4645 = vmatpush1.msra.mxu0 %v4604
    %4646 = vmatprep.subr.mxu0 0.0
    %4647 = vmatpush2.msra.mxu0 0.0
    %4648 = vmatprep.subr.mxu0 0.0
    %4649 = vmatpush2.msra.mxu0 0.0
    %4650 = vmatprep.subr.mxu0 0.0
    %4651 = vmatpush2.msra.mxu0 0.0
    %4652 = vmatprep.subr.mxu0 0.0
    %4653 = vmatpush2.msra.mxu0 0.0
    %4654 = vmatprep.subr.mxu0 0.0
    %4655 = vmatpush2.msra.mxu0 0.0
    %4656 = vmatprep.subr.mxu0 0.0
    %4657 = vmatpush2.msra.mxu0 0.0
    %4658 = vmatprep.subr.mxu0 0.0
    %4659 = vmatpush2.msra.mxu0 0.0
    %4660 = vmatprep.subr.mxu0 0.0
    %4661 = vmatpush2.msra.mxu0 0.0
    %4662 = vmatprep.subr.mxu0 0.0
    %4663 = vmatpush2.msra.mxu0 0.0
    %4664 = vmatprep.subr.mxu0 0.0
    %4665 = vmatpush2.msra.mxu0 0.0
    %4666 = vmatprep.subr.mxu0 0.0
    %4667 = vmatpush2.msra.mxu0 0.0
    %4668 = vmatprep.subr.mxu0 0.0
    %4669 = vmatpush2.msra.mxu0 0.0
    %4670 = vmatprep.subr.mxu0 0.0
    %4671 = vmatpush2.msra.mxu0 0.0
    %4672 = vmatprep.subr.mxu0 0.0
    %4673 = vmatpush2.msra.mxu0 0.0
    %4674 = vmatprep.subr.mxu0 0.0
    %4675 = vmatpush2.msra.mxu0 0.0
    %4676 = vmatprep.subr.mxu0 0.0
    %4677 = vmatpush2.msra.mxu0 0.0
    %4678 = vmatprep.mubr.f32.mxu0 0.0
    %4679 = vmatmul.mubr.f32.gmra.mxu0 %v4606
    %v4680 = vpop.f32.mrf.mxu0
    %v4681 = vadd.f32 0.0, %v4680
    %v4682 = vpop.f32.mrf.mxu0
    %4683 = vmatprep.mubr.f32.mxu0 0.0
    %4684 = vmatmul.mubr.f32.gmra.mxu0 %v4609
    %v4685 = vpop.f32.mrf.mxu0
    %v4686 = vadd.f32 0.0, %v4685
    %v4687 = vpop.f32.mrf.mxu0
    %4688 = vmatprep.mubr.f32.mxu0 0.0
    %4689 = vmatmul.mubr.f32.gmra.mxu0 %v4612
    %v4690 = vpop.f32.mrf.mxu0
    %v4691 = vadd.f32 0.0, %v4690
    %v4692 = vpop.f32.mrf.mxu0
    %4693 = vdwg.mxu0
    %v4694 = vadd.f32 %v4359, %v4681
    %v4695 = vadd.f32 %v4360, %v4686
    %v4696 = vadd.f32 %v4361, %v4691
    %4697 = vrot.lane.b32.xlu0 %v3673, 104
    %v4698 = vpop.permute.xlu0 %4697
    %4699 = vrot.lane.b32.xlu0 %v3678, 104
    %v4700 = vpop.permute.xlu0 %4699
    %4701 = vrot.lane.b32.xlu0 %v3683, 104
    %v4702 = vpop.permute.xlu0 %4701
    %4703 = vrot.lane.b32.xlu0 %v3673, 72
    %v4704 = vpop.permute.xlu0 %4703
    %4705 = vrot.lane.b32.xlu0 %v3678, 72
    %v4706 = vpop.permute.xlu0 %4705
    %4707 = vrot.lane.b32.xlu0 %v3683, 72
    %v4708 = vpop.permute.xlu0 %4707
    %v4709 = vsel %vm649, %v4698, 0
    %v4711 = vsel %vm649, %v4700, 0
    %v4713 = vsel %vm649, %v4702, 0
    %v4715 = vsel %vm649, %v4704, 0
    %v4717 = vsel %vm649, %v4706, 0
    %v4719 = vsel %vm649, %v4708, 0
    %4721 = vmatprep.subr.mxu0 0.0
    %4722 = vmatpush1.xpose.msra.mxu0 0.0
    %4723 = vmatprep.subr.mxu0 0.0
    %4724 = vmatpush1.xpose.msra.mxu0 0.0
    %4725 = vmatprep.subr.mxu0 0.0
    %4726 = vmatpush1.xpose.msra.mxu0 0.0
    %4727 = vmatprep.subr.mxu0 0.0
    %4728 = vmatpush1.xpose.msra.mxu0 0.0
    %4729 = vmatprep.subr.mxu0 0.0
    %4730 = vmatpush1.xpose.msra.mxu0 0.0
    %4731 = vmatprep.subr.mxu0 0.0
    %4732 = vmatpush1.xpose.msra.mxu0 0.0
    %4733 = vmatprep.subr.mxu0 0.0
    %4734 = vmatpush1.xpose.msra.mxu0 0.0
    %4735 = vmatprep.subr.mxu0 0.0
    %4736 = vmatpush1.xpose.msra.mxu0 0.0
    %4737 = vmatprep.subr.mxu0 0.0
    %4738 = vmatpush1.xpose.msra.mxu0 0.0
    %4739 = vmatprep.subr.mxu0 0.0
    %4740 = vmatpush1.xpose.msra.mxu0 0.0
    %4741 = vmatprep.subr.mxu0 0.0
    %4742 = vmatpush1.xpose.msra.mxu0 0.0
    %4743 = vmatprep.subr.mxu0 0.0
    %4744 = vmatpush1.xpose.msra.mxu0 0.0
    %4745 = vmatprep.subr.mxu0 0.0
    %4746 = vmatpush1.xpose.msra.mxu0 0.0
    %4747 = vmatprep.subr.mxu0 0.0
    %4748 = vmatpush1.xpose.msra.mxu0 %v4719
    %4749 = vmatprep.subr.mxu0 0.0
    %4750 = vmatpush1.xpose.msra.mxu0 %v4717
    %4751 = vmatprep.subr.mxu0 0.0
    %4752 = vmatpush1.xpose.msra.mxu0 %v4715
    %4753 = vmatprep.subr.mxu0 0.0
    %4754 = vmatpush2.xpose.msra.mxu0 0.0
    %4755 = vmatprep.subr.mxu0 0.0
    %4756 = vmatpush2.xpose.msra.mxu0 0.0
    %4757 = vmatprep.subr.mxu0 0.0
    %4758 = vmatpush2.xpose.msra.mxu0 0.0
    %4759 = vmatprep.subr.mxu0 0.0
    %4760 = vmatpush2.xpose.msra.mxu0 0.0
    %4761 = vmatprep.subr.mxu0 0.0
    %4762 = vmatpush2.xpose.msra.mxu0 0.0
    %4763 = vmatprep.subr.mxu0 0.0
    %4764 = vmatpush2.xpose.msra.mxu0 0.0
    %4765 = vmatprep.subr.mxu0 0.0
    %4766 = vmatpush2.xpose.msra.mxu0 0.0
    %4767 = vmatprep.subr.mxu0 0.0
    %4768 = vmatpush2.xpose.msra.mxu0 0.0
    %4769 = vmatprep.subr.mxu0 0.0
    %4770 = vmatpush2.xpose.msra.mxu0 0.0
    %4771 = vmatprep.subr.mxu0 0.0
    %4772 = vmatpush2.xpose.msra.mxu0 0.0
    %4773 = vmatprep.subr.mxu0 0.0
    %4774 = vmatpush2.xpose.msra.mxu0 0.0
    %4775 = vmatprep.subr.mxu0 0.0
    %4776 = vmatpush2.xpose.msra.mxu0 0.0
    %4777 = vmatprep.subr.mxu0 0.0
    %4778 = vmatpush2.xpose.msra.mxu0 0.0
    %4779 = vmatprep.subr.mxu0 0.0
    %4780 = vmatpush2.xpose.msra.mxu0 0.0
    %4781 = vmatprep.subr.mxu0 0.0
    %4782 = vmatpush2.xpose.msra.mxu0 0.0
    %4783 = vmatprep.subr.mxu0 0.0
    %4784 = vmatpush2.xpose.msra.mxu0 0.0
    %4785 = vmatprep.mubr.f32.mxu0 0.0
    %4786 = vmatmul.mubr.f32.gmra.mxu0 %v4709
    %v4787 = vpop.f32.mrf.mxu0
    %v4788 = vadd.f32 0.0, %v4787
    %v4789 = vpop.f32.mrf.mxu0
    %4790 = vmatprep.mubr.f32.mxu0 0.0
    %4791 = vmatmul.mubr.f32.gmra.mxu0 %v4711
    %v4792 = vpop.f32.mrf.mxu0
    %v4793 = vadd.f32 0.0, %v4792
    %v4794 = vpop.f32.mrf.mxu0
    %4795 = vmatprep.mubr.f32.mxu0 0.0
    %4796 = vmatmul.mubr.f32.gmra.mxu0 %v4713
    %v4797 = vpop.f32.mrf.mxu0
    %v4798 = vadd.f32 0.0, %v4797
    %v4799 = vpop.f32.mrf.mxu0
    %4800 = vdwg.mxu0
    %v4801 = vmul.f32 %v4788, 0.35355338
    %v4802 = vmul.f32 %v4793, 0.35355338
    %v4803 = vmul.f32 %v4798, 0.35355338
    %v4804 = vadd.f32 %v4801, %v536
    %v4805 = vadd.f32 %v4802, %v537
    %v4806 = vadd.f32 %v4803, %v538
    %v4807 = vsel %vm748, %v4804, -inf
    %4808 = vmax.xlane.f32.xlu0 %v4807
    %v4809 = vpop.xlane.xlu0 %4808
    %v4810 = vsel %vm748, %v4805, -inf
    %4811 = vmax.xlane.f32.xlu0 %v4810
    %v4812 = vpop.xlane.xlu0 %4811
    %v4813 = vsel %vm755, %v4806, -inf
    %4814 = vmax.xlane.f32.xlu0 %v4813
    %v4815 = vpop.xlane.xlu0 %4814
    %v4816 = vsub.f32 %v4804, %v4809
    %v4817 = vsub.f32 %v4805, %v4812
    %v4818 = vsub.f32 %v4806, %v4815
    %v4819 = vmul.f32 %v4816, 1.442695
    %v4820 = vpow.pop %v4819
    %v4821 = vmul.f32 %v4817, 1.442695
    %v4822 = vpow.pop %v4821
    %v4823 = vmul.f32 %v4818, 1.442695
    %v4824 = vpow.pop %v4823
    %v4825 = vsel %vm748, %v4820, 0.0
    %4826 = vadd.xlane.f32.xlu0 %v4825
    %v4827 = vpop.xlane.xlu0 %4826
    %v4828 = vsel %vm748, %v4822, 0.0
    %4829 = vadd.xlane.f32.xlu0 %v4828
    %v4830 = vpop.xlane.xlu0 %4829
    %v4831 = vsel %vm755, %v4824, 0.0
    %4832 = vadd.xlane.f32.xlu0 %v4831
    %v4833 = vpop.xlane.xlu0 %4832
    %v4834 = vrcp.pop %v4827
    %v4835 = vrcp.pop %v4830
    %v4836 = vrcp.pop %v4833
    %v4837 = vmul.f32 %v4820, %v4834
    %v4838 = vmul.f32 %v4822, %v4835
    %v4839 = vmul.f32 %v4824, %v4836
    %4840 = vrot.lane.b32.xlu0 %v3673, 40
    %v4841 = vpop.permute.xlu0 %4840
    %4842 = vrot.lane.b32.xlu0 %v3678, 40
    %v4843 = vpop.permute.xlu0 %4842
    %4844 = vrot.lane.b32.xlu0 %v3683, 40
    %v4845 = vpop.permute.xlu0 %4844
    %v4849 = vsel %vm748, %v4837, 0
    %v4852 = vsel %vm748, %v4838, 0
    %v4855 = vsel %vm748, %v4839, 0
    %v4857 = vsel %vm800, %v4845, 0
    %4859 = vmatprep.subr.mxu0 0.0
    %4860 = vmatpush1.msra.mxu0 0.0
    %4861 = vmatprep.subr.mxu0 0.0
    %4862 = vmatpush1.msra.mxu0 0.0
    %4863 = vmatprep.subr.mxu0 0.0
    %4864 = vmatpush1.msra.mxu0 0.0
    %4865 = vmatprep.subr.mxu0 0.0
    %4866 = vmatpush1.msra.mxu0 0.0
    %4867 = vmatprep.subr.mxu0 0.0
    %4868 = vmatpush1.msra.mxu0 0.0
    %4869 = vmatprep.subr.mxu0 0.0
    %4870 = vmatpush1.msra.mxu0 0.0
    %4871 = vmatprep.subr.mxu0 0.0
    %4872 = vmatpush1.msra.mxu0 0.0
    %4873 = vmatprep.subr.mxu0 0.0
    %4874 = vmatpush1.msra.mxu0 0.0
    %4875 = vmatprep.subr.mxu0 0.0
    %4876 = vmatpush1.msra.mxu0 0.0
    %4877 = vmatprep.subr.mxu0 0.0
    %4878 = vmatpush1.msra.mxu0 0.0
    %4879 = vmatprep.subr.mxu0 0.0
    %4880 = vmatpush1.msra.mxu0 0.0
    %4881 = vmatprep.subr.mxu0 0.0
    %4882 = vmatpush1.msra.mxu0 0.0
    %4883 = vmatprep.subr.mxu0 0.0
    %4884 = vmatpush1.msra.mxu0 0.0
    %4885 = vmatprep.subr.mxu0 0.0
    %4886 = vmatpush1.msra.mxu0 %v4857
    %4887 = vmatprep.subr.mxu0 0.0
    %4888 = vmatpush1.msra.mxu0 %v4843
    %4889 = vmatprep.subr.mxu0 0.0
    %4890 = vmatpush1.msra.mxu0 %v4841
    %4891 = vmatprep.subr.mxu0 0.0
    %4892 = vmatpush2.msra.mxu0 0.0
    %4893 = vmatprep.subr.mxu0 0.0
    %4894 = vmatpush2.msra.mxu0 0.0
    %4895 = vmatprep.subr.mxu0 0.0
    %4896 = vmatpush2.msra.mxu0 0.0
    %4897 = vmatprep.subr.mxu0 0.0
    %4898 = vmatpush2.msra.mxu0 0.0
    %4899 = vmatprep.subr.mxu0 0.0
    %4900 = vmatpush2.msra.mxu0 0.0
    %4901 = vmatprep.subr.mxu0 0.0
    %4902 = vmatpush2.msra.mxu0 0.0
    %4903 = vmatprep.subr.mxu0 0.0
    %4904 = vmatpush2.msra.mxu0 0.0
    %4905 = vmatprep.subr.mxu0 0.0
    %4906 = vmatpush2.msra.mxu0 0.0
    %4907 = vmatprep.subr.mxu0 0.0
    %4908 = vmatpush2.msra.mxu0 0.0
    %4909 = vmatprep.subr.mxu0 0.0
    %4910 = vmatpush2.msra.mxu0 0.0
    %4911 = vmatprep.subr.mxu0 0.0
    %4912 = vmatpush2.msra.mxu0 0.0
    %4913 = vmatprep.subr.mxu0 0.0
    %4914 = vmatpush2.msra.mxu0 0.0
    %4915 = vmatprep.subr.mxu0 0.0
    %4916 = vmatpush2.msra.mxu0 0.0
    %4917 = vmatprep.subr.mxu0 0.0
    %4918 = vmatpush2.msra.mxu0 0.0
    %4919 = vmatprep.subr.mxu0 0.0
    %4920 = vmatpush2.msra.mxu0 0.0
    %4921 = vmatprep.subr.mxu0 0.0
    %4922 = vmatpush2.msra.mxu0 0.0
    %4923 = vmatprep.mubr.f32.mxu0 0.0
    %4924 = vmatmul.mubr.f32.gmra.mxu0 %v4849
    %v4925 = vpop.f32.mrf.mxu0
    %v4926 = vadd.f32 0.0, %v4925
    %v4927 = vpop.f32.mrf.mxu0
    %4928 = vmatprep.mubr.f32.mxu0 0.0
    %4929 = vmatmul.mubr.f32.gmra.mxu0 %v4852
    %v4930 = vpop.f32.mrf.mxu0
    %v4931 = vadd.f32 0.0, %v4930
    %v4932 = vpop.f32.mrf.mxu0
    %4933 = vmatprep.mubr.f32.mxu0 0.0
    %4934 = vmatmul.mubr.f32.gmra.mxu0 %v4855
    %v4935 = vpop.f32.mrf.mxu0
    %v4936 = vadd.f32 0.0, %v4935
    %v4937 = vpop.f32.mrf.mxu0
    %4938 = vdwg.mxu0
    %v4939 = vld [vmem:[%s3927 + $0x18] sm:$0xff]
    %v4941 = vsel %vm649, %v4926, 0
    %v4944 = vsel %vm649, %v4931, 0
    %v4947 = vsel %vm649, %v4936, 0
    %4949 = vmatprep.subr.mxu0 0.0
    %4950 = vmatpush1.msra.mxu0 0.0
    %4951 = vmatprep.subr.mxu0 0.0
    %4952 = vmatpush1.msra.mxu0 0.0
    %4953 = vmatprep.subr.mxu0 0.0
    %4954 = vmatpush1.msra.mxu0 0.0
    %4955 = vmatprep.subr.mxu0 0.0
    %4956 = vmatpush1.msra.mxu0 0.0
    %4957 = vmatprep.subr.mxu0 0.0
    %4958 = vmatpush1.msra.mxu0 0.0
    %4959 = vmatprep.subr.mxu0 0.0
    %4960 = vmatpush1.msra.mxu0 0.0
    %4961 = vmatprep.subr.mxu0 0.0
    %4962 = vmatpush1.msra.mxu0 0.0
    %4963 = vmatprep.subr.mxu0 0.0
    %4964 = vmatpush1.msra.mxu0 0.0
    %4965 = vmatprep.subr.mxu0 0.0
    %4966 = vmatpush1.msra.mxu0 0.0
    %4967 = vmatprep.subr.mxu0 0.0
    %4968 = vmatpush1.msra.mxu0 0.0
    %4969 = vmatprep.subr.mxu0 0.0
    %4970 = vmatpush1.msra.mxu0 0.0
    %4971 = vmatprep.subr.mxu0 0.0
    %4972 = vmatpush1.msra.mxu0 0.0
    %4973 = vmatprep.subr.mxu0 0.0
    %4974 = vmatpush1.msra.mxu0 0.0
    %4975 = vmatprep.subr.mxu0 0.0
    %4976 = vmatpush1.msra.mxu0 0.0
    %4977 = vmatprep.subr.mxu0 0.0
    %4978 = vmatpush1.msra.mxu0 0.0
    %4979 = vmatprep.subr.mxu0 0.0
    %4980 = vmatpush1.msra.mxu0 %v4939
    %4981 = vmatprep.subr.mxu0 0.0
    %4982 = vmatpush2.msra.mxu0 0.0
    %4983 = vmatprep.subr.mxu0 0.0
    %4984 = vmatpush2.msra.mxu0 0.0
    %4985 = vmatprep.subr.mxu0 0.0
    %4986 = vmatpush2.msra.mxu0 0.0
    %4987 = vmatprep.subr.mxu0 0.0
    %4988 = vmatpush2.msra.mxu0 0.0
    %4989 = vmatprep.subr.mxu0 0.0
    %4990 = vmatpush2.msra.mxu0 0.0
    %4991 = vmatprep.subr.mxu0 0.0
    %4992 = vmatpush2.msra.mxu0 0.0
    %4993 = vmatprep.subr.mxu0 0.0
    %4994 = vmatpush2.msra.mxu0 0.0
    %4995 = vmatprep.subr.mxu0 0.0
    %4996 = vmatpush2.msra.mxu0 0.0
    %4997 = vmatprep.subr.mxu0 0.0
    %4998 = vmatpush2.msra.mxu0 0.0
    %4999 = vmatprep.subr.mxu0 0.0
    %5000 = vmatpush2.msra.mxu0 0.0
    %5001 = vmatprep.subr.mxu0 0.0
    %5002 = vmatpush2.msra.mxu0 0.0
    %5003 = vmatprep.subr.mxu0 0.0
    %5004 = vmatpush2.msra.mxu0 0.0
    %5005 = vmatprep.subr.mxu0 0.0
    %5006 = vmatpush2.msra.mxu0 0.0
    %5007 = vmatprep.subr.mxu0 0.0
    %5008 = vmatpush2.msra.mxu0 0.0
    %5009 = vmatprep.subr.mxu0 0.0
    %5010 = vmatpush2.msra.mxu0 0.0
    %5011 = vmatprep.subr.mxu0 0.0
    %5012 = vmatpush2.msra.mxu0 0.0
    %5013 = vmatprep.mubr.f32.mxu0 0.0
    %5014 = vmatmul.mubr.f32.gmra.mxu0 %v4941
    %v5015 = vpop.f32.mrf.mxu0
    %v5016 = vadd.f32 0.0, %v5015
    %v5017 = vpop.f32.mrf.mxu0
    %5018 = vmatprep.mubr.f32.mxu0 0.0
    %5019 = vmatmul.mubr.f32.gmra.mxu0 %v4944
    %v5020 = vpop.f32.mrf.mxu0
    %v5021 = vadd.f32 0.0, %v5020
    %v5022 = vpop.f32.mrf.mxu0
    %5023 = vmatprep.mubr.f32.mxu0 0.0
    %5024 = vmatmul.mubr.f32.gmra.mxu0 %v4947
    %v5025 = vpop.f32.mrf.mxu0
    %v5026 = vadd.f32 0.0, %v5025
    %v5027 = vpop.f32.mrf.mxu0
    %5028 = vdwg.mxu0
    %v5029 = vadd.f32 %v4694, %v5016
    %v5030 = vadd.f32 %v4695, %v5021
    %v5031 = vadd.f32 %v4696, %v5026
    %v5032 = vadd.f32 %v3581, %v5029
    %v5033 = vadd.f32 %v3582, %v5030
    %v5034 = vadd.f32 %v3583, %v5031
    %s5035 = scalar_lea.vmem [#allocation15], 1
    %v5036 = vld [vmem:[%s5035] sm:$0x1]
    %s5037 = scalar_lea.vmem [#allocation16], 1
    %v5038 = vld [vmem:[%s5037] sm:$0x1]
    %v5039 = vsel %vm391, %v5032, 0.0
    %5040 = vadd.xlane.f32.xlu0 %v5039
    %v5041 = vpop.xlane.xlu0 %5040
    %v5042 = vsel %vm391, %v5033, 0.0
    %5043 = vadd.xlane.f32.xlu0 %v5042
    %v5044 = vpop.xlane.xlu0 %5043
    %v5045 = vsel %vm1998, %v5034, 0.0
    %5046 = vadd.xlane.f32.xlu0 %v5045
    %v5047 = vpop.xlane.xlu0 %5046
    %v5048 = vmul.f32 %v5041, %v2002
    %v5049 = vmul.f32 %v5044, %v2002
    %v5050 = vmul.f32 %v5047, %v2002
    %v5051 = vsub.f32 %v5032, %v5048
    %v5052 = vsub.f32 %v5033, %v5049
    %v5053 = vsub.f32 %v5034, %v5050
    %v5054 = vmul.f32 %v5051, %v5051
    %v5055 = vmul.f32 %v5052, %v5052
    %v5056 = vmul.f32 %v5053, %v5053
    %v5057 = vsel %vm391, %v5054, 0.0
    %5058 = vadd.xlane.f32.xlu0 %v5057
    %v5059 = vpop.xlane.xlu0 %5058
    %v5060 = vsel %vm391, %v5055, 0.0
    %5061 = vadd.xlane.f32.xlu0 %v5060
    %v5062 = vpop.xlane.xlu0 %5061
    %v5063 = vsel %vm1998, %v5056, 0.0
    %5064 = vadd.xlane.f32.xlu0 %v5063
    %v5065 = vpop.xlane.xlu0 %5064
    %v5066 = vmul.f32 %v5059, %v2002
    %v5067 = vmul.f32 %v5062, %v2002
    %v5068 = vmul.f32 %v5065, %v2002
    %v5069 = vadd.f32 %v5066, 1e-05
    %v5070 = vadd.f32 %v5067, 1e-05
    %v5071 = vadd.f32 %v5068, 1e-05
    %v5072 = vrsqrt.pop %v5069
    %v5073 = vrsqrt.pop %v5070
    %v5074 = vrsqrt.pop %v5071
    %v5075 = vmul.f32 %v5051, %v5072
    %v5076 = vmul.f32 %v5052, %v5073
    %v5077 = vmul.f32 %v5053, %v5074
    %v5079 = vlaneseq
    %v5080 = vshrl.u32 %v5079, 7
    %v5081 = vsub.s32 0, %v5080
    %v5082 = vrot.slane %v5036, %v5081
    %v5084 = vmul.f32 %v5075, %v5082
    %v5085 = vmul.f32 %v5076, %v5082
    %v5086 = vmul.f32 %v5077, %v5082
    %v5088 = vlaneseq
    %v5089 = vshrl.u32 %v5088, 7
    %v5090 = vsub.s32 0, %v5089
    %v5091 = vrot.slane %v5038, %v5090
    %v5093 = vadd.f32 %v5084, %v5091
    %v5094 = vadd.f32 %v5085, %v5091
    %v5095 = vadd.f32 %v5086, %v5091
    %s5096 = scalar_lea.vmem [#allocation13], 1
    %v5097 = vld [vmem:[%s5096] sm:$0x1]
    %v5099 = vlaneseq
    %v5100 = vshrl.u32 %v5099, 7
    %v5101 = vsub.s32 0, %v5100
    %v5102 = vrot.slane %v5097, %v5101
    %v5104 = vadd.f32 %v5093, %v5102
    %v5105 = vadd.f32 %v5094, %v5102
    %v5106 = vadd.f32 %v5095, %v5102
    %s5107 = scalar_lea.vmem [#allocation18], 1
    %v5108 = vld [vmem:[%s5107] sm:$0x1]
    %s5109 = scalar_lea.vmem [#allocation19], 1
    %v5110 = vld [vmem:[%s5109] sm:$0x1]
    %v5111 = vsel %vm391, %v5104, 0.0
    %5112 = vadd.xlane.f32.xlu0 %v5111
    %v5113 = vpop.xlane.xlu0 %5112
    %v5114 = vsel %vm391, %v5105, 0.0
    %5115 = vadd.xlane.f32.xlu0 %v5114
    %v5116 = vpop.xlane.xlu0 %5115
    %v5117 = vsel %vm1998, %v5106, 0.0
    %5118 = vadd.xlane.f32.xlu0 %v5117
    %v5119 = vpop.xlane.xlu0 %5118
    %v5120 = vmul.f32 %v5113, %v2002
    %v5121 = vmul.f32 %v5116, %v2002
    %v5122 = vmul.f32 %v5119, %v2002
    %v5123 = vsub.f32 %v5104, %v5120
    %v5124 = vsub.f32 %v5105, %v5121
    %v5125 = vsub.f32 %v5106, %v5122
    %v5126 = vmul.f32 %v5123, %v5123
    %v5127 = vmul.f32 %v5124, %v5124
    %v5128 = vmul.f32 %v5125, %v5125
    %v5129 = vsel %vm391, %v5126, 0.0
    %5130 = vadd.xlane.f32.xlu0 %v5129
    %v5131 = vpop.xlane.xlu0 %5130
    %v5132 = vsel %vm391, %v5127, 0.0
    %5133 = vadd.xlane.f32.xlu0 %v5132
    %v5134 = vpop.xlane.xlu0 %5133
    %v5135 = vsel %vm1998, %v5128, 0.0
    %5136 = vadd.xlane.f32.xlu0 %v5135
    %v5137 = vpop.xlane.xlu0 %5136
    %v5138 = vmul.f32 %v5131, %v2002
    %v5139 = vmul.f32 %v5134, %v2002
    %v5140 = vmul.f32 %v5137, %v2002
    %v5141 = vadd.f32 %v5138, 1e-05
    %v5142 = vadd.f32 %v5139, 1e-05
    %v5143 = vadd.f32 %v5140, 1e-05
    %v5144 = vrsqrt.pop %v5141
    %v5145 = vrsqrt.pop %v5142
    %v5146 = vrsqrt.pop %v5143
    %v5147 = vmul.f32 %v5123, %v5144
    %v5148 = vmul.f32 %v5124, %v5145
    %v5149 = vmul.f32 %v5125, %v5146
    %v5151 = vlaneseq
    %v5152 = vshrl.u32 %v5151, 7
    %v5153 = vsub.s32 0, %v5152
    %v5154 = vrot.slane %v5108, %v5153
    %v5156 = vmul.f32 %v5147, %v5154
    %v5157 = vmul.f32 %v5148, %v5154
    %v5158 = vmul.f32 %v5149, %v5154
    %v5160 = vlaneseq
    %v5161 = vshrl.u32 %v5160, 7
    %v5162 = vsub.s32 0, %v5161
    %v5163 = vrot.slane %v5110, %v5162
    %v5165 = vadd.f32 %v5156, %v5163
    %v5166 = vadd.f32 %v5157, %v5163
    %v5167 = vadd.f32 %v5158, %v5163
    %s5168 = sshll.u32 %s2121, 4
    %5169 = dma.done %s2128, %s5168
    %s5170 = sshll.u32 %s2121, 4
    %5171 = dma.done %s2142, %s5170
    %v5172 = vpack.c.bf16 %v5166, %v5165
    %v5173 = vpack.c.bf16 %v5167, %v5167
    %v5174 = vld [vmem:[%s2127] sm:$0xff]
    %v5175 = vld [vmem:[%s2127 + $0x8] sm:$0xff]
    %v5176 = vld [vmem:[%s2127 + $0x40] sm:$0xff]
    %v5177 = vld [vmem:[%s2127 + $0x48] sm:$0xff]
    %v5178 = vld [vmem:[%s2127 + $0x80] sm:$0xff]
    %v5179 = vld [vmem:[%s2127 + $0x88] sm:$0xff]
    %v5180 = vld [vmem:[%s2127 + $0xc0] sm:$0xff]
    %v5181 = vld [vmem:[%s2127 + $0xc8] sm:$0xff]
    %s5182 = scalar_lea.vmem %s18, 16
    %v5183 = vld [vmem:[%s5182] sm:$0xf]
    %v5185 = vlaneseq
    %v5186 = vshrl.u32 %v5185, 7
    %v5187 = vsub.s32 0, %v5186
    %v5188 = vrot.slane %v5183, %v5187
    %v5189 = vlaneseq
    %v5190 = vshrl.u32 %v5189, 7
    %v5191 = vsub.s32 1, %v5190
    %v5192 = vrot.slane %v5183, %v5191
    %v5193 = vlaneseq
    %v5194 = vshrl.u32 %v5193, 7
    %v5195 = vsub.s32 2, %v5194
    %v5196 = vrot.slane %v5183, %v5195
    %v5197 = vlaneseq
    %v5198 = vshrl.u32 %v5197, 7
    %v5199 = vsub.s32 3, %v5198
    %v5200 = vrot.slane %v5183, %v5199
    %v5213 = vunpack.c.l.b16 %v5174
    %v5214 = vunpack.c.h.b16 %v5174
    %v5215 = vunpack.c.l.b16 %v5175
    %v5216 = vunpack.c.h.b16 %v5175
    %v5217 = vunpack.c.l.b16 %v5176
    %v5218 = vunpack.c.h.b16 %v5176
    %v5219 = vunpack.c.l.b16 %v5177
    %v5220 = vunpack.c.h.b16 %v5177
    %v5221 = vunpack.c.l.b16 %v5178
    %v5222 = vunpack.c.h.b16 %v5178
    %v5223 = vunpack.c.l.b16 %v5179
    %v5224 = vunpack.c.h.b16 %v5179
    %v5225 = vunpack.c.l.b16 %v5180
    %v5226 = vunpack.c.h.b16 %v5180
    %v5227 = vunpack.c.l.b16 %v5181
    %v5228 = vunpack.c.h.b16 %v5181
    %v5229 = vpack.c.b16 %v5217, %v5213
    %v5230 = vpack.c.b16 %v5218, %v5214
    %v5231 = vpack.c.b16 %v5219, %v5215
    %v5232 = vpack.c.b16 %v5220, %v5216
    %v5233 = vpack.c.b16 %v5225, %v5221
    %v5234 = vpack.c.b16 %v5226, %v5222
    %v5235 = vpack.c.b16 %v5227, %v5223
    %v5236 = vpack.c.b16 %v5228, %v5224
    %v5246 = vsel %vm391, %v5172, 0
    %v5249 = vsel %vm391, %v5173, 0
    %5251 = vmatprep.subr.bf16.mxu0 0
    %5252 = vmatpush1.bf16.msra.mxu0 0
    %5253 = vmatprep.subr.bf16.mxu0 0
    %5254 = vmatpush1.bf16.msra.mxu0 0
    %5255 = vmatprep.subr.bf16.mxu0 0
    %5256 = vmatpush1.bf16.msra.mxu0 0
    %5257 = vmatprep.subr.bf16.mxu0 0
    %5258 = vmatpush1.bf16.msra.mxu0 0
    %5259 = vmatprep.subr.bf16.mxu0 0
    %5260 = vmatpush1.bf16.msra.mxu0 0
    %5261 = vmatprep.subr.bf16.mxu0 0
    %5262 = vmatpush1.bf16.msra.mxu0 0
    %5263 = vmatprep.subr.bf16.mxu0 %v5234
    %5264 = vmatpush1.bf16.msra.mxu0 %v5233
    %5265 = vmatprep.subr.bf16.mxu0 %v5230
    %5266 = vmatpush1.bf16.msra.mxu0 %v5229
    %5267 = vmatprep.subr.bf16.mxu0 0
    %5268 = vmatpush2.bf16.msra.mxu0 0
    %5269 = vmatprep.subr.bf16.mxu0 0
    %5270 = vmatpush2.bf16.msra.mxu0 0
    %5271 = vmatprep.subr.bf16.mxu0 0
    %5272 = vmatpush2.bf16.msra.mxu0 0
    %5273 = vmatprep.subr.bf16.mxu0 0
    %5274 = vmatpush2.bf16.msra.mxu0 0
    %5275 = vmatprep.subr.bf16.mxu0 0
    %5276 = vmatpush2.bf16.msra.mxu0 0
    %5277 = vmatprep.subr.bf16.mxu0 0
    %5278 = vmatpush2.bf16.msra.mxu0 0
    %5279 = vmatprep.subr.bf16.mxu0 0
    %5280 = vmatpush2.bf16.msra.mxu0 0
    %5281 = vmatprep.subr.bf16.mxu0 0
    %5282 = vmatpush2.bf16.msra.mxu0 0
    %5283 = vmatprep.mubr.bf16.mxu0 0
    %5284 = vmatmul.mubr.bf16.gmra.mxu0 %v5246
    %v5285 = vpop.f32.mrf.mxu0
    %v5286 = vadd.f32 %v5188, %v5285
    %v5287 = vpop.f32.mrf.mxu0
    %v5288 = vadd.f32 %v5192, %v5287
    %v5289 = vpop.f32.mrf.mxu0
    %v5290 = vadd.f32 %v5188, %v5289
    %v5291 = vpop.f32.mrf.mxu0
    %v5292 = vadd.f32 %v5192, %v5291
    %5293 = vmatprep.mubr.bf16.mxu0 0
    %5294 = vmatmul.mubr.bf16.gmra.mxu0 %v5249
    %v5295 = vpop.f32.mrf.mxu0
    %v5296 = vadd.f32 %v5188, %v5295
    %v5297 = vpop.f32.mrf.mxu0
    %v5298 = vadd.f32 %v5192, %v5297
    %v5299 = vpop.f32.mrf.mxu0
    %v5300 = vpop.f32.mrf.mxu0
    %5301 = vdwg.mxu0
    %5302 = vmatprep.subr.bf16.mxu0 0
    %5303 = vmatpush1.bf16.msra.mxu0 0
    %5304 = vmatprep.subr.bf16.mxu0 0
    %5305 = vmatpush1.bf16.msra.mxu0 0
    %5306 = vmatprep.subr.bf16.mxu0 0
    %5307 = vmatpush1.bf16.msra.mxu0 0
    %5308 = vmatprep.subr.bf16.mxu0 0
    %5309 = vmatpush1.bf16.msra.mxu0 0
    %5310 = vmatprep.subr.bf16.mxu0 0
    %5311 = vmatpush1.bf16.msra.mxu0 0
    %5312 = vmatprep.subr.bf16.mxu0 0
    %5313 = vmatpush1.bf16.msra.mxu0 0
    %5314 = vmatprep.subr.bf16.mxu0 %v5236
    %5315 = vmatpush1.bf16.msra.mxu0 %v5235
    %5316 = vmatprep.subr.bf16.mxu0 %v5232
    %5317 = vmatpush1.bf16.msra.mxu0 %v5231
    %5318 = vmatprep.subr.bf16.mxu0 0
    %5319 = vmatpush2.bf16.msra.mxu0 0
    %5320 = vmatprep.subr.bf16.mxu0 0
    %5321 = vmatpush2.bf16.msra.mxu0 0
    %5322 = vmatprep.subr.bf16.mxu0 0
    %5323 = vmatpush2.bf16.msra.mxu0 0
    %5324 = vmatprep.subr.bf16.mxu0 0
    %5325 = vmatpush2.bf16.msra.mxu0 0
    %5326 = vmatprep.subr.bf16.mxu0 0
    %5327 = vmatpush2.bf16.msra.mxu0 0
    %5328 = vmatprep.subr.bf16.mxu0 0
    %5329 = vmatpush2.bf16.msra.mxu0 0
    %5330 = vmatprep.subr.bf16.mxu0 0
    %5331 = vmatpush2.bf16.msra.mxu0 0
    %5332 = vmatprep.subr.bf16.mxu0 0
    %5333 = vmatpush2.bf16.msra.mxu0 0
    %5334 = vmatprep.mubr.bf16.mxu0 0
    %5335 = vmatmul.mubr.bf16.gmra.mxu0 %v5246
    %v5336 = vpop.f32.mrf.mxu0
    %v5337 = vadd.f32 %v5196, %v5336
    %v5338 = vpop.f32.mrf.mxu0
    %v5339 = vadd.f32 %v5200, %v5338
    %v5340 = vpop.f32.mrf.mxu0
    %v5341 = vadd.f32 %v5196, %v5340
    %v5342 = vpop.f32.mrf.mxu0
    %v5343 = vadd.f32 %v5200, %v5342
    %5344 = vmatprep.mubr.bf16.mxu0 0
    %5345 = vmatmul.mubr.bf16.gmra.mxu0 %v5249
    %v5346 = vpop.f32.mrf.mxu0
    %v5347 = vadd.f32 %v5196, %v5346
    %v5348 = vpop.f32.mrf.mxu0
    %v5349 = vadd.f32 %v5200, %v5348
    %v5350 = vpop.f32.mrf.mxu0
    %v5351 = vpop.f32.mrf.mxu0
    %5352 = vdwg.mxu0
    %v5353 = vmax.f32 %v5286, 0.0
    %v5354 = vmax.f32 %v5288, 0.0
    %v5355 = vmax.f32 %v5337, 0.0
    %v5356 = vmax.f32 %v5339, 0.0
    %v5357 = vmax.f32 %v5290, 0.0
    %v5358 = vmax.f32 %v5292, 0.0
    %v5359 = vmax.f32 %v5341, 0.0
    %v5360 = vmax.f32 %v5343, 0.0
    %v5361 = vmax.f32 %v5296, 0.0
    %v5362 = vmax.f32 %v5298, 0.0
    %v5363 = vmax.f32 %v5347, 0.0
    %v5364 = vmax.f32 %v5349, 0.0
    %v5365 = vpack.c.bf16 %v5357, %v5353
    %v5366 = vpack.c.bf16 %v5358, %v5354
    %v5367 = vpack.c.bf16 %v5359, %v5355
    %v5368 = vpack.c.bf16 %v5360, %v5356
    %v5369 = vpack.c.bf16 %v5361, %v5361
    %v5370 = vpack.c.bf16 %v5362, %v5362
    %v5371 = vpack.c.bf16 %v5363, %v5363
    %v5372 = vpack.c.bf16 %v5364, %v5364
    %v5373 = vld [vmem:[%s2141] sm:$0xff]
    %v5374 = vld [vmem:[%s2141 + $0x8] sm:$0xff]
    %v5375 = vld [vmem:[%s2141 + $0x40] sm:$0xff]
    %v5376 = vld [vmem:[%s2141 + $0x48] sm:$0xff]
    %v5377 = vld [vmem:[%s2141 + $0x80] sm:$0xff]
    %v5378 = vld [vmem:[%s2141 + $0x88] sm:$0xff]
    %v5379 = vld [vmem:[%s2141 + $0xc0] sm:$0xff]
    %v5380 = vld [vmem:[%s2141 + $0xc8] sm:$0xff]
    %v5381 = vld [vmem:[%s2127 + $0x10] sm:$0xff]
    %v5382 = vld [vmem:[%s2127 + $0x18] sm:$0xff]
    %v5383 = vld [vmem:[%s2127 + $0x50] sm:$0xff]
    %v5384 = vld [vmem:[%s2127 + $0x58] sm:$0xff]
    %v5385 = vld [vmem:[%s2127 + $0x90] sm:$0xff]
    %v5386 = vld [vmem:[%s2127 + $0x98] sm:$0xff]
    %v5387 = vld [vmem:[%s2127 + $0xd0] sm:$0xff]
    %v5388 = vld [vmem:[%s2127 + $0xd8] sm:$0xff]
    %v5389 = vld [vmem:[%s5182 + $0x4] sm:$0xf]
    %v5391 = vlaneseq
    %v5392 = vshrl.u32 %v5391, 7
    %v5393 = vsub.s32 0, %v5392
    %v5394 = vrot.slane %v5389, %v5393
    %v5395 = vlaneseq
    %v5396 = vshrl.u32 %v5395, 7
    %v5397 = vsub.s32 1, %v5396
    %v5398 = vrot.slane %v5389, %v5397
    %v5399 = vlaneseq
    %v5400 = vshrl.u32 %v5399, 7
    %v5401 = vsub.s32 2, %v5400
    %v5402 = vrot.slane %v5389, %v5401
    %v5403 = vlaneseq
    %v5404 = vshrl.u32 %v5403, 7
    %v5405 = vsub.s32 3, %v5404
    %v5406 = vrot.slane %v5389, %v5405
    %v5419 = vunpack.c.l.b16 %v5381
    %v5420 = vunpack.c.h.b16 %v5381
    %v5421 = vunpack.c.l.b16 %v5382
    %v5422 = vunpack.c.h.b16 %v5382
    %v5423 = vunpack.c.l.b16 %v5383
    %v5424 = vunpack.c.h.b16 %v5383
    %v5425 = vunpack.c.l.b16 %v5384
    %v5426 = vunpack.c.h.b16 %v5384
    %v5427 = vunpack.c.l.b16 %v5385
    %v5428 = vunpack.c.h.b16 %v5385
    %v5429 = vunpack.c.l.b16 %v5386
    %v5430 = vunpack.c.h.b16 %v5386
    %v5431 = vunpack.c.l.b16 %v5387
    %v5432 = vunpack.c.h.b16 %v5387
    %v5433 = vunpack.c.l.b16 %v5388
    %v5434 = vunpack.c.h.b16 %v5388
    %v5435 = vpack.c.b16 %v5423, %v5419
    %v5436 = vpack.c.b16 %v5424, %v5420
    %v5437 = vpack.c.b16 %v5425, %v5421
    %v5438 = vpack.c.b16 %v5426, %v5422
    %v5439 = vpack.c.b16 %v5431, %v5427
    %v5440 = vpack.c.b16 %v5432, %v5428
    %v5441 = vpack.c.b16 %v5433, %v5429
    %v5442 = vpack.c.b16 %v5434, %v5430
    %5451 = vmatprep.subr.bf16.mxu0 0
    %5452 = vmatpush1.bf16.msra.mxu0 0
    %5453 = vmatprep.subr.bf16.mxu0 0
    %5454 = vmatpush1.bf16.msra.mxu0 0
    %5455 = vmatprep.subr.bf16.mxu0 0
    %5456 = vmatpush1.bf16.msra.mxu0 0
    %5457 = vmatprep.subr.bf16.mxu0 0
    %5458 = vmatpush1.bf16.msra.mxu0 0
    %5459 = vmatprep.subr.bf16.mxu0 0
    %5460 = vmatpush1.bf16.msra.mxu0 0
    %5461 = vmatprep.subr.bf16.mxu0 0
    %5462 = vmatpush1.bf16.msra.mxu0 0
    %5463 = vmatprep.subr.bf16.mxu0 %v5440
    %5464 = vmatpush1.bf16.msra.mxu0 %v5439
    %5465 = vmatprep.subr.bf16.mxu0 %v5436
    %5466 = vmatpush1.bf16.msra.mxu0 %v5435
    %5467 = vmatprep.subr.bf16.mxu0 0
    %5468 = vmatpush2.bf16.msra.mxu0 0
    %5469 = vmatprep.subr.bf16.mxu0 0
    %5470 = vmatpush2.bf16.msra.mxu0 0
    %5471 = vmatprep.subr.bf16.mxu0 0
    %5472 = vmatpush2.bf16.msra.mxu0 0
    %5473 = vmatprep.subr.bf16.mxu0 0
    %5474 = vmatpush2.bf16.msra.mxu0 0
    %5475 = vmatprep.subr.bf16.mxu0 0
    %5476 = vmatpush2.bf16.msra.mxu0 0
    %5477 = vmatprep.subr.bf16.mxu0 0
    %5478 = vmatpush2.bf16.msra.mxu0 0
    %5479 = vmatprep.subr.bf16.mxu0 0
    %5480 = vmatpush2.bf16.msra.mxu0 0
    %5481 = vmatprep.subr.bf16.mxu0 0
    %5482 = vmatpush2.bf16.msra.mxu0 0
    %5483 = vmatprep.mubr.bf16.mxu0 0
    %5484 = vmatmul.mubr.bf16.gmra.mxu0 %v5246
    %v5485 = vpop.f32.mrf.mxu0
    %v5486 = vadd.f32 %v5394, %v5485
    %v5487 = vpop.f32.mrf.mxu0
    %v5488 = vadd.f32 %v5398, %v5487
    %v5489 = vpop.f32.mrf.mxu0
    %v5490 = vadd.f32 %v5394, %v5489
    %v5491 = vpop.f32.mrf.mxu0
    %v5492 = vadd.f32 %v5398, %v5491
    %5493 = vmatprep.mubr.bf16.mxu0 0
    %5494 = vmatmul.mubr.bf16.gmra.mxu0 %v5249
    %v5495 = vpop.f32.mrf.mxu0
    %v5496 = vadd.f32 %v5394, %v5495
    %v5497 = vpop.f32.mrf.mxu0
    %v5498 = vadd.f32 %v5398, %v5497
    %v5499 = vpop.f32.mrf.mxu0
    %v5500 = vpop.f32.mrf.mxu0
    %5501 = vdwg.mxu0
    %5502 = vmatprep.subr.bf16.mxu0 0
    %5503 = vmatpush1.bf16.msra.mxu0 0
    %5504 = vmatprep.subr.bf16.mxu0 0
    %5505 = vmatpush1.bf16.msra.mxu0 0
    %5506 = vmatprep.subr.bf16.mxu0 0
    %5507 = vmatpush1.bf16.msra.mxu0 0
    %5508 = vmatprep.subr.bf16.mxu0 0
    %5509 = vmatpush1.bf16.msra.mxu0 0
    %5510 = vmatprep.subr.bf16.mxu0 0
    %5511 = vmatpush1.bf16.msra.mxu0 0
    %5512 = vmatprep.subr.bf16.mxu0 0
    %5513 = vmatpush1.bf16.msra.mxu0 0
    %5514 = vmatprep.subr.bf16.mxu0 %v5442
    %5515 = vmatpush1.bf16.msra.mxu0 %v5441
    %5516 = vmatprep.subr.bf16.mxu0 %v5438
    %5517 = vmatpush1.bf16.msra.mxu0 %v5437
    %5518 = vmatprep.subr.bf16.mxu0 0
    %5519 = vmatpush2.bf16.msra.mxu0 0
    %5520 = vmatprep.subr.bf16.mxu0 0
    %5521 = vmatpush2.bf16.msra.mxu0 0
    %5522 = vmatprep.subr.bf16.mxu0 0
    %5523 = vmatpush2.bf16.msra.mxu0 0
    %5524 = vmatprep.subr.bf16.mxu0 0
    %5525 = vmatpush2.bf16.msra.mxu0 0
    %5526 = vmatprep.subr.bf16.mxu0 0
    %5527 = vmatpush2.bf16.msra.mxu0 0
    %5528 = vmatprep.subr.bf16.mxu0 0
    %5529 = vmatpush2.bf16.msra.mxu0 0
    %5530 = vmatprep.subr.bf16.mxu0 0
    %5531 = vmatpush2.bf16.msra.mxu0 0
    %5532 = vmatprep.subr.bf16.mxu0 0
    %5533 = vmatpush2.bf16.msra.mxu0 0
    %5534 = vmatprep.mubr.bf16.mxu0 0
    %5535 = vmatmul.mubr.bf16.gmra.mxu0 %v5246
    %v5536 = vpop.f32.mrf.mxu0
    %v5537 = vadd.f32 %v5402, %v5536
    %v5538 = vpop.f32.mrf.mxu0
    %v5539 = vadd.f32 %v5406, %v5538
    %v5540 = vpop.f32.mrf.mxu0
    %v5541 = vadd.f32 %v5402, %v5540
    %v5542 = vpop.f32.mrf.mxu0
    %v5543 = vadd.f32 %v5406, %v5542
    %5544 = vmatprep.mubr.bf16.mxu0 0
    %5545 = vmatmul.mubr.bf16.gmra.mxu0 %v5249
    %v5546 = vpop.f32.mrf.mxu0
    %v5547 = vadd.f32 %v5402, %v5546
    %v5548 = vpop.f32.mrf.mxu0
    %v5549 = vadd.f32 %v5406, %v5548
    %v5550 = vpop.f32.mrf.mxu0
    %v5551 = vpop.f32.mrf.mxu0
    %5552 = vdwg.mxu0
    %v5553 = vmax.f32 %v5486, 0.0
    %v5554 = vmax.f32 %v5488, 0.0
    %v5555 = vmax.f32 %v5537, 0.0
    %v5556 = vmax.f32 %v5539, 0.0
    %v5557 = vmax.f32 %v5490, 0.0
    %v5558 = vmax.f32 %v5492, 0.0
    %v5559 = vmax.f32 %v5541, 0.0
    %v5560 = vmax.f32 %v5543, 0.0
    %v5561 = vmax.f32 %v5496, 0.0
    %v5562 = vmax.f32 %v5498, 0.0
    %v5563 = vmax.f32 %v5547, 0.0
    %v5564 = vmax.f32 %v5549, 0.0
    %v5565 = vpack.c.bf16 %v5557, %v5553
    %v5566 = vpack.c.bf16 %v5558, %v5554
    %v5567 = vpack.c.bf16 %v5559, %v5555
    %v5568 = vpack.c.bf16 %v5560, %v5556
    %v5569 = vpack.c.bf16 %v5561, %v5561
    %v5570 = vpack.c.bf16 %v5562, %v5562
    %v5571 = vpack.c.bf16 %v5563, %v5563
    %v5572 = vpack.c.bf16 %v5564, %v5564
    %v5573 = vld [vmem:[%s2141 + $0x10] sm:$0xff]
    %v5574 = vld [vmem:[%s2141 + $0x18] sm:$0xff]
    %v5575 = vld [vmem:[%s2141 + $0x50] sm:$0xff]
    %v5576 = vld [vmem:[%s2141 + $0x58] sm:$0xff]
    %v5577 = vld [vmem:[%s2141 + $0x90] sm:$0xff]
    %v5578 = vld [vmem:[%s2141 + $0x98] sm:$0xff]
    %v5579 = vld [vmem:[%s2141 + $0xd0] sm:$0xff]
    %v5580 = vld [vmem:[%s2141 + $0xd8] sm:$0xff]
    %v5589 = vunpack.c.l.b16 %v5573
    %v5590 = vunpack.c.h.b16 %v5573
    %v5591 = vunpack.c.l.b16 %v5574
    %v5592 = vunpack.c.h.b16 %v5574
    %v5593 = vunpack.c.l.b16 %v5575
    %v5594 = vunpack.c.h.b16 %v5575
    %v5595 = vunpack.c.l.b16 %v5576
    %v5596 = vunpack.c.h.b16 %v5576
    %v5597 = vunpack.c.l.b16 %v5577
    %v5598 = vunpack.c.h.b16 %v5577
    %v5599 = vunpack.c.l.b16 %v5578
    %v5600 = vunpack.c.h.b16 %v5578
    %v5601 = vunpack.c.l.b16 %v5579
    %v5602 = vunpack.c.h.b16 %v5579
    %v5603 = vunpack.c.l.b16 %v5580
    %v5604 = vunpack.c.h.b16 %v5580
    %v5605 = vpack.c.b16 %v5593, %v5589
    %v5606 = vpack.c.b16 %v5594, %v5590
    %v5607 = vpack.c.b16 %v5595, %v5591
    %v5608 = vpack.c.b16 %v5596, %v5592
    %v5609 = vpack.c.b16 %v5601, %v5597
    %v5610 = vpack.c.b16 %v5602, %v5598
    %v5611 = vpack.c.b16 %v5603, %v5599
    %v5612 = vpack.c.b16 %v5604, %v5600
    %5621 = vmatprep.subr.bf16.mxu0 0
    %5622 = vmatpush1.bf16.xpose.msra.mxu0 0
    %5623 = vmatprep.subr.bf16.mxu0 0
    %5624 = vmatpush1.bf16.xpose.msra.mxu0 0
    %5625 = vmatprep.subr.bf16.mxu0 0
    %5626 = vmatpush1.bf16.xpose.msra.mxu0 0
    %5627 = vmatprep.subr.bf16.mxu0 0
    %5628 = vmatpush1.bf16.xpose.msra.mxu0 0
    %5629 = vmatprep.subr.bf16.mxu0 0
    %5630 = vmatpush1.bf16.xpose.msra.mxu0 0
    %5631 = vmatprep.subr.bf16.mxu0 0
    %5632 = vmatpush1.bf16.xpose.msra.mxu0 0
    %5633 = vmatprep.subr.bf16.mxu0 %v5610
    %5634 = vmatpush1.bf16.xpose.msra.mxu0 %v5609
    %5635 = vmatprep.subr.bf16.mxu0 %v5606
    %5636 = vmatpush1.bf16.xpose.msra.mxu0 %v5605
    %5637 = vmatprep.subr.bf16.mxu0 0
    %5638 = vmatpush2.bf16.xpose.msra.mxu0 0
    %5639 = vmatprep.subr.bf16.mxu0 0
    %5640 = vmatpush2.bf16.xpose.msra.mxu0 0
    %5641 = vmatprep.subr.bf16.mxu0 0
    %5642 = vmatpush2.bf16.xpose.msra.mxu0 0
    %5643 = vmatprep.subr.bf16.mxu0 0
    %5644 = vmatpush2.bf16.xpose.msra.mxu0 0
    %5645 = vmatprep.subr.bf16.mxu0 0
    %5646 = vmatpush2.bf16.xpose.msra.mxu0 0
    %5647 = vmatprep.subr.bf16.mxu0 0
    %5648 = vmatpush2.bf16.xpose.msra.mxu0 0
    %5649 = vmatprep.subr.bf16.mxu0 0
    %5650 = vmatpush2.bf16.xpose.msra.mxu0 0
    %5651 = vmatprep.subr.bf16.mxu0 0
    %5652 = vmatpush2.bf16.xpose.msra.mxu0 0
    %5653 = vmatprep.mubr.bf16.mxu0 %v5566
    %5654 = vmatmul.mubr.bf16.gmra.mxu0 %v5565
    %v5655 = vpop.f32.mrf.mxu0
    %v5656 = vadd.f32 0.0, %v5655
    %v5657 = vpop.f32.mrf.mxu0
    %v5658 = vpop.f32.mrf.mxu0
    %v5659 = vadd.f32 0.0, %v5658
    %v5660 = vpop.f32.mrf.mxu0
    %5661 = vmatprep.mubr.bf16.mxu0 %v5570
    %5662 = vmatmul.mubr.bf16.gmra.mxu0 %v5569
    %v5663 = vpop.f32.mrf.mxu0
    %v5664 = vadd.f32 0.0, %v5663
    %v5665 = vpop.f32.mrf.mxu0
    %v5666 = vpop.f32.mrf.mxu0
    %v5667 = vpop.f32.mrf.mxu0
    %5668 = vdwg.mxu0
    %5669 = vmatprep.subr.bf16.mxu0 0
    %5670 = vmatpush1.bf16.xpose.msra.mxu0 0
    %5671 = vmatprep.subr.bf16.mxu0 0
    %5672 = vmatpush1.bf16.xpose.msra.mxu0 0
    %5673 = vmatprep.subr.bf16.mxu0 0
    %5674 = vmatpush1.bf16.xpose.msra.mxu0 0
    %5675 = vmatprep.subr.bf16.mxu0 0
    %5676 = vmatpush1.bf16.xpose.msra.mxu0 0
    %5677 = vmatprep.subr.bf16.mxu0 0
    %5678 = vmatpush1.bf16.xpose.msra.mxu0 0
    %5679 = vmatprep.subr.bf16.mxu0 0
    %5680 = vmatpush1.bf16.xpose.msra.mxu0 0
    %5681 = vmatprep.subr.bf16.mxu0 %v5612
    %5682 = vmatpush1.bf16.xpose.msra.mxu0 %v5611
    %5683 = vmatprep.subr.bf16.mxu0 %v5608
    %5684 = vmatpush1.bf16.xpose.msra.mxu0 %v5607
    %5685 = vmatprep.subr.bf16.mxu0 0
    %5686 = vmatpush2.bf16.xpose.msra.mxu0 0
    %5687 = vmatprep.subr.bf16.mxu0 0
    %5688 = vmatpush2.bf16.xpose.msra.mxu0 0
    %5689 = vmatprep.subr.bf16.mxu0 0
    %5690 = vmatpush2.bf16.xpose.msra.mxu0 0
    %5691 = vmatprep.subr.bf16.mxu0 0
    %5692 = vmatpush2.bf16.xpose.msra.mxu0 0
    %5693 = vmatprep.subr.bf16.mxu0 0
    %5694 = vmatpush2.bf16.xpose.msra.mxu0 0
    %5695 = vmatprep.subr.bf16.mxu0 0
    %5696 = vmatpush2.bf16.xpose.msra.mxu0 0
    %5697 = vmatprep.subr.bf16.mxu0 0
    %5698 = vmatpush2.bf16.xpose.msra.mxu0 0
    %5699 = vmatprep.subr.bf16.mxu0 0
    %5700 = vmatpush2.bf16.xpose.msra.mxu0 0
    %5701 = vmatprep.mubr.bf16.mxu0 %v5568
    %5702 = vmatmul.mubr.bf16.gmra.mxu0 %v5567
    %v5703 = vpop.f32.mrf.mxu0
    %v5704 = vadd.f32 %v5656, %v5703
    %v5705 = vpop.f32.mrf.mxu0
    %v5706 = vpop.f32.mrf.mxu0
    %v5707 = vadd.f32 %v5659, %v5706
    %v5708 = vpop.f32.mrf.mxu0
    %5709 = vmatprep.mubr.bf16.mxu0 %v5572
    %5710 = vmatmul.mubr.bf16.gmra.mxu0 %v5571
    %v5711 = vpop.f32.mrf.mxu0
    %v5712 = vadd.f32 %v5664, %v5711
    %v5713 = vpop.f32.mrf.mxu0
    %v5714 = vpop.f32.mrf.mxu0
    %v5715 = vpop.f32.mrf.mxu0
    %5716 = vdwg.mxu0
    %v5725 = vunpack.c.l.b16 %v5373
    %v5726 = vunpack.c.h.b16 %v5373
    %v5727 = vunpack.c.l.b16 %v5374
    %v5728 = vunpack.c.h.b16 %v5374
    %v5729 = vunpack.c.l.b16 %v5375
    %v5730 = vunpack.c.h.b16 %v5375
    %v5731 = vunpack.c.l.b16 %v5376
    %v5732 = vunpack.c.h.b16 %v5376
    %v5733 = vunpack.c.l.b16 %v5377
    %v5734 = vunpack.c.h.b16 %v5377
    %v5735 = vunpack.c.l.b16 %v5378
    %v5736 = vunpack.c.h.b16 %v5378
    %v5737 = vunpack.c.l.b16 %v5379
    %v5738 = vunpack.c.h.b16 %v5379
    %v5739 = vunpack.c.l.b16 %v5380
    %v5740 = vunpack.c.h.b16 %v5380
    %v5741 = vpack.c.b16 %v5729, %v5725
    %v5742 = vpack.c.b16 %v5730, %v5726
    %v5743 = vpack.c.b16 %v5731, %v5727
    %v5744 = vpack.c.b16 %v5732, %v5728
    %v5745 = vpack.c.b16 %v5737, %v5733
    %v5746 = vpack.c.b16 %v5738, %v5734
    %v5747 = vpack.c.b16 %v5739, %v5735
    %v5748 = vpack.c.b16 %v5740, %v5736
    %5757 = vmatprep.subr.bf16.mxu0 0
    %5758 = vmatpush1.bf16.xpose.msra.mxu0 0
    %5759 = vmatprep.subr.bf16.mxu0 0
    %5760 = vmatpush1.bf16.xpose.msra.mxu0 0
    %5761 = vmatprep.subr.bf16.mxu0 0
    %5762 = vmatpush1.bf16.xpose.msra.mxu0 0
    %5763 = vmatprep.subr.bf16.mxu0 0
    %5764 = vmatpush1.bf16.xpose.msra.mxu0 0
    %5765 = vmatprep.subr.bf16.mxu0 0
    %5766 = vmatpush1.bf16.xpose.msra.mxu0 0
    %5767 = vmatprep.subr.bf16.mxu0 0
    %5768 = vmatpush1.bf16.xpose.msra.mxu0 0
    %5769 = vmatprep.subr.bf16.mxu0 %v5746
    %5770 = vmatpush1.bf16.xpose.msra.mxu0 %v5745
    %5771 = vmatprep.subr.bf16.mxu0 %v5742
    %5772 = vmatpush1.bf16.xpose.msra.mxu0 %v5741
    %5773 = vmatprep.subr.bf16.mxu0 0
    %5774 = vmatpush2.bf16.xpose.msra.mxu0 0
    %5775 = vmatprep.subr.bf16.mxu0 0
    %5776 = vmatpush2.bf16.xpose.msra.mxu0 0
    %5777 = vmatprep.subr.bf16.mxu0 0
    %5778 = vmatpush2.bf16.xpose.msra.mxu0 0
    %5779 = vmatprep.subr.bf16.mxu0 0
    %5780 = vmatpush2.bf16.xpose.msra.mxu0 0
    %5781 = vmatprep.subr.bf16.mxu0 0
    %5782 = vmatpush2.bf16.xpose.msra.mxu0 0
    %5783 = vmatprep.subr.bf16.mxu0 0
    %5784 = vmatpush2.bf16.xpose.msra.mxu0 0
    %5785 = vmatprep.subr.bf16.mxu0 0
    %5786 = vmatpush2.bf16.xpose.msra.mxu0 0
    %5787 = vmatprep.subr.bf16.mxu0 0
    %5788 = vmatpush2.bf16.xpose.msra.mxu0 0
    %5789 = vmatprep.mubr.bf16.mxu0 %v5366
    %5790 = vmatmul.mubr.bf16.gmra.mxu0 %v5365
    %v5791 = vpop.f32.mrf.mxu0
    %v5792 = vadd.f32 %v5704, %v5791
    %v5793 = vpop.f32.mrf.mxu0
    %v5794 = vpop.f32.mrf.mxu0
    %v5795 = vadd.f32 %v5707, %v5794
    %v5796 = vpop.f32.mrf.mxu0
    %5797 = vmatprep.mubr.bf16.mxu0 %v5370
    %5798 = vmatmul.mubr.bf16.gmra.mxu0 %v5369
    %v5799 = vpop.f32.mrf.mxu0
    %v5800 = vadd.f32 %v5712, %v5799
    %v5801 = vpop.f32.mrf.mxu0
    %v5802 = vpop.f32.mrf.mxu0
    %v5803 = vpop.f32.mrf.mxu0
    %5804 = vdwg.mxu0
    %5805 = vmatprep.subr.bf16.mxu0 0
    %5806 = vmatpush1.bf16.xpose.msra.mxu0 0
    %5807 = vmatprep.subr.bf16.mxu0 0
    %5808 = vmatpush1.bf16.xpose.msra.mxu0 0
    %5809 = vmatprep.subr.bf16.mxu0 0
    %5810 = vmatpush1.bf16.xpose.msra.mxu0 0
    %5811 = vmatprep.subr.bf16.mxu0 0
    %5812 = vmatpush1.bf16.xpose.msra.mxu0 0
    %5813 = vmatprep.subr.bf16.mxu0 0
    %5814 = vmatpush1.bf16.xpose.msra.mxu0 0
    %5815 = vmatprep.subr.bf16.mxu0 0
    %5816 = vmatpush1.bf16.xpose.msra.mxu0 0
    %5817 = vmatprep.subr.bf16.mxu0 %v5748
    %5818 = vmatpush1.bf16.xpose.msra.mxu0 %v5747
    %5819 = vmatprep.subr.bf16.mxu0 %v5744
    %5820 = vmatpush1.bf16.xpose.msra.mxu0 %v5743
    %5821 = vmatprep.subr.bf16.mxu0 0
    %5822 = vmatpush2.bf16.xpose.msra.mxu0 0
    %5823 = vmatprep.subr.bf16.mxu0 0
    %5824 = vmatpush2.bf16.xpose.msra.mxu0 0
    %5825 = vmatprep.subr.bf16.mxu0 0
    %5826 = vmatpush2.bf16.xpose.msra.mxu0 0
    %5827 = vmatprep.subr.bf16.mxu0 0
    %5828 = vmatpush2.bf16.xpose.msra.mxu0 0
    %5829 = vmatprep.subr.bf16.mxu0 0
    %5830 = vmatpush2.bf16.xpose.msra.mxu0 0
    %5831 = vmatprep.subr.bf16.mxu0 0
    %5832 = vmatpush2.bf16.xpose.msra.mxu0 0
    %5833 = vmatprep.subr.bf16.mxu0 0
    %5834 = vmatpush2.bf16.xpose.msra.mxu0 0
    %5835 = vmatprep.subr.bf16.mxu0 0
    %5836 = vmatpush2.bf16.xpose.msra.mxu0 0
    %5837 = vmatprep.mubr.bf16.mxu0 %v5368
    %5838 = vmatmul.mubr.bf16.gmra.mxu0 %v5367
    %v5839 = vpop.f32.mrf.mxu0
    %v5840 = vadd.f32 %v5792, %v5839
    %v5841 = vpop.f32.mrf.mxu0
    %v5842 = vpop.f32.mrf.mxu0
    %v5843 = vadd.f32 %v5795, %v5842
    %v5844 = vpop.f32.mrf.mxu0
    %5845 = vmatprep.mubr.bf16.mxu0 %v5372
    %5846 = vmatmul.mubr.bf16.gmra.mxu0 %v5371
    %v5847 = vpop.f32.mrf.mxu0
    %v5848 = vadd.f32 %v5800, %v5847
    %v5849 = vpop.f32.mrf.mxu0
    %v5850 = vpop.f32.mrf.mxu0
    %v5851 = vpop.f32.mrf.mxu0
    %5852 = vdwg.mxu0
    %v5853 = vld [vmem:[%s2127 + $0x20] sm:$0xff]
    %v5854 = vld [vmem:[%s2127 + $0x28] sm:$0xff]
    %v5855 = vld [vmem:[%s2127 + $0x60] sm:$0xff]
    %v5856 = vld [vmem:[%s2127 + $0x68] sm:$0xff]
    %v5857 = vld [vmem:[%s2127 + $0xa0] sm:$0xff]
    %v5858 = vld [vmem:[%s2127 + $0xa8] sm:$0xff]
    %v5859 = vld [vmem:[%s2127 + $0xe0] sm:$0xff]
    %v5860 = vld [vmem:[%s2127 + $0xe8] sm:$0xff]
    %v5861 = vld [vmem:[%s5182 + $0x8] sm:$0xf]
    %v5863 = vlaneseq
    %v5864 = vshrl.u32 %v5863, 7
    %v5865 = vsub.s32 0, %v5864
    %v5866 = vrot.slane %v5861, %v5865
    %v5867 = vlaneseq
    %v5868 = vshrl.u32 %v5867, 7
    %v5869 = vsub.s32 1, %v5868
    %v5870 = vrot.slane %v5861, %v5869
    %v5871 = vlaneseq
    %v5872 = vshrl.u32 %v5871, 7
    %v5873 = vsub.s32 2, %v5872
    %v5874 = vrot.slane %v5861, %v5873
    %v5875 = vlaneseq
    %v5876 = vshrl.u32 %v5875, 7
    %v5877 = vsub.s32 3, %v5876
    %v5878 = vrot.slane %v5861, %v5877
    %v5891 = vunpack.c.l.b16 %v5853
    %v5892 = vunpack.c.h.b16 %v5853
    %v5893 = vunpack.c.l.b16 %v5854
    %v5894 = vunpack.c.h.b16 %v5854
    %v5895 = vunpack.c.l.b16 %v5855
    %v5896 = vunpack.c.h.b16 %v5855
    %v5897 = vunpack.c.l.b16 %v5856
    %v5898 = vunpack.c.h.b16 %v5856
    %v5899 = vunpack.c.l.b16 %v5857
    %v5900 = vunpack.c.h.b16 %v5857
    %v5901 = vunpack.c.l.b16 %v5858
    %v5902 = vunpack.c.h.b16 %v5858
    %v5903 = vunpack.c.l.b16 %v5859
    %v5904 = vunpack.c.h.b16 %v5859
    %v5905 = vunpack.c.l.b16 %v5860
    %v5906 = vunpack.c.h.b16 %v5860
    %v5907 = vpack.c.b16 %v5895, %v5891
    %v5908 = vpack.c.b16 %v5896, %v5892
    %v5909 = vpack.c.b16 %v5897, %v5893
    %v5910 = vpack.c.b16 %v5898, %v5894
    %v5911 = vpack.c.b16 %v5903, %v5899
    %v5912 = vpack.c.b16 %v5904, %v5900
    %v5913 = vpack.c.b16 %v5905, %v5901
    %v5914 = vpack.c.b16 %v5906, %v5902
    %5923 = vmatprep.subr.bf16.mxu0 0
    %5924 = vmatpush1.bf16.msra.mxu0 0
    %5925 = vmatprep.subr.bf16.mxu0 0
    %5926 = vmatpush1.bf16.msra.mxu0 0
    %5927 = vmatprep.subr.bf16.mxu0 0
    %5928 = vmatpush1.bf16.msra.mxu0 0
    %5929 = vmatprep.subr.bf16.mxu0 0
    %5930 = vmatpush1.bf16.msra.mxu0 0
    %5931 = vmatprep.subr.bf16.mxu0 0
    %5932 = vmatpush1.bf16.msra.mxu0 0
    %5933 = vmatprep.subr.bf16.mxu0 0
    %5934 = vmatpush1.bf16.msra.mxu0 0
    %5935 = vmatprep.subr.bf16.mxu0 %v5912
    %5936 = vmatpush1.bf16.msra.mxu0 %v5911
    %5937 = vmatprep.subr.bf16.mxu0 %v5908
    %5938 = vmatpush1.bf16.msra.mxu0 %v5907
    %5939 = vmatprep.subr.bf16.mxu0 0
    %5940 = vmatpush2.bf16.msra.mxu0 0
    %5941 = vmatprep.subr.bf16.mxu0 0
    %5942 = vmatpush2.bf16.msra.mxu0 0
    %5943 = vmatprep.subr.bf16.mxu0 0
    %5944 = vmatpush2.bf16.msra.mxu0 0
    %5945 = vmatprep.subr.bf16.mxu0 0
    %5946 = vmatpush2.bf16.msra.mxu0 0
    %5947 = vmatprep.subr.bf16.mxu0 0
    %5948 = vmatpush2.bf16.msra.mxu0 0
    %5949 = vmatprep.subr.bf16.mxu0 0
    %5950 = vmatpush2.bf16.msra.mxu0 0
    %5951 = vmatprep.subr.bf16.mxu0 0
    %5952 = vmatpush2.bf16.msra.mxu0 0
    %5953 = vmatprep.subr.bf16.mxu0 0
    %5954 = vmatpush2.bf16.msra.mxu0 0
    %5955 = vmatprep.mubr.bf16.mxu0 0
    %5956 = vmatmul.mubr.bf16.gmra.mxu0 %v5246
    %v5957 = vpop.f32.mrf.mxu0
    %v5958 = vadd.f32 %v5866, %v5957
    %v5959 = vpop.f32.mrf.mxu0
    %v5960 = vadd.f32 %v5870, %v5959
    %v5961 = vpop.f32.mrf.mxu0
    %v5962 = vadd.f32 %v5866, %v5961
    %v5963 = vpop.f32.mrf.mxu0
    %v5964 = vadd.f32 %v5870, %v5963
    %5965 = vmatprep.mubr.bf16.mxu0 0
    %5966 = vmatmul.mubr.bf16.gmra.mxu0 %v5249
    %v5967 = vpop.f32.mrf.mxu0
    %v5968 = vadd.f32 %v5866, %v5967
    %v5969 = vpop.f32.mrf.mxu0
    %v5970 = vadd.f32 %v5870, %v5969
    %v5971 = vpop.f32.mrf.mxu0
    %v5972 = vpop.f32.mrf.mxu0
    %5973 = vdwg.mxu0
    %5974 = vmatprep.subr.bf16.mxu0 0
    %5975 = vmatpush1.bf16.msra.mxu0 0
    %5976 = vmatprep.subr.bf16.mxu0 0
    %5977 = vmatpush1.bf16.msra.mxu0 0
    %5978 = vmatprep.subr.bf16.mxu0 0
    %5979 = vmatpush1.bf16.msra.mxu0 0
    %5980 = vmatprep.subr.bf16.mxu0 0
    %5981 = vmatpush1.bf16.msra.mxu0 0
    %5982 = vmatprep.subr.bf16.mxu0 0
    %5983 = vmatpush1.bf16.msra.mxu0 0
    %5984 = vmatprep.subr.bf16.mxu0 0
    %5985 = vmatpush1.bf16.msra.mxu0 0
    %5986 = vmatprep.subr.bf16.mxu0 %v5914
    %5987 = vmatpush1.bf16.msra.mxu0 %v5913
    %5988 = vmatprep.subr.bf16.mxu0 %v5910
    %5989 = vmatpush1.bf16.msra.mxu0 %v5909
    %5990 = vmatprep.subr.bf16.mxu0 0
    %5991 = vmatpush2.bf16.msra.mxu0 0
    %5992 = vmatprep.subr.bf16.mxu0 0
    %5993 = vmatpush2.bf16.msra.mxu0 0
    %5994 = vmatprep.subr.bf16.mxu0 0
    %5995 = vmatpush2.bf16.msra.mxu0 0
    %5996 = vmatprep.subr.bf16.mxu0 0
    %5997 = vmatpush2.bf16.msra.mxu0 0
    %5998 = vmatprep.subr.bf16.mxu0 0
    %5999 = vmatpush2.bf16.msra.mxu0 0
    %6000 = vmatprep.subr.bf16.mxu0 0
    %6001 = vmatpush2.bf16.msra.mxu0 0
    %6002 = vmatprep.subr.bf16.mxu0 0
    %6003 = vmatpush2.bf16.msra.mxu0 0
    %6004 = vmatprep.subr.bf16.mxu0 0
    %6005 = vmatpush2.bf16.msra.mxu0 0
    %6006 = vmatprep.mubr.bf16.mxu0 0
    %6007 = vmatmul.mubr.bf16.gmra.mxu0 %v5246
    %v6008 = vpop.f32.mrf.mxu0
    %v6009 = vadd.f32 %v5874, %v6008
    %v6010 = vpop.f32.mrf.mxu0
    %v6011 = vadd.f32 %v5878, %v6010
    %v6012 = vpop.f32.mrf.mxu0
    %v6013 = vadd.f32 %v5874, %v6012
    %v6014 = vpop.f32.mrf.mxu0
    %v6015 = vadd.f32 %v5878, %v6014
    %6016 = vmatprep.mubr.bf16.mxu0 0
    %6017 = vmatmul.mubr.bf16.gmra.mxu0 %v5249
    %v6018 = vpop.f32.mrf.mxu0
    %v6019 = vadd.f32 %v5874, %v6018
    %v6020 = vpop.f32.mrf.mxu0
    %v6021 = vadd.f32 %v5878, %v6020
    %v6022 = vpop.f32.mrf.mxu0
    %v6023 = vpop.f32.mrf.mxu0
    %6024 = vdwg.mxu0
    %v6025 = vmax.f32 %v5958, 0.0
    %v6026 = vmax.f32 %v5960, 0.0
    %v6027 = vmax.f32 %v6009, 0.0
    %v6028 = vmax.f32 %v6011, 0.0
    %v6029 = vmax.f32 %v5962, 0.0
    %v6030 = vmax.f32 %v5964, 0.0
    %v6031 = vmax.f32 %v6013, 0.0
    %v6032 = vmax.f32 %v6015, 0.0
    %v6033 = vmax.f32 %v5968, 0.0
    %v6034 = vmax.f32 %v5970, 0.0
    %v6035 = vmax.f32 %v6019, 0.0
    %v6036 = vmax.f32 %v6021, 0.0
    %v6037 = vpack.c.bf16 %v6029, %v6025
    %v6038 = vpack.c.bf16 %v6030, %v6026
    %v6039 = vpack.c.bf16 %v6031, %v6027
    %v6040 = vpack.c.bf16 %v6032, %v6028
    %v6041 = vpack.c.bf16 %v6033, %v6033
    %v6042 = vpack.c.bf16 %v6034, %v6034
    %v6043 = vpack.c.bf16 %v6035, %v6035
    %v6044 = vpack.c.bf16 %v6036, %v6036
    %v6045 = vld [vmem:[%s2141 + $0x20] sm:$0xff]
    %v6046 = vld [vmem:[%s2141 + $0x28] sm:$0xff]
    %v6047 = vld [vmem:[%s2141 + $0x60] sm:$0xff]
    %v6048 = vld [vmem:[%s2141 + $0x68] sm:$0xff]
    %v6049 = vld [vmem:[%s2141 + $0xa0] sm:$0xff]
    %v6050 = vld [vmem:[%s2141 + $0xa8] sm:$0xff]
    %v6051 = vld [vmem:[%s2141 + $0xe0] sm:$0xff]
    %v6052 = vld [vmem:[%s2141 + $0xe8] sm:$0xff]
    %v6061 = vunpack.c.l.b16 %v6045
    %v6062 = vunpack.c.h.b16 %v6045
    %v6063 = vunpack.c.l.b16 %v6046
    %v6064 = vunpack.c.h.b16 %v6046
    %v6065 = vunpack.c.l.b16 %v6047
    %v6066 = vunpack.c.h.b16 %v6047
    %v6067 = vunpack.c.l.b16 %v6048
    %v6068 = vunpack.c.h.b16 %v6048
    %v6069 = vunpack.c.l.b16 %v6049
    %v6070 = vunpack.c.h.b16 %v6049
    %v6071 = vunpack.c.l.b16 %v6050
    %v6072 = vunpack.c.h.b16 %v6050
    %v6073 = vunpack.c.l.b16 %v6051
    %v6074 = vunpack.c.h.b16 %v6051
    %v6075 = vunpack.c.l.b16 %v6052
    %v6076 = vunpack.c.h.b16 %v6052
    %v6077 = vpack.c.b16 %v6065, %v6061
    %v6078 = vpack.c.b16 %v6066, %v6062
    %v6079 = vpack.c.b16 %v6067, %v6063
    %v6080 = vpack.c.b16 %v6068, %v6064
    %v6081 = vpack.c.b16 %v6073, %v6069
    %v6082 = vpack.c.b16 %v6074, %v6070
    %v6083 = vpack.c.b16 %v6075, %v6071
    %v6084 = vpack.c.b16 %v6076, %v6072
    %6093 = vmatprep.subr.bf16.mxu0 0
    %6094 = vmatpush1.bf16.xpose.msra.mxu0 0
    %6095 = vmatprep.subr.bf16.mxu0 0
    %6096 = vmatpush1.bf16.xpose.msra.mxu0 0
    %6097 = vmatprep.subr.bf16.mxu0 0
    %6098 = vmatpush1.bf16.xpose.msra.mxu0 0
    %6099 = vmatprep.subr.bf16.mxu0 0
    %6100 = vmatpush1.bf16.xpose.msra.mxu0 0
    %6101 = vmatprep.subr.bf16.mxu0 0
    %6102 = vmatpush1.bf16.xpose.msra.mxu0 0
    %6103 = vmatprep.subr.bf16.mxu0 0
    %6104 = vmatpush1.bf16.xpose.msra.mxu0 0
    %6105 = vmatprep.subr.bf16.mxu0 %v6082
    %6106 = vmatpush1.bf16.xpose.msra.mxu0 %v6081
    %6107 = vmatprep.subr.bf16.mxu0 %v6078
    %6108 = vmatpush1.bf16.xpose.msra.mxu0 %v6077
    %6109 = vmatprep.subr.bf16.mxu0 0
    %6110 = vmatpush2.bf16.xpose.msra.mxu0 0
    %6111 = vmatprep.subr.bf16.mxu0 0
    %6112 = vmatpush2.bf16.xpose.msra.mxu0 0
    %6113 = vmatprep.subr.bf16.mxu0 0
    %6114 = vmatpush2.bf16.xpose.msra.mxu0 0
    %6115 = vmatprep.subr.bf16.mxu0 0
    %6116 = vmatpush2.bf16.xpose.msra.mxu0 0
    %6117 = vmatprep.subr.bf16.mxu0 0
    %6118 = vmatpush2.bf16.xpose.msra.mxu0 0
    %6119 = vmatprep.subr.bf16.mxu0 0
    %6120 = vmatpush2.bf16.xpose.msra.mxu0 0
    %6121 = vmatprep.subr.bf16.mxu0 0
    %6122 = vmatpush2.bf16.xpose.msra.mxu0 0
    %6123 = vmatprep.subr.bf16.mxu0 0
    %6124 = vmatpush2.bf16.xpose.msra.mxu0 0
    %6125 = vmatprep.mubr.bf16.mxu0 %v6038
    %6126 = vmatmul.mubr.bf16.gmra.mxu0 %v6037
    %v6127 = vpop.f32.mrf.mxu0
    %v6128 = vadd.f32 0.0, %v6127
    %v6129 = vpop.f32.mrf.mxu0
    %v6130 = vpop.f32.mrf.mxu0
    %v6131 = vadd.f32 0.0, %v6130
    %v6132 = vpop.f32.mrf.mxu0
    %6133 = vmatprep.mubr.bf16.mxu0 %v6042
    %6134 = vmatmul.mubr.bf16.gmra.mxu0 %v6041
    %v6135 = vpop.f32.mrf.mxu0
    %v6136 = vadd.f32 0.0, %v6135
    %v6137 = vpop.f32.mrf.mxu0
    %v6138 = vpop.f32.mrf.mxu0
    %v6139 = vpop.f32.mrf.mxu0
    %6140 = vdwg.mxu0
    %6141 = vmatprep.subr.bf16.mxu0 0
    %6142 = vmatpush1.bf16.xpose.msra.mxu0 0
    %6143 = vmatprep.subr.bf16.mxu0 0
    %6144 = vmatpush1.bf16.xpose.msra.mxu0 0
    %6145 = vmatprep.subr.bf16.mxu0 0
    %6146 = vmatpush1.bf16.xpose.msra.mxu0 0
    %6147 = vmatprep.subr.bf16.mxu0 0
    %6148 = vmatpush1.bf16.xpose.msra.mxu0 0
    %6149 = vmatprep.subr.bf16.mxu0 0
    %6150 = vmatpush1.bf16.xpose.msra.mxu0 0
    %6151 = vmatprep.subr.bf16.mxu0 0
    %6152 = vmatpush1.bf16.xpose.msra.mxu0 0
    %6153 = vmatprep.subr.bf16.mxu0 %v6084
    %6154 = vmatpush1.bf16.xpose.msra.mxu0 %v6083
    %6155 = vmatprep.subr.bf16.mxu0 %v6080
    %6156 = vmatpush1.bf16.xpose.msra.mxu0 %v6079
    %6157 = vmatprep.subr.bf16.mxu0 0
    %6158 = vmatpush2.bf16.xpose.msra.mxu0 0
    %6159 = vmatprep.subr.bf16.mxu0 0
    %6160 = vmatpush2.bf16.xpose.msra.mxu0 0
    %6161 = vmatprep.subr.bf16.mxu0 0
    %6162 = vmatpush2.bf16.xpose.msra.mxu0 0
    %6163 = vmatprep.subr.bf16.mxu0 0
    %6164 = vmatpush2.bf16.xpose.msra.mxu0 0
    %6165 = vmatprep.subr.bf16.mxu0 0
    %6166 = vmatpush2.bf16.xpose.msra.mxu0 0
    %6167 = vmatprep.subr.bf16.mxu0 0
    %6168 = vmatpush2.bf16.xpose.msra.mxu0 0
    %6169 = vmatprep.subr.bf16.mxu0 0
    %6170 = vmatpush2.bf16.xpose.msra.mxu0 0
    %6171 = vmatprep.subr.bf16.mxu0 0
    %6172 = vmatpush2.bf16.xpose.msra.mxu0 0
    %6173 = vmatprep.mubr.bf16.mxu0 %v6040
    %6174 = vmatmul.mubr.bf16.gmra.mxu0 %v6039
    %v6175 = vpop.f32.mrf.mxu0
    %v6176 = vadd.f32 %v6128, %v6175
    %v6177 = vpop.f32.mrf.mxu0
    %v6178 = vpop.f32.mrf.mxu0
    %v6179 = vadd.f32 %v6131, %v6178
    %v6180 = vpop.f32.mrf.mxu0
    %6181 = vmatprep.mubr.bf16.mxu0 %v6044
    %6182 = vmatmul.mubr.bf16.gmra.mxu0 %v6043
    %v6183 = vpop.f32.mrf.mxu0
    %v6184 = vadd.f32 %v6136, %v6183
    %v6185 = vpop.f32.mrf.mxu0
    %v6186 = vpop.f32.mrf.mxu0
    %v6187 = vpop.f32.mrf.mxu0
    %6188 = vdwg.mxu0
    %v6189 = vadd.f32 %v5840, %v6176
    %v6190 = vadd.f32 %v5843, %v6179
    %v6191 = vadd.f32 %v5848, %v6184
    %v6192 = vld [vmem:[%s2127 + $0x30] sm:$0xff]
    %v6193 = vld [vmem:[%s2127 + $0x38] sm:$0xff]
    %v6194 = vld [vmem:[%s2127 + $0x70] sm:$0xff]
    %v6195 = vld [vmem:[%s2127 + $0x78] sm:$0xff]
    %v6196 = vld [vmem:[%s2127 + $0xb0] sm:$0xff]
    %v6197 = vld [vmem:[%s2127 + $0xb8] sm:$0xff]
    %v6198 = vld [vmem:[%s2127 + $0xf0] sm:$0xff]
    %v6199 = vld [vmem:[%s2127 + $0xf8] sm:$0xff]
    %v6200 = vld [vmem:[%s5182 + $0xc] sm:$0xf]
    %v6202 = vlaneseq
    %v6203 = vshrl.u32 %v6202, 7
    %v6204 = vsub.s32 0, %v6203
    %v6205 = vrot.slane %v6200, %v6204
    %v6206 = vlaneseq
    %v6207 = vshrl.u32 %v6206, 7
    %v6208 = vsub.s32 1, %v6207
    %v6209 = vrot.slane %v6200, %v6208
    %v6210 = vlaneseq
    %v6211 = vshrl.u32 %v6210, 7
    %v6212 = vsub.s32 2, %v6211
    %v6213 = vrot.slane %v6200, %v6212
    %v6214 = vlaneseq
    %v6215 = vshrl.u32 %v6214, 7
    %v6216 = vsub.s32 3, %v6215
    %v6217 = vrot.slane %v6200, %v6216
    %v6230 = vunpack.c.l.b16 %v6192
    %v6231 = vunpack.c.h.b16 %v6192
    %v6232 = vunpack.c.l.b16 %v6193
    %v6233 = vunpack.c.h.b16 %v6193
    %v6234 = vunpack.c.l.b16 %v6194
    %v6235 = vunpack.c.h.b16 %v6194
    %v6236 = vunpack.c.l.b16 %v6195
    %v6237 = vunpack.c.h.b16 %v6195
    %v6238 = vunpack.c.l.b16 %v6196
    %v6239 = vunpack.c.h.b16 %v6196
    %v6240 = vunpack.c.l.b16 %v6197
    %v6241 = vunpack.c.h.b16 %v6197
    %v6242 = vunpack.c.l.b16 %v6198
    %v6243 = vunpack.c.h.b16 %v6198
    %v6244 = vunpack.c.l.b16 %v6199
    %v6245 = vunpack.c.h.b16 %v6199
    %v6246 = vpack.c.b16 %v6234, %v6230
    %v6247 = vpack.c.b16 %v6235, %v6231
    %v6248 = vpack.c.b16 %v6236, %v6232
    %v6249 = vpack.c.b16 %v6237, %v6233
    %v6250 = vpack.c.b16 %v6242, %v6238
    %v6251 = vpack.c.b16 %v6243, %v6239
    %v6252 = vpack.c.b16 %v6244, %v6240
    %v6253 = vpack.c.b16 %v6245, %v6241
    %6262 = vmatprep.subr.bf16.mxu0 0
    %6263 = vmatpush1.bf16.msra.mxu0 0
    %6264 = vmatprep.subr.bf16.mxu0 0
    %6265 = vmatpush1.bf16.msra.mxu0 0
    %6266 = vmatprep.subr.bf16.mxu0 0
    %6267 = vmatpush1.bf16.msra.mxu0 0
    %6268 = vmatprep.subr.bf16.mxu0 0
    %6269 = vmatpush1.bf16.msra.mxu0 0
    %6270 = vmatprep.subr.bf16.mxu0 0
    %6271 = vmatpush1.bf16.msra.mxu0 0
    %6272 = vmatprep.subr.bf16.mxu0 0
    %6273 = vmatpush1.bf16.msra.mxu0 0
    %6274 = vmatprep.subr.bf16.mxu0 %v6251
    %6275 = vmatpush1.bf16.msra.mxu0 %v6250
    %6276 = vmatprep.subr.bf16.mxu0 %v6247
    %6277 = vmatpush1.bf16.msra.mxu0 %v6246
    %6278 = vmatprep.subr.bf16.mxu0 0
    %6279 = vmatpush2.bf16.msra.mxu0 0
    %6280 = vmatprep.subr.bf16.mxu0 0
    %6281 = vmatpush2.bf16.msra.mxu0 0
    %6282 = vmatprep.subr.bf16.mxu0 0
    %6283 = vmatpush2.bf16.msra.mxu0 0
    %6284 = vmatprep.subr.bf16.mxu0 0
    %6285 = vmatpush2.bf16.msra.mxu0 0
    %6286 = vmatprep.subr.bf16.mxu0 0
    %6287 = vmatpush2.bf16.msra.mxu0 0
    %6288 = vmatprep.subr.bf16.mxu0 0
    %6289 = vmatpush2.bf16.msra.mxu0 0
    %6290 = vmatprep.subr.bf16.mxu0 0
    %6291 = vmatpush2.bf16.msra.mxu0 0
    %6292 = vmatprep.subr.bf16.mxu0 0
    %6293 = vmatpush2.bf16.msra.mxu0 0
    %6294 = vmatprep.mubr.bf16.mxu0 0
    %6295 = vmatmul.mubr.bf16.gmra.mxu0 %v5246
    %v6296 = vpop.f32.mrf.mxu0
    %v6297 = vadd.f32 %v6205, %v6296
    %v6298 = vpop.f32.mrf.mxu0
    %v6299 = vadd.f32 %v6209, %v6298
    %v6300 = vpop.f32.mrf.mxu0
    %v6301 = vadd.f32 %v6205, %v6300
    %v6302 = vpop.f32.mrf.mxu0
    %v6303 = vadd.f32 %v6209, %v6302
    %6304 = vmatprep.mubr.bf16.mxu0 0
    %6305 = vmatmul.mubr.bf16.gmra.mxu0 %v5249
    %v6306 = vpop.f32.mrf.mxu0
    %v6307 = vadd.f32 %v6205, %v6306
    %v6308 = vpop.f32.mrf.mxu0
    %v6309 = vadd.f32 %v6209, %v6308
    %v6310 = vpop.f32.mrf.mxu0
    %v6311 = vpop.f32.mrf.mxu0
    %6312 = vdwg.mxu0
    %6313 = vmatprep.subr.bf16.mxu0 0
    %6314 = vmatpush1.bf16.msra.mxu0 0
    %6315 = vmatprep.subr.bf16.mxu0 0
    %6316 = vmatpush1.bf16.msra.mxu0 0
    %6317 = vmatprep.subr.bf16.mxu0 0
    %6318 = vmatpush1.bf16.msra.mxu0 0
    %6319 = vmatprep.subr.bf16.mxu0 0
    %6320 = vmatpush1.bf16.msra.mxu0 0
    %6321 = vmatprep.subr.bf16.mxu0 0
    %6322 = vmatpush1.bf16.msra.mxu0 0
    %6323 = vmatprep.subr.bf16.mxu0 0
    %6324 = vmatpush1.bf16.msra.mxu0 0
    %6325 = vmatprep.subr.bf16.mxu0 %v6253
    %6326 = vmatpush1.bf16.msra.mxu0 %v6252
    %6327 = vmatprep.subr.bf16.mxu0 %v6249
    %6328 = vmatpush1.bf16.msra.mxu0 %v6248
    %6329 = vmatprep.subr.bf16.mxu0 0
    %6330 = vmatpush2.bf16.msra.mxu0 0
    %6331 = vmatprep.subr.bf16.mxu0 0
    %6332 = vmatpush2.bf16.msra.mxu0 0
    %6333 = vmatprep.subr.bf16.mxu0 0
    %6334 = vmatpush2.bf16.msra.mxu0 0
    %6335 = vmatprep.subr.bf16.mxu0 0
    %6336 = vmatpush2.bf16.msra.mxu0 0
    %6337 = vmatprep.subr.bf16.mxu0 0
    %6338 = vmatpush2.bf16.msra.mxu0 0
    %6339 = vmatprep.subr.bf16.mxu0 0
    %6340 = vmatpush2.bf16.msra.mxu0 0
    %6341 = vmatprep.subr.bf16.mxu0 0
    %6342 = vmatpush2.bf16.msra.mxu0 0
    %6343 = vmatprep.subr.bf16.mxu0 0
    %6344 = vmatpush2.bf16.msra.mxu0 0
    %6345 = vmatprep.mubr.bf16.mxu0 0
    %6346 = vmatmul.mubr.bf16.gmra.mxu0 %v5246
    %v6347 = vpop.f32.mrf.mxu0
    %v6348 = vadd.f32 %v6213, %v6347
    %v6349 = vpop.f32.mrf.mxu0
    %v6350 = vadd.f32 %v6217, %v6349
    %v6351 = vpop.f32.mrf.mxu0
    %v6352 = vadd.f32 %v6213, %v6351
    %v6353 = vpop.f32.mrf.mxu0
    %v6354 = vadd.f32 %v6217, %v6353
    %6355 = vmatprep.mubr.bf16.mxu0 0
    %6356 = vmatmul.mubr.bf16.gmra.mxu0 %v5249
    %v6357 = vpop.f32.mrf.mxu0
    %v6358 = vadd.f32 %v6213, %v6357
    %v6359 = vpop.f32.mrf.mxu0
    %v6360 = vadd.f32 %v6217, %v6359
    %v6361 = vpop.f32.mrf.mxu0
    %v6362 = vpop.f32.mrf.mxu0
    %6363 = vdwg.mxu0
    %v6364 = vmax.f32 %v6297, 0.0
    %v6365 = vmax.f32 %v6299, 0.0
    %v6366 = vmax.f32 %v6348, 0.0
    %v6367 = vmax.f32 %v6350, 0.0
    %v6368 = vmax.f32 %v6301, 0.0
    %v6369 = vmax.f32 %v6303, 0.0
    %v6370 = vmax.f32 %v6352, 0.0
    %v6371 = vmax.f32 %v6354, 0.0
    %v6372 = vmax.f32 %v6307, 0.0
    %v6373 = vmax.f32 %v6309, 0.0
    %v6374 = vmax.f32 %v6358, 0.0
    %v6375 = vmax.f32 %v6360, 0.0
    %v6376 = vpack.c.bf16 %v6368, %v6364
    %v6377 = vpack.c.bf16 %v6369, %v6365
    %v6378 = vpack.c.bf16 %v6370, %v6366
    %v6379 = vpack.c.bf16 %v6371, %v6367
    %v6380 = vpack.c.bf16 %v6372, %v6372
    %v6381 = vpack.c.bf16 %v6373, %v6373
    %v6382 = vpack.c.bf16 %v6374, %v6374
    %v6383 = vpack.c.bf16 %v6375, %v6375
    %v6384 = vld [vmem:[%s2141 + $0x30] sm:$0xff]
    %v6385 = vld [vmem:[%s2141 + $0x38] sm:$0xff]
    %v6386 = vld [vmem:[%s2141 + $0x70] sm:$0xff]
    %v6387 = vld [vmem:[%s2141 + $0x78] sm:$0xff]
    %v6388 = vld [vmem:[%s2141 + $0xb0] sm:$0xff]
    %v6389 = vld [vmem:[%s2141 + $0xb8] sm:$0xff]
    %v6390 = vld [vmem:[%s2141 + $0xf0] sm:$0xff]
    %v6391 = vld [vmem:[%s2141 + $0xf8] sm:$0xff]
    %v6400 = vunpack.c.l.b16 %v6384
    %v6401 = vunpack.c.h.b16 %v6384
    %v6402 = vunpack.c.l.b16 %v6385
    %v6403 = vunpack.c.h.b16 %v6385
    %v6404 = vunpack.c.l.b16 %v6386
    %v6405 = vunpack.c.h.b16 %v6386
    %v6406 = vunpack.c.l.b16 %v6387
    %v6407 = vunpack.c.h.b16 %v6387
    %v6408 = vunpack.c.l.b16 %v6388
    %v6409 = vunpack.c.h.b16 %v6388
    %v6410 = vunpack.c.l.b16 %v6389
    %v6411 = vunpack.c.h.b16 %v6389
    %v6412 = vunpack.c.l.b16 %v6390
    %v6413 = vunpack.c.h.b16 %v6390
    %v6414 = vunpack.c.l.b16 %v6391
    %v6415 = vunpack.c.h.b16 %v6391
    %v6416 = vpack.c.b16 %v6404, %v6400
    %v6417 = vpack.c.b16 %v6405, %v6401
    %v6418 = vpack.c.b16 %v6406, %v6402
    %v6419 = vpack.c.b16 %v6407, %v6403
    %v6420 = vpack.c.b16 %v6412, %v6408
    %v6421 = vpack.c.b16 %v6413, %v6409
    %v6422 = vpack.c.b16 %v6414, %v6410
    %v6423 = vpack.c.b16 %v6415, %v6411
    %6432 = vmatprep.subr.bf16.mxu0 0
    %6433 = vmatpush1.bf16.xpose.msra.mxu0 0
    %6434 = vmatprep.subr.bf16.mxu0 0
    %6435 = vmatpush1.bf16.xpose.msra.mxu0 0
    %6436 = vmatprep.subr.bf16.mxu0 0
    %6437 = vmatpush1.bf16.xpose.msra.mxu0 0
    %6438 = vmatprep.subr.bf16.mxu0 0
    %6439 = vmatpush1.bf16.xpose.msra.mxu0 0
    %6440 = vmatprep.subr.bf16.mxu0 0
    %6441 = vmatpush1.bf16.xpose.msra.mxu0 0
    %6442 = vmatprep.subr.bf16.mxu0 0
    %6443 = vmatpush1.bf16.xpose.msra.mxu0 0
    %6444 = vmatprep.subr.bf16.mxu0 %v6421
    %6445 = vmatpush1.bf16.xpose.msra.mxu0 %v6420
    %6446 = vmatprep.subr.bf16.mxu0 %v6417
    %6447 = vmatpush1.bf16.xpose.msra.mxu0 %v6416
    %6448 = vmatprep.subr.bf16.mxu0 0
    %6449 = vmatpush2.bf16.xpose.msra.mxu0 0
    %6450 = vmatprep.subr.bf16.mxu0 0
    %6451 = vmatpush2.bf16.xpose.msra.mxu0 0
    %6452 = vmatprep.subr.bf16.mxu0 0
    %6453 = vmatpush2.bf16.xpose.msra.mxu0 0
    %6454 = vmatprep.subr.bf16.mxu0 0
    %6455 = vmatpush2.bf16.xpose.msra.mxu0 0
    %6456 = vmatprep.subr.bf16.mxu0 0
    %6457 = vmatpush2.bf16.xpose.msra.mxu0 0
    %6458 = vmatprep.subr.bf16.mxu0 0
    %6459 = vmatpush2.bf16.xpose.msra.mxu0 0
    %6460 = vmatprep.subr.bf16.mxu0 0
    %6461 = vmatpush2.bf16.xpose.msra.mxu0 0
    %6462 = vmatprep.subr.bf16.mxu0 0
    %6463 = vmatpush2.bf16.xpose.msra.mxu0 0
    %6464 = vmatprep.mubr.bf16.mxu0 %v6377
    %6465 = vmatmul.mubr.bf16.gmra.mxu0 %v6376
    %v6466 = vpop.f32.mrf.mxu0
    %v6467 = vadd.f32 0.0, %v6466
    %v6468 = vpop.f32.mrf.mxu0
    %v6469 = vpop.f32.mrf.mxu0
    %v6470 = vadd.f32 0.0, %v6469
    %v6471 = vpop.f32.mrf.mxu0
    %6472 = vmatprep.mubr.bf16.mxu0 %v6381
    %6473 = vmatmul.mubr.bf16.gmra.mxu0 %v6380
    %v6474 = vpop.f32.mrf.mxu0
    %v6475 = vadd.f32 0.0, %v6474
    %v6476 = vpop.f32.mrf.mxu0
    %v6477 = vpop.f32.mrf.mxu0
    %v6478 = vpop.f32.mrf.mxu0
    %6479 = vdwg.mxu0
    %6480 = vmatprep.subr.bf16.mxu0 0
    %6481 = vmatpush1.bf16.xpose.msra.mxu0 0
    %6482 = vmatprep.subr.bf16.mxu0 0
    %6483 = vmatpush1.bf16.xpose.msra.mxu0 0
    %6484 = vmatprep.subr.bf16.mxu0 0
    %6485 = vmatpush1.bf16.xpose.msra.mxu0 0
    %6486 = vmatprep.subr.bf16.mxu0 0
    %6487 = vmatpush1.bf16.xpose.msra.mxu0 0
    %6488 = vmatprep.subr.bf16.mxu0 0
    %6489 = vmatpush1.bf16.xpose.msra.mxu0 0
    %6490 = vmatprep.subr.bf16.mxu0 0
    %6491 = vmatpush1.bf16.xpose.msra.mxu0 0
    %6492 = vmatprep.subr.bf16.mxu0 %v6423
    %6493 = vmatpush1.bf16.xpose.msra.mxu0 %v6422
    %6494 = vmatprep.subr.bf16.mxu0 %v6419
    %6495 = vmatpush1.bf16.xpose.msra.mxu0 %v6418
    %6496 = vmatprep.subr.bf16.mxu0 0
    %6497 = vmatpush2.bf16.xpose.msra.mxu0 0
    %6498 = vmatprep.subr.bf16.mxu0 0
    %6499 = vmatpush2.bf16.xpose.msra.mxu0 0
    %6500 = vmatprep.subr.bf16.mxu0 0
    %6501 = vmatpush2.bf16.xpose.msra.mxu0 0
    %6502 = vmatprep.subr.bf16.mxu0 0
    %6503 = vmatpush2.bf16.xpose.msra.mxu0 0
    %6504 = vmatprep.subr.bf16.mxu0 0
    %6505 = vmatpush2.bf16.xpose.msra.mxu0 0
    %6506 = vmatprep.subr.bf16.mxu0 0
    %6507 = vmatpush2.bf16.xpose.msra.mxu0 0
    %6508 = vmatprep.subr.bf16.mxu0 0
    %6509 = vmatpush2.bf16.xpose.msra.mxu0 0
    %6510 = vmatprep.subr.bf16.mxu0 0
    %6511 = vmatpush2.bf16.xpose.msra.mxu0 0
    %6512 = vmatprep.mubr.bf16.mxu0 %v6379
    %6513 = vmatmul.mubr.bf16.gmra.mxu0 %v6378
    %v6514 = vpop.f32.mrf.mxu0
    %v6515 = vadd.f32 %v6467, %v6514
    %v6516 = vpop.f32.mrf.mxu0
    %v6517 = vpop.f32.mrf.mxu0
    %v6518 = vadd.f32 %v6470, %v6517
    %v6519 = vpop.f32.mrf.mxu0
    %6520 = vmatprep.mubr.bf16.mxu0 %v6383
    %6521 = vmatmul.mubr.bf16.gmra.mxu0 %v6382
    %v6522 = vpop.f32.mrf.mxu0
    %v6523 = vadd.f32 %v6475, %v6522
    %v6524 = vpop.f32.mrf.mxu0
    %v6525 = vpop.f32.mrf.mxu0
    %v6526 = vpop.f32.mrf.mxu0
    %6527 = vdwg.mxu0
    %v6528 = vadd.f32 %v6189, %v6515
    %v6529 = vadd.f32 %v6190, %v6518
    %v6530 = vadd.f32 %v6191, %v6523
    %v6531 = vadd.f32 %v5165, %v6528
    %v6532 = vadd.f32 %v5166, %v6529
    %v6533 = vadd.f32 %v5167, %v6530
    %s6534 = scalar_lea.vmem [#allocation24], 1
    %v6535 = vld [vmem:[%s6534] sm:$0x1]
    %v6537 = vlaneseq
    %v6538 = vshrl.u32 %v6537, 7
    %v6539 = vsub.s32 0, %v6538
    %v6540 = vrot.slane %v6535, %v6539
    %v6542 = vadd.f32 %v6531, %v6540
    %v6543 = vadd.f32 %v6532, %v6540
    %v6544 = vadd.f32 %v6533, %v6540
    %s6545 = scalar_lea.vmem [#allocation21], 1
    %v6546 = vld [vmem:[%s6545] sm:$0x1]
    %s6547 = scalar_lea.vmem [#allocation22], 1
    %v6548 = vld [vmem:[%s6547] sm:$0x1]
    %v6549 = vsel %vm391, %v6542, 0.0
    %6550 = vadd.xlane.f32.xlu0 %v6549
    %v6551 = vpop.xlane.xlu0 %6550
    %v6552 = vsel %vm391, %v6543, 0.0
    %6553 = vadd.xlane.f32.xlu0 %v6552
    %v6554 = vpop.xlane.xlu0 %6553
    %v6555 = vsel %vm1998, %v6544, 0.0
    %6556 = vadd.xlane.f32.xlu0 %v6555
    %v6557 = vpop.xlane.xlu0 %6556
    %v6558 = vmul.f32 %v6551, %v2002
    %v6559 = vmul.f32 %v6554, %v2002
    %v6560 = vmul.f32 %v6557, %v2002
    %v6561 = vsub.f32 %v6542, %v6558
    %v6562 = vsub.f32 %v6543, %v6559
    %v6563 = vsub.f32 %v6544, %v6560
    %v6564 = vmul.f32 %v6561, %v6561
    %v6565 = vmul.f32 %v6562, %v6562
    %v6566 = vmul.f32 %v6563, %v6563
    %v6567 = vsel %vm391, %v6564, 0.0
    %6568 = vadd.xlane.f32.xlu0 %v6567
    %v6569 = vpop.xlane.xlu0 %6568
    %v6570 = vsel %vm391, %v6565, 0.0
    %6571 = vadd.xlane.f32.xlu0 %v6570
    %v6572 = vpop.xlane.xlu0 %6571
    %v6573 = vsel %vm1998, %v6566, 0.0
    %6574 = vadd.xlane.f32.xlu0 %v6573
    %v6575 = vpop.xlane.xlu0 %6574
    %v6576 = vmul.f32 %v6569, %v2002
    %v6577 = vmul.f32 %v6572, %v2002
    %v6578 = vmul.f32 %v6575, %v2002
    %v6579 = vadd.f32 %v6576, 1e-05
    %v6580 = vadd.f32 %v6577, 1e-05
    %v6581 = vadd.f32 %v6578, 1e-05
    %v6582 = vrsqrt.pop %v6579
    %v6583 = vrsqrt.pop %v6580
    %v6584 = vrsqrt.pop %v6581
    %v6585 = vmul.f32 %v6561, %v6582
    %v6586 = vmul.f32 %v6562, %v6583
    %v6587 = vmul.f32 %v6563, %v6584
    %v6589 = vlaneseq
    %v6590 = vshrl.u32 %v6589, 7
    %v6591 = vsub.s32 0, %v6590
    %v6592 = vrot.slane %v6546, %v6591
    %v6594 = vmul.f32 %v6585, %v6592
    %v6595 = vmul.f32 %v6586, %v6592
    %v6596 = vmul.f32 %v6587, %v6592
    %v6598 = vlaneseq
    %v6599 = vshrl.u32 %v6598, 7
    %v6600 = vsub.s32 0, %v6599
    %v6601 = vrot.slane %v6548, %v6600
    %v6603 = vadd.f32 %v6594, %v6601
    %v6604 = vadd.f32 %v6595, %v6601
    %v6605 = vadd.f32 %v6596, %v6601
    %v6606 = vld [vmem:[#allocation25] sm:$0xff]
    %v6607 = vld [vmem:[#allocation25 + $0x8] sm:$0xff]
    %v6608 = vld [vmem:[#allocation25 + $0x10] sm:$0xff]
    %v6609 = vld [vmem:[#allocation25 + $0x18] sm:$0xff]
    %v6610 = vld [vmem:[#allocation27] sm:$0x1]
    %v6612 = vlaneseq
    %v6613 = vshrl.u32 %v6612, 7
    %v6614 = vsub.s32 0, %v6613
    %v6615 = vrot.slane %v6610, %v6614
    %v6618 = vsel %vm391, %v6603, 0
    %v6621 = vsel %vm391, %v6604, 0
    %v6624 = vsel %vm391, %v6605, 0
    %6626 = vmatprep.subr.mxu0 0.0
    %6627 = vmatpush1.msra.mxu0 0.0
    %6628 = vmatprep.subr.mxu0 0.0
    %6629 = vmatpush1.msra.mxu0 0.0
    %6630 = vmatprep.subr.mxu0 0.0
    %6631 = vmatpush1.msra.mxu0 0.0
    %6632 = vmatprep.subr.mxu0 0.0
    %6633 = vmatpush1.msra.mxu0 0.0
    %6634 = vmatprep.subr.mxu0 0.0
    %6635 = vmatpush1.msra.mxu0 0.0
    %6636 = vmatprep.subr.mxu0 0.0
    %6637 = vmatpush1.msra.mxu0 0.0
    %6638 = vmatprep.subr.mxu0 0.0
    %6639 = vmatpush1.msra.mxu0 0.0
    %6640 = vmatprep.subr.mxu0 0.0
    %6641 = vmatpush1.msra.mxu0 0.0
    %6642 = vmatprep.subr.mxu0 0.0
    %6643 = vmatpush1.msra.mxu0 0.0
    %6644 = vmatprep.subr.mxu0 0.0
    %6645 = vmatpush1.msra.mxu0 0.0
    %6646 = vmatprep.subr.mxu0 0.0
    %6647 = vmatpush1.msra.mxu0 0.0
    %6648 = vmatprep.subr.mxu0 0.0
    %6649 = vmatpush1.msra.mxu0 0.0
    %6650 = vmatprep.subr.mxu0 0.0
    %6651 = vmatpush1.msra.mxu0 %v6609
    %6652 = vmatprep.subr.mxu0 0.0
    %6653 = vmatpush1.msra.mxu0 %v6608
    %6654 = vmatprep.subr.mxu0 0.0
    %6655 = vmatpush1.msra.mxu0 %v6607
    %6656 = vmatprep.subr.mxu0 0.0
    %6657 = vmatpush1.msra.mxu0 %v6606
    %6658 = vmatprep.subr.mxu0 0.0
    %6659 = vmatpush2.msra.mxu0 0.0
    %6660 = vmatprep.subr.mxu0 0.0
    %6661 = vmatpush2.msra.mxu0 0.0
    %6662 = vmatprep.subr.mxu0 0.0
    %6663 = vmatpush2.msra.mxu0 0.0
    %6664 = vmatprep.subr.mxu0 0.0
    %6665 = vmatpush2.msra.mxu0 0.0
    %6666 = vmatprep.subr.mxu0 0.0
    %6667 = vmatpush2.msra.mxu0 0.0
    %6668 = vmatprep.subr.mxu0 0.0
    %6669 = vmatpush2.msra.mxu0 0.0
    %6670 = vmatprep.subr.mxu0 0.0
    %6671 = vmatpush2.msra.mxu0 0.0
    %6672 = vmatprep.subr.mxu0 0.0
    %6673 = vmatpush2.msra.mxu0 0.0
    %6674 = vmatprep.subr.mxu0 0.0
    %6675 = vmatpush2.msra.mxu0 0.0
    %6676 = vmatprep.subr.mxu0 0.0
    %6677 = vmatpush2.msra.mxu0 0.0
    %6678 = vmatprep.subr.mxu0 0.0
    %6679 = vmatpush2.msra.mxu0 0.0
    %6680 = vmatprep.subr.mxu0 0.0
    %6681 = vmatpush2.msra.mxu0 0.0
    %6682 = vmatprep.subr.mxu0 0.0
    %6683 = vmatpush2.msra.mxu0 0.0
    %6684 = vmatprep.subr.mxu0 0.0
    %6685 = vmatpush2.msra.mxu0 0.0
    %6686 = vmatprep.subr.mxu0 0.0
    %6687 = vmatpush2.msra.mxu0 0.0
    %6688 = vmatprep.subr.mxu0 0.0
    %6689 = vmatpush2.msra.mxu0 0.0
    %6690 = vmatprep.mubr.f32.mxu0 0.0
    %6691 = vmatmul.mubr.f32.gmra.mxu0 %v6618
    %v6692 = vpop.f32.mrf.mxu0
    %v6693 = vadd.f32 %v6615, %v6692
    %v6694 = vpop.f32.mrf.mxu0
    %6695 = vmatprep.mubr.f32.mxu0 0.0
    %6696 = vmatmul.mubr.f32.gmra.mxu0 %v6621
    %v6697 = vpop.f32.mrf.mxu0
    %v6698 = vadd.f32 %v6615, %v6697
    %v6699 = vpop.f32.mrf.mxu0
    %6700 = vmatprep.mubr.f32.mxu0 0.0
    %6701 = vmatmul.mubr.f32.gmra.mxu0 %v6624
    %v6702 = vpop.f32.mrf.mxu0
    %v6703 = vadd.f32 %v6615, %v6702
    %v6704 = vpop.f32.mrf.mxu0
    %6705 = vdwg.mxu0
    %vm6706 = vcmp.lt.s32.totalorder %v492, 16
    %vm6707 = vmand %vm502, %vm6706
    %vm6708 = vcmp.ge.s32.totalorder %v492, 16
    %vm6709 = vcmp.lt.s32.totalorder %v492, 32
    %vm6710 = vmand %vm6708, %vm6709
    %v6711 = vsel %vm6707, %v6693, -1e+30
    %v6712 = vsel %vm6707, %v6698, -1e+30
    %v6713 = vsel %vm6707, %v6703, -1e+30
    %v6714 = vsel %vm391, %v6711, -inf
    %6715 = vmax.xlane.f32.xlu0 %v6714
    %v6716 = vpop.xlane.xlu0 %6715
    %v6717 = vsel %vm391, %v6712, -inf
    %6718 = vmax.xlane.f32.xlu0 %v6717
    %v6719 = vpop.xlane.xlu0 %6718
    %v6720 = vsel %vm1998, %v6713, -inf
    %6721 = vmax.xlane.f32.xlu0 %v6720
    %v6722 = vpop.xlane.xlu0 %6721
    %v6723 = vsel %vm6707, %v6716, 0.0
    %v6724 = vsel %vm6707, %v6719, 0.0
    %v6725 = vsel %vm6707, %v6722, 0.0
    %v6726 = vsel %vm6710, %v6693, -1e+30
    %v6727 = vsel %vm6710, %v6698, -1e+30
    %v6728 = vsel %vm6710, %v6703, -1e+30
    %v6729 = vsel %vm391, %v6726, -inf
    %6730 = vmax.xlane.f32.xlu0 %v6729
    %v6731 = vpop.xlane.xlu0 %6730
    %v6732 = vsel %vm391, %v6727, -inf
    %6733 = vmax.xlane.f32.xlu0 %v6732
    %v6734 = vpop.xlane.xlu0 %6733
    %v6735 = vsel %vm1998, %v6728, -inf
    %6736 = vmax.xlane.f32.xlu0 %v6735
    %v6737 = vpop.xlane.xlu0 %6736
    %v6738 = vsel %vm6710, %v6731, %v6723
    %v6739 = vsel %vm6710, %v6734, %v6724
    %v6740 = vsel %vm6710, %v6737, %v6725
    %v6741 = vsub.f32 %v6693, %v6738
    %v6742 = vsub.f32 %v6698, %v6739
    %v6743 = vsub.f32 %v6703, %v6740
    %v6744 = vmul.f32 %v6741, 1.442695
    %v6745 = vpow.pop %v6744
    %v6746 = vmul.f32 %v6742, 1.442695
    %v6747 = vpow.pop %v6746
    %v6748 = vmul.f32 %v6743, 1.442695
    %v6749 = vpow.pop %v6748
    %v6750 = vsel %vm6707, %v6745, 0.0
    %v6751 = vsel %vm6707, %v6747, 0.0
    %v6752 = vsel %vm6707, %v6749, 0.0
    %v6753 = vsel %vm391, %v6750, 0.0
    %6754 = vadd.xlane.f32.xlu0 %v6753
    %v6755 = vpop.xlane.xlu0 %6754
    %v6756 = vsel %vm391, %v6751, 0.0
    %6757 = vadd.xlane.f32.xlu0 %v6756
    %v6758 = vpop.xlane.xlu0 %6757
    %v6759 = vsel %vm1998, %v6752, 0.0
    %6760 = vadd.xlane.f32.xlu0 %v6759
    %v6761 = vpop.xlane.xlu0 %6760
    %v6762 = vsel %vm6707, %v6755, 1.0
    %v6763 = vsel %vm6707, %v6758, 1.0
    %v6764 = vsel %vm6707, %v6761, 1.0
    %v6765 = vsel %vm6710, %v6745, 0.0
    %v6766 = vsel %vm6710, %v6747, 0.0
    %v6767 = vsel %vm6710, %v6749, 0.0
    %v6768 = vsel %vm391, %v6765, 0.0
    %6769 = vadd.xlane.f32.xlu0 %v6768
    %v6770 = vpop.xlane.xlu0 %6769
    %v6771 = vsel %vm391, %v6766, 0.0
    %6772 = vadd.xlane.f32.xlu0 %v6771
    %v6773 = vpop.xlane.xlu0 %6772
    %v6774 = vsel %vm1998, %v6767, 0.0
    %6775 = vadd.xlane.f32.xlu0 %v6774
    %v6776 = vpop.xlane.xlu0 %6775
    %v6777 = vsel %vm6710, %v6770, %v6762
    %v6778 = vsel %vm6710, %v6773, %v6763
    %v6779 = vsel %vm6710, %v6776, %v6764
    %v6780 = vrcp.pop %v6777
    %v6781 = vmul.f32 %v6745, %v6780
    %v6782 = vrcp.pop %v6778
    %v6783 = vmul.f32 %v6747, %v6782
    %v6784 = vrcp.pop %v6779
    %v6785 = vmul.f32 %v6749, %v6784
    %6786 = vst.msk [vmem:[%s23] sm:$0xff] %vm391, %v6781
    %6787 = vst.msk [vmem:[%s23 + $0x8] sm:$0xff] %vm391, %v6783
    %6788 = vst.msk [vmem:[%s23 + $0x10] sm:$0x3] %vm1998, %v6785
    // Predicated region
    $region162: #{transformer3_forward.1} parent=1 // pred_check
      _
    $region163: #{transformer3_forward.1} parent=1 // pred_check_branch
      %6790 = sbr.rel (0) target = $region165
    $region164: #{transformer3_forward.1} parent=1 // pred_region
      _
    $region165: #{transformer3_forward.1} parent=1 // pred_fallthru
      _
    // Predicated region
    $region166: #{transformer3_forward.1} parent=1 // pred_check
      _
    $region167: #{transformer3_forward.1} parent=1 // pred_check_branch
      %6792 = sbr.rel (0) target = $region169
    $region168: #{transformer3_forward.1} parent=1 // pred_region
      _
    $region169: #{transformer3_forward.1} parent=1 // pred_fallthru
      _
    %6793 = vsyncpa [#allocation6], 1
    %6794 = vsyncpa [#allocation8], 1
    %6795 = vsyncpa [#allocation11], 1
    %6796 = vsyncpa [#allocation14], 1
    %6797 = vsyncpa [#allocation17], 1
    %6798 = vsyncpa [#allocation20], 1
    %6799 = vsyncpa [#allocation23], 1
    %6800 = vsyncpa [#allocation26], 1
  %6801 = vsyncmov [#allocation4]
  %s6802 = vpop.sfrf %6801
  %p6803 = scmp.eq.s32.totalorder %s6802, 0
  %p6804 = pneg %p6803
  %6806 = shalt.err (%p6804)
  %s6807 = scalar_lea.sflag [#allocation4], 1
  %6808 = vsyncmov %s6807
  %s6809 = vpop.sfrf %6808
  %p6810 = scmp.eq.s32.totalorder %s6809, 0
  %p6811 = pneg %p6810
  %6813 = shalt.err (%p6811)
  %s6814 = scalar_lea.sflag [#allocation4], 2
  %6815 = vsyncmov %s6814
  %s6816 = vpop.sfrf %6815
  %p6817 = scmp.eq.s32.totalorder %s6816, 0
  %p6818 = pneg %p6817
  %6820 = shalt.err (%p6818)
  %s6821 = scalar_lea.sflag [#allocation4], 3
  %6822 = vsyncmov %s6821
  %s6823 = vpop.sfrf %6822
  %p6824 = scmp.eq.s32.totalorder %s6823, 0
  %p6825 = pneg %p6824
  %6827 = shalt.err (%p6825)

</llo_original>
